<compile_context>
chip_gen: v6e
topology: v6e:2x2x1
jax: 0.10.0
libtpu: 0.0.40
codegen_flags: <defaults>
</compile_context>

<pallas_src>
import jax
import jax.numpy as jnp
from jax import lax
from jax.experimental import pallas as pl
from jax.experimental.pallas import tpu as pltpu

# ---------------------------------------------------------------------------
# Problem constants (fc1 in_features = 9216 = 64*12*12 pins the 1x28x28 input)
# ---------------------------------------------------------------------------
H_IN = 28
H1 = H_IN - 2            # 26 : conv1 output spatial size
H2 = H1 - 2              # 24 : conv2 output spatial size
HP = H2 // 2             # 12 : pooled spatial size
C1, C2 = 32, 64
ROWS1 = H1 * H1          # 676 : conv1 rows per image (row = h*26 + w)
SLAB = 680               # conv1 rows computed per image (>= 678 needed, 8-aligned)
ACC = H2 * H1            # 624 : conv2 rows r2 = ho*26 + wo (wo>=24 is garbage)
POOL_ROWS = HP * HP      # 144 : dense pooled rows (row = po*12 + qo)
FC1_IN = HP * HP * C2    # 9216
FC1_OUT = 128
N_CLASSES = 10
K1W = 3 * 9              # 27 : widened conv1 patch columns
N1W = 3 * C1             # 96 : widened conv1 output lanes (kw*32 + c)


def _default_vmem_limit():
    try:
        phys = pltpu.get_tpu_info().vmem_capacity_bytes
    except Exception:
        phys = 64 * 1024 * 1024
    # ~96 MiB on v5e/v6e (128 MiB physical), ~48 MiB on v7x (64 MiB physical)
    return int(min(phys * 3 // 4, 96 * 1024 * 1024))


VMEM_LIMIT = _default_vmem_limit()


# ---------------------------------------------------------------------------
# Kernel 1: fused conv1 + ReLU + conv2 + ReLU + 2x2 max-pool, G images / step
# ---------------------------------------------------------------------------
def _make_conv_pool_kernel(group):
    def kernel(p1w_ref, w1w_ref, b1w_ref, w2_ref, b2_ref, o_ref, y1w_scr, z_scr):
        # p1w_ref : (G, 680, 27) bf16  widened conv1 patches, col = kw*9 + j
        # w1w_ref : (27, 96)     bf16  block-diagonal widened conv1 weights
        # b1w_ref : (1, 96)      f32   conv1 bias tiled 3x
        # w2_ref  : (288, 64)    bf16  conv2 weights, row = (kh*3+kw)*32 + cin
        # b2_ref  : (1, 64)      f32
        # o_ref   : (G, 144, 64) bf16  dense pooled output, row = po*12 + qo
        # y1w_scr : (680, 96)    bf16  widened relu(conv1) for the current image
        # z_scr   : (624, 64)    f32   post-activation conv2 (for pooling reads)
        w1w = w1w_ref[...]
        b1w = b1w_ref[...]
        b2 = b2_ref[...]
        w2g = [w2_ref[pl.ds(kh * N1W, N1W), :] for kh in range(3)]  # 3x (96,64)
        for g in range(group):
            # conv1 + bias + ReLU in the lane-widened layout:
            #   y1w[r, kw*32 + c] = relu(conv1)[r + kw, c]     (r = h*26 + w)
            y1 = jnp.dot(p1w_ref[g], w1w, preferred_element_type=jnp.float32)
            y1w_scr[...] = jnp.maximum(y1 + b1w, 0.0).astype(y1w_scr.dtype)

            # conv2: 3 value-accumulated K=96 dots (tap-row groups kh = 0,1,2);
            # partial sums never round-trip through a VMEM accumulator.
            z = jnp.dot(y1w_scr[pl.ds(0, ACC), :], w2g[0],
                        preferred_element_type=jnp.float32)
            z = z + jnp.dot(y1w_scr[pl.ds(H1, ACC), :], w2g[1],
                            preferred_element_type=jnp.float32)
            z = z + jnp.dot(y1w_scr[pl.ds(2 * H1, ACC), :], w2g[2],
                            preferred_element_type=jnp.float32)
            # bias + ReLU in f32; columns wo in {24,25} hold finite garbage
            # that the pooling below never reads.
            z_scr[...] = jnp.maximum(z + b2, 0.0)

            # 2x2 max-pool straight into the dense (144, 64) output rows.
            for po in range(HP):
                r0 = (2 * po) * H1
                r1 = r0 + H1
                blk = jnp.maximum(
                    jnp.maximum(z_scr[pl.ds(r0, HP, 2), :],
                                z_scr[pl.ds(r0 + 1, HP, 2), :]),
                    jnp.maximum(z_scr[pl.ds(r1, HP, 2), :],
                                z_scr[pl.ds(r1 + 1, HP, 2), :]))
                o_ref[g, pl.ds(po * HP, HP), :] = blk.astype(o_ref.dtype)

    return kernel


def conv_stage(p1w, w1w, b1w, w2, b2, group):
    B = p1w.shape[0]
    return pl.pallas_call(
        _make_conv_pool_kernel(group),
        out_shape=jax.ShapeDtypeStruct((B, POOL_ROWS, C2), jnp.bfloat16),
        grid=(B // group,),
        in_specs=[
            pl.BlockSpec((group, SLAB, K1W), lambda i: (i, 0, 0)),
            pl.BlockSpec((K1W, N1W), lambda i: (0, 0)),      # VMEM-resident
            pl.BlockSpec((1, N1W), lambda i: (0, 0)),
            pl.BlockSpec((9 * C1, C2), lambda i: (0, 0)),    # VMEM-resident
            pl.BlockSpec((1, C2), lambda i: (0, 0)),
        ],
        out_specs=pl.BlockSpec((group, POOL_ROWS, C2), lambda i: (i, 0, 0)),
        scratch_shapes=[pltpu.VMEM((SLAB, N1W), jnp.bfloat16),
                        pltpu.VMEM((ACC, C2), jnp.float32)],
        compiler_params=pltpu.CompilerParams(
            dimension_semantics=("parallel",),
            vmem_limit_bytes=VMEM_LIMIT),
    )(p1w, w1w, b1w, w2, b2)


# ---------------------------------------------------------------------------
# Kernel 2: fused fc1 + ReLU + fc2 + log_softmax (bf16 operands, f32 accum)
# ---------------------------------------------------------------------------
def _fc_head_kernel(x_ref, w3_ref, b3_ref, w4_ref, b4_ref, o_ref):
    h = jnp.dot(x_ref[...], w3_ref[...],
                preferred_element_type=jnp.float32) + b3_ref[...]
    h = jnp.maximum(h, 0.0).astype(jnp.bfloat16)
    z = jnp.dot(h, w4_ref[...],
                preferred_element_type=jnp.float32) + b4_ref[...]
    m = jnp.max(z, axis=-1, keepdims=True)
    lse = m + jnp.log(jnp.sum(jnp.exp(z - m), axis=-1, keepdims=True))
    o_ref[...] = (z - lse).astype(o_ref.dtype)


def fc_head(flat, w3, b3, w4, b4):
    M, K = flat.shape
    tb = 128 if M >= 256 else M          # >=2 parallel steps once M >= 256 (v7x)
    mp = pl.cdiv(M, tb) * tb
    if mp != M:
        flat = jnp.pad(flat, ((0, mp - M), (0, 0)))
    out = pl.pallas_call(
        _fc_head_kernel,
        out_shape=jax.ShapeDtypeStruct((mp, N_CLASSES), jnp.float32),
        grid=(mp // tb,),
        in_specs=[
            pl.BlockSpec((tb, K), lambda i: (i, 0)),
            pl.BlockSpec((K, FC1_OUT), lambda i: (0, 0)),    # bf16 w3 resident
            pl.BlockSpec((1, FC1_OUT), lambda i: (0, 0)),
            pl.BlockSpec((FC1_OUT, N_CLASSES), lambda i: (0, 0)),
            pl.BlockSpec((1, N_CLASSES), lambda i: (0, 0)),
        ],
        out_specs=pl.BlockSpec((tb, N_CLASSES), lambda i: (i, 0)),
        compiler_params=pltpu.CompilerParams(
            dimension_semantics=("parallel",),
            vmem_limit_bytes=VMEM_LIMIT),
    )(flat, w3, b3, w4, b4)
    return out[:M]


# ---------------------------------------------------------------------------
# Plain-JAX glue (layout only) + parameter preparation
# ---------------------------------------------------------------------------
def _pick_group(batch):
    """Images per conv grid step; keeps >=2 grid steps when possible."""
    for g in (8, 4, 2):
        if batch % g == 0 and batch // g >= 2:
            return g
    return 1


def _conv1_patches_wide(xb):
    """Lane-widened 3x3 patch extraction (bf16, pure data movement)."""
    B = xb.shape[0]
    cols = [xb[:, kh:kh + H1, kw:kw + H1] for kh in range(3) for kw in range(3)]
    p1 = jnp.stack(cols, axis=-1).reshape(B, ROWS1, 9)            # row = h*26 + w
    p1 = jnp.pad(p1, ((0, 0), (0, SLAB + 2 - ROWS1), (0, 0)))     # (B, 682, 9)
    return jnp.concatenate(
        [p1[:, 0:SLAB], p1[:, 1:SLAB + 1], p1[:, 2:SLAB + 2]], axis=-1)  # (B,680,27)


def init_params(key):
    """Torch-layout synthetic parameters (PyTorch-default-style uniform init)."""
    ks = jax.random.split(key, 8)

    def u(k, shape, fan_in):
        b = 1.0 / jnp.sqrt(jnp.float32(fan_in))
        return jax.random.uniform(k, shape, jnp.float32, -b, b)

    w1 = u(ks[0], (C1, 1, 3, 3), 9)
    b1 = u(ks[1], (C1,), 9)
    w2 = u(ks[2], (C2, C1, 3, 3), C1 * 9)
    b2 = u(ks[3], (C2,), C1 * 9)
    w3 = u(ks[4], (FC1_OUT, FC1_IN), FC1_IN)
    b3 = u(ks[5], (FC1_OUT,), FC1_IN)
    w4 = u(ks[6], (N_CLASSES, FC1_OUT), FC1_OUT)
    b4 = u(ks[7], (N_CLASSES,), FC1_OUT)
    return (w1, b1, w2, b2, w3, b3, w4, b4)


def prepare_params(params):
    """One-time conversion of torch-layout parameters to kernel layouts."""
    w1, b1, w2, b2, w3, b3, w4, b4 = params
    bf16 = jnp.bfloat16
    # conv1: (Cout,1,3,3) -> (9, 32), row j = kh*3+kw; then block-diagonal
    # widening so one dot emits y1w[r, kw*32 + c] = conv1[r + kw, c].
    w1f = jnp.transpose(w1, (2, 3, 1, 0)).reshape(9, C1)
    w1w = jnp.zeros((K1W, N1W), jnp.float32)
    for kw in range(3):
        w1w = w1w.at[kw * 9:(kw + 1) * 9, kw * C1:(kw + 1) * C1].set(w1f)
    b1w = jnp.tile(b1, 3).reshape(1, N1W)
    # conv2: (Cout,Cin,3,3) -> (288, 64), row = (kh*3 + kw)*32 + cin
    w2f = jnp.transpose(w2, (2, 3, 1, 0)).reshape(9 * C1, C2)
    # fc1: permute rows once from torch's (c,h,w) flatten order to the kernel's
    # (h,w,c) order so the conv->fc glue is a free reshape.
    w3k = jnp.transpose(w3, (1, 0)).reshape(C2, POOL_ROWS, FC1_OUT)
    w3k = jnp.transpose(w3k, (1, 0, 2)).reshape(FC1_IN, FC1_OUT)
    w4k = jnp.transpose(w4, (1, 0))
    return (w1w.astype(bf16), b1w, w2f.astype(bf16), b2.reshape(1, C2),
            w3k.astype(bf16), b3.reshape(1, FC1_OUT),
            w4k.astype(bf16), b4.reshape(1, N_CLASSES))


@jax.jit
def simple_cnn_forward(x_nchw, prep):
    w1w, b1w, w2, b2, w3, b3, w4, b4 = prep
    B = x_nchw.shape[0]
    xb = x_nchw[:, 0].astype(jnp.bfloat16)                        # (B, 28, 28)
    p1w = _conv1_patches_wide(xb)                                 # (B, 680, 27)
    pooled = conv_stage(p1w, w1w, b1w, w2, b2, _pick_group(B))    # (B, 144, 64) bf16
    flat = pooled.reshape(B, FC1_IN)     # (h,w,c) flatten; w3 rows pre-permuted
    return fc_head(flat, w3, b3, w4, b4)                          # (B, 10) f32


def reference_forward(x_nchw, params):
    """Pure-JAX reference with the same bf16 operand rounding as the kernels."""
    w1, b1, w2, b2, w3, b3, w4, b4 = params
    hi = lax.Precision.HIGHEST
    q = lambda a: a.astype(jnp.bfloat16).astype(jnp.float32)
    B = x_nchw.shape[0]
    y = lax.conv_general_dilated(q(x_nchw), q(w1), (1, 1), "VALID",
                                 dimension_numbers=("NCHW", "OIHW", "NCHW"),
                                 precision=hi)
    y = jnp.maximum(y + b1.reshape(1, -1, 1, 1), 0.0)
    y = lax.conv_general_dilated(q(y), q(w2), (1, 1), "VALID",
                                 dimension_numbers=("NCHW", "OIHW", "NCHW"),
                                 precision=hi)
    y = jnp.maximum(y + b2.reshape(1, -1, 1, 1), 0.0)
    y = y.reshape(B, C2, HP, 2, HP, 2).max(axis=(3, 5))
    flat = y.reshape(B, FC1_IN)                                   # torch NCHW flatten
    h = jnp.maximum(jnp.dot(q(flat), q(w3).T, precision=hi) + b3, 0.0)
    z = jnp.dot(q(h), q(w4).T, precision=hi) + b4
    return jax.nn.log_softmax(z, axis=-1)


if __name__ == "__main__":
    key = jax.random.PRNGKey(0)
    kx, kp = jax.random.split(key)
    # fc1's in_features = 9216 (= 64*12*12) pins the input to 1x28x28 (MNIST).
    x = jax.random.normal(kx, (2, 1, 28, 28), jnp.float32)
    params = init_params(kp)
    prep = prepare_params(params)

    out = jax.block_until_ready(simple_cnn_forward(x, prep))
    assert out.shape == (2, 10), out.shape
    assert bool(jnp.all(jnp.isfinite(out)))
    # log_softmax sanity: probabilities sum to 1 per row
    assert jnp.allclose(jnp.sum(jnp.exp(out), axis=1), 1.0, atol=1e-3)
    # cross-check against the bf16-aware pure-JAX reference
    ref = jax.block_until_ready(reference_forward(x, params))
    err = float(jnp.max(jnp.abs(out - ref)))
    assert err < 5e-2, err
    print("KERNEL_OK")
</pallas_src>

<mosaic_0001>
module attributes {stable_mosaic.version = 11 : i64} {
  func.func @kernel(%arg0: i32, %arg1: memref<1x680x27xbf16, #tpu.memory_space<vmem>>, %arg2: memref<27x96xbf16, #tpu.memory_space<vmem>>, %arg3: memref<1x96xf32, #tpu.memory_space<vmem>>, %arg4: memref<288x64xbf16, #tpu.memory_space<vmem>>, %arg5: memref<1x64xf32, #tpu.memory_space<vmem>>, %arg6: memref<1x144x64xbf16, #tpu.memory_space<vmem>>, %arg7: memref<680x96xbf16, #tpu.memory_space<vmem>>, %arg8: memref<624x64xf32, #tpu.memory_space<vmem>>) attributes {dimension_semantics = [#tpu.dimension_semantics<parallel>], iteration_bounds = array<i64: 2>, scalar_prefetch = 0 : i64, scratch_operands = 2 : i64, tpu.core_type = #tpu.core_type<tc>, window_params = [{transform_indices = @transform_0, window_bounds = array<i64: 1, 680, 27>}, {pipeline_mode = #tpu.pipeline_mode<synchronous>, transform_indices = @transform_1, window_bounds = array<i64: 27, 96>}, {pipeline_mode = #tpu.pipeline_mode<synchronous>, transform_indices = @transform_2, window_bounds = array<i64: 1, 96>}, {pipeline_mode = #tpu.pipeline_mode<synchronous>, transform_indices = @transform_3, window_bounds = array<i64: 288, 64>}, {pipeline_mode = #tpu.pipeline_mode<synchronous>, transform_indices = @transform_4, window_bounds = array<i64: 1, 64>}, {transform_indices = @transform_5, window_bounds = array<i64: 1, 144, 64>}]} {
    %c0 = arith.constant 0 : index
    %c0_0 = arith.constant 0 : index
    %0 = vector.load %arg2[%c0, %c0_0] : memref<27x96xbf16, #tpu.memory_space<vmem>>, vector<27x96xbf16>
    %c0_1 = arith.constant 0 : index
    %c0_2 = arith.constant 0 : index
    %1 = vector.load %arg3[%c0_1, %c0_2] : memref<1x96xf32, #tpu.memory_space<vmem>>, vector<1x96xf32>
    %c0_3 = arith.constant 0 : index
    %c0_4 = arith.constant 0 : index
    %2 = vector.load %arg5[%c0_3, %c0_4] : memref<1x64xf32, #tpu.memory_space<vmem>>, vector<1x64xf32>
    %c0_5 = arith.constant 0 : index
    %c0_6 = arith.constant 0 : index
    %3 = vector.load %arg4[%c0_5, %c0_6] : memref<288x64xbf16, #tpu.memory_space<vmem>>, vector<96x64xbf16>
    %c96 = arith.constant 96 : index
    %c0_7 = arith.constant 0 : index
    %4 = vector.load %arg4[%c96, %c0_7] : memref<288x64xbf16, #tpu.memory_space<vmem>>, vector<96x64xbf16>
    %c192 = arith.constant 192 : index
    %c0_8 = arith.constant 0 : index
    %5 = vector.load %arg4[%c192, %c0_8] : memref<288x64xbf16, #tpu.memory_space<vmem>>, vector<96x64xbf16>
    %c0_9 = arith.constant 0 : index
    %c0_10 = arith.constant 0 : index
    %c0_11 = arith.constant 0 : index
    %6 = vector.load %arg1[%c0_9, %c0_10, %c0_11] : memref<1x680x27xbf16, #tpu.memory_space<vmem>>, vector<1x680x27xbf16>
    %7 = vector.shape_cast %6 : vector<1x680x27xbf16> to vector<680x27xbf16>
    %cst = arith.constant dense<0.000000e+00> : vector<680x96xf32>
    %8 = tpu.matmul %7, %0, %cst {dimension_numbers = #tpu.dot_dimension_numbers<[1], [0], [0], [1], [0, 0, 1, 1], [], []>} : vector<680x27xbf16>, vector<27x96xbf16>, vector<680x96xf32> -> vector<680x96xf32>
    %9 = vector.broadcast %1 : vector<1x96xf32> to vector<680x96xf32>
    %10 = arith.addf %8, %9 : vector<680x96xf32>
    %cst_12 = arith.constant 0.000000e+00 : f32
    %11 = vector.broadcast %cst_12 : f32 to vector<680x96xf32>
    %12 = arith.maximumf %10, %11 : vector<680x96xf32>
    %13 = arith.truncf %12 : vector<680x96xf32> to vector<680x96xbf16>
    %c0_13 = arith.constant 0 : index
    %c0_14 = arith.constant 0 : index
    %14 = vector.load %arg7[%c0_13, %c0_14] : memref<680x96xbf16, #tpu.memory_space<vmem>>, vector<680x96xbf16>
    tpu.vector_store %arg7[%c0_13, %c0_14], %13 {strides = array<i32>} : memref<680x96xbf16, #tpu.memory_space<vmem>>, vector<680x96xbf16>,
    %c0_15 = arith.constant 0 : index
    %c0_16 = arith.constant 0 : index
    %15 = vector.load %arg7[%c0_15, %c0_16] : memref<680x96xbf16, #tpu.memory_space<vmem>>, vector<624x96xbf16>
    %cst_17 = arith.constant dense<0.000000e+00> : vector<624x64xf32>
    %16 = tpu.matmul %15, %3, %cst_17 {dimension_numbers = #tpu.dot_dimension_numbers<[1], [0], [0], [1], [0, 0, 1, 1], [], []>} : vector<624x96xbf16>, vector<96x64xbf16>, vector<624x64xf32> -> vector<624x64xf32>
    %c26 = arith.constant 26 : index
    %c0_18 = arith.constant 0 : index
    %17 = vector.load %arg7[%c26, %c0_18] : memref<680x96xbf16, #tpu.memory_space<vmem>>, vector<624x96xbf16>
    %cst_19 = arith.constant dense<0.000000e+00> : vector<624x64xf32>
    %18 = tpu.matmul %17, %4, %cst_19 {dimension_numbers = #tpu.dot_dimension_numbers<[1], [0], [0], [1], [0, 0, 1, 1], [], []>} : vector<624x96xbf16>, vector<96x64xbf16>, vector<624x64xf32> -> vector<624x64xf32>
    %19 = arith.addf %16, %18 : vector<624x64xf32>
    %c52 = arith.constant 52 : index
    %c0_20 = arith.constant 0 : index
    %20 = vector.load %arg7[%c52, %c0_20] : memref<680x96xbf16, #tpu.memory_space<vmem>>, vector<624x96xbf16>
    %cst_21 = arith.constant dense<0.000000e+00> : vector<624x64xf32>
    %21 = tpu.matmul %20, %5, %cst_21 {dimension_numbers = #tpu.dot_dimension_numbers<[1], [0], [0], [1], [0, 0, 1, 1], [], []>} : vector<624x96xbf16>, vector<96x64xbf16>, vector<624x64xf32> -> vector<624x64xf32>
    %22 = arith.addf %19, %21 : vector<624x64xf32>
    %23 = vector.broadcast %2 : vector<1x64xf32> to vector<624x64xf32>
    %24 = arith.addf %22, %23 : vector<624x64xf32>
    %cst_22 = arith.constant 0.000000e+00 : f32
    %25 = vector.broadcast %cst_22 : f32 to vector<624x64xf32>
    %26 = arith.maximumf %24, %25 : vector<624x64xf32>
    %c0_23 = arith.constant 0 : index
    %c0_24 = arith.constant 0 : index
    %27 = vector.load %arg8[%c0_23, %c0_24] : memref<624x64xf32, #tpu.memory_space<vmem>>, vector<624x64xf32>
    tpu.vector_store %arg8[%c0_23, %c0_24], %26 {strides = array<i32>} : memref<624x64xf32, #tpu.memory_space<vmem>>, vector<624x64xf32>,
    %c0_25 = arith.constant 0 : index
    %c0_26 = arith.constant 0 : index
    %28 = tpu.strided_load %arg8[%c0_25, %c0_26] {strides = array<i32: 2, 1>} : memref<624x64xf32, #tpu.memory_space<vmem>>, vector<12x64xf32>
    %c1 = arith.constant 1 : index
    %c0_27 = arith.constant 0 : index
    %29 = tpu.strided_load %arg8[%c1, %c0_27] {strides = array<i32: 2, 1>} : memref<624x64xf32, #tpu.memory_space<vmem>>, vector<12x64xf32>
    %30 = arith.maximumf %28, %29 : vector<12x64xf32>
    %c26_28 = arith.constant 26 : index
    %c0_29 = arith.constant 0 : index
    %31 = tpu.strided_load %arg8[%c26_28, %c0_29] {strides = array<i32: 2, 1>} : memref<624x64xf32, #tpu.memory_space<vmem>>, vector<12x64xf32>
    %c27 = arith.constant 27 : index
    %c0_30 = arith.constant 0 : index
    %32 = tpu.strided_load %arg8[%c27, %c0_30] {strides = array<i32: 2, 1>} : memref<624x64xf32, #tpu.memory_space<vmem>>, vector<12x64xf32>
    %33 = arith.maximumf %31, %32 : vector<12x64xf32>
    %34 = arith.maximumf %30, %33 : vector<12x64xf32>
    %35 = arith.truncf %34 : vector<12x64xf32> to vector<12x64xbf16>
    %c0_31 = arith.constant 0 : index
    %c0_32 = arith.constant 0 : index
    %c0_33 = arith.constant 0 : index
    %36 = vector.load %arg6[%c0_31, %c0_32, %c0_33] : memref<1x144x64xbf16, #tpu.memory_space<vmem>>, vector<1x12x64xbf16>
    %37 = vector.shape_cast %36 : vector<1x12x64xbf16> to vector<12x64xbf16>
    %38 = vector.shape_cast %35 : vector<12x64xbf16> to vector<1x12x64xbf16>
    tpu.vector_store %arg6[%c0_31, %c0_32, %c0_33], %38 {strides = array<i32>} : memref<1x144x64xbf16, #tpu.memory_space<vmem>>, vector<1x12x64xbf16>,
    %c52_34 = arith.constant 52 : index
    %c0_35 = arith.constant 0 : index
    %39 = tpu.strided_load %arg8[%c52_34, %c0_35] {strides = array<i32: 2, 1>} : memref<624x64xf32, #tpu.memory_space<vmem>>, vector<12x64xf32>
    %c53 = arith.constant 53 : index
    %c0_36 = arith.constant 0 : index
    %40 = tpu.strided_load %arg8[%c53, %c0_36] {strides = array<i32: 2, 1>} : memref<624x64xf32, #tpu.memory_space<vmem>>, vector<12x64xf32>
    %41 = arith.maximumf %39, %40 : vector<12x64xf32>
    %c78 = arith.constant 78 : index
    %c0_37 = arith.constant 0 : index
    %42 = tpu.strided_load %arg8[%c78, %c0_37] {strides = array<i32: 2, 1>} : memref<624x64xf32, #tpu.memory_space<vmem>>, vector<12x64xf32>
    %c79 = arith.constant 79 : index
    %c0_38 = arith.constant 0 : index
    %43 = tpu.strided_load %arg8[%c79, %c0_38] {strides = array<i32: 2, 1>} : memref<624x64xf32, #tpu.memory_space<vmem>>, vector<12x64xf32>
    %44 = arith.maximumf %42, %43 : vector<12x64xf32>
    %45 = arith.maximumf %41, %44 : vector<12x64xf32>
    %46 = arith.truncf %45 : vector<12x64xf32> to vector<12x64xbf16>
    %c0_39 = arith.constant 0 : index
    %c12 = arith.constant 12 : index
    %c0_40 = arith.constant 0 : index
    %47 = vector.load %arg6[%c0_39, %c12, %c0_40] : memref<1x144x64xbf16, #tpu.memory_space<vmem>>, vector<1x12x64xbf16>
    %48 = vector.shape_cast %47 : vector<1x12x64xbf16> to vector<12x64xbf16>
    %49 = vector.shape_cast %46 : vector<12x64xbf16> to vector<1x12x64xbf16>
    tpu.vector_store %arg6[%c0_39, %c12, %c0_40], %49 {strides = array<i32>} : memref<1x144x64xbf16, #tpu.memory_space<vmem>>, vector<1x12x64xbf16>,
    %c104 = arith.constant 104 : index
    %c0_41 = arith.constant 0 : index
    %50 = tpu.strided_load %arg8[%c104, %c0_41] {strides = array<i32: 2, 1>} : memref<624x64xf32, #tpu.memory_space<vmem>>, vector<12x64xf32>
    %c105 = arith.constant 105 : index
    %c0_42 = arith.constant 0 : index
    %51 = tpu.strided_load %arg8[%c105, %c0_42] {strides = array<i32: 2, 1>} : memref<624x64xf32, #tpu.memory_space<vmem>>, vector<12x64xf32>
    %52 = arith.maximumf %50, %51 : vector<12x64xf32>
    %c130 = arith.constant 130 : index
    %c0_43 = arith.constant 0 : index
    %53 = tpu.strided_load %arg8[%c130, %c0_43] {strides = array<i32: 2, 1>} : memref<624x64xf32, #tpu.memory_space<vmem>>, vector<12x64xf32>
    %c131 = arith.constant 131 : index
    %c0_44 = arith.constant 0 : index
    %54 = tpu.strided_load %arg8[%c131, %c0_44] {strides = array<i32: 2, 1>} : memref<624x64xf32, #tpu.memory_space<vmem>>, vector<12x64xf32>
    %55 = arith.maximumf %53, %54 : vector<12x64xf32>
    %56 = arith.maximumf %52, %55 : vector<12x64xf32>
    %57 = arith.truncf %56 : vector<12x64xf32> to vector<12x64xbf16>
    %c0_45 = arith.constant 0 : index
    %c24 = arith.constant 24 : index
    %c0_46 = arith.constant 0 : index
    %58 = vector.load %arg6[%c0_45, %c24, %c0_46] : memref<1x144x64xbf16, #tpu.memory_space<vmem>>, vector<1x12x64xbf16>
    %59 = vector.shape_cast %58 : vector<1x12x64xbf16> to vector<12x64xbf16>
    %60 = vector.shape_cast %57 : vector<12x64xbf16> to vector<1x12x64xbf16>
    tpu.vector_store %arg6[%c0_45, %c24, %c0_46], %60 {strides = array<i32>} : memref<1x144x64xbf16, #tpu.memory_space<vmem>>, vector<1x12x64xbf16>,
    %c156 = arith.constant 156 : index
    %c0_47 = arith.constant 0 : index
    %61 = tpu.strided_load %arg8[%c156, %c0_47] {strides = array<i32: 2, 1>} : memref<624x64xf32, #tpu.memory_space<vmem>>, vector<12x64xf32>
    %c157 = arith.constant 157 : index
    %c0_48 = arith.constant 0 : index
    %62 = tpu.strided_load %arg8[%c157, %c0_48] {strides = array<i32: 2, 1>} : memref<624x64xf32, #tpu.memory_space<vmem>>, vector<12x64xf32>
    %63 = arith.maximumf %61, %62 : vector<12x64xf32>
    %c182 = arith.constant 182 : index
    %c0_49 = arith.constant 0 : index
    %64 = tpu.strided_load %arg8[%c182, %c0_49] {strides = array<i32: 2, 1>} : memref<624x64xf32, #tpu.memory_space<vmem>>, vector<12x64xf32>
    %c183 = arith.constant 183 : index
    %c0_50 = arith.constant 0 : index
    %65 = tpu.strided_load %arg8[%c183, %c0_50] {strides = array<i32: 2, 1>} : memref<624x64xf32, #tpu.memory_space<vmem>>, vector<12x64xf32>
    %66 = arith.maximumf %64, %65 : vector<12x64xf32>
    %67 = arith.maximumf %63, %66 : vector<12x64xf32>
    %68 = arith.truncf %67 : vector<12x64xf32> to vector<12x64xbf16>
    %c0_51 = arith.constant 0 : index
    %c36 = arith.constant 36 : index
    %c0_52 = arith.constant 0 : index
    %69 = vector.load %arg6[%c0_51, %c36, %c0_52] : memref<1x144x64xbf16, #tpu.memory_space<vmem>>, vector<1x12x64xbf16>
    %70 = vector.shape_cast %69 : vector<1x12x64xbf16> to vector<12x64xbf16>
    %71 = vector.shape_cast %68 : vector<12x64xbf16> to vector<1x12x64xbf16>
    tpu.vector_store %arg6[%c0_51, %c36, %c0_52], %71 {strides = array<i32>} : memref<1x144x64xbf16, #tpu.memory_space<vmem>>, vector<1x12x64xbf16>,
    %c208 = arith.constant 208 : index
    %c0_53 = arith.constant 0 : index
    %72 = tpu.strided_load %arg8[%c208, %c0_53] {strides = array<i32: 2, 1>} : memref<624x64xf32, #tpu.memory_space<vmem>>, vector<12x64xf32>
    %c209 = arith.constant 209 : index
    %c0_54 = arith.constant 0 : index
    %73 = tpu.strided_load %arg8[%c209, %c0_54] {strides = array<i32: 2, 1>} : memref<624x64xf32, #tpu.memory_space<vmem>>, vector<12x64xf32>
    %74 = arith.maximumf %72, %73 : vector<12x64xf32>
    %c234 = arith.constant 234 : index
    %c0_55 = arith.constant 0 : index
    %75 = tpu.strided_load %arg8[%c234, %c0_55] {strides = array<i32: 2, 1>} : memref<624x64xf32, #tpu.memory_space<vmem>>, vector<12x64xf32>
    %c235 = arith.constant 235 : index
    %c0_56 = arith.constant 0 : index
    %76 = tpu.strided_load %arg8[%c235, %c0_56] {strides = array<i32: 2, 1>} : memref<624x64xf32, #tpu.memory_space<vmem>>, vector<12x64xf32>
    %77 = arith.maximumf %75, %76 : vector<12x64xf32>
    %78 = arith.maximumf %74, %77 : vector<12x64xf32>
    %79 = arith.truncf %78 : vector<12x64xf32> to vector<12x64xbf16>
    %c0_57 = arith.constant 0 : index
    %c48 = arith.constant 48 : index
    %c0_58 = arith.constant 0 : index
    %80 = vector.load %arg6[%c0_57, %c48, %c0_58] : memref<1x144x64xbf16, #tpu.memory_space<vmem>>, vector<1x12x64xbf16>
    %81 = vector.shape_cast %80 : vector<1x12x64xbf16> to vector<12x64xbf16>
    %82 = vector.shape_cast %79 : vector<12x64xbf16> to vector<1x12x64xbf16>
    tpu.vector_store %arg6[%c0_57, %c48, %c0_58], %82 {strides = array<i32>} : memref<1x144x64xbf16, #tpu.memory_space<vmem>>, vector<1x12x64xbf16>,
    %c260 = arith.constant 260 : index
    %c0_59 = arith.constant 0 : index
    %83 = tpu.strided_load %arg8[%c260, %c0_59] {strides = array<i32: 2, 1>} : memref<624x64xf32, #tpu.memory_space<vmem>>, vector<12x64xf32>
    %c261 = arith.constant 261 : index
    %c0_60 = arith.constant 0 : index
    %84 = tpu.strided_load %arg8[%c261, %c0_60] {strides = array<i32: 2, 1>} : memref<624x64xf32, #tpu.memory_space<vmem>>, vector<12x64xf32>
    %85 = arith.maximumf %83, %84 : vector<12x64xf32>
    %c286 = arith.constant 286 : index
    %c0_61 = arith.constant 0 : index
    %86 = tpu.strided_load %arg8[%c286, %c0_61] {strides = array<i32: 2, 1>} : memref<624x64xf32, #tpu.memory_space<vmem>>, vector<12x64xf32>
    %c287 = arith.constant 287 : index
    %c0_62 = arith.constant 0 : index
    %87 = tpu.strided_load %arg8[%c287, %c0_62] {strides = array<i32: 2, 1>} : memref<624x64xf32, #tpu.memory_space<vmem>>, vector<12x64xf32>
    %88 = arith.maximumf %86, %87 : vector<12x64xf32>
    %89 = arith.maximumf %85, %88 : vector<12x64xf32>
    %90 = arith.truncf %89 : vector<12x64xf32> to vector<12x64xbf16>
    %c0_63 = arith.constant 0 : index
    %c60 = arith.constant 60 : index
    %c0_64 = arith.constant 0 : index
    %91 = vector.load %arg6[%c0_63, %c60, %c0_64] : memref<1x144x64xbf16, #tpu.memory_space<vmem>>, vector<1x12x64xbf16>
    %92 = vector.shape_cast %91 : vector<1x12x64xbf16> to vector<12x64xbf16>
    %93 = vector.shape_cast %90 : vector<12x64xbf16> to vector<1x12x64xbf16>
    tpu.vector_store %arg6[%c0_63, %c60, %c0_64], %93 {strides = array<i32>} : memref<1x144x64xbf16, #tpu.memory_space<vmem>>, vector<1x12x64xbf16>,
    %c312 = arith.constant 312 : index
    %c0_65 = arith.constant 0 : index
    %94 = tpu.strided_load %arg8[%c312, %c0_65] {strides = array<i32: 2, 1>} : memref<624x64xf32, #tpu.memory_space<vmem>>, vector<12x64xf32>
    %c313 = arith.constant 313 : index
    %c0_66 = arith.constant 0 : index
    %95 = tpu.strided_load %arg8[%c313, %c0_66] {strides = array<i32: 2, 1>} : memref<624x64xf32, #tpu.memory_space<vmem>>, vector<12x64xf32>
    %96 = arith.maximumf %94, %95 : vector<12x64xf32>
    %c338 = arith.constant 338 : index
    %c0_67 = arith.constant 0 : index
    %97 = tpu.strided_load %arg8[%c338, %c0_67] {strides = array<i32: 2, 1>} : memref<624x64xf32, #tpu.memory_space<vmem>>, vector<12x64xf32>
    %c339 = arith.constant 339 : index
    %c0_68 = arith.constant 0 : index
    %98 = tpu.strided_load %arg8[%c339, %c0_68] {strides = array<i32: 2, 1>} : memref<624x64xf32, #tpu.memory_space<vmem>>, vector<12x64xf32>
    %99 = arith.maximumf %97, %98 : vector<12x64xf32>
    %100 = arith.maximumf %96, %99 : vector<12x64xf32>
    %101 = arith.truncf %100 : vector<12x64xf32> to vector<12x64xbf16>
    %c0_69 = arith.constant 0 : index
    %c72 = arith.constant 72 : index
    %c0_70 = arith.constant 0 : index
    %102 = vector.load %arg6[%c0_69, %c72, %c0_70] : memref<1x144x64xbf16, #tpu.memory_space<vmem>>, vector<1x12x64xbf16>
    %103 = vector.shape_cast %102 : vector<1x12x64xbf16> to vector<12x64xbf16>
    %104 = vector.shape_cast %101 : vector<12x64xbf16> to vector<1x12x64xbf16>
    tpu.vector_store %arg6[%c0_69, %c72, %c0_70], %104 {strides = array<i32>} : memref<1x144x64xbf16, #tpu.memory_space<vmem>>, vector<1x12x64xbf16>,
    %c364 = arith.constant 364 : index
    %c0_71 = arith.constant 0 : index
    %105 = tpu.strided_load %arg8[%c364, %c0_71] {strides = array<i32: 2, 1>} : memref<624x64xf32, #tpu.memory_space<vmem>>, vector<12x64xf32>
    %c365 = arith.constant 365 : index
    %c0_72 = arith.constant 0 : index
    %106 = tpu.strided_load %arg8[%c365, %c0_72] {strides = array<i32: 2, 1>} : memref<624x64xf32, #tpu.memory_space<vmem>>, vector<12x64xf32>
    %107 = arith.maximumf %105, %106 : vector<12x64xf32>
    %c390 = arith.constant 390 : index
    %c0_73 = arith.constant 0 : index
    %108 = tpu.strided_load %arg8[%c390, %c0_73] {strides = array<i32: 2, 1>} : memref<624x64xf32, #tpu.memory_space<vmem>>, vector<12x64xf32>
    %c391 = arith.constant 391 : index
    %c0_74 = arith.constant 0 : index
    %109 = tpu.strided_load %arg8[%c391, %c0_74] {strides = array<i32: 2, 1>} : memref<624x64xf32, #tpu.memory_space<vmem>>, vector<12x64xf32>
    %110 = arith.maximumf %108, %109 : vector<12x64xf32>
    %111 = arith.maximumf %107, %110 : vector<12x64xf32>
    %112 = arith.truncf %111 : vector<12x64xf32> to vector<12x64xbf16>
    %c0_75 = arith.constant 0 : index
    %c84 = arith.constant 84 : index
    %c0_76 = arith.constant 0 : index
    %113 = vector.load %arg6[%c0_75, %c84, %c0_76] : memref<1x144x64xbf16, #tpu.memory_space<vmem>>, vector<1x12x64xbf16>
    %114 = vector.shape_cast %113 : vector<1x12x64xbf16> to vector<12x64xbf16>
    %115 = vector.shape_cast %112 : vector<12x64xbf16> to vector<1x12x64xbf16>
    tpu.vector_store %arg6[%c0_75, %c84, %c0_76], %115 {strides = array<i32>} : memref<1x144x64xbf16, #tpu.memory_space<vmem>>, vector<1x12x64xbf16>,
    %c416 = arith.constant 416 : index
    %c0_77 = arith.constant 0 : index
    %116 = tpu.strided_load %arg8[%c416, %c0_77] {strides = array<i32: 2, 1>} : memref<624x64xf32, #tpu.memory_space<vmem>>, vector<12x64xf32>
    %c417 = arith.constant 417 : index
    %c0_78 = arith.constant 0 : index
    %117 = tpu.strided_load %arg8[%c417, %c0_78] {strides = array<i32: 2, 1>} : memref<624x64xf32, #tpu.memory_space<vmem>>, vector<12x64xf32>
    %118 = arith.maximumf %116, %117 : vector<12x64xf32>
    %c442 = arith.constant 442 : index
    %c0_79 = arith.constant 0 : index
    %119 = tpu.strided_load %arg8[%c442, %c0_79] {strides = array<i32: 2, 1>} : memref<624x64xf32, #tpu.memory_space<vmem>>, vector<12x64xf32>
    %c443 = arith.constant 443 : index
    %c0_80 = arith.constant 0 : index
    %120 = tpu.strided_load %arg8[%c443, %c0_80] {strides = array<i32: 2, 1>} : memref<624x64xf32, #tpu.memory_space<vmem>>, vector<12x64xf32>
    %121 = arith.maximumf %119, %120 : vector<12x64xf32>
    %122 = arith.maximumf %118, %121 : vector<12x64xf32>
    %123 = arith.truncf %122 : vector<12x64xf32> to vector<12x64xbf16>
    %c0_81 = arith.constant 0 : index
    %c96_82 = arith.constant 96 : index
    %c0_83 = arith.constant 0 : index
    %124 = vector.load %arg6[%c0_81, %c96_82, %c0_83] : memref<1x144x64xbf16, #tpu.memory_space<vmem>>, vector<1x12x64xbf16>
    %125 = vector.shape_cast %124 : vector<1x12x64xbf16> to vector<12x64xbf16>
    %126 = vector.shape_cast %123 : vector<12x64xbf16> to vector<1x12x64xbf16>
    tpu.vector_store %arg6[%c0_81, %c96_82, %c0_83], %126 {strides = array<i32>} : memref<1x144x64xbf16, #tpu.memory_space<vmem>>, vector<1x12x64xbf16>,
    %c468 = arith.constant 468 : index
    %c0_84 = arith.constant 0 : index
    %127 = tpu.strided_load %arg8[%c468, %c0_84] {strides = array<i32: 2, 1>} : memref<624x64xf32, #tpu.memory_space<vmem>>, vector<12x64xf32>
    %c469 = arith.constant 469 : index
    %c0_85 = arith.constant 0 : index
    %128 = tpu.strided_load %arg8[%c469, %c0_85] {strides = array<i32: 2, 1>} : memref<624x64xf32, #tpu.memory_space<vmem>>, vector<12x64xf32>
    %129 = arith.maximumf %127, %128 : vector<12x64xf32>
    %c494 = arith.constant 494 : index
    %c0_86 = arith.constant 0 : index
    %130 = tpu.strided_load %arg8[%c494, %c0_86] {strides = array<i32: 2, 1>} : memref<624x64xf32, #tpu.memory_space<vmem>>, vector<12x64xf32>
    %c495 = arith.constant 495 : index
    %c0_87 = arith.constant 0 : index
    %131 = tpu.strided_load %arg8[%c495, %c0_87] {strides = array<i32: 2, 1>} : memref<624x64xf32, #tpu.memory_space<vmem>>, vector<12x64xf32>
    %132 = arith.maximumf %130, %131 : vector<12x64xf32>
    %133 = arith.maximumf %129, %132 : vector<12x64xf32>
    %134 = arith.truncf %133 : vector<12x64xf32> to vector<12x64xbf16>
    %c0_88 = arith.constant 0 : index
    %c108 = arith.constant 108 : index
    %c0_89 = arith.constant 0 : index
    %135 = vector.load %arg6[%c0_88, %c108, %c0_89] : memref<1x144x64xbf16, #tpu.memory_space<vmem>>, vector<1x12x64xbf16>
    %136 = vector.shape_cast %135 : vector<1x12x64xbf16> to vector<12x64xbf16>
    %137 = vector.shape_cast %134 : vector<12x64xbf16> to vector<1x12x64xbf16>
    tpu.vector_store %arg6[%c0_88, %c108, %c0_89], %137 {strides = array<i32>} : memref<1x144x64xbf16, #tpu.memory_space<vmem>>, vector<1x12x64xbf16>,
    %c520 = arith.constant 520 : index
    %c0_90 = arith.constant 0 : index
    %138 = tpu.strided_load %arg8[%c520, %c0_90] {strides = array<i32: 2, 1>} : memref<624x64xf32, #tpu.memory_space<vmem>>, vector<12x64xf32>
    %c521 = arith.constant 521 : index
    %c0_91 = arith.constant 0 : index
    %139 = tpu.strided_load %arg8[%c521, %c0_91] {strides = array<i32: 2, 1>} : memref<624x64xf32, #tpu.memory_space<vmem>>, vector<12x64xf32>
    %140 = arith.maximumf %138, %139 : vector<12x64xf32>
    %c546 = arith.constant 546 : index
    %c0_92 = arith.constant 0 : index
    %141 = tpu.strided_load %arg8[%c546, %c0_92] {strides = array<i32: 2, 1>} : memref<624x64xf32, #tpu.memory_space<vmem>>, vector<12x64xf32>
    %c547 = arith.constant 547 : index
    %c0_93 = arith.constant 0 : index
    %142 = tpu.strided_load %arg8[%c547, %c0_93] {strides = array<i32: 2, 1>} : memref<624x64xf32, #tpu.memory_space<vmem>>, vector<12x64xf32>
    %143 = arith.maximumf %141, %142 : vector<12x64xf32>
    %144 = arith.maximumf %140, %143 : vector<12x64xf32>
    %145 = arith.truncf %144 : vector<12x64xf32> to vector<12x64xbf16>
    %c0_94 = arith.constant 0 : index
    %c120 = arith.constant 120 : index
    %c0_95 = arith.constant 0 : index
    %146 = vector.load %arg6[%c0_94, %c120, %c0_95] : memref<1x144x64xbf16, #tpu.memory_space<vmem>>, vector<1x12x64xbf16>
    %147 = vector.shape_cast %146 : vector<1x12x64xbf16> to vector<12x64xbf16>
    %148 = vector.shape_cast %145 : vector<12x64xbf16> to vector<1x12x64xbf16>
    tpu.vector_store %arg6[%c0_94, %c120, %c0_95], %148 {strides = array<i32>} : memref<1x144x64xbf16, #tpu.memory_space<vmem>>, vector<1x12x64xbf16>,
    %c572 = arith.constant 572 : index
    %c0_96 = arith.constant 0 : index
    %149 = tpu.strided_load %arg8[%c572, %c0_96] {strides = array<i32: 2, 1>} : memref<624x64xf32, #tpu.memory_space<vmem>>, vector<12x64xf32>
    %c573 = arith.constant 573 : index
    %c0_97 = arith.constant 0 : index
    %150 = tpu.strided_load %arg8[%c573, %c0_97] {strides = array<i32: 2, 1>} : memref<624x64xf32, #tpu.memory_space<vmem>>, vector<12x64xf32>
    %151 = arith.maximumf %149, %150 : vector<12x64xf32>
    %c598 = arith.constant 598 : index
    %c0_98 = arith.constant 0 : index
    %152 = tpu.strided_load %arg8[%c598, %c0_98] {strides = array<i32: 2, 1>} : memref<624x64xf32, #tpu.memory_space<vmem>>, vector<12x64xf32>
    %c599 = arith.constant 599 : index
    %c0_99 = arith.constant 0 : index
    %153 = tpu.strided_load %arg8[%c599, %c0_99] {strides = array<i32: 2, 1>} : memref<624x64xf32, #tpu.memory_space<vmem>>, vector<12x64xf32>
    %154 = arith.maximumf %152, %153 : vector<12x64xf32>
    %155 = arith.maximumf %151, %154 : vector<12x64xf32>
    %156 = arith.truncf %155 : vector<12x64xf32> to vector<12x64xbf16>
    %c0_100 = arith.constant 0 : index
    %c132 = arith.constant 132 : index
    %c0_101 = arith.constant 0 : index
    %157 = vector.load %arg6[%c0_100, %c132, %c0_101] : memref<1x144x64xbf16, #tpu.memory_space<vmem>>, vector<1x12x64xbf16>
    %158 = vector.shape_cast %157 : vector<1x12x64xbf16> to vector<12x64xbf16>
    %159 = vector.shape_cast %156 : vector<12x64xbf16> to vector<1x12x64xbf16>
    tpu.vector_store %arg6[%c0_100, %c132, %c0_101], %159 {strides = array<i32>} : memref<1x144x64xbf16, #tpu.memory_space<vmem>>, vector<1x12x64xbf16>,
    return
  }
  func.func @transform_0(%arg0: i32) -> (i32, i32, i32) {
    %c0_i32 = arith.constant 0 : i32
    %c0_i32_0 = arith.constant 0 : i32
    %c0_i32_1 = arith.constant 0 : i32
    return %arg0, %c0_i32, %c0_i32_0 : i32, i32, i32
  }
  func.func @transform_1(%arg0: i32) -> (i32, i32) {
    %c0_i32 = arith.constant 0 : i32
    %c0_i32_0 = arith.constant 0 : i32
    %c0_i32_1 = arith.constant 0 : i32
    return %c0_i32, %c0_i32_0 : i32, i32
  }
  func.func @transform_2(%arg0: i32) -> (i32, i32) {
    %c0_i32 = arith.constant 0 : i32
    %c0_i32_0 = arith.constant 0 : i32
    %c0_i32_1 = arith.constant 0 : i32
    return %c0_i32, %c0_i32_0 : i32, i32
  }
  func.func @transform_3(%arg0: i32) -> (i32, i32) {
    %c0_i32 = arith.constant 0 : i32
    %c0_i32_0 = arith.constant 0 : i32
    %c0_i32_1 = arith.constant 0 : i32
    return %c0_i32, %c0_i32_0 : i32, i32
  }
  func.func @transform_4(%arg0: i32) -> (i32, i32) {
    %c0_i32 = arith.constant 0 : i32
    %c0_i32_0 = arith.constant 0 : i32
    %c0_i32_1 = arith.constant 0 : i32
    return %c0_i32, %c0_i32_0 : i32, i32
  }
  func.func @transform_5(%arg0: i32) -> (i32, i32, i32) {
    %c0_i32 = arith.constant 0 : i32
    %c0_i32_0 = arith.constant 0 : i32
    %c0_i32_1 = arith.constant 0 : i32
    return %arg0, %c0_i32, %c0_i32_0 : i32, i32, i32
  }
}

module attributes {stable_mosaic.version = 11 : i64} {
  func.func @_fc_head_kernel(%arg0: i32, %arg1: memref<2x9216xbf16, #tpu.memory_space<vmem>>, %arg2: memref<9216x128xbf16, #tpu.memory_space<vmem>>, %arg3: memref<1x128xf32, #tpu.memory_space<vmem>>, %arg4: memref<128x10xbf16, #tpu.memory_space<vmem>>, %arg5: memref<1x10xf32, #tpu.memory_space<vmem>>, %arg6: memref<2x10xf32, #tpu.memory_space<vmem>>) attributes {dimension_semantics = [#tpu.dimension_semantics<parallel>], iteration_bounds = array<i64: 1>, scalar_prefetch = 0 : i64, scratch_operands = 0 : i64, tpu.core_type = #tpu.core_type<tc>, window_params = [{transform_indices = @transform_0, window_bounds = array<i64: 2, 9216>}, {pipeline_mode = #tpu.pipeline_mode<synchronous>, transform_indices = @transform_1, window_bounds = array<i64: 9216, 128>}, {pipeline_mode = #tpu.pipeline_mode<synchronous>, transform_indices = @transform_2, window_bounds = array<i64: 1, 128>}, {pipeline_mode = #tpu.pipeline_mode<synchronous>, transform_indices = @transform_3, window_bounds = array<i64: 128, 10>}, {pipeline_mode = #tpu.pipeline_mode<synchronous>, transform_indices = @transform_4, window_bounds = array<i64: 1, 10>}, {transform_indices = @transform_5, window_bounds = array<i64: 2, 10>}]} {
    %c0 = arith.constant 0 : index
    %c0_0 = arith.constant 0 : index
    %0 = vector.load %arg1[%c0, %c0_0] : memref<2x9216xbf16, #tpu.memory_space<vmem>>, vector<2x9216xbf16>
    %c0_1 = arith.constant 0 : index
    %c0_2 = arith.constant 0 : index
    %1 = vector.load %arg2[%c0_1, %c0_2] : memref<9216x128xbf16, #tpu.memory_space<vmem>>, vector<9216x128xbf16>
    %cst = arith.constant dense<0.000000e+00> : vector<2x128xf32>
    %2 = tpu.matmul %0, %1, %cst {dimension_numbers = #tpu.dot_dimension_numbers<[1], [0], [0], [1], [0, 0, 1, 1], [], []>} : vector<2x9216xbf16>, vector<9216x128xbf16>, vector<2x128xf32> -> vector<2x128xf32>
    %c0_3 = arith.constant 0 : index
    %c0_4 = arith.constant 0 : index
    %3 = vector.load %arg3[%c0_3, %c0_4] : memref<1x128xf32, #tpu.memory_space<vmem>>, vector<1x128xf32>
    %4 = vector.broadcast %3 : vector<1x128xf32> to vector<2x128xf32>
    %5 = arith.addf %2, %4 : vector<2x128xf32>
    %cst_5 = arith.constant 0.000000e+00 : f32
    %6 = vector.broadcast %cst_5 : f32 to vector<2x128xf32>
    %7 = arith.maximumf %5, %6 : vector<2x128xf32>
    %8 = arith.truncf %7 : vector<2x128xf32> to vector<2x128xbf16>
    %c0_6 = arith.constant 0 : index
    %c0_7 = arith.constant 0 : index
    %9 = vector.load %arg4[%c0_6, %c0_7] : memref<128x10xbf16, #tpu.memory_space<vmem>>, vector<128x10xbf16>
    %cst_8 = arith.constant dense<0.000000e+00> : vector<2x10xf32>
    %10 = tpu.matmul %8, %9, %cst_8 {dimension_numbers = #tpu.dot_dimension_numbers<[1], [0], [0], [1], [0, 0, 1, 1], [], []>} : vector<2x128xbf16>, vector<128x10xbf16>, vector<2x10xf32> -> vector<2x10xf32>
    %c0_9 = arith.constant 0 : index
    %c0_10 = arith.constant 0 : index
    %11 = vector.load %arg5[%c0_9, %c0_10] : memref<1x10xf32, #tpu.memory_space<vmem>>, vector<1x10xf32>
    %12 = vector.broadcast %11 : vector<1x10xf32> to vector<2x10xf32>
    %13 = arith.addf %10, %12 : vector<2x10xf32>
    %cst_11 = arith.constant dense<0xFF800000> : vector<2xf32>
    %14 = vector.multi_reduction <maximumf>, %13, %cst_11 [1] : vector<2x10xf32> to vector<2xf32>
    %15 = vector.shape_cast %14 : vector<2xf32> to vector<2x1xf32>
    %16 = vector.broadcast %15 : vector<2x1xf32> to vector<2x10xf32>
    %17 = arith.subf %13, %16 : vector<2x10xf32>
    %18 = math.exp %17 : vector<2x10xf32>
    %cst_12 = arith.constant dense<0.000000e+00> : vector<2xf32>
    %19 = vector.multi_reduction <add>, %18, %cst_12 [1] : vector<2x10xf32> to vector<2xf32>
    %20 = vector.shape_cast %19 : vector<2xf32> to vector<2x1xf32>
    %21 = math.log %20 : vector<2x1xf32>
    %22 = arith.addf %15, %21 : vector<2x1xf32>
    %23 = vector.broadcast %22 : vector<2x1xf32> to vector<2x10xf32>
    %24 = arith.subf %13, %23 : vector<2x10xf32>
    %c0_13 = arith.constant 0 : index
    %c0_14 = arith.constant 0 : index
    %25 = vector.load %arg6[%c0_13, %c0_14] : memref<2x10xf32, #tpu.memory_space<vmem>>, vector<2x10xf32>
    tpu.vector_store %arg6[%c0_13, %c0_14], %24 {strides = array<i32>} : memref<2x10xf32, #tpu.memory_space<vmem>>, vector<2x10xf32>,
    return
  }
  func.func @transform_0(%arg0: i32) -> (i32, i32) {
    %c0_i32 = arith.constant 0 : i32
    %c0_i32_0 = arith.constant 0 : i32
    return %arg0, %c0_i32 : i32, i32
  }
  func.func @transform_1(%arg0: i32) -> (i32, i32) {
    %c0_i32 = arith.constant 0 : i32
    %c0_i32_0 = arith.constant 0 : i32
    %c0_i32_1 = arith.constant 0 : i32
    return %c0_i32, %c0_i32_0 : i32, i32
  }
  func.func @transform_2(%arg0: i32) -> (i32, i32) {
    %c0_i32 = arith.constant 0 : i32
    %c0_i32_0 = arith.constant 0 : i32
    %c0_i32_1 = arith.constant 0 : i32
    return %c0_i32, %c0_i32_0 : i32, i32
  }
  func.func @transform_3(%arg0: i32) -> (i32, i32) {
    %c0_i32 = arith.constant 0 : i32
    %c0_i32_0 = arith.constant 0 : i32
    %c0_i32_1 = arith.constant 0 : i32
    return %c0_i32, %c0_i32_0 : i32, i32
  }
  func.func @transform_4(%arg0: i32) -> (i32, i32) {
    %c0_i32 = arith.constant 0 : i32
    %c0_i32_0 = arith.constant 0 : i32
    %c0_i32_1 = arith.constant 0 : i32
    return %c0_i32, %c0_i32_0 : i32, i32
  }
  func.func @transform_5(%arg0: i32) -> (i32, i32) {
    %c0_i32 = arith.constant 0 : i32
    %c0_i32_0 = arith.constant 0 : i32
    return %arg0, %c0_i32 : i32, i32
  }
}

</mosaic_0001>

<llo_original>
// kernel: simple_cnn_forward.2
$region0: #{simple_cnn_forward.2}
  #allocation0 [shape = 'u32[]', space=smem, size = 0x4, offset = 0x4, fixed_abs, tag = 'smem constant byte address 0x4 - core index']
  #allocation1 [shape = 'u32[144,128]{1,0:T(1,128)}', space=vmem, size = 0x12000, scoped, tag = 'internal scratch']
  #allocation2 [shape = 'bf16[680,96]{1,0:T(8,128)(2,1)}', space=vmem, size = 0x2a800, scoped, tag = 'scratch operand']
  #allocation3 [shape = 'f32[624,64]{1,0:T(8,128)}', space=vmem, size = 0x4e000, scoped, tag = 'scratch operand']
  %s0 = inlined_call_operand.vmem [shape: bf16[2,680,27], index: 0, kind: input, shape index: {}]
  %s1 = inlined_call_operand.hbm [shape: bf16[27,96], index: 1, kind: input, shape index: {}]
  %s2 = inlined_call_operand.hbm [shape: f32[1,96], index: 2, kind: input, shape index: {}]
  %s3 = inlined_call_operand.vmem [shape: bf16[288,64], index: 3, kind: input, shape index: {}]
  %s4 = inlined_call_operand.hbm [shape: f32[1,64], index: 4, kind: input, shape index: {}]
  %s5 = inlined_call_operand.vmem [shape: bf16[2,144,64], index: 5, kind: output, shape index: {}]
  %s6 = sld [smem:[#allocation0]]
  $region65: #{simple_cnn_forward.2} parent=0
    _
  %s8 = ssub.s32 1, %s6
  %s9 = scalar_select 0, %s8, %s6
  $region1: #{simple_cnn_forward.2} parent=0
    #allocation4 [shape = 'u8[8192]{0}', space=vmem, size = 0x2000, scoped, tag = 'input window, operand 1, single buffered']
    #allocation5 [shape = 's32[2]{0}', space=sflag, size = 0x8, scoped, tag = 'scoped memory for simple_cnn_forward.2']
    #allocation6 [shape = 'u8[512]{0}', space=vmem, size = 0x400, scoped, tag = 'input window, operand 2, single buffered']
    #allocation7 [shape = 's32[1]{0}', space=sflag, size = 0x4, scoped, tag = 'scoped memory for simple_cnn_forward.2']
    #allocation8 [shape = 'u8[512]{0}', space=vmem, size = 0x400, scoped, tag = 'input window, operand 4, single buffered']
    %10 = vsyncpa [#allocation5], 0
    %11 = vsyncpa [#allocation7], 0
    loop: start=0, step=1, limit=4
    $region2: #{simple_cnn_forward.2} parent=1 // loop_pre_header
      _
    $region3: #{simple_cnn_forward.2} parent=1 // loop_header
      %s13 = sphi 0, %s17
      %p14 = scmp.ge.s32.totalorder %s13, 4
      %s23 = sphi 0, %s25
      %s26 = sphi 0, %s23
      %s27 = sphi 0, %s26
      %s43 = sphi 0, %s27
      %s47 = sphi 0, %s47
      %s49 = sphi 0, %s47
      %s50 = sphi 0, %s49
      %s64 = sphi 0, %s50
      %s68 = sphi 0, %s68
      %s70 = sphi 0, %s68
      %s71 = sphi 0, %s70
      %s85 = sphi 0, %s71
      %s89 = sphi 0, %s89
      %s91 = sphi 0, %s89
      %s92 = sphi 0, %s91
      %s106 = sphi 0, %s92
      %s110 = sphi 0, %s110
      %s112 = sphi 0, %s110
      %s113 = sphi 0, %s112
      %s127 = sphi 0, %s113
      %s133 = sphi 0, %s135
      %s136 = sphi 0, %s133
      %s137 = sphi 0, %s136
      %s153 = sphi 0, %s137
    $region4: #{simple_cnn_forward.2} parent=1 // loop_header_branch
      %16 = sbr.rel (%p14) target = $region8
    $region5: #{simple_cnn_forward.2} parent=1 // loop_body
      %s18 = ssub.s32 %s13, 1
      %s19 = ssub.s32 %s13, 2
      %s20 = sadd.s32 %s13, 1
      %s21 = ssub.s32 %s13, %s20
      %p22 = scmp.eq.s32.totalorder %s21, 0
      %s24 = sadd.s32 %s23, 1
      %s25 = scalar_select %p22, %s23, %s24
      %p28 = pneg %p22
      %p29 = scmp.eq.s32.totalorder %s13, 1
      %p30 = por %p28, %p29
      %p31 = scmp.ne.s32.totalorder %s23, %s26
      %p32 = scmp.eq.s32.totalorder %s13, 0
      %p33 = por %p31, %p32
      %p34 = scmp.ne.s32.totalorder %s23, %s26
      %p35 = scmp.eq.s32.totalorder %s18, 1
      %p36 = por %p34, %p35
      %p37 = scmp.ne.s32.totalorder %s26, %s27
      %p38 = scmp.eq.s32.totalorder %s18, 0
      %p39 = por %p37, %p38
      %p40 = scmp.ne.s32.totalorder %s26, %s27
      %p41 = scmp.eq.s32.totalorder %s19, 1
      %p42 = por %p40, %p41
      %p44 = scmp.ne.s32.totalorder %s27, %s43
      %p45 = scmp.eq.s32.totalorder %s19, 0
      %p46 = por %p44, %p45
      %s48 = sadd.s32 %s47, 1
      %p51 = scmp.eq.s32.totalorder %s13, 1
      %p52 = scmp.ne.s32.totalorder %s47, %s49
      %p53 = scmp.eq.s32.totalorder %s13, 0
      %p54 = por %p52, %p53
      %p55 = scmp.ne.s32.totalorder %s47, %s49
      %p56 = scmp.eq.s32.totalorder %s18, 1
      %p57 = por %p55, %p56
      %p58 = scmp.ne.s32.totalorder %s49, %s50
      %p59 = scmp.eq.s32.totalorder %s18, 0
      %p60 = por %p58, %p59
      %p61 = scmp.ne.s32.totalorder %s49, %s50
      %p62 = scmp.eq.s32.totalorder %s19, 1
      %p63 = por %p61, %p62
      %p65 = scmp.ne.s32.totalorder %s50, %s64
      %p66 = scmp.eq.s32.totalorder %s19, 0
      %p67 = por %p65, %p66
      %s69 = sadd.s32 %s68, 1
      %p72 = scmp.eq.s32.totalorder %s13, 1
      %p73 = scmp.ne.s32.totalorder %s68, %s70
      %p74 = scmp.eq.s32.totalorder %s13, 0
      %p75 = por %p73, %p74
      %p76 = scmp.ne.s32.totalorder %s68, %s70
      %p77 = scmp.eq.s32.totalorder %s18, 1
      %p78 = por %p76, %p77
      %p79 = scmp.ne.s32.totalorder %s70, %s71
      %p80 = scmp.eq.s32.totalorder %s18, 0
      %p81 = por %p79, %p80
      %p82 = scmp.ne.s32.totalorder %s70, %s71
      %p83 = scmp.eq.s32.totalorder %s19, 1
      %p84 = por %p82, %p83
      %p86 = scmp.ne.s32.totalorder %s71, %s85
      %p87 = scmp.eq.s32.totalorder %s19, 0
      %p88 = por %p86, %p87
      %s90 = sadd.s32 %s89, 1
      %p93 = scmp.eq.s32.totalorder %s13, 1
      %p94 = scmp.ne.s32.totalorder %s89, %s91
      %p95 = scmp.eq.s32.totalorder %s13, 0
      %p96 = por %p94, %p95
      %p97 = scmp.ne.s32.totalorder %s89, %s91
      %p98 = scmp.eq.s32.totalorder %s18, 1
      %p99 = por %p97, %p98
      %p100 = scmp.ne.s32.totalorder %s91, %s92
      %p101 = scmp.eq.s32.totalorder %s18, 0
      %p102 = por %p100, %p101
      %p103 = scmp.ne.s32.totalorder %s91, %s92
      %p104 = scmp.eq.s32.totalorder %s19, 1
      %p105 = por %p103, %p104
      %p107 = scmp.ne.s32.totalorder %s92, %s106
      %p108 = scmp.eq.s32.totalorder %s19, 0
      %p109 = por %p107, %p108
      %s111 = sadd.s32 %s110, 1
      %p114 = scmp.eq.s32.totalorder %s13, 1
      %p115 = scmp.ne.s32.totalorder %s110, %s112
      %p116 = scmp.eq.s32.totalorder %s13, 0
      %p117 = por %p115, %p116
      %p118 = scmp.ne.s32.totalorder %s110, %s112
      %p119 = scmp.eq.s32.totalorder %s18, 1
      %p120 = por %p118, %p119
      %p121 = scmp.ne.s32.totalorder %s112, %s113
      %p122 = scmp.eq.s32.totalorder %s18, 0
      %p123 = por %p121, %p122
      %p124 = scmp.ne.s32.totalorder %s112, %s113
      %p125 = scmp.eq.s32.totalorder %s19, 1
      %p126 = por %p124, %p125
      %p128 = scmp.ne.s32.totalorder %s113, %s127
      %p129 = scmp.eq.s32.totalorder %s19, 0
      %p130 = por %p128, %p129
      %s131 = ssub.s32 %s13, %s20
      %p132 = scmp.eq.s32.totalorder %s131, 0
      %s134 = sadd.s32 %s133, 1
      %s135 = scalar_select %p132, %s133, %s134
      %p138 = pneg %p132
      %p139 = scmp.eq.s32.totalorder %s13, 1
      %p140 = por %p138, %p139
      %p141 = scmp.ne.s32.totalorder %s133, %s136
      %p142 = scmp.eq.s32.totalorder %s13, 0
      %p143 = por %p141, %p142
      %p144 = scmp.ne.s32.totalorder %s133, %s136
      %p145 = scmp.eq.s32.totalorder %s18, 1
      %p146 = por %p144, %p145
      %p147 = scmp.ne.s32.totalorder %s136, %s137
      %p148 = scmp.eq.s32.totalorder %s18, 0
      %p149 = por %p147, %p148
      %p150 = scmp.ne.s32.totalorder %s136, %s137
      %p151 = scmp.eq.s32.totalorder %s19, 1
      %p152 = por %p150, %p151
      %p154 = scmp.ne.s32.totalorder %s137, %s153
      %p155 = scmp.eq.s32.totalorder %s19, 0
      %p156 = por %p154, %p155
      %p157 = scmp.le.s32.totalorder 1, %s13
      %p158 = scmp.lt.s32.totalorder %s13, 3
      %p159 = pnand %p157, %p158
      %p160 = pneg %p159
      // Predicated region
      $region9: #{simple_cnn_forward.2} parent=5 // pred_check
        _
      $region10: #{simple_cnn_forward.2} parent=5 // pred_check_branch
        %162 = sbr.rel (%p159) target = $region12
      $region11: #{simple_cnn_forward.2} parent=5 // pred_region
        %s163 = ssub.s32 %s13, 1
        // Predicated region
        $region13: #{simple_cnn_forward.2} parent=11 // pred_check
          %p164 = pneg %p60
        $region14: #{simple_cnn_forward.2} parent=11 // pred_check_branch
          %166 = sbr.rel (%p164) target = $region16
        $region15: #{simple_cnn_forward.2} parent=11 // pred_region
          %s168 = ssub.s32 256, 256
          %169 = vsyncadd [#allocation5], %s168
          %s170 = sshll.u32 [#allocation4], 4
          %s171 = int_to_ptr.vmem [resolvable:$true] %s170
          %176 = dma.hbm_to_vmem [thread:$0]  %s1, 256, %s171, [#allocation5], 64, 64, 4
        $region16: #{simple_cnn_forward.2} parent=11 // pred_fallthru
          _
        // Predicated region
        $region17: #{simple_cnn_forward.2} parent=11 // pred_check
          %p177 = pneg %p81
        $region18: #{simple_cnn_forward.2} parent=11 // pred_check_branch
          %179 = sbr.rel (%p177) target = $region20
        $region19: #{simple_cnn_forward.2} parent=11 // pred_region
          %s181 = ssub.s32 16, 16
          %182 = vsyncadd [#allocation7], %s181
          %s184 = sshll.u32 [#allocation6], 4
          %s185 = int_to_ptr.vmem [resolvable:$true] %s184
          %187 = dma.hbm_to_vmem [thread:$0]  %s2, 16, %s185, [#allocation7]
        $region20: #{simple_cnn_forward.2} parent=11 // pred_fallthru
          _
        // Predicated region
        $region21: #{simple_cnn_forward.2} parent=11 // pred_check
          %p188 = pneg %p102
        $region22: #{simple_cnn_forward.2} parent=11 // pred_check_branch
          %190 = sbr.rel (%p188) target = $region24
        $region23: #{simple_cnn_forward.2} parent=11 // pred_region
          _
        $region24: #{simple_cnn_forward.2} parent=11 // pred_fallthru
          _
        // Predicated region
        $region25: #{simple_cnn_forward.2} parent=11 // pred_check
          %p191 = pneg %p123
        $region26: #{simple_cnn_forward.2} parent=11 // pred_check_branch
          %193 = sbr.rel (%p191) target = $region28
        $region27: #{simple_cnn_forward.2} parent=11 // pred_region
          %s195 = ssub.s32 16, 16
          %196 = vsyncadd [#allocation7], %s195
          %s198 = sshll.u32 [#allocation8], 4
          %s199 = int_to_ptr.vmem [resolvable:$true] %s198
          %201 = dma.hbm_to_vmem [thread:$0]  %s4, 16, %s199, [#allocation7]
        $region28: #{simple_cnn_forward.2} parent=11 // pred_fallthru
          _
      $region12: #{simple_cnn_forward.2} parent=5 // pred_fallthru
        _
      %p202 = scmp.lt.s32.totalorder %s13, 2
      // Predicated region
      $region29: #{simple_cnn_forward.2} parent=5 // pred_check
        %p203 = pneg %p202
      $region30: #{simple_cnn_forward.2} parent=5 // pred_check_branch
        %205 = sbr.rel (%p203) target = $region32
      $region31: #{simple_cnn_forward.2} parent=5 // pred_region
        // Predicated region
        $region33: #{simple_cnn_forward.2} parent=31 // pred_check
          %p206 = pneg %p33
        $region34: #{simple_cnn_forward.2} parent=31 // pred_check_branch
          %208 = sbr.rel (%p206) target = $region36
        $region35: #{simple_cnn_forward.2} parent=31 // pred_region
          %p209 = scmp.lt.s32.totalorder %s13, 1
          %s210 = scalar_select %p209, %s13, 1
          %s211 = smul.addr %s210, 85
          %s212 = smul.addr %s211, 4
          %s213 = scalar_lea.vmem %s0, %s212
        $region36: #{simple_cnn_forward.2} parent=31 // pred_fallthru
          _
      $region32: #{simple_cnn_forward.2} parent=5 // pred_fallthru
        _
      %p214 = scmp.le.s32.totalorder 1, %s13
      %p215 = scmp.lt.s32.totalorder %s13, 3
      %p216 = pnand %p214, %p215
      %p217 = pneg %p216
      // Predicated region
      $region37: #{simple_cnn_forward.2} parent=5 // pred_check
        _
      $region38: #{simple_cnn_forward.2} parent=5 // pred_check_branch
        %219 = sbr.rel (%p216) target = $region40
      $region39: #{simple_cnn_forward.2} parent=5 // pred_region
        %s220 = ssub.s32 %s13, 1
        // Predicated region
        $region41: #{simple_cnn_forward.2} parent=39 // pred_check
          %p221 = pneg %p60
        $region42: #{simple_cnn_forward.2} parent=39 // pred_check_branch
          %223 = sbr.rel (%p221) target = $region44
        $region43: #{simple_cnn_forward.2} parent=39 // pred_region
          %224 = dma.done [#allocation5], 256
        $region44: #{simple_cnn_forward.2} parent=39 // pred_fallthru
          _
        // Predicated region
        $region45: #{simple_cnn_forward.2} parent=39 // pred_check
          %p225 = pneg %p81
        $region46: #{simple_cnn_forward.2} parent=39 // pred_check_branch
          %227 = sbr.rel (%p225) target = $region48
        $region47: #{simple_cnn_forward.2} parent=39 // pred_region
          %228 = dma.done [#allocation7], 16
        $region48: #{simple_cnn_forward.2} parent=39 // pred_fallthru
          _
        // Predicated region
        $region49: #{simple_cnn_forward.2} parent=39 // pred_check
          %p229 = pneg %p123
        $region50: #{simple_cnn_forward.2} parent=39 // pred_check_branch
          %231 = sbr.rel (%p229) target = $region52
        $region51: #{simple_cnn_forward.2} parent=39 // pred_region
          %232 = dma.done [#allocation7], 16
        $region52: #{simple_cnn_forward.2} parent=39 // pred_fallthru
          _
        %p233 = scmp.lt.s32.totalorder %s18, 1
        %s234 = scalar_select %p233, %s18, 1
        %s235 = smul.addr %s234, 85
        %s236 = smul.addr %s235, 4
        %s237 = scalar_lea.vmem %s0, %s236
        %p238 = pneg %p39
        %p239 = pneg %p36
        %p240 = pneg %p60
        %p241 = pneg %p57
        %p242 = pneg %p81
        %p243 = pneg %p78
        %p244 = pneg %p102
        %p245 = pneg %p99
        %p246 = pneg %p123
        %p247 = pneg %p120
        %p248 = pneg %p149
        %p249 = pneg %p146
        %p250 = scmp.lt.s32.totalorder %s18, 1
        %s251 = scalar_select %p250, %s18, 1
        %s252 = smul.addr %s251, 18
        %s253 = smul.addr %s252, 4
        %s254 = scalar_lea.vmem %s5, %s253
        %p255 = scmp.lt.s32.totalorder %s18, 1
        %s256 = scalar_select %p255, %s18, 1
        %s257 = smul.addr %s256, 85
        %s258 = smul.addr %s257, 4
        %s259 = scalar_lea.vmem %s0, %s258
        %p260 = scmp.lt.s32.totalorder %s18, 1
        %s261 = scalar_select %p260, %s18, 1
        %s262 = smul.addr %s261, 18
        %s263 = smul.addr %s262, 4
        %s264 = scalar_lea.vmem %s5, %s263
        %v266 = vld [vmem:[#allocation4] sm:$0xf]
        %v267 = vld [vmem:[#allocation4 + $0x4] sm:$0xf]
        %v268 = vld [vmem:[#allocation4 + $0x8] sm:$0xf]
        %v269 = vld [vmem:[#allocation4 + $0xc] sm:$0x3]
        %v270 = vld [vmem:[#allocation6] sm:$0x1]
        %v271 = vld [vmem:[#allocation8] sm:$0x1]
        %v272 = vld [vmem:[%s3] sm:$0xf]
        %v273 = vld [vmem:[%s3 + $0x4] sm:$0xf]
        %v274 = vld [vmem:[%s3 + $0x8] sm:$0xf]
        %v275 = vld [vmem:[%s3 + $0xc] sm:$0xf]
        %v276 = vld [vmem:[%s3 + $0x10] sm:$0xf]
        %v277 = vld [vmem:[%s3 + $0x14] sm:$0xf]
        %v278 = vld [vmem:[%s3 + $0x18] sm:$0xf]
        %v279 = vld [vmem:[%s3 + $0x1c] sm:$0xf]
        %v280 = vld [vmem:[%s3 + $0x20] sm:$0xf]
        %v281 = vld [vmem:[%s3 + $0x24] sm:$0xf]
        %v282 = vld [vmem:[%s3 + $0x28] sm:$0xf]
        %v283 = vld [vmem:[%s3 + $0x2c] sm:$0xf]
        %v284 = vld [vmem:[%s3 + $0x30] sm:$0xf]
        %v285 = vld [vmem:[%s3 + $0x34] sm:$0xf]
        %v286 = vld [vmem:[%s3 + $0x38] sm:$0xf]
        %v287 = vld [vmem:[%s3 + $0x3c] sm:$0xf]
        %v288 = vld [vmem:[%s3 + $0x40] sm:$0xf]
        %v289 = vld [vmem:[%s3 + $0x44] sm:$0xf]
        %v290 = vld [vmem:[%s3 + $0x48] sm:$0xf]
        %v291 = vld [vmem:[%s3 + $0x4c] sm:$0xf]
        %v292 = vld [vmem:[%s3 + $0x50] sm:$0xf]
        %v293 = vld [vmem:[%s3 + $0x54] sm:$0xf]
        %v294 = vld [vmem:[%s3 + $0x58] sm:$0xf]
        %v295 = vld [vmem:[%s3 + $0x5c] sm:$0xf]
        %v296 = vld [vmem:[%s3 + $0x60] sm:$0xf]
        %v297 = vld [vmem:[%s3 + $0x64] sm:$0xf]
        %v298 = vld [vmem:[%s3 + $0x68] sm:$0xf]
        %v299 = vld [vmem:[%s3 + $0x6c] sm:$0xf]
        %v300 = vld [vmem:[%s3 + $0x70] sm:$0xf]
        %v301 = vld [vmem:[%s3 + $0x74] sm:$0xf]
        %v302 = vld [vmem:[%s3 + $0x78] sm:$0xf]
        %v303 = vld [vmem:[%s3 + $0x7c] sm:$0xf]
        %v304 = vld [vmem:[%s3 + $0x80] sm:$0xf]
        %v305 = vld [vmem:[%s3 + $0x84] sm:$0xf]
        %v306 = vld [vmem:[%s3 + $0x88] sm:$0xf]
        %v307 = vld [vmem:[%s3 + $0x8c] sm:$0xf]
        %v308 = vld [vmem:[%s259] sm:$0xf]
        %v309 = vld [vmem:[%s259 + $0x4] sm:$0xf]
        %v310 = vld [vmem:[%s259 + $0x8] sm:$0xf]
        %v311 = vld [vmem:[%s259 + $0xc] sm:$0xf]
        %v312 = vld [vmem:[%s259 + $0x10] sm:$0xf]
        %v313 = vld [vmem:[%s259 + $0x14] sm:$0xf]
        %v314 = vld [vmem:[%s259 + $0x18] sm:$0xf]
        %v315 = vld [vmem:[%s259 + $0x1c] sm:$0xf]
        %v316 = vld [vmem:[%s259 + $0x20] sm:$0xf]
        %v317 = vld [vmem:[%s259 + $0x24] sm:$0xf]
        %v318 = vld [vmem:[%s259 + $0x28] sm:$0xf]
        %v319 = vld [vmem:[%s259 + $0x2c] sm:$0xf]
        %v320 = vld [vmem:[%s259 + $0x30] sm:$0xf]
        %v321 = vld [vmem:[%s259 + $0x34] sm:$0xf]
        %v322 = vld [vmem:[%s259 + $0x38] sm:$0xf]
        %v323 = vld [vmem:[%s259 + $0x3c] sm:$0xf]
        %v324 = vld [vmem:[%s259 + $0x40] sm:$0xf]
        %v325 = vld [vmem:[%s259 + $0x44] sm:$0xf]
        %v326 = vld [vmem:[%s259 + $0x48] sm:$0xf]
        %v327 = vld [vmem:[%s259 + $0x4c] sm:$0xf]
        %v328 = vld [vmem:[%s259 + $0x50] sm:$0xf]
        %v329 = vld [vmem:[%s259 + $0x54] sm:$0xf]
        %v330 = vld [vmem:[%s259 + $0x58] sm:$0xf]
        %v331 = vld [vmem:[%s259 + $0x5c] sm:$0xf]
        %v332 = vld [vmem:[%s259 + $0x60] sm:$0xf]
        %v333 = vld [vmem:[%s259 + $0x64] sm:$0xf]
        %v334 = vld [vmem:[%s259 + $0x68] sm:$0xf]
        %v335 = vld [vmem:[%s259 + $0x6c] sm:$0xf]
        %v336 = vld [vmem:[%s259 + $0x70] sm:$0xf]
        %v337 = vld [vmem:[%s259 + $0x74] sm:$0xf]
        %v338 = vld [vmem:[%s259 + $0x78] sm:$0xf]
        %v339 = vld [vmem:[%s259 + $0x7c] sm:$0xf]
        %v340 = vld [vmem:[%s259 + $0x80] sm:$0xf]
        %v341 = vld [vmem:[%s259 + $0x84] sm:$0xf]
        %v342 = vld [vmem:[%s259 + $0x88] sm:$0xf]
        %v343 = vld [vmem:[%s259 + $0x8c] sm:$0xf]
        %v344 = vld [vmem:[%s259 + $0x90] sm:$0xf]
        %v345 = vld [vmem:[%s259 + $0x94] sm:$0xf]
        %v346 = vld [vmem:[%s259 + $0x98] sm:$0xf]
        %v347 = vld [vmem:[%s259 + $0x9c] sm:$0xf]
        %v348 = vld [vmem:[%s259 + $0xa0] sm:$0xf]
        %v349 = vld [vmem:[%s259 + $0xa4] sm:$0xf]
        %v350 = vld [vmem:[%s259 + $0xa8] sm:$0xf]
        %v351 = vld [vmem:[%s259 + $0xac] sm:$0xf]
        %v352 = vld [vmem:[%s259 + $0xb0] sm:$0xf]
        %v353 = vld [vmem:[%s259 + $0xb4] sm:$0xf]
        %v354 = vld [vmem:[%s259 + $0xb8] sm:$0xf]
        %v355 = vld [vmem:[%s259 + $0xbc] sm:$0xf]
        %v356 = vld [vmem:[%s259 + $0xc0] sm:$0xf]
        %v357 = vld [vmem:[%s259 + $0xc4] sm:$0xf]
        %v358 = vld [vmem:[%s259 + $0xc8] sm:$0xf]
        %v359 = vld [vmem:[%s259 + $0xcc] sm:$0xf]
        %v360 = vld [vmem:[%s259 + $0xd0] sm:$0xf]
        %v361 = vld [vmem:[%s259 + $0xd4] sm:$0xf]
        %v362 = vld [vmem:[%s259 + $0xd8] sm:$0xf]
        %v363 = vld [vmem:[%s259 + $0xdc] sm:$0xf]
        %v364 = vld [vmem:[%s259 + $0xe0] sm:$0xf]
        %v365 = vld [vmem:[%s259 + $0xe4] sm:$0xf]
        %v366 = vld [vmem:[%s259 + $0xe8] sm:$0xf]
        %v367 = vld [vmem:[%s259 + $0xec] sm:$0xf]
        %v368 = vld [vmem:[%s259 + $0xf0] sm:$0xf]
        %v369 = vld [vmem:[%s259 + $0xf4] sm:$0xf]
        %v370 = vld [vmem:[%s259 + $0xf8] sm:$0xf]
        %v371 = vld [vmem:[%s259 + $0xfc] sm:$0xf]
        %v372 = vld [vmem:[%s259 + $0x100] sm:$0xf]
        %v373 = vld [vmem:[%s259 + $0x104] sm:$0xf]
        %v374 = vld [vmem:[%s259 + $0x108] sm:$0xf]
        %v375 = vld [vmem:[%s259 + $0x10c] sm:$0xf]
        %v376 = vld [vmem:[%s259 + $0x110] sm:$0xf]
        %v377 = vld [vmem:[%s259 + $0x114] sm:$0xf]
        %v378 = vld [vmem:[%s259 + $0x118] sm:$0xf]
        %v379 = vld [vmem:[%s259 + $0x11c] sm:$0xf]
        %v380 = vld [vmem:[%s259 + $0x120] sm:$0xf]
        %v381 = vld [vmem:[%s259 + $0x124] sm:$0xf]
        %v382 = vld [vmem:[%s259 + $0x128] sm:$0xf]
        %v383 = vld [vmem:[%s259 + $0x12c] sm:$0xf]
        %v384 = vld [vmem:[%s259 + $0x130] sm:$0xf]
        %v385 = vld [vmem:[%s259 + $0x134] sm:$0xf]
        %v386 = vld [vmem:[%s259 + $0x138] sm:$0xf]
        %v387 = vld [vmem:[%s259 + $0x13c] sm:$0xf]
        %v388 = vld [vmem:[%s259 + $0x140] sm:$0xf]
        %v389 = vld [vmem:[%s259 + $0x144] sm:$0xf]
        %v390 = vld [vmem:[%s259 + $0x148] sm:$0xf]
        %v391 = vld [vmem:[%s259 + $0x14c] sm:$0xf]
        %v392 = vld [vmem:[%s259 + $0x150] sm:$0xf]
        %v394 = vlaneseq
        %v395 = vshrl.u32 %v394, 7
        %v396 = vsub.s32 0, %v395
        %v397 = vrot.slane %v270, %v396
        %v484 = vunpack.c.l.b16 %v308
        %v485 = vunpack.c.l.b16 %v309
        %v486 = vunpack.c.l.b16 %v310
        %v487 = vunpack.c.l.b16 %v311
        %v488 = vunpack.c.l.b16 %v312
        %v489 = vunpack.c.l.b16 %v313
        %v490 = vunpack.c.l.b16 %v314
        %v491 = vunpack.c.l.b16 %v315
        %v492 = vunpack.c.l.b16 %v316
        %v493 = vunpack.c.l.b16 %v317
        %v494 = vunpack.c.l.b16 %v318
        %v495 = vunpack.c.l.b16 %v319
        %v496 = vunpack.c.l.b16 %v320
        %v497 = vunpack.c.l.b16 %v321
        %v498 = vunpack.c.l.b16 %v322
        %v499 = vunpack.c.l.b16 %v323
        %v500 = vunpack.c.l.b16 %v324
        %v501 = vunpack.c.l.b16 %v325
        %v502 = vunpack.c.l.b16 %v326
        %v503 = vunpack.c.l.b16 %v327
        %v504 = vunpack.c.l.b16 %v328
        %v505 = vunpack.c.l.b16 %v329
        %v506 = vunpack.c.l.b16 %v330
        %v507 = vunpack.c.l.b16 %v331
        %v508 = vunpack.c.l.b16 %v332
        %v509 = vunpack.c.l.b16 %v333
        %v510 = vunpack.c.l.b16 %v334
        %v511 = vunpack.c.l.b16 %v335
        %v512 = vunpack.c.l.b16 %v336
        %v513 = vunpack.c.l.b16 %v337
        %v514 = vunpack.c.l.b16 %v338
        %v515 = vunpack.c.l.b16 %v339
        %v516 = vunpack.c.l.b16 %v340
        %v517 = vunpack.c.l.b16 %v341
        %v518 = vunpack.c.l.b16 %v342
        %v519 = vunpack.c.l.b16 %v343
        %v520 = vunpack.c.l.b16 %v344
        %v521 = vunpack.c.l.b16 %v345
        %v522 = vunpack.c.l.b16 %v346
        %v523 = vunpack.c.l.b16 %v347
        %v524 = vunpack.c.l.b16 %v348
        %v525 = vunpack.c.l.b16 %v349
        %v526 = vunpack.c.l.b16 %v350
        %v527 = vunpack.c.l.b16 %v351
        %v528 = vunpack.c.l.b16 %v352
        %v529 = vunpack.c.l.b16 %v353
        %v530 = vunpack.c.l.b16 %v354
        %v531 = vunpack.c.l.b16 %v355
        %v532 = vunpack.c.l.b16 %v356
        %v533 = vunpack.c.l.b16 %v357
        %v534 = vunpack.c.l.b16 %v358
        %v535 = vunpack.c.l.b16 %v359
        %v536 = vunpack.c.l.b16 %v360
        %v537 = vunpack.c.l.b16 %v361
        %v538 = vunpack.c.l.b16 %v362
        %v539 = vunpack.c.l.b16 %v363
        %v540 = vunpack.c.l.b16 %v364
        %v541 = vunpack.c.l.b16 %v365
        %v542 = vunpack.c.l.b16 %v366
        %v543 = vunpack.c.l.b16 %v367
        %v544 = vunpack.c.l.b16 %v368
        %v545 = vunpack.c.l.b16 %v369
        %v546 = vunpack.c.l.b16 %v370
        %v547 = vunpack.c.l.b16 %v371
        %v548 = vunpack.c.l.b16 %v372
        %v549 = vunpack.c.l.b16 %v373
        %v550 = vunpack.c.l.b16 %v374
        %v551 = vunpack.c.l.b16 %v375
        %v552 = vunpack.c.l.b16 %v376
        %v553 = vunpack.c.l.b16 %v377
        %v554 = vunpack.c.l.b16 %v378
        %v555 = vunpack.c.l.b16 %v379
        %v556 = vunpack.c.l.b16 %v380
        %v557 = vunpack.c.l.b16 %v381
        %v558 = vunpack.c.l.b16 %v382
        %v559 = vunpack.c.l.b16 %v383
        %v560 = vunpack.c.l.b16 %v384
        %v561 = vunpack.c.l.b16 %v385
        %v562 = vunpack.c.l.b16 %v386
        %v563 = vunpack.c.l.b16 %v387
        %v564 = vunpack.c.l.b16 %v388
        %v565 = vunpack.c.l.b16 %v389
        %v566 = vunpack.c.l.b16 %v390
        %v567 = vunpack.c.l.b16 %v391
        %v568 = vunpack.c.l.b16 %v392
        %v569 = vpack.c.b16 %v485, %v484
        %v570 = vpack.c.b16 %v487, %v486
        %v571 = vpack.c.b16 %v489, %v488
        %v572 = vpack.c.b16 %v491, %v490
        %v573 = vpack.c.b16 %v493, %v492
        %v574 = vpack.c.b16 %v495, %v494
        %v575 = vpack.c.b16 %v497, %v496
        %v576 = vpack.c.b16 %v499, %v498
        %v577 = vpack.c.b16 %v501, %v500
        %v578 = vpack.c.b16 %v503, %v502
        %v579 = vpack.c.b16 %v505, %v504
        %v580 = vpack.c.b16 %v507, %v506
        %v581 = vpack.c.b16 %v509, %v508
        %v582 = vpack.c.b16 %v511, %v510
        %v583 = vpack.c.b16 %v513, %v512
        %v584 = vpack.c.b16 %v515, %v514
        %v585 = vpack.c.b16 %v517, %v516
        %v586 = vpack.c.b16 %v519, %v518
        %v587 = vpack.c.b16 %v521, %v520
        %v588 = vpack.c.b16 %v523, %v522
        %v589 = vpack.c.b16 %v525, %v524
        %v590 = vpack.c.b16 %v527, %v526
        %v591 = vpack.c.b16 %v529, %v528
        %v592 = vpack.c.b16 %v531, %v530
        %v593 = vpack.c.b16 %v533, %v532
        %v594 = vpack.c.b16 %v535, %v534
        %v595 = vpack.c.b16 %v537, %v536
        %v596 = vpack.c.b16 %v539, %v538
        %v597 = vpack.c.b16 %v541, %v540
        %v598 = vpack.c.b16 %v543, %v542
        %v599 = vpack.c.b16 %v545, %v544
        %v600 = vpack.c.b16 %v547, %v546
        %v601 = vpack.c.b16 %v549, %v548
        %v602 = vpack.c.b16 %v551, %v550
        %v603 = vpack.c.b16 %v553, %v552
        %v604 = vpack.c.b16 %v555, %v554
        %v605 = vpack.c.b16 %v557, %v556
        %v606 = vpack.c.b16 %v559, %v558
        %v607 = vpack.c.b16 %v561, %v560
        %v608 = vpack.c.b16 %v563, %v562
        %v609 = vpack.c.b16 %v565, %v564
        %v610 = vpack.c.b16 %v567, %v566
        %v611 = vpack.c.b16 %v568, %v568
        %v616 = vunpack.c.l.b16 %v266
        %v617 = vunpack.c.l.b16 %v267
        %v618 = vunpack.c.l.b16 %v268
        %v619 = vunpack.c.l.b16 %v269
        %v620 = vpack.c.b16 %v617, %v616
        %v621 = vpack.c.b16 %v619, %v618
        %vm623 = vcmask 220160
        %v625 = vsel %vm623, %v569, 0
        %v628 = vsel %vm623, %v570, 0
        %v631 = vsel %vm623, %v571, 0
        %v634 = vsel %vm623, %v572, 0
        %v637 = vsel %vm623, %v573, 0
        %v640 = vsel %vm623, %v574, 0
        %v643 = vsel %vm623, %v575, 0
        %v646 = vsel %vm623, %v576, 0
        %v649 = vsel %vm623, %v577, 0
        %v652 = vsel %vm623, %v578, 0
        %v655 = vsel %vm623, %v579, 0
        %v658 = vsel %vm623, %v580, 0
        %v661 = vsel %vm623, %v581, 0
        %v664 = vsel %vm623, %v582, 0
        %v667 = vsel %vm623, %v583, 0
        %v670 = vsel %vm623, %v584, 0
        %v673 = vsel %vm623, %v585, 0
        %v676 = vsel %vm623, %v586, 0
        %v679 = vsel %vm623, %v587, 0
        %v682 = vsel %vm623, %v588, 0
        %v685 = vsel %vm623, %v589, 0
        %v688 = vsel %vm623, %v590, 0
        %v691 = vsel %vm623, %v591, 0
        %v694 = vsel %vm623, %v592, 0
        %v697 = vsel %vm623, %v593, 0
        %v700 = vsel %vm623, %v594, 0
        %v703 = vsel %vm623, %v595, 0
        %v706 = vsel %vm623, %v596, 0
        %v709 = vsel %vm623, %v597, 0
        %v712 = vsel %vm623, %v598, 0
        %v715 = vsel %vm623, %v599, 0
        %v718 = vsel %vm623, %v600, 0
        %v721 = vsel %vm623, %v601, 0
        %v724 = vsel %vm623, %v602, 0
        %v727 = vsel %vm623, %v603, 0
        %v730 = vsel %vm623, %v604, 0
        %v733 = vsel %vm623, %v605, 0
        %v736 = vsel %vm623, %v606, 0
        %v739 = vsel %vm623, %v607, 0
        %v742 = vsel %vm623, %v608, 0
        %v745 = vsel %vm623, %v609, 0
        %v748 = vsel %vm623, %v610, 0
        %v751 = vsel %vm623, %v611, 0
        %vm753 = vcmask 1044480
        %vm754 = vcmask 1045504
        %v755 = vsel %vm753, 4294967295, 65535
        %v756 = vsel %vm754, %v755, 0
        %v758 = vand.u32 %v621, %v756
        %760 = vmatprep.subr.bf16.mxu0 0
        %761 = vmatpush1.bf16.msra.mxu0 0
        %762 = vmatprep.subr.bf16.mxu0 0
        %763 = vmatpush1.bf16.msra.mxu0 0
        %764 = vmatprep.subr.bf16.mxu0 0
        %765 = vmatpush1.bf16.msra.mxu0 0
        %766 = vmatprep.subr.bf16.mxu0 0
        %767 = vmatpush1.bf16.msra.mxu0 0
        %768 = vmatprep.subr.bf16.mxu0 0
        %769 = vmatpush1.bf16.msra.mxu0 0
        %770 = vmatprep.subr.bf16.mxu0 0
        %771 = vmatpush1.bf16.msra.mxu0 0
        %772 = vmatprep.subr.bf16.mxu0 0
        %773 = vmatpush1.bf16.msra.mxu0 %v758
        %774 = vmatprep.subr.bf16.mxu0 0
        %775 = vmatpush1.bf16.msra.mxu0 %v620
        %776 = vmatprep.subr.bf16.mxu0 0
        %777 = vmatpush2.bf16.msra.mxu0 0
        %778 = vmatprep.subr.bf16.mxu0 0
        %779 = vmatpush2.bf16.msra.mxu0 0
        %780 = vmatprep.subr.bf16.mxu0 0
        %781 = vmatpush2.bf16.msra.mxu0 0
        %782 = vmatprep.subr.bf16.mxu0 0
        %783 = vmatpush2.bf16.msra.mxu0 0
        %784 = vmatprep.subr.bf16.mxu0 0
        %785 = vmatpush2.bf16.msra.mxu0 0
        %786 = vmatprep.subr.bf16.mxu0 0
        %787 = vmatpush2.bf16.msra.mxu0 0
        %788 = vmatprep.subr.bf16.mxu0 0
        %789 = vmatpush2.bf16.msra.mxu0 0
        %790 = vmatprep.subr.bf16.mxu0 0
        %791 = vmatpush2.bf16.msra.mxu0 0
        %792 = vmatprep.mubr.bf16.mxu0 0
        %793 = vmatmul.mubr.bf16.gmra.mxu0 %v625
        %v794 = vpop.f32.mrf.mxu0
        %v795 = vadd.f32 %v397, %v794
        %v796 = vpop.f32.mrf.mxu0
        %v797 = vpop.f32.mrf.mxu0
        %v798 = vadd.f32 %v397, %v797
        %v799 = vpop.f32.mrf.mxu0
        %800 = vmatprep.mubr.bf16.mxu0 0
        %801 = vmatmul.mubr.bf16.gmra.mxu0 %v628
        %v802 = vpop.f32.mrf.mxu0
        %v803 = vadd.f32 %v397, %v802
        %v804 = vpop.f32.mrf.mxu0
        %v805 = vpop.f32.mrf.mxu0
        %v806 = vadd.f32 %v397, %v805
        %v807 = vpop.f32.mrf.mxu0
        %808 = vmatprep.mubr.bf16.mxu0 0
        %809 = vmatmul.mubr.bf16.gmra.mxu0 %v631
        %v810 = vpop.f32.mrf.mxu0
        %v811 = vadd.f32 %v397, %v810
        %v812 = vpop.f32.mrf.mxu0
        %v813 = vpop.f32.mrf.mxu0
        %v814 = vadd.f32 %v397, %v813
        %v815 = vpop.f32.mrf.mxu0
        %816 = vmatprep.mubr.bf16.mxu0 0
        %817 = vmatmul.mubr.bf16.gmra.mxu0 %v634
        %v818 = vpop.f32.mrf.mxu0
        %v819 = vadd.f32 %v397, %v818
        %v820 = vpop.f32.mrf.mxu0
        %v821 = vpop.f32.mrf.mxu0
        %v822 = vadd.f32 %v397, %v821
        %v823 = vpop.f32.mrf.mxu0
        %824 = vmatprep.mubr.bf16.mxu0 0
        %825 = vmatmul.mubr.bf16.gmra.mxu0 %v637
        %v826 = vpop.f32.mrf.mxu0
        %v827 = vadd.f32 %v397, %v826
        %v828 = vpop.f32.mrf.mxu0
        %v829 = vpop.f32.mrf.mxu0
        %v830 = vadd.f32 %v397, %v829
        %v831 = vpop.f32.mrf.mxu0
        %832 = vmatprep.mubr.bf16.mxu0 0
        %833 = vmatmul.mubr.bf16.gmra.mxu0 %v640
        %v834 = vpop.f32.mrf.mxu0
        %v835 = vadd.f32 %v397, %v834
        %v836 = vpop.f32.mrf.mxu0
        %v837 = vpop.f32.mrf.mxu0
        %v838 = vadd.f32 %v397, %v837
        %v839 = vpop.f32.mrf.mxu0
        %840 = vmatprep.mubr.bf16.mxu0 0
        %841 = vmatmul.mubr.bf16.gmra.mxu0 %v643
        %v842 = vpop.f32.mrf.mxu0
        %v843 = vadd.f32 %v397, %v842
        %v844 = vpop.f32.mrf.mxu0
        %v845 = vpop.f32.mrf.mxu0
        %v846 = vadd.f32 %v397, %v845
        %v847 = vpop.f32.mrf.mxu0
        %848 = vmatprep.mubr.bf16.mxu0 0
        %849 = vmatmul.mubr.bf16.gmra.mxu0 %v646
        %v850 = vpop.f32.mrf.mxu0
        %v851 = vadd.f32 %v397, %v850
        %v852 = vpop.f32.mrf.mxu0
        %v853 = vpop.f32.mrf.mxu0
        %v854 = vadd.f32 %v397, %v853
        %v855 = vpop.f32.mrf.mxu0
        %856 = vmatprep.mubr.bf16.mxu0 0
        %857 = vmatmul.mubr.bf16.gmra.mxu0 %v649
        %v858 = vpop.f32.mrf.mxu0
        %v859 = vadd.f32 %v397, %v858
        %v860 = vpop.f32.mrf.mxu0
        %v861 = vpop.f32.mrf.mxu0
        %v862 = vadd.f32 %v397, %v861
        %v863 = vpop.f32.mrf.mxu0
        %864 = vmatprep.mubr.bf16.mxu0 0
        %865 = vmatmul.mubr.bf16.gmra.mxu0 %v652
        %v866 = vpop.f32.mrf.mxu0
        %v867 = vadd.f32 %v397, %v866
        %v868 = vpop.f32.mrf.mxu0
        %v869 = vpop.f32.mrf.mxu0
        %v870 = vadd.f32 %v397, %v869
        %v871 = vpop.f32.mrf.mxu0
        %872 = vmatprep.mubr.bf16.mxu0 0
        %873 = vmatmul.mubr.bf16.gmra.mxu0 %v655
        %v874 = vpop.f32.mrf.mxu0
        %v875 = vadd.f32 %v397, %v874
        %v876 = vpop.f32.mrf.mxu0
        %v877 = vpop.f32.mrf.mxu0
        %v878 = vadd.f32 %v397, %v877
        %v879 = vpop.f32.mrf.mxu0
        %880 = vmatprep.mubr.bf16.mxu0 0
        %881 = vmatmul.mubr.bf16.gmra.mxu0 %v658
        %v882 = vpop.f32.mrf.mxu0
        %v883 = vadd.f32 %v397, %v882
        %v884 = vpop.f32.mrf.mxu0
        %v885 = vpop.f32.mrf.mxu0
        %v886 = vadd.f32 %v397, %v885
        %v887 = vpop.f32.mrf.mxu0
        %888 = vmatprep.mubr.bf16.mxu0 0
        %889 = vmatmul.mubr.bf16.gmra.mxu0 %v661
        %v890 = vpop.f32.mrf.mxu0
        %v891 = vadd.f32 %v397, %v890
        %v892 = vpop.f32.mrf.mxu0
        %v893 = vpop.f32.mrf.mxu0
        %v894 = vadd.f32 %v397, %v893
        %v895 = vpop.f32.mrf.mxu0
        %896 = vmatprep.mubr.bf16.mxu0 0
        %897 = vmatmul.mubr.bf16.gmra.mxu0 %v664
        %v898 = vpop.f32.mrf.mxu0
        %v899 = vadd.f32 %v397, %v898
        %v900 = vpop.f32.mrf.mxu0
        %v901 = vpop.f32.mrf.mxu0
        %v902 = vadd.f32 %v397, %v901
        %v903 = vpop.f32.mrf.mxu0
        %904 = vmatprep.mubr.bf16.mxu0 0
        %905 = vmatmul.mubr.bf16.gmra.mxu0 %v667
        %v906 = vpop.f32.mrf.mxu0
        %v907 = vadd.f32 %v397, %v906
        %v908 = vpop.f32.mrf.mxu0
        %v909 = vpop.f32.mrf.mxu0
        %v910 = vadd.f32 %v397, %v909
        %v911 = vpop.f32.mrf.mxu0
        %912 = vmatprep.mubr.bf16.mxu0 0
        %913 = vmatmul.mubr.bf16.gmra.mxu0 %v670
        %v914 = vpop.f32.mrf.mxu0
        %v915 = vadd.f32 %v397, %v914
        %v916 = vpop.f32.mrf.mxu0
        %v917 = vpop.f32.mrf.mxu0
        %v918 = vadd.f32 %v397, %v917
        %v919 = vpop.f32.mrf.mxu0
        %920 = vmatprep.mubr.bf16.mxu0 0
        %921 = vmatmul.mubr.bf16.gmra.mxu0 %v673
        %v922 = vpop.f32.mrf.mxu0
        %v923 = vadd.f32 %v397, %v922
        %v924 = vpop.f32.mrf.mxu0
        %v925 = vpop.f32.mrf.mxu0
        %v926 = vadd.f32 %v397, %v925
        %v927 = vpop.f32.mrf.mxu0
        %928 = vmatprep.mubr.bf16.mxu0 0
        %929 = vmatmul.mubr.bf16.gmra.mxu0 %v676
        %v930 = vpop.f32.mrf.mxu0
        %v931 = vadd.f32 %v397, %v930
        %v932 = vpop.f32.mrf.mxu0
        %v933 = vpop.f32.mrf.mxu0
        %v934 = vadd.f32 %v397, %v933
        %v935 = vpop.f32.mrf.mxu0
        %936 = vmatprep.mubr.bf16.mxu0 0
        %937 = vmatmul.mubr.bf16.gmra.mxu0 %v679
        %v938 = vpop.f32.mrf.mxu0
        %v939 = vadd.f32 %v397, %v938
        %v940 = vpop.f32.mrf.mxu0
        %v941 = vpop.f32.mrf.mxu0
        %v942 = vadd.f32 %v397, %v941
        %v943 = vpop.f32.mrf.mxu0
        %944 = vmatprep.mubr.bf16.mxu0 0
        %945 = vmatmul.mubr.bf16.gmra.mxu0 %v682
        %v946 = vpop.f32.mrf.mxu0
        %v947 = vadd.f32 %v397, %v946
        %v948 = vpop.f32.mrf.mxu0
        %v949 = vpop.f32.mrf.mxu0
        %v950 = vadd.f32 %v397, %v949
        %v951 = vpop.f32.mrf.mxu0
        %952 = vmatprep.mubr.bf16.mxu0 0
        %953 = vmatmul.mubr.bf16.gmra.mxu0 %v685
        %v954 = vpop.f32.mrf.mxu0
        %v955 = vadd.f32 %v397, %v954
        %v956 = vpop.f32.mrf.mxu0
        %v957 = vpop.f32.mrf.mxu0
        %v958 = vadd.f32 %v397, %v957
        %v959 = vpop.f32.mrf.mxu0
        %960 = vmatprep.mubr.bf16.mxu0 0
        %961 = vmatmul.mubr.bf16.gmra.mxu0 %v688
        %v962 = vpop.f32.mrf.mxu0
        %v963 = vadd.f32 %v397, %v962
        %v964 = vpop.f32.mrf.mxu0
        %v965 = vpop.f32.mrf.mxu0
        %v966 = vadd.f32 %v397, %v965
        %v967 = vpop.f32.mrf.mxu0
        %968 = vmatprep.mubr.bf16.mxu0 0
        %969 = vmatmul.mubr.bf16.gmra.mxu0 %v691
        %v970 = vpop.f32.mrf.mxu0
        %v971 = vadd.f32 %v397, %v970
        %v972 = vpop.f32.mrf.mxu0
        %v973 = vpop.f32.mrf.mxu0
        %v974 = vadd.f32 %v397, %v973
        %v975 = vpop.f32.mrf.mxu0
        %976 = vmatprep.mubr.bf16.mxu0 0
        %977 = vmatmul.mubr.bf16.gmra.mxu0 %v694
        %v978 = vpop.f32.mrf.mxu0
        %v979 = vadd.f32 %v397, %v978
        %v980 = vpop.f32.mrf.mxu0
        %v981 = vpop.f32.mrf.mxu0
        %v982 = vadd.f32 %v397, %v981
        %v983 = vpop.f32.mrf.mxu0
        %984 = vmatprep.mubr.bf16.mxu0 0
        %985 = vmatmul.mubr.bf16.gmra.mxu0 %v697
        %v986 = vpop.f32.mrf.mxu0
        %v987 = vadd.f32 %v397, %v986
        %v988 = vpop.f32.mrf.mxu0
        %v989 = vpop.f32.mrf.mxu0
        %v990 = vadd.f32 %v397, %v989
        %v991 = vpop.f32.mrf.mxu0
        %992 = vmatprep.mubr.bf16.mxu0 0
        %993 = vmatmul.mubr.bf16.gmra.mxu0 %v700
        %v994 = vpop.f32.mrf.mxu0
        %v995 = vadd.f32 %v397, %v994
        %v996 = vpop.f32.mrf.mxu0
        %v997 = vpop.f32.mrf.mxu0
        %v998 = vadd.f32 %v397, %v997
        %v999 = vpop.f32.mrf.mxu0
        %1000 = vmatprep.mubr.bf16.mxu0 0
        %1001 = vmatmul.mubr.bf16.gmra.mxu0 %v703
        %v1002 = vpop.f32.mrf.mxu0
        %v1003 = vadd.f32 %v397, %v1002
        %v1004 = vpop.f32.mrf.mxu0
        %v1005 = vpop.f32.mrf.mxu0
        %v1006 = vadd.f32 %v397, %v1005
        %v1007 = vpop.f32.mrf.mxu0
        %1008 = vmatprep.mubr.bf16.mxu0 0
        %1009 = vmatmul.mubr.bf16.gmra.mxu0 %v706
        %v1010 = vpop.f32.mrf.mxu0
        %v1011 = vadd.f32 %v397, %v1010
        %v1012 = vpop.f32.mrf.mxu0
        %v1013 = vpop.f32.mrf.mxu0
        %v1014 = vadd.f32 %v397, %v1013
        %v1015 = vpop.f32.mrf.mxu0
        %1016 = vmatprep.mubr.bf16.mxu0 0
        %1017 = vmatmul.mubr.bf16.gmra.mxu0 %v709
        %v1018 = vpop.f32.mrf.mxu0
        %v1019 = vadd.f32 %v397, %v1018
        %v1020 = vpop.f32.mrf.mxu0
        %v1021 = vpop.f32.mrf.mxu0
        %v1022 = vadd.f32 %v397, %v1021
        %v1023 = vpop.f32.mrf.mxu0
        %1024 = vmatprep.mubr.bf16.mxu0 0
        %1025 = vmatmul.mubr.bf16.gmra.mxu0 %v712
        %v1026 = vpop.f32.mrf.mxu0
        %v1027 = vadd.f32 %v397, %v1026
        %v1028 = vpop.f32.mrf.mxu0
        %v1029 = vpop.f32.mrf.mxu0
        %v1030 = vadd.f32 %v397, %v1029
        %v1031 = vpop.f32.mrf.mxu0
        %1032 = vmatprep.mubr.bf16.mxu0 0
        %1033 = vmatmul.mubr.bf16.gmra.mxu0 %v715
        %v1034 = vpop.f32.mrf.mxu0
        %v1035 = vadd.f32 %v397, %v1034
        %v1036 = vpop.f32.mrf.mxu0
        %v1037 = vpop.f32.mrf.mxu0
        %v1038 = vadd.f32 %v397, %v1037
        %v1039 = vpop.f32.mrf.mxu0
        %1040 = vmatprep.mubr.bf16.mxu0 0
        %1041 = vmatmul.mubr.bf16.gmra.mxu0 %v718
        %v1042 = vpop.f32.mrf.mxu0
        %v1043 = vadd.f32 %v397, %v1042
        %v1044 = vpop.f32.mrf.mxu0
        %v1045 = vpop.f32.mrf.mxu0
        %v1046 = vadd.f32 %v397, %v1045
        %v1047 = vpop.f32.mrf.mxu0
        %1048 = vmatprep.mubr.bf16.mxu0 0
        %1049 = vmatmul.mubr.bf16.gmra.mxu0 %v721
        %v1050 = vpop.f32.mrf.mxu0
        %v1051 = vadd.f32 %v397, %v1050
        %v1052 = vpop.f32.mrf.mxu0
        %v1053 = vpop.f32.mrf.mxu0
        %v1054 = vadd.f32 %v397, %v1053
        %v1055 = vpop.f32.mrf.mxu0
        %1056 = vmatprep.mubr.bf16.mxu0 0
        %1057 = vmatmul.mubr.bf16.gmra.mxu0 %v724
        %v1058 = vpop.f32.mrf.mxu0
        %v1059 = vadd.f32 %v397, %v1058
        %v1060 = vpop.f32.mrf.mxu0
        %v1061 = vpop.f32.mrf.mxu0
        %v1062 = vadd.f32 %v397, %v1061
        %v1063 = vpop.f32.mrf.mxu0
        %1064 = vmatprep.mubr.bf16.mxu0 0
        %1065 = vmatmul.mubr.bf16.gmra.mxu0 %v727
        %v1066 = vpop.f32.mrf.mxu0
        %v1067 = vadd.f32 %v397, %v1066
        %v1068 = vpop.f32.mrf.mxu0
        %v1069 = vpop.f32.mrf.mxu0
        %v1070 = vadd.f32 %v397, %v1069
        %v1071 = vpop.f32.mrf.mxu0
        %1072 = vmatprep.mubr.bf16.mxu0 0
        %1073 = vmatmul.mubr.bf16.gmra.mxu0 %v730
        %v1074 = vpop.f32.mrf.mxu0
        %v1075 = vadd.f32 %v397, %v1074
        %v1076 = vpop.f32.mrf.mxu0
        %v1077 = vpop.f32.mrf.mxu0
        %v1078 = vadd.f32 %v397, %v1077
        %v1079 = vpop.f32.mrf.mxu0
        %1080 = vmatprep.mubr.bf16.mxu0 0
        %1081 = vmatmul.mubr.bf16.gmra.mxu0 %v733
        %v1082 = vpop.f32.mrf.mxu0
        %v1083 = vadd.f32 %v397, %v1082
        %v1084 = vpop.f32.mrf.mxu0
        %v1085 = vpop.f32.mrf.mxu0
        %v1086 = vadd.f32 %v397, %v1085
        %v1087 = vpop.f32.mrf.mxu0
        %1088 = vmatprep.mubr.bf16.mxu0 0
        %1089 = vmatmul.mubr.bf16.gmra.mxu0 %v736
        %v1090 = vpop.f32.mrf.mxu0
        %v1091 = vadd.f32 %v397, %v1090
        %v1092 = vpop.f32.mrf.mxu0
        %v1093 = vpop.f32.mrf.mxu0
        %v1094 = vadd.f32 %v397, %v1093
        %v1095 = vpop.f32.mrf.mxu0
        %1096 = vmatprep.mubr.bf16.mxu0 0
        %1097 = vmatmul.mubr.bf16.gmra.mxu0 %v739
        %v1098 = vpop.f32.mrf.mxu0
        %v1099 = vadd.f32 %v397, %v1098
        %v1100 = vpop.f32.mrf.mxu0
        %v1101 = vpop.f32.mrf.mxu0
        %v1102 = vadd.f32 %v397, %v1101
        %v1103 = vpop.f32.mrf.mxu0
        %1104 = vmatprep.mubr.bf16.mxu0 0
        %1105 = vmatmul.mubr.bf16.gmra.mxu0 %v742
        %v1106 = vpop.f32.mrf.mxu0
        %v1107 = vadd.f32 %v397, %v1106
        %v1108 = vpop.f32.mrf.mxu0
        %v1109 = vpop.f32.mrf.mxu0
        %v1110 = vadd.f32 %v397, %v1109
        %v1111 = vpop.f32.mrf.mxu0
        %1112 = vmatprep.mubr.bf16.mxu0 0
        %1113 = vmatmul.mubr.bf16.gmra.mxu0 %v745
        %v1114 = vpop.f32.mrf.mxu0
        %v1115 = vadd.f32 %v397, %v1114
        %v1116 = vpop.f32.mrf.mxu0
        %v1117 = vpop.f32.mrf.mxu0
        %v1118 = vadd.f32 %v397, %v1117
        %v1119 = vpop.f32.mrf.mxu0
        %1120 = vmatprep.mubr.bf16.mxu0 0
        %1121 = vmatmul.mubr.bf16.gmra.mxu0 %v748
        %v1122 = vpop.f32.mrf.mxu0
        %v1123 = vadd.f32 %v397, %v1122
        %v1124 = vpop.f32.mrf.mxu0
        %v1125 = vpop.f32.mrf.mxu0
        %v1126 = vadd.f32 %v397, %v1125
        %v1127 = vpop.f32.mrf.mxu0
        %1128 = vmatprep.mubr.bf16.mxu0 0
        %1129 = vmatmul.mubr.bf16.gmra.mxu0 %v751
        %v1130 = vpop.f32.mrf.mxu0
        %v1131 = vadd.f32 %v397, %v1130
        %v1132 = vpop.f32.mrf.mxu0
        %v1133 = vpop.f32.mrf.mxu0
        %v1134 = vpop.f32.mrf.mxu0
        %1135 = vdwg.mxu0
        %v1136 = vmax.f32 %v795, 0.0
        %v1137 = vmax.f32 %v798, 0.0
        %v1138 = vmax.f32 %v803, 0.0
        %v1139 = vmax.f32 %v806, 0.0
        %v1140 = vmax.f32 %v811, 0.0
        %v1141 = vmax.f32 %v814, 0.0
        %v1142 = vmax.f32 %v819, 0.0
        %v1143 = vmax.f32 %v822, 0.0
        %v1144 = vmax.f32 %v827, 0.0
        %v1145 = vmax.f32 %v830, 0.0
        %v1146 = vmax.f32 %v835, 0.0
        %v1147 = vmax.f32 %v838, 0.0
        %v1148 = vmax.f32 %v843, 0.0
        %v1149 = vmax.f32 %v846, 0.0
        %v1150 = vmax.f32 %v851, 0.0
        %v1151 = vmax.f32 %v854, 0.0
        %v1152 = vmax.f32 %v859, 0.0
        %v1153 = vmax.f32 %v862, 0.0
        %v1154 = vmax.f32 %v867, 0.0
        %v1155 = vmax.f32 %v870, 0.0
        %v1156 = vmax.f32 %v875, 0.0
        %v1157 = vmax.f32 %v878, 0.0
        %v1158 = vmax.f32 %v883, 0.0
        %v1159 = vmax.f32 %v886, 0.0
        %v1160 = vmax.f32 %v891, 0.0
        %v1161 = vmax.f32 %v894, 0.0
        %v1162 = vmax.f32 %v899, 0.0
        %v1163 = vmax.f32 %v902, 0.0
        %v1164 = vmax.f32 %v907, 0.0
        %v1165 = vmax.f32 %v910, 0.0
        %v1166 = vmax.f32 %v915, 0.0
        %v1167 = vmax.f32 %v918, 0.0
        %v1168 = vmax.f32 %v923, 0.0
        %v1169 = vmax.f32 %v926, 0.0
        %v1170 = vmax.f32 %v931, 0.0
        %v1171 = vmax.f32 %v934, 0.0
        %v1172 = vmax.f32 %v939, 0.0
        %v1173 = vmax.f32 %v942, 0.0
        %v1174 = vmax.f32 %v947, 0.0
        %v1175 = vmax.f32 %v950, 0.0
        %v1176 = vmax.f32 %v955, 0.0
        %v1177 = vmax.f32 %v958, 0.0
        %v1178 = vmax.f32 %v963, 0.0
        %v1179 = vmax.f32 %v966, 0.0
        %v1180 = vmax.f32 %v971, 0.0
        %v1181 = vmax.f32 %v974, 0.0
        %v1182 = vmax.f32 %v979, 0.0
        %v1183 = vmax.f32 %v982, 0.0
        %v1184 = vmax.f32 %v987, 0.0
        %v1185 = vmax.f32 %v990, 0.0
        %v1186 = vmax.f32 %v995, 0.0
        %v1187 = vmax.f32 %v998, 0.0
        %v1188 = vmax.f32 %v1003, 0.0
        %v1189 = vmax.f32 %v1006, 0.0
        %v1190 = vmax.f32 %v1011, 0.0
        %v1191 = vmax.f32 %v1014, 0.0
        %v1192 = vmax.f32 %v1019, 0.0
        %v1193 = vmax.f32 %v1022, 0.0
        %v1194 = vmax.f32 %v1027, 0.0
        %v1195 = vmax.f32 %v1030, 0.0
        %v1196 = vmax.f32 %v1035, 0.0
        %v1197 = vmax.f32 %v1038, 0.0
        %v1198 = vmax.f32 %v1043, 0.0
        %v1199 = vmax.f32 %v1046, 0.0
        %v1200 = vmax.f32 %v1051, 0.0
        %v1201 = vmax.f32 %v1054, 0.0
        %v1202 = vmax.f32 %v1059, 0.0
        %v1203 = vmax.f32 %v1062, 0.0
        %v1204 = vmax.f32 %v1067, 0.0
        %v1205 = vmax.f32 %v1070, 0.0
        %v1206 = vmax.f32 %v1075, 0.0
        %v1207 = vmax.f32 %v1078, 0.0
        %v1208 = vmax.f32 %v1083, 0.0
        %v1209 = vmax.f32 %v1086, 0.0
        %v1210 = vmax.f32 %v1091, 0.0
        %v1211 = vmax.f32 %v1094, 0.0
        %v1212 = vmax.f32 %v1099, 0.0
        %v1213 = vmax.f32 %v1102, 0.0
        %v1214 = vmax.f32 %v1107, 0.0
        %v1215 = vmax.f32 %v1110, 0.0
        %v1216 = vmax.f32 %v1115, 0.0
        %v1217 = vmax.f32 %v1118, 0.0
        %v1218 = vmax.f32 %v1123, 0.0
        %v1219 = vmax.f32 %v1126, 0.0
        %v1220 = vmax.f32 %v1131, 0.0
        %v1221 = vpack.c.bf16 %v1137, %v1136
        %v1222 = vpack.c.bf16 %v1139, %v1138
        %v1223 = vpack.c.bf16 %v1141, %v1140
        %v1224 = vpack.c.bf16 %v1143, %v1142
        %v1225 = vpack.c.bf16 %v1145, %v1144
        %v1226 = vpack.c.bf16 %v1147, %v1146
        %v1227 = vpack.c.bf16 %v1149, %v1148
        %v1228 = vpack.c.bf16 %v1151, %v1150
        %v1229 = vpack.c.bf16 %v1153, %v1152
        %v1230 = vpack.c.bf16 %v1155, %v1154
        %v1231 = vpack.c.bf16 %v1157, %v1156
        %v1232 = vpack.c.bf16 %v1159, %v1158
        %v1233 = vpack.c.bf16 %v1161, %v1160
        %v1234 = vpack.c.bf16 %v1163, %v1162
        %v1235 = vpack.c.bf16 %v1165, %v1164
        %v1236 = vpack.c.bf16 %v1167, %v1166
        %v1237 = vpack.c.bf16 %v1169, %v1168
        %v1238 = vpack.c.bf16 %v1171, %v1170
        %v1239 = vpack.c.bf16 %v1173, %v1172
        %v1240 = vpack.c.bf16 %v1175, %v1174
        %v1241 = vpack.c.bf16 %v1177, %v1176
        %v1242 = vpack.c.bf16 %v1179, %v1178
        %v1243 = vpack.c.bf16 %v1181, %v1180
        %v1244 = vpack.c.bf16 %v1183, %v1182
        %v1245 = vpack.c.bf16 %v1185, %v1184
        %v1246 = vpack.c.bf16 %v1187, %v1186
        %v1247 = vpack.c.bf16 %v1189, %v1188
        %v1248 = vpack.c.bf16 %v1191, %v1190
        %v1249 = vpack.c.bf16 %v1193, %v1192
        %v1250 = vpack.c.bf16 %v1195, %v1194
        %v1251 = vpack.c.bf16 %v1197, %v1196
        %v1252 = vpack.c.bf16 %v1199, %v1198
        %v1253 = vpack.c.bf16 %v1201, %v1200
        %v1254 = vpack.c.bf16 %v1203, %v1202
        %v1255 = vpack.c.bf16 %v1205, %v1204
        %v1256 = vpack.c.bf16 %v1207, %v1206
        %v1257 = vpack.c.bf16 %v1209, %v1208
        %v1258 = vpack.c.bf16 %v1211, %v1210
        %v1259 = vpack.c.bf16 %v1213, %v1212
        %v1260 = vpack.c.bf16 %v1215, %v1214
        %v1261 = vpack.c.bf16 %v1217, %v1216
        %v1262 = vpack.c.bf16 %v1219, %v1218
        %v1263 = vpack.c.bf16 %v1220, %v1220
        %v1307 = vunpack.c.l.b16 %v1221
        %v1308 = vunpack.c.h.b16 %v1221
        %v1309 = vunpack.c.l.b16 %v1222
        %v1310 = vunpack.c.h.b16 %v1222
        %v1311 = vunpack.c.l.b16 %v1223
        %v1312 = vunpack.c.h.b16 %v1223
        %v1313 = vunpack.c.l.b16 %v1224
        %v1314 = vunpack.c.h.b16 %v1224
        %v1315 = vunpack.c.l.b16 %v1225
        %v1316 = vunpack.c.h.b16 %v1225
        %v1317 = vunpack.c.l.b16 %v1226
        %v1318 = vunpack.c.h.b16 %v1226
        %v1319 = vunpack.c.l.b16 %v1227
        %v1320 = vunpack.c.h.b16 %v1227
        %v1321 = vunpack.c.l.b16 %v1228
        %v1322 = vunpack.c.h.b16 %v1228
        %v1323 = vunpack.c.l.b16 %v1229
        %v1324 = vunpack.c.h.b16 %v1229
        %v1325 = vunpack.c.l.b16 %v1230
        %v1326 = vunpack.c.h.b16 %v1230
        %v1327 = vunpack.c.l.b16 %v1231
        %v1328 = vunpack.c.h.b16 %v1231
        %v1329 = vunpack.c.l.b16 %v1232
        %v1330 = vunpack.c.h.b16 %v1232
        %v1331 = vunpack.c.l.b16 %v1233
        %v1332 = vunpack.c.h.b16 %v1233
        %v1333 = vunpack.c.l.b16 %v1234
        %v1334 = vunpack.c.h.b16 %v1234
        %v1335 = vunpack.c.l.b16 %v1235
        %v1336 = vunpack.c.h.b16 %v1235
        %v1337 = vunpack.c.l.b16 %v1236
        %v1338 = vunpack.c.h.b16 %v1236
        %v1339 = vunpack.c.l.b16 %v1237
        %v1340 = vunpack.c.h.b16 %v1237
        %v1341 = vunpack.c.l.b16 %v1238
        %v1342 = vunpack.c.h.b16 %v1238
        %v1343 = vunpack.c.l.b16 %v1239
        %v1344 = vunpack.c.h.b16 %v1239
        %v1345 = vunpack.c.l.b16 %v1240
        %v1346 = vunpack.c.h.b16 %v1240
        %v1347 = vunpack.c.l.b16 %v1241
        %v1348 = vunpack.c.h.b16 %v1241
        %v1349 = vunpack.c.l.b16 %v1242
        %v1350 = vunpack.c.h.b16 %v1242
        %v1351 = vunpack.c.l.b16 %v1243
        %v1352 = vunpack.c.h.b16 %v1243
        %v1353 = vunpack.c.l.b16 %v1244
        %v1354 = vunpack.c.h.b16 %v1244
        %v1355 = vunpack.c.l.b16 %v1245
        %v1356 = vunpack.c.h.b16 %v1245
        %v1357 = vunpack.c.l.b16 %v1246
        %v1358 = vunpack.c.h.b16 %v1246
        %v1359 = vunpack.c.l.b16 %v1247
        %v1360 = vunpack.c.h.b16 %v1247
        %v1361 = vunpack.c.l.b16 %v1248
        %v1362 = vunpack.c.h.b16 %v1248
        %v1363 = vunpack.c.l.b16 %v1249
        %v1364 = vunpack.c.h.b16 %v1249
        %v1365 = vunpack.c.l.b16 %v1250
        %v1366 = vunpack.c.h.b16 %v1250
        %v1367 = vunpack.c.l.b16 %v1251
        %v1368 = vunpack.c.h.b16 %v1251
        %v1369 = vunpack.c.l.b16 %v1252
        %v1370 = vunpack.c.h.b16 %v1252
        %v1371 = vunpack.c.l.b16 %v1253
        %v1372 = vunpack.c.h.b16 %v1253
        %v1373 = vunpack.c.l.b16 %v1254
        %v1374 = vunpack.c.h.b16 %v1254
        %v1375 = vunpack.c.l.b16 %v1255
        %v1376 = vunpack.c.h.b16 %v1255
        %v1377 = vunpack.c.l.b16 %v1256
        %v1378 = vunpack.c.h.b16 %v1256
        %v1379 = vunpack.c.l.b16 %v1257
        %v1380 = vunpack.c.h.b16 %v1257
        %v1381 = vunpack.c.l.b16 %v1258
        %v1382 = vunpack.c.h.b16 %v1258
        %v1383 = vunpack.c.l.b16 %v1259
        %v1384 = vunpack.c.h.b16 %v1259
        %v1385 = vunpack.c.l.b16 %v1260
        %v1386 = vunpack.c.h.b16 %v1260
        %v1387 = vunpack.c.l.b16 %v1261
        %v1388 = vunpack.c.h.b16 %v1261
        %v1389 = vunpack.c.l.b16 %v1262
        %v1390 = vunpack.c.h.b16 %v1262
        %v1391 = vunpack.c.l.b16 %v1263
        %v1392 = vpack.c.b16 %v1307, %v1307
        %v1393 = vpack.c.b16 %v1308, %v1308
        %v1394 = vpack.c.b16 %v1309, %v1309
        %v1395 = vpack.c.b16 %v1310, %v1310
        %v1396 = vpack.c.b16 %v1311, %v1311
        %v1397 = vpack.c.b16 %v1312, %v1312
        %v1398 = vpack.c.b16 %v1313, %v1313
        %v1399 = vpack.c.b16 %v1314, %v1314
        %v1400 = vpack.c.b16 %v1315, %v1315
        %v1401 = vpack.c.b16 %v1316, %v1316
        %v1402 = vpack.c.b16 %v1317, %v1317
        %v1403 = vpack.c.b16 %v1318, %v1318
        %v1404 = vpack.c.b16 %v1319, %v1319
        %v1405 = vpack.c.b16 %v1320, %v1320
        %v1406 = vpack.c.b16 %v1321, %v1321
        %v1407 = vpack.c.b16 %v1322, %v1322
        %v1408 = vpack.c.b16 %v1323, %v1323
        %v1409 = vpack.c.b16 %v1324, %v1324
        %v1410 = vpack.c.b16 %v1325, %v1325
        %v1411 = vpack.c.b16 %v1326, %v1326
        %v1412 = vpack.c.b16 %v1327, %v1327
        %v1413 = vpack.c.b16 %v1328, %v1328
        %v1414 = vpack.c.b16 %v1329, %v1329
        %v1415 = vpack.c.b16 %v1330, %v1330
        %v1416 = vpack.c.b16 %v1331, %v1331
        %v1417 = vpack.c.b16 %v1332, %v1332
        %v1418 = vpack.c.b16 %v1333, %v1333
        %v1419 = vpack.c.b16 %v1334, %v1334
        %v1420 = vpack.c.b16 %v1335, %v1335
        %v1421 = vpack.c.b16 %v1336, %v1336
        %v1422 = vpack.c.b16 %v1337, %v1337
        %v1423 = vpack.c.b16 %v1338, %v1338
        %v1424 = vpack.c.b16 %v1339, %v1339
        %v1425 = vpack.c.b16 %v1340, %v1340
        %v1426 = vpack.c.b16 %v1341, %v1341
        %v1427 = vpack.c.b16 %v1342, %v1342
        %v1428 = vpack.c.b16 %v1343, %v1343
        %v1429 = vpack.c.b16 %v1344, %v1344
        %v1430 = vpack.c.b16 %v1345, %v1345
        %v1431 = vpack.c.b16 %v1346, %v1346
        %v1432 = vpack.c.b16 %v1347, %v1347
        %v1433 = vpack.c.b16 %v1348, %v1348
        %v1434 = vpack.c.b16 %v1349, %v1349
        %v1435 = vpack.c.b16 %v1350, %v1350
        %v1436 = vpack.c.b16 %v1351, %v1351
        %v1437 = vpack.c.b16 %v1352, %v1352
        %v1438 = vpack.c.b16 %v1353, %v1353
        %v1439 = vpack.c.b16 %v1354, %v1354
        %v1440 = vpack.c.b16 %v1355, %v1355
        %v1441 = vpack.c.b16 %v1356, %v1356
        %v1442 = vpack.c.b16 %v1357, %v1357
        %v1443 = vpack.c.b16 %v1358, %v1358
        %v1444 = vpack.c.b16 %v1359, %v1359
        %v1445 = vpack.c.b16 %v1360, %v1360
        %v1446 = vpack.c.b16 %v1361, %v1361
        %v1447 = vpack.c.b16 %v1362, %v1362
        %v1448 = vpack.c.b16 %v1363, %v1363
        %v1449 = vpack.c.b16 %v1364, %v1364
        %v1450 = vpack.c.b16 %v1365, %v1365
        %v1451 = vpack.c.b16 %v1366, %v1366
        %v1452 = vpack.c.b16 %v1367, %v1367
        %v1453 = vpack.c.b16 %v1368, %v1368
        %v1454 = vpack.c.b16 %v1369, %v1369
        %v1455 = vpack.c.b16 %v1370, %v1370
        %v1456 = vpack.c.b16 %v1371, %v1371
        %v1457 = vpack.c.b16 %v1372, %v1372
        %v1458 = vpack.c.b16 %v1373, %v1373
        %v1459 = vpack.c.b16 %v1374, %v1374
        %v1460 = vpack.c.b16 %v1375, %v1375
        %v1461 = vpack.c.b16 %v1376, %v1376
        %v1462 = vpack.c.b16 %v1377, %v1377
        %v1463 = vpack.c.b16 %v1378, %v1378
        %v1464 = vpack.c.b16 %v1379, %v1379
        %v1465 = vpack.c.b16 %v1380, %v1380
        %v1466 = vpack.c.b16 %v1381, %v1381
        %v1467 = vpack.c.b16 %v1382, %v1382
        %v1468 = vpack.c.b16 %v1383, %v1383
        %v1469 = vpack.c.b16 %v1384, %v1384
        %v1470 = vpack.c.b16 %v1385, %v1385
        %v1471 = vpack.c.b16 %v1386, %v1386
        %v1472 = vpack.c.b16 %v1387, %v1387
        %v1473 = vpack.c.b16 %v1388, %v1388
        %v1474 = vpack.c.b16 %v1389, %v1389
        %v1475 = vpack.c.b16 %v1390, %v1390
        %v1476 = vpack.c.b16 %v1391, %v1391
        %vm1562 = vcmask 781312
        %1563 = vst.msk [vmem:[#allocation2] sm:$0xf] %vm1562, %v1392
        %1564 = vst.msk [vmem:[#allocation2 + $0x4] sm:$0xf] %vm1562, %v1393
        %1565 = vst.msk [vmem:[#allocation2 + $0x8] sm:$0xf] %vm1562, %v1394
        %1566 = vst.msk [vmem:[#allocation2 + $0xc] sm:$0xf] %vm1562, %v1395
        %1567 = vst.msk [vmem:[#allocation2 + $0x10] sm:$0xf] %vm1562, %v1396
        %1568 = vst.msk [vmem:[#allocation2 + $0x14] sm:$0xf] %vm1562, %v1397
        %1569 = vst.msk [vmem:[#allocation2 + $0x18] sm:$0xf] %vm1562, %v1398
        %1570 = vst.msk [vmem:[#allocation2 + $0x1c] sm:$0xf] %vm1562, %v1399
        %1571 = vst.msk [vmem:[#allocation2 + $0x20] sm:$0xf] %vm1562, %v1400
        %1572 = vst.msk [vmem:[#allocation2 + $0x24] sm:$0xf] %vm1562, %v1401
        %1573 = vst.msk [vmem:[#allocation2 + $0x28] sm:$0xf] %vm1562, %v1402
        %1574 = vst.msk [vmem:[#allocation2 + $0x2c] sm:$0xf] %vm1562, %v1403
        %1575 = vst.msk [vmem:[#allocation2 + $0x30] sm:$0xf] %vm1562, %v1404
        %1576 = vst.msk [vmem:[#allocation2 + $0x34] sm:$0xf] %vm1562, %v1405
        %1577 = vst.msk [vmem:[#allocation2 + $0x38] sm:$0xf] %vm1562, %v1406
        %1578 = vst.msk [vmem:[#allocation2 + $0x3c] sm:$0xf] %vm1562, %v1407
        %1579 = vst.msk [vmem:[#allocation2 + $0x40] sm:$0xf] %vm1562, %v1408
        %1580 = vst.msk [vmem:[#allocation2 + $0x44] sm:$0xf] %vm1562, %v1409
        %1581 = vst.msk [vmem:[#allocation2 + $0x48] sm:$0xf] %vm1562, %v1410
        %1582 = vst.msk [vmem:[#allocation2 + $0x4c] sm:$0xf] %vm1562, %v1411
        %1583 = vst.msk [vmem:[#allocation2 + $0x50] sm:$0xf] %vm1562, %v1412
        %1584 = vst.msk [vmem:[#allocation2 + $0x54] sm:$0xf] %vm1562, %v1413
        %1585 = vst.msk [vmem:[#allocation2 + $0x58] sm:$0xf] %vm1562, %v1414
        %1586 = vst.msk [vmem:[#allocation2 + $0x5c] sm:$0xf] %vm1562, %v1415
        %1587 = vst.msk [vmem:[#allocation2 + $0x60] sm:$0xf] %vm1562, %v1416
        %1588 = vst.msk [vmem:[#allocation2 + $0x64] sm:$0xf] %vm1562, %v1417
        %1589 = vst.msk [vmem:[#allocation2 + $0x68] sm:$0xf] %vm1562, %v1418
        %1590 = vst.msk [vmem:[#allocation2 + $0x6c] sm:$0xf] %vm1562, %v1419
        %1591 = vst.msk [vmem:[#allocation2 + $0x70] sm:$0xf] %vm1562, %v1420
        %1592 = vst.msk [vmem:[#allocation2 + $0x74] sm:$0xf] %vm1562, %v1421
        %1593 = vst.msk [vmem:[#allocation2 + $0x78] sm:$0xf] %vm1562, %v1422
        %1594 = vst.msk [vmem:[#allocation2 + $0x7c] sm:$0xf] %vm1562, %v1423
        %1595 = vst.msk [vmem:[#allocation2 + $0x80] sm:$0xf] %vm1562, %v1424
        %1596 = vst.msk [vmem:[#allocation2 + $0x84] sm:$0xf] %vm1562, %v1425
        %1597 = vst.msk [vmem:[#allocation2 + $0x88] sm:$0xf] %vm1562, %v1426
        %1598 = vst.msk [vmem:[#allocation2 + $0x8c] sm:$0xf] %vm1562, %v1427
        %1599 = vst.msk [vmem:[#allocation2 + $0x90] sm:$0xf] %vm1562, %v1428
        %1600 = vst.msk [vmem:[#allocation2 + $0x94] sm:$0xf] %vm1562, %v1429
        %1601 = vst.msk [vmem:[#allocation2 + $0x98] sm:$0xf] %vm1562, %v1430
        %1602 = vst.msk [vmem:[#allocation2 + $0x9c] sm:$0xf] %vm1562, %v1431
        %1603 = vst.msk [vmem:[#allocation2 + $0xa0] sm:$0xf] %vm1562, %v1432
        %1604 = vst.msk [vmem:[#allocation2 + $0xa4] sm:$0xf] %vm1562, %v1433
        %1605 = vst.msk [vmem:[#allocation2 + $0xa8] sm:$0xf] %vm1562, %v1434
        %1606 = vst.msk [vmem:[#allocation2 + $0xac] sm:$0xf] %vm1562, %v1435
        %1607 = vst.msk [vmem:[#allocation2 + $0xb0] sm:$0xf] %vm1562, %v1436
        %1608 = vst.msk [vmem:[#allocation2 + $0xb4] sm:$0xf] %vm1562, %v1437
        %1609 = vst.msk [vmem:[#allocation2 + $0xb8] sm:$0xf] %vm1562, %v1438
        %1610 = vst.msk [vmem:[#allocation2 + $0xbc] sm:$0xf] %vm1562, %v1439
        %1611 = vst.msk [vmem:[#allocation2 + $0xc0] sm:$0xf] %vm1562, %v1440
        %1612 = vst.msk [vmem:[#allocation2 + $0xc4] sm:$0xf] %vm1562, %v1441
        %1613 = vst.msk [vmem:[#allocation2 + $0xc8] sm:$0xf] %vm1562, %v1442
        %1614 = vst.msk [vmem:[#allocation2 + $0xcc] sm:$0xf] %vm1562, %v1443
        %1615 = vst.msk [vmem:[#allocation2 + $0xd0] sm:$0xf] %vm1562, %v1444
        %1616 = vst.msk [vmem:[#allocation2 + $0xd4] sm:$0xf] %vm1562, %v1445
        %1617 = vst.msk [vmem:[#allocation2 + $0xd8] sm:$0xf] %vm1562, %v1446
        %1618 = vst.msk [vmem:[#allocation2 + $0xdc] sm:$0xf] %vm1562, %v1447
        %1619 = vst.msk [vmem:[#allocation2 + $0xe0] sm:$0xf] %vm1562, %v1448
        %1620 = vst.msk [vmem:[#allocation2 + $0xe4] sm:$0xf] %vm1562, %v1449
        %1621 = vst.msk [vmem:[#allocation2 + $0xe8] sm:$0xf] %vm1562, %v1450
        %1622 = vst.msk [vmem:[#allocation2 + $0xec] sm:$0xf] %vm1562, %v1451
        %1623 = vst.msk [vmem:[#allocation2 + $0xf0] sm:$0xf] %vm1562, %v1452
        %1624 = vst.msk [vmem:[#allocation2 + $0xf4] sm:$0xf] %vm1562, %v1453
        %1625 = vst.msk [vmem:[#allocation2 + $0xf8] sm:$0xf] %vm1562, %v1454
        %1626 = vst.msk [vmem:[#allocation2 + $0xfc] sm:$0xf] %vm1562, %v1455
        %1627 = vst.msk [vmem:[#allocation2 + $0x100] sm:$0xf] %vm1562, %v1456
        %1628 = vst.msk [vmem:[#allocation2 + $0x104] sm:$0xf] %vm1562, %v1457
        %1629 = vst.msk [vmem:[#allocation2 + $0x108] sm:$0xf] %vm1562, %v1458
        %1630 = vst.msk [vmem:[#allocation2 + $0x10c] sm:$0xf] %vm1562, %v1459
        %1631 = vst.msk [vmem:[#allocation2 + $0x110] sm:$0xf] %vm1562, %v1460
        %1632 = vst.msk [vmem:[#allocation2 + $0x114] sm:$0xf] %vm1562, %v1461
        %1633 = vst.msk [vmem:[#allocation2 + $0x118] sm:$0xf] %vm1562, %v1462
        %1634 = vst.msk [vmem:[#allocation2 + $0x11c] sm:$0xf] %vm1562, %v1463
        %1635 = vst.msk [vmem:[#allocation2 + $0x120] sm:$0xf] %vm1562, %v1464
        %1636 = vst.msk [vmem:[#allocation2 + $0x124] sm:$0xf] %vm1562, %v1465
        %1637 = vst.msk [vmem:[#allocation2 + $0x128] sm:$0xf] %vm1562, %v1466
        %1638 = vst.msk [vmem:[#allocation2 + $0x12c] sm:$0xf] %vm1562, %v1467
        %1639 = vst.msk [vmem:[#allocation2 + $0x130] sm:$0xf] %vm1562, %v1468
        %1640 = vst.msk [vmem:[#allocation2 + $0x134] sm:$0xf] %vm1562, %v1469
        %1641 = vst.msk [vmem:[#allocation2 + $0x138] sm:$0xf] %vm1562, %v1470
        %1642 = vst.msk [vmem:[#allocation2 + $0x13c] sm:$0xf] %vm1562, %v1471
        %1643 = vst.msk [vmem:[#allocation2 + $0x140] sm:$0xf] %vm1562, %v1472
        %1644 = vst.msk [vmem:[#allocation2 + $0x144] sm:$0xf] %vm1562, %v1473
        %1645 = vst.msk [vmem:[#allocation2 + $0x148] sm:$0xf] %vm1562, %v1474
        %1646 = vst.msk [vmem:[#allocation2 + $0x14c] sm:$0xf] %vm1562, %v1475
        %1647 = vst.msk [vmem:[#allocation2 + $0x150] sm:$0xf] %vm1562, %v1476
        %v1648 = vld [vmem:[#allocation2] sm:$0xf]
        %v1649 = vld [vmem:[#allocation2 + $0x4] sm:$0xf]
        %v1650 = vld [vmem:[#allocation2 + $0x8] sm:$0xf]
        %v1651 = vld [vmem:[#allocation2 + $0xc] sm:$0xf]
        %v1652 = vld [vmem:[#allocation2 + $0x10] sm:$0xf]
        %v1653 = vld [vmem:[#allocation2 + $0x14] sm:$0xf]
        %v1654 = vld [vmem:[#allocation2 + $0x18] sm:$0xf]
        %v1655 = vld [vmem:[#allocation2 + $0x1c] sm:$0xf]
        %v1656 = vld [vmem:[#allocation2 + $0x20] sm:$0xf]
        %v1657 = vld [vmem:[#allocation2 + $0x24] sm:$0xf]
        %v1658 = vld [vmem:[#allocation2 + $0x28] sm:$0xf]
        %v1659 = vld [vmem:[#allocation2 + $0x2c] sm:$0xf]
        %v1660 = vld [vmem:[#allocation2 + $0x30] sm:$0xf]
        %v1661 = vld [vmem:[#allocation2 + $0x34] sm:$0xf]
        %v1662 = vld [vmem:[#allocation2 + $0x38] sm:$0xf]
        %v1663 = vld [vmem:[#allocation2 + $0x3c] sm:$0xf]
        %v1664 = vld [vmem:[#allocation2 + $0x40] sm:$0xf]
        %v1665 = vld [vmem:[#allocation2 + $0x44] sm:$0xf]
        %v1666 = vld [vmem:[#allocation2 + $0x48] sm:$0xf]
        %v1667 = vld [vmem:[#allocation2 + $0x4c] sm:$0xf]
        %v1668 = vld [vmem:[#allocation2 + $0x50] sm:$0xf]
        %v1669 = vld [vmem:[#allocation2 + $0x54] sm:$0xf]
        %v1670 = vld [vmem:[#allocation2 + $0x58] sm:$0xf]
        %v1671 = vld [vmem:[#allocation2 + $0x5c] sm:$0xf]
        %v1672 = vld [vmem:[#allocation2 + $0x60] sm:$0xf]
        %v1673 = vld [vmem:[#allocation2 + $0x64] sm:$0xf]
        %v1674 = vld [vmem:[#allocation2 + $0x68] sm:$0xf]
        %v1675 = vld [vmem:[#allocation2 + $0x6c] sm:$0xf]
        %v1676 = vld [vmem:[#allocation2 + $0x70] sm:$0xf]
        %v1677 = vld [vmem:[#allocation2 + $0x74] sm:$0xf]
        %v1678 = vld [vmem:[#allocation2 + $0x78] sm:$0xf]
        %v1679 = vld [vmem:[#allocation2 + $0x7c] sm:$0xf]
        %v1680 = vld [vmem:[#allocation2 + $0x80] sm:$0xf]
        %v1681 = vld [vmem:[#allocation2 + $0x84] sm:$0xf]
        %v1682 = vld [vmem:[#allocation2 + $0x88] sm:$0xf]
        %v1683 = vld [vmem:[#allocation2 + $0x8c] sm:$0xf]
        %v1684 = vld [vmem:[#allocation2 + $0x90] sm:$0xf]
        %v1685 = vld [vmem:[#allocation2 + $0x94] sm:$0xf]
        %v1686 = vld [vmem:[#allocation2 + $0x98] sm:$0xf]
        %v1687 = vld [vmem:[#allocation2 + $0x9c] sm:$0xf]
        %v1688 = vld [vmem:[#allocation2 + $0xa0] sm:$0xf]
        %v1689 = vld [vmem:[#allocation2 + $0xa4] sm:$0xf]
        %v1690 = vld [vmem:[#allocation2 + $0xa8] sm:$0xf]
        %v1691 = vld [vmem:[#allocation2 + $0xac] sm:$0xf]
        %v1692 = vld [vmem:[#allocation2 + $0xb0] sm:$0xf]
        %v1693 = vld [vmem:[#allocation2 + $0xb4] sm:$0xf]
        %v1694 = vld [vmem:[#allocation2 + $0xb8] sm:$0xf]
        %v1695 = vld [vmem:[#allocation2 + $0xbc] sm:$0xf]
        %v1696 = vld [vmem:[#allocation2 + $0xc0] sm:$0xf]
        %v1697 = vld [vmem:[#allocation2 + $0xc4] sm:$0xf]
        %v1698 = vld [vmem:[#allocation2 + $0xc8] sm:$0xf]
        %v1699 = vld [vmem:[#allocation2 + $0xcc] sm:$0xf]
        %v1700 = vld [vmem:[#allocation2 + $0xd0] sm:$0xf]
        %v1701 = vld [vmem:[#allocation2 + $0xd4] sm:$0xf]
        %v1702 = vld [vmem:[#allocation2 + $0xd8] sm:$0xf]
        %v1703 = vld [vmem:[#allocation2 + $0xdc] sm:$0xf]
        %v1704 = vld [vmem:[#allocation2 + $0xe0] sm:$0xf]
        %v1705 = vld [vmem:[#allocation2 + $0xe4] sm:$0xf]
        %v1706 = vld [vmem:[#allocation2 + $0xe8] sm:$0xf]
        %v1707 = vld [vmem:[#allocation2 + $0xec] sm:$0xf]
        %v1708 = vld [vmem:[#allocation2 + $0xf0] sm:$0xf]
        %v1709 = vld [vmem:[#allocation2 + $0xf4] sm:$0xf]
        %v1710 = vld [vmem:[#allocation2 + $0xf8] sm:$0xf]
        %v1711 = vld [vmem:[#allocation2 + $0xfc] sm:$0xf]
        %v1712 = vld [vmem:[#allocation2 + $0x100] sm:$0xf]
        %v1713 = vld [vmem:[#allocation2 + $0x104] sm:$0xf]
        %v1714 = vld [vmem:[#allocation2 + $0x108] sm:$0xf]
        %v1715 = vld [vmem:[#allocation2 + $0x10c] sm:$0xf]
        %v1716 = vld [vmem:[#allocation2 + $0x110] sm:$0xf]
        %v1717 = vld [vmem:[#allocation2 + $0x114] sm:$0xf]
        %v1718 = vld [vmem:[#allocation2 + $0x118] sm:$0xf]
        %v1719 = vld [vmem:[#allocation2 + $0x11c] sm:$0xf]
        %v1720 = vld [vmem:[#allocation2 + $0x120] sm:$0xf]
        %v1721 = vld [vmem:[#allocation2 + $0x124] sm:$0xf]
        %v1722 = vld [vmem:[#allocation2 + $0x128] sm:$0xf]
        %v1723 = vld [vmem:[#allocation2 + $0x12c] sm:$0xf]
        %v1724 = vld [vmem:[#allocation2 + $0x130] sm:$0xf]
        %v1725 = vld [vmem:[#allocation2 + $0x134] sm:$0xf]
        %v1726 = vld [vmem:[#allocation2 + $0xc] sm:$0xe]
        %v1727 = vld [vmem:[#allocation2 + $0x138] sm:$0xf]
        %v1728 = vld [vmem:[#allocation2 + $0x13c] sm:$0xf]
        %v1729 = vld [vmem:[#allocation2 + $0x140] sm:$0xf]
        %v1730 = vld [vmem:[#allocation2 + $0x144] sm:$0x1]
        %v1810 = vunpack.c.l.b16 %v1726
        %v1811 = vunpack.c.l.b16 %v1652
        %v1812 = vunpack.c.l.b16 %v1653
        %v1813 = vunpack.c.l.b16 %v1654
        %v1814 = vunpack.c.l.b16 %v1655
        %v1815 = vunpack.c.l.b16 %v1656
        %v1816 = vunpack.c.l.b16 %v1657
        %v1817 = vunpack.c.l.b16 %v1658
        %v1818 = vunpack.c.l.b16 %v1659
        %v1819 = vunpack.c.l.b16 %v1660
        %v1820 = vunpack.c.l.b16 %v1661
        %v1821 = vunpack.c.l.b16 %v1662
        %v1822 = vunpack.c.l.b16 %v1663
        %v1823 = vunpack.c.l.b16 %v1664
        %v1824 = vunpack.c.l.b16 %v1665
        %v1825 = vunpack.c.l.b16 %v1666
        %v1826 = vunpack.c.l.b16 %v1667
        %v1827 = vunpack.c.l.b16 %v1668
        %v1828 = vunpack.c.l.b16 %v1669
        %v1829 = vunpack.c.l.b16 %v1670
        %v1830 = vunpack.c.l.b16 %v1671
        %v1831 = vunpack.c.l.b16 %v1672
        %v1832 = vunpack.c.l.b16 %v1673
        %v1833 = vunpack.c.l.b16 %v1674
        %v1834 = vunpack.c.l.b16 %v1675
        %v1835 = vunpack.c.l.b16 %v1676
        %v1836 = vunpack.c.l.b16 %v1677
        %v1837 = vunpack.c.l.b16 %v1678
        %v1838 = vunpack.c.l.b16 %v1679
        %v1839 = vunpack.c.l.b16 %v1680
        %v1840 = vunpack.c.l.b16 %v1681
        %v1841 = vunpack.c.l.b16 %v1682
        %v1842 = vunpack.c.l.b16 %v1683
        %v1843 = vunpack.c.l.b16 %v1684
        %v1844 = vunpack.c.l.b16 %v1685
        %v1845 = vunpack.c.l.b16 %v1686
        %v1846 = vunpack.c.l.b16 %v1687
        %v1847 = vunpack.c.l.b16 %v1688
        %v1848 = vunpack.c.l.b16 %v1689
        %v1849 = vunpack.c.l.b16 %v1690
        %v1850 = vunpack.c.l.b16 %v1691
        %v1851 = vunpack.c.l.b16 %v1692
        %v1852 = vunpack.c.l.b16 %v1693
        %v1853 = vunpack.c.l.b16 %v1694
        %v1854 = vunpack.c.l.b16 %v1695
        %v1855 = vunpack.c.l.b16 %v1696
        %v1856 = vunpack.c.l.b16 %v1697
        %v1857 = vunpack.c.l.b16 %v1698
        %v1858 = vunpack.c.l.b16 %v1699
        %v1859 = vunpack.c.l.b16 %v1700
        %v1860 = vunpack.c.l.b16 %v1701
        %v1861 = vunpack.c.l.b16 %v1702
        %v1862 = vunpack.c.l.b16 %v1703
        %v1863 = vunpack.c.l.b16 %v1704
        %v1864 = vunpack.c.l.b16 %v1705
        %v1865 = vunpack.c.l.b16 %v1706
        %v1866 = vunpack.c.l.b16 %v1707
        %v1867 = vunpack.c.l.b16 %v1708
        %v1868 = vunpack.c.l.b16 %v1709
        %v1869 = vunpack.c.l.b16 %v1710
        %v1870 = vunpack.c.l.b16 %v1711
        %v1871 = vunpack.c.l.b16 %v1712
        %v1872 = vunpack.c.l.b16 %v1713
        %v1873 = vunpack.c.l.b16 %v1714
        %v1874 = vunpack.c.l.b16 %v1715
        %v1875 = vunpack.c.l.b16 %v1716
        %v1876 = vunpack.c.l.b16 %v1717
        %v1877 = vunpack.c.l.b16 %v1718
        %v1878 = vunpack.c.l.b16 %v1719
        %v1879 = vunpack.c.l.b16 %v1720
        %v1880 = vunpack.c.l.b16 %v1721
        %v1881 = vunpack.c.l.b16 %v1722
        %v1882 = vunpack.c.l.b16 %v1723
        %v1883 = vunpack.c.l.b16 %v1724
        %v1884 = vunpack.c.l.b16 %v1725
        %v1885 = vunpack.c.l.b16 %v1727
        %v1886 = vunpack.c.l.b16 %v1728
        %v1887 = vunpack.c.l.b16 %v1729
        %v1888 = vunpack.c.l.b16 %v1730
        %v1889 = vpack.c.b16 %v1811, %v1810
        %v1890 = vpack.c.b16 %v1813, %v1812
        %v1891 = vpack.c.b16 %v1815, %v1814
        %v1892 = vpack.c.b16 %v1817, %v1816
        %v1893 = vpack.c.b16 %v1819, %v1818
        %v1894 = vpack.c.b16 %v1821, %v1820
        %v1895 = vpack.c.b16 %v1823, %v1822
        %v1896 = vpack.c.b16 %v1825, %v1824
        %v1897 = vpack.c.b16 %v1827, %v1826
        %v1898 = vpack.c.b16 %v1829, %v1828
        %v1899 = vpack.c.b16 %v1831, %v1830
        %v1900 = vpack.c.b16 %v1833, %v1832
        %v1901 = vpack.c.b16 %v1835, %v1834
        %v1902 = vpack.c.b16 %v1837, %v1836
        %v1903 = vpack.c.b16 %v1839, %v1838
        %v1904 = vpack.c.b16 %v1841, %v1840
        %v1905 = vpack.c.b16 %v1843, %v1842
        %v1906 = vpack.c.b16 %v1845, %v1844
        %v1907 = vpack.c.b16 %v1847, %v1846
        %v1908 = vpack.c.b16 %v1849, %v1848
        %v1909 = vpack.c.b16 %v1851, %v1850
        %v1910 = vpack.c.b16 %v1853, %v1852
        %v1911 = vpack.c.b16 %v1855, %v1854
        %v1912 = vpack.c.b16 %v1857, %v1856
        %v1913 = vpack.c.b16 %v1859, %v1858
        %v1914 = vpack.c.b16 %v1861, %v1860
        %v1915 = vpack.c.b16 %v1863, %v1862
        %v1916 = vpack.c.b16 %v1865, %v1864
        %v1917 = vpack.c.b16 %v1867, %v1866
        %v1918 = vpack.c.b16 %v1869, %v1868
        %v1919 = vpack.c.b16 %v1871, %v1870
        %v1920 = vpack.c.b16 %v1873, %v1872
        %v1921 = vpack.c.b16 %v1875, %v1874
        %v1922 = vpack.c.b16 %v1877, %v1876
        %v1923 = vpack.c.b16 %v1879, %v1878
        %v1924 = vpack.c.b16 %v1881, %v1880
        %v1925 = vpack.c.b16 %v1883, %v1882
        %v1926 = vpack.c.b16 %v1885, %v1884
        %v1927 = vpack.c.b16 %v1887, %v1886
        %v1928 = vpack.c.b16 %v1888, %v1888
        %vm1929 = vcmask 1046528
        %v1930 = vrot.slane %v1889, 1
        %v1931 = vrot.slane %v1890, 1
        %v1932 = vsel %vm1929, %v1930, %v1931
        %v1933 = vrot.slane %v1891, 1
        %v1934 = vsel %vm1929, %v1931, %v1933
        %v1935 = vrot.slane %v1892, 1
        %v1936 = vsel %vm1929, %v1933, %v1935
        %v1937 = vrot.slane %v1893, 1
        %v1938 = vsel %vm1929, %v1935, %v1937
        %v1939 = vrot.slane %v1894, 1
        %v1940 = vsel %vm1929, %v1937, %v1939
        %v1941 = vrot.slane %v1895, 1
        %v1942 = vsel %vm1929, %v1939, %v1941
        %v1943 = vrot.slane %v1896, 1
        %v1944 = vsel %vm1929, %v1941, %v1943
        %v1945 = vrot.slane %v1897, 1
        %v1946 = vsel %vm1929, %v1943, %v1945
        %v1947 = vrot.slane %v1898, 1
        %v1948 = vsel %vm1929, %v1945, %v1947
        %v1949 = vrot.slane %v1899, 1
        %v1950 = vsel %vm1929, %v1947, %v1949
        %v1951 = vrot.slane %v1900, 1
        %v1952 = vsel %vm1929, %v1949, %v1951
        %v1953 = vrot.slane %v1901, 1
        %v1954 = vsel %vm1929, %v1951, %v1953
        %v1955 = vrot.slane %v1902, 1
        %v1956 = vsel %vm1929, %v1953, %v1955
        %v1957 = vrot.slane %v1903, 1
        %v1958 = vsel %vm1929, %v1955, %v1957
        %v1959 = vrot.slane %v1904, 1
        %v1960 = vsel %vm1929, %v1957, %v1959
        %v1961 = vrot.slane %v1905, 1
        %v1962 = vsel %vm1929, %v1959, %v1961
        %v1963 = vrot.slane %v1906, 1
        %v1964 = vsel %vm1929, %v1961, %v1963
        %v1965 = vrot.slane %v1907, 1
        %v1966 = vsel %vm1929, %v1963, %v1965
        %v1967 = vrot.slane %v1908, 1
        %v1968 = vsel %vm1929, %v1965, %v1967
        %v1969 = vrot.slane %v1909, 1
        %v1970 = vsel %vm1929, %v1967, %v1969
        %v1971 = vrot.slane %v1910, 1
        %v1972 = vsel %vm1929, %v1969, %v1971
        %v1973 = vrot.slane %v1911, 1
        %v1974 = vsel %vm1929, %v1971, %v1973
        %v1975 = vrot.slane %v1912, 1
        %v1976 = vsel %vm1929, %v1973, %v1975
        %v1977 = vrot.slane %v1913, 1
        %v1978 = vsel %vm1929, %v1975, %v1977
        %v1979 = vrot.slane %v1914, 1
        %v1980 = vsel %vm1929, %v1977, %v1979
        %v1981 = vrot.slane %v1915, 1
        %v1982 = vsel %vm1929, %v1979, %v1981
        %v1983 = vrot.slane %v1916, 1
        %v1984 = vsel %vm1929, %v1981, %v1983
        %v1985 = vrot.slane %v1917, 1
        %v1986 = vsel %vm1929, %v1983, %v1985
        %v1987 = vrot.slane %v1918, 1
        %v1988 = vsel %vm1929, %v1985, %v1987
        %v1989 = vrot.slane %v1919, 1
        %v1990 = vsel %vm1929, %v1987, %v1989
        %v1991 = vrot.slane %v1920, 1
        %v1992 = vsel %vm1929, %v1989, %v1991
        %v1993 = vrot.slane %v1921, 1
        %v1994 = vsel %vm1929, %v1991, %v1993
        %v1995 = vrot.slane %v1922, 1
        %v1996 = vsel %vm1929, %v1993, %v1995
        %v1997 = vrot.slane %v1923, 1
        %v1998 = vsel %vm1929, %v1995, %v1997
        %v1999 = vrot.slane %v1924, 1
        %v2000 = vsel %vm1929, %v1997, %v1999
        %v2001 = vrot.slane %v1925, 1
        %v2002 = vsel %vm1929, %v1999, %v2001
        %v2003 = vrot.slane %v1926, 1
        %v2004 = vsel %vm1929, %v2001, %v2003
        %v2005 = vrot.slane %v1927, 1
        %v2006 = vsel %vm1929, %v2003, %v2005
        %v2007 = vrot.slane %v1928, 1
        %v2008 = vsel %vm1929, %v2005, %v2007
        %v2021 = vunpack.c.l.b16 %v284
        %v2022 = vunpack.c.l.b16 %v285
        %v2023 = vunpack.c.l.b16 %v286
        %v2024 = vunpack.c.l.b16 %v287
        %v2025 = vunpack.c.l.b16 %v288
        %v2026 = vunpack.c.l.b16 %v289
        %v2027 = vunpack.c.l.b16 %v290
        %v2028 = vunpack.c.l.b16 %v291
        %v2029 = vunpack.c.l.b16 %v292
        %v2030 = vunpack.c.l.b16 %v293
        %v2031 = vunpack.c.l.b16 %v294
        %v2032 = vunpack.c.l.b16 %v295
        %v2033 = vpack.c.b16 %v2022, %v2021
        %v2034 = vpack.c.b16 %v2024, %v2023
        %v2035 = vpack.c.b16 %v2026, %v2025
        %v2036 = vpack.c.b16 %v2028, %v2027
        %v2037 = vpack.c.b16 %v2030, %v2029
        %v2038 = vpack.c.b16 %v2032, %v2031
        %vm2045 = vcmask 785408
        %v2047 = vsel %vm2045, %v1932, 0
        %v2050 = vsel %vm2045, %v1934, 0
        %v2053 = vsel %vm2045, %v1936, 0
        %v2056 = vsel %vm2045, %v1938, 0
        %v2059 = vsel %vm2045, %v1940, 0
        %v2062 = vsel %vm2045, %v1942, 0
        %v2065 = vsel %vm2045, %v1944, 0
        %v2068 = vsel %vm2045, %v1946, 0
        %v2071 = vsel %vm2045, %v1948, 0
        %v2074 = vsel %vm2045, %v1950, 0
        %v2077 = vsel %vm2045, %v1952, 0
        %v2080 = vsel %vm2045, %v1954, 0
        %v2083 = vsel %vm2045, %v1956, 0
        %v2086 = vsel %vm2045, %v1958, 0
        %v2089 = vsel %vm2045, %v1960, 0
        %v2092 = vsel %vm2045, %v1962, 0
        %v2095 = vsel %vm2045, %v1964, 0
        %v2098 = vsel %vm2045, %v1966, 0
        %v2101 = vsel %vm2045, %v1968, 0
        %v2104 = vsel %vm2045, %v1970, 0
        %v2107 = vsel %vm2045, %v1972, 0
        %v2110 = vsel %vm2045, %v1974, 0
        %v2113 = vsel %vm2045, %v1976, 0
        %v2116 = vsel %vm2045, %v1978, 0
        %v2119 = vsel %vm2045, %v1980, 0
        %v2122 = vsel %vm2045, %v1982, 0
        %v2125 = vsel %vm2045, %v1984, 0
        %v2128 = vsel %vm2045, %v1986, 0
        %v2131 = vsel %vm2045, %v1988, 0
        %v2134 = vsel %vm2045, %v1990, 0
        %v2137 = vsel %vm2045, %v1992, 0
        %v2140 = vsel %vm2045, %v1994, 0
        %v2143 = vsel %vm2045, %v1996, 0
        %v2146 = vsel %vm2045, %v1998, 0
        %v2149 = vsel %vm2045, %v2000, 0
        %v2152 = vsel %vm2045, %v2002, 0
        %v2155 = vsel %vm2045, %v2004, 0
        %v2158 = vsel %vm2045, %v2006, 0
        %v2161 = vsel %vm2045, %v2008, 0
        %2163 = vmatprep.subr.bf16.mxu0 0
        %2164 = vmatpush1.bf16.msra.mxu0 0
        %2165 = vmatprep.subr.bf16.mxu0 0
        %2166 = vmatpush1.bf16.msra.mxu0 0
        %2167 = vmatprep.subr.bf16.mxu0 0
        %2168 = vmatpush1.bf16.msra.mxu0 %v2038
        %2169 = vmatprep.subr.bf16.mxu0 0
        %2170 = vmatpush1.bf16.msra.mxu0 %v2037
        %2171 = vmatprep.subr.bf16.mxu0 0
        %2172 = vmatpush1.bf16.msra.mxu0 %v2036
        %2173 = vmatprep.subr.bf16.mxu0 0
        %2174 = vmatpush1.bf16.msra.mxu0 %v2035
        %2175 = vmatprep.subr.bf16.mxu0 0
        %2176 = vmatpush1.bf16.msra.mxu0 %v2034
        %2177 = vmatprep.subr.bf16.mxu0 0
        %2178 = vmatpush1.bf16.msra.mxu0 %v2033
        %2179 = vmatprep.subr.bf16.mxu0 0
        %2180 = vmatpush2.bf16.msra.mxu0 0
        %2181 = vmatprep.subr.bf16.mxu0 0
        %2182 = vmatpush2.bf16.msra.mxu0 0
        %2183 = vmatprep.subr.bf16.mxu0 0
        %2184 = vmatpush2.bf16.msra.mxu0 0
        %2185 = vmatprep.subr.bf16.mxu0 0
        %2186 = vmatpush2.bf16.msra.mxu0 0
        %2187 = vmatprep.subr.bf16.mxu0 0
        %2188 = vmatpush2.bf16.msra.mxu0 0
        %2189 = vmatprep.subr.bf16.mxu0 0
        %2190 = vmatpush2.bf16.msra.mxu0 0
        %2191 = vmatprep.subr.bf16.mxu0 0
        %2192 = vmatpush2.bf16.msra.mxu0 0
        %2193 = vmatprep.subr.bf16.mxu0 0
        %2194 = vmatpush2.bf16.msra.mxu0 0
        %2195 = vmatprep.mubr.bf16.mxu0 0
        %2196 = vmatmul.mubr.bf16.gmra.mxu0 %v2047
        %v2197 = vpop.f32.mrf.mxu0
        %v2198 = vadd.f32 0.0, %v2197
        %v2199 = vpop.f32.mrf.mxu0
        %v2200 = vpop.f32.mrf.mxu0
        %v2201 = vadd.f32 0.0, %v2200
        %v2202 = vpop.f32.mrf.mxu0
        %2203 = vmatprep.mubr.bf16.mxu0 0
        %2204 = vmatmul.mubr.bf16.gmra.mxu0 %v2050
        %v2205 = vpop.f32.mrf.mxu0
        %v2206 = vadd.f32 0.0, %v2205
        %v2207 = vpop.f32.mrf.mxu0
        %v2208 = vpop.f32.mrf.mxu0
        %v2209 = vadd.f32 0.0, %v2208
        %v2210 = vpop.f32.mrf.mxu0
        %2211 = vmatprep.mubr.bf16.mxu0 0
        %2212 = vmatmul.mubr.bf16.gmra.mxu0 %v2053
        %v2213 = vpop.f32.mrf.mxu0
        %v2214 = vadd.f32 0.0, %v2213
        %v2215 = vpop.f32.mrf.mxu0
        %v2216 = vpop.f32.mrf.mxu0
        %v2217 = vadd.f32 0.0, %v2216
        %v2218 = vpop.f32.mrf.mxu0
        %2219 = vmatprep.mubr.bf16.mxu0 0
        %2220 = vmatmul.mubr.bf16.gmra.mxu0 %v2056
        %v2221 = vpop.f32.mrf.mxu0
        %v2222 = vadd.f32 0.0, %v2221
        %v2223 = vpop.f32.mrf.mxu0
        %v2224 = vpop.f32.mrf.mxu0
        %v2225 = vadd.f32 0.0, %v2224
        %v2226 = vpop.f32.mrf.mxu0
        %2227 = vmatprep.mubr.bf16.mxu0 0
        %2228 = vmatmul.mubr.bf16.gmra.mxu0 %v2059
        %v2229 = vpop.f32.mrf.mxu0
        %v2230 = vadd.f32 0.0, %v2229
        %v2231 = vpop.f32.mrf.mxu0
        %v2232 = vpop.f32.mrf.mxu0
        %v2233 = vadd.f32 0.0, %v2232
        %v2234 = vpop.f32.mrf.mxu0
        %2235 = vmatprep.mubr.bf16.mxu0 0
        %2236 = vmatmul.mubr.bf16.gmra.mxu0 %v2062
        %v2237 = vpop.f32.mrf.mxu0
        %v2238 = vadd.f32 0.0, %v2237
        %v2239 = vpop.f32.mrf.mxu0
        %v2240 = vpop.f32.mrf.mxu0
        %v2241 = vadd.f32 0.0, %v2240
        %v2242 = vpop.f32.mrf.mxu0
        %2243 = vmatprep.mubr.bf16.mxu0 0
        %2244 = vmatmul.mubr.bf16.gmra.mxu0 %v2065
        %v2245 = vpop.f32.mrf.mxu0
        %v2246 = vadd.f32 0.0, %v2245
        %v2247 = vpop.f32.mrf.mxu0
        %v2248 = vpop.f32.mrf.mxu0
        %v2249 = vadd.f32 0.0, %v2248
        %v2250 = vpop.f32.mrf.mxu0
        %2251 = vmatprep.mubr.bf16.mxu0 0
        %2252 = vmatmul.mubr.bf16.gmra.mxu0 %v2068
        %v2253 = vpop.f32.mrf.mxu0
        %v2254 = vadd.f32 0.0, %v2253
        %v2255 = vpop.f32.mrf.mxu0
        %v2256 = vpop.f32.mrf.mxu0
        %v2257 = vadd.f32 0.0, %v2256
        %v2258 = vpop.f32.mrf.mxu0
        %2259 = vmatprep.mubr.bf16.mxu0 0
        %2260 = vmatmul.mubr.bf16.gmra.mxu0 %v2071
        %v2261 = vpop.f32.mrf.mxu0
        %v2262 = vadd.f32 0.0, %v2261
        %v2263 = vpop.f32.mrf.mxu0
        %v2264 = vpop.f32.mrf.mxu0
        %v2265 = vadd.f32 0.0, %v2264
        %v2266 = vpop.f32.mrf.mxu0
        %2267 = vmatprep.mubr.bf16.mxu0 0
        %2268 = vmatmul.mubr.bf16.gmra.mxu0 %v2074
        %v2269 = vpop.f32.mrf.mxu0
        %v2270 = vadd.f32 0.0, %v2269
        %v2271 = vpop.f32.mrf.mxu0
        %v2272 = vpop.f32.mrf.mxu0
        %v2273 = vadd.f32 0.0, %v2272
        %v2274 = vpop.f32.mrf.mxu0
        %2275 = vmatprep.mubr.bf16.mxu0 0
        %2276 = vmatmul.mubr.bf16.gmra.mxu0 %v2077
        %v2277 = vpop.f32.mrf.mxu0
        %v2278 = vadd.f32 0.0, %v2277
        %v2279 = vpop.f32.mrf.mxu0
        %v2280 = vpop.f32.mrf.mxu0
        %v2281 = vadd.f32 0.0, %v2280
        %v2282 = vpop.f32.mrf.mxu0
        %2283 = vmatprep.mubr.bf16.mxu0 0
        %2284 = vmatmul.mubr.bf16.gmra.mxu0 %v2080
        %v2285 = vpop.f32.mrf.mxu0
        %v2286 = vadd.f32 0.0, %v2285
        %v2287 = vpop.f32.mrf.mxu0
        %v2288 = vpop.f32.mrf.mxu0
        %v2289 = vadd.f32 0.0, %v2288
        %v2290 = vpop.f32.mrf.mxu0
        %2291 = vmatprep.mubr.bf16.mxu0 0
        %2292 = vmatmul.mubr.bf16.gmra.mxu0 %v2083
        %v2293 = vpop.f32.mrf.mxu0
        %v2294 = vadd.f32 0.0, %v2293
        %v2295 = vpop.f32.mrf.mxu0
        %v2296 = vpop.f32.mrf.mxu0
        %v2297 = vadd.f32 0.0, %v2296
        %v2298 = vpop.f32.mrf.mxu0
        %2299 = vmatprep.mubr.bf16.mxu0 0
        %2300 = vmatmul.mubr.bf16.gmra.mxu0 %v2086
        %v2301 = vpop.f32.mrf.mxu0
        %v2302 = vadd.f32 0.0, %v2301
        %v2303 = vpop.f32.mrf.mxu0
        %v2304 = vpop.f32.mrf.mxu0
        %v2305 = vadd.f32 0.0, %v2304
        %v2306 = vpop.f32.mrf.mxu0
        %2307 = vmatprep.mubr.bf16.mxu0 0
        %2308 = vmatmul.mubr.bf16.gmra.mxu0 %v2089
        %v2309 = vpop.f32.mrf.mxu0
        %v2310 = vadd.f32 0.0, %v2309
        %v2311 = vpop.f32.mrf.mxu0
        %v2312 = vpop.f32.mrf.mxu0
        %v2313 = vadd.f32 0.0, %v2312
        %v2314 = vpop.f32.mrf.mxu0
        %2315 = vmatprep.mubr.bf16.mxu0 0
        %2316 = vmatmul.mubr.bf16.gmra.mxu0 %v2092
        %v2317 = vpop.f32.mrf.mxu0
        %v2318 = vadd.f32 0.0, %v2317
        %v2319 = vpop.f32.mrf.mxu0
        %v2320 = vpop.f32.mrf.mxu0
        %v2321 = vadd.f32 0.0, %v2320
        %v2322 = vpop.f32.mrf.mxu0
        %2323 = vmatprep.mubr.bf16.mxu0 0
        %2324 = vmatmul.mubr.bf16.gmra.mxu0 %v2095
        %v2325 = vpop.f32.mrf.mxu0
        %v2326 = vadd.f32 0.0, %v2325
        %v2327 = vpop.f32.mrf.mxu0
        %v2328 = vpop.f32.mrf.mxu0
        %v2329 = vadd.f32 0.0, %v2328
        %v2330 = vpop.f32.mrf.mxu0
        %2331 = vmatprep.mubr.bf16.mxu0 0
        %2332 = vmatmul.mubr.bf16.gmra.mxu0 %v2098
        %v2333 = vpop.f32.mrf.mxu0
        %v2334 = vadd.f32 0.0, %v2333
        %v2335 = vpop.f32.mrf.mxu0
        %v2336 = vpop.f32.mrf.mxu0
        %v2337 = vadd.f32 0.0, %v2336
        %v2338 = vpop.f32.mrf.mxu0
        %2339 = vmatprep.mubr.bf16.mxu0 0
        %2340 = vmatmul.mubr.bf16.gmra.mxu0 %v2101
        %v2341 = vpop.f32.mrf.mxu0
        %v2342 = vadd.f32 0.0, %v2341
        %v2343 = vpop.f32.mrf.mxu0
        %v2344 = vpop.f32.mrf.mxu0
        %v2345 = vadd.f32 0.0, %v2344
        %v2346 = vpop.f32.mrf.mxu0
        %2347 = vmatprep.mubr.bf16.mxu0 0
        %2348 = vmatmul.mubr.bf16.gmra.mxu0 %v2104
        %v2349 = vpop.f32.mrf.mxu0
        %v2350 = vadd.f32 0.0, %v2349
        %v2351 = vpop.f32.mrf.mxu0
        %v2352 = vpop.f32.mrf.mxu0
        %v2353 = vadd.f32 0.0, %v2352
        %v2354 = vpop.f32.mrf.mxu0
        %2355 = vmatprep.mubr.bf16.mxu0 0
        %2356 = vmatmul.mubr.bf16.gmra.mxu0 %v2107
        %v2357 = vpop.f32.mrf.mxu0
        %v2358 = vadd.f32 0.0, %v2357
        %v2359 = vpop.f32.mrf.mxu0
        %v2360 = vpop.f32.mrf.mxu0
        %v2361 = vadd.f32 0.0, %v2360
        %v2362 = vpop.f32.mrf.mxu0
        %2363 = vmatprep.mubr.bf16.mxu0 0
        %2364 = vmatmul.mubr.bf16.gmra.mxu0 %v2110
        %v2365 = vpop.f32.mrf.mxu0
        %v2366 = vadd.f32 0.0, %v2365
        %v2367 = vpop.f32.mrf.mxu0
        %v2368 = vpop.f32.mrf.mxu0
        %v2369 = vadd.f32 0.0, %v2368
        %v2370 = vpop.f32.mrf.mxu0
        %2371 = vmatprep.mubr.bf16.mxu0 0
        %2372 = vmatmul.mubr.bf16.gmra.mxu0 %v2113
        %v2373 = vpop.f32.mrf.mxu0
        %v2374 = vadd.f32 0.0, %v2373
        %v2375 = vpop.f32.mrf.mxu0
        %v2376 = vpop.f32.mrf.mxu0
        %v2377 = vadd.f32 0.0, %v2376
        %v2378 = vpop.f32.mrf.mxu0
        %2379 = vmatprep.mubr.bf16.mxu0 0
        %2380 = vmatmul.mubr.bf16.gmra.mxu0 %v2116
        %v2381 = vpop.f32.mrf.mxu0
        %v2382 = vadd.f32 0.0, %v2381
        %v2383 = vpop.f32.mrf.mxu0
        %v2384 = vpop.f32.mrf.mxu0
        %v2385 = vadd.f32 0.0, %v2384
        %v2386 = vpop.f32.mrf.mxu0
        %2387 = vmatprep.mubr.bf16.mxu0 0
        %2388 = vmatmul.mubr.bf16.gmra.mxu0 %v2119
        %v2389 = vpop.f32.mrf.mxu0
        %v2390 = vadd.f32 0.0, %v2389
        %v2391 = vpop.f32.mrf.mxu0
        %v2392 = vpop.f32.mrf.mxu0
        %v2393 = vadd.f32 0.0, %v2392
        %v2394 = vpop.f32.mrf.mxu0
        %2395 = vmatprep.mubr.bf16.mxu0 0
        %2396 = vmatmul.mubr.bf16.gmra.mxu0 %v2122
        %v2397 = vpop.f32.mrf.mxu0
        %v2398 = vadd.f32 0.0, %v2397
        %v2399 = vpop.f32.mrf.mxu0
        %v2400 = vpop.f32.mrf.mxu0
        %v2401 = vadd.f32 0.0, %v2400
        %v2402 = vpop.f32.mrf.mxu0
        %2403 = vmatprep.mubr.bf16.mxu0 0
        %2404 = vmatmul.mubr.bf16.gmra.mxu0 %v2125
        %v2405 = vpop.f32.mrf.mxu0
        %v2406 = vadd.f32 0.0, %v2405
        %v2407 = vpop.f32.mrf.mxu0
        %v2408 = vpop.f32.mrf.mxu0
        %v2409 = vadd.f32 0.0, %v2408
        %v2410 = vpop.f32.mrf.mxu0
        %2411 = vmatprep.mubr.bf16.mxu0 0
        %2412 = vmatmul.mubr.bf16.gmra.mxu0 %v2128
        %v2413 = vpop.f32.mrf.mxu0
        %v2414 = vadd.f32 0.0, %v2413
        %v2415 = vpop.f32.mrf.mxu0
        %v2416 = vpop.f32.mrf.mxu0
        %v2417 = vadd.f32 0.0, %v2416
        %v2418 = vpop.f32.mrf.mxu0
        %2419 = vmatprep.mubr.bf16.mxu0 0
        %2420 = vmatmul.mubr.bf16.gmra.mxu0 %v2131
        %v2421 = vpop.f32.mrf.mxu0
        %v2422 = vadd.f32 0.0, %v2421
        %v2423 = vpop.f32.mrf.mxu0
        %v2424 = vpop.f32.mrf.mxu0
        %v2425 = vadd.f32 0.0, %v2424
        %v2426 = vpop.f32.mrf.mxu0
        %2427 = vmatprep.mubr.bf16.mxu0 0
        %2428 = vmatmul.mubr.bf16.gmra.mxu0 %v2134
        %v2429 = vpop.f32.mrf.mxu0
        %v2430 = vadd.f32 0.0, %v2429
        %v2431 = vpop.f32.mrf.mxu0
        %v2432 = vpop.f32.mrf.mxu0
        %v2433 = vadd.f32 0.0, %v2432
        %v2434 = vpop.f32.mrf.mxu0
        %2435 = vmatprep.mubr.bf16.mxu0 0
        %2436 = vmatmul.mubr.bf16.gmra.mxu0 %v2137
        %v2437 = vpop.f32.mrf.mxu0
        %v2438 = vadd.f32 0.0, %v2437
        %v2439 = vpop.f32.mrf.mxu0
        %v2440 = vpop.f32.mrf.mxu0
        %v2441 = vadd.f32 0.0, %v2440
        %v2442 = vpop.f32.mrf.mxu0
        %2443 = vmatprep.mubr.bf16.mxu0 0
        %2444 = vmatmul.mubr.bf16.gmra.mxu0 %v2140
        %v2445 = vpop.f32.mrf.mxu0
        %v2446 = vadd.f32 0.0, %v2445
        %v2447 = vpop.f32.mrf.mxu0
        %v2448 = vpop.f32.mrf.mxu0
        %v2449 = vadd.f32 0.0, %v2448
        %v2450 = vpop.f32.mrf.mxu0
        %2451 = vmatprep.mubr.bf16.mxu0 0
        %2452 = vmatmul.mubr.bf16.gmra.mxu0 %v2143
        %v2453 = vpop.f32.mrf.mxu0
        %v2454 = vadd.f32 0.0, %v2453
        %v2455 = vpop.f32.mrf.mxu0
        %v2456 = vpop.f32.mrf.mxu0
        %v2457 = vadd.f32 0.0, %v2456
        %v2458 = vpop.f32.mrf.mxu0
        %2459 = vmatprep.mubr.bf16.mxu0 0
        %2460 = vmatmul.mubr.bf16.gmra.mxu0 %v2146
        %v2461 = vpop.f32.mrf.mxu0
        %v2462 = vadd.f32 0.0, %v2461
        %v2463 = vpop.f32.mrf.mxu0
        %v2464 = vpop.f32.mrf.mxu0
        %v2465 = vadd.f32 0.0, %v2464
        %v2466 = vpop.f32.mrf.mxu0
        %2467 = vmatprep.mubr.bf16.mxu0 0
        %2468 = vmatmul.mubr.bf16.gmra.mxu0 %v2149
        %v2469 = vpop.f32.mrf.mxu0
        %v2470 = vadd.f32 0.0, %v2469
        %v2471 = vpop.f32.mrf.mxu0
        %v2472 = vpop.f32.mrf.mxu0
        %v2473 = vadd.f32 0.0, %v2472
        %v2474 = vpop.f32.mrf.mxu0
        %2475 = vmatprep.mubr.bf16.mxu0 0
        %2476 = vmatmul.mubr.bf16.gmra.mxu0 %v2152
        %v2477 = vpop.f32.mrf.mxu0
        %v2478 = vadd.f32 0.0, %v2477
        %v2479 = vpop.f32.mrf.mxu0
        %v2480 = vpop.f32.mrf.mxu0
        %v2481 = vadd.f32 0.0, %v2480
        %v2482 = vpop.f32.mrf.mxu0
        %2483 = vmatprep.mubr.bf16.mxu0 0
        %2484 = vmatmul.mubr.bf16.gmra.mxu0 %v2155
        %v2485 = vpop.f32.mrf.mxu0
        %v2486 = vadd.f32 0.0, %v2485
        %v2487 = vpop.f32.mrf.mxu0
        %v2488 = vpop.f32.mrf.mxu0
        %v2489 = vadd.f32 0.0, %v2488
        %v2490 = vpop.f32.mrf.mxu0
        %2491 = vmatprep.mubr.bf16.mxu0 0
        %2492 = vmatmul.mubr.bf16.gmra.mxu0 %v2158
        %v2493 = vpop.f32.mrf.mxu0
        %v2494 = vadd.f32 0.0, %v2493
        %v2495 = vpop.f32.mrf.mxu0
        %v2496 = vpop.f32.mrf.mxu0
        %v2497 = vadd.f32 0.0, %v2496
        %v2498 = vpop.f32.mrf.mxu0
        %2499 = vmatprep.mubr.bf16.mxu0 0
        %2500 = vmatmul.mubr.bf16.gmra.mxu0 %v2161
        %v2501 = vpop.f32.mrf.mxu0
        %v2502 = vadd.f32 0.0, %v2501
        %v2503 = vpop.f32.mrf.mxu0
        %v2504 = vpop.f32.mrf.mxu0
        %v2505 = vadd.f32 0.0, %v2504
        %v2506 = vpop.f32.mrf.mxu0
        %2507 = vdwg.mxu0
        %v2512 = vunpack.c.l.b16 %v1648
        %v2513 = vunpack.c.l.b16 %v1649
        %v2514 = vunpack.c.l.b16 %v1650
        %v2515 = vunpack.c.l.b16 %v1651
        %v2516 = vpack.c.b16 %v2513, %v2512
        %v2517 = vpack.c.b16 %v2515, %v2514
        %v2518 = vpack.c.b16 %v1812, %v1811
        %v2519 = vpack.c.b16 %v1814, %v1813
        %v2520 = vpack.c.b16 %v1816, %v1815
        %v2521 = vpack.c.b16 %v1818, %v1817
        %v2522 = vpack.c.b16 %v1820, %v1819
        %v2523 = vpack.c.b16 %v1822, %v1821
        %v2524 = vpack.c.b16 %v1824, %v1823
        %v2525 = vpack.c.b16 %v1826, %v1825
        %v2526 = vpack.c.b16 %v1828, %v1827
        %v2527 = vpack.c.b16 %v1830, %v1829
        %v2528 = vpack.c.b16 %v1832, %v1831
        %v2529 = vpack.c.b16 %v1834, %v1833
        %v2530 = vpack.c.b16 %v1836, %v1835
        %v2531 = vpack.c.b16 %v1838, %v1837
        %v2532 = vpack.c.b16 %v1840, %v1839
        %v2533 = vpack.c.b16 %v1842, %v1841
        %v2534 = vpack.c.b16 %v1844, %v1843
        %v2535 = vpack.c.b16 %v1846, %v1845
        %v2536 = vpack.c.b16 %v1848, %v1847
        %v2537 = vpack.c.b16 %v1850, %v1849
        %v2538 = vpack.c.b16 %v1852, %v1851
        %v2539 = vpack.c.b16 %v1854, %v1853
        %v2540 = vpack.c.b16 %v1856, %v1855
        %v2541 = vpack.c.b16 %v1858, %v1857
        %v2542 = vpack.c.b16 %v1860, %v1859
        %v2543 = vpack.c.b16 %v1862, %v1861
        %v2544 = vpack.c.b16 %v1864, %v1863
        %v2545 = vpack.c.b16 %v1866, %v1865
        %v2546 = vpack.c.b16 %v1868, %v1867
        %v2547 = vpack.c.b16 %v1870, %v1869
        %v2548 = vpack.c.b16 %v1872, %v1871
        %v2549 = vpack.c.b16 %v1874, %v1873
        %v2550 = vpack.c.b16 %v1876, %v1875
        %v2551 = vpack.c.b16 %v1878, %v1877
        %v2552 = vpack.c.b16 %v1880, %v1879
        %v2553 = vpack.c.b16 %v1882, %v1881
        %v2554 = vpack.c.b16 %v1884, %v1883
        %v2567 = vunpack.c.l.b16 %v272
        %v2568 = vunpack.c.l.b16 %v273
        %v2569 = vunpack.c.l.b16 %v274
        %v2570 = vunpack.c.l.b16 %v275
        %v2571 = vunpack.c.l.b16 %v276
        %v2572 = vunpack.c.l.b16 %v277
        %v2573 = vunpack.c.l.b16 %v278
        %v2574 = vunpack.c.l.b16 %v279
        %v2575 = vunpack.c.l.b16 %v280
        %v2576 = vunpack.c.l.b16 %v281
        %v2577 = vunpack.c.l.b16 %v282
        %v2578 = vunpack.c.l.b16 %v283
        %v2579 = vpack.c.b16 %v2568, %v2567
        %v2580 = vpack.c.b16 %v2570, %v2569
        %v2581 = vpack.c.b16 %v2572, %v2571
        %v2582 = vpack.c.b16 %v2574, %v2573
        %v2583 = vpack.c.b16 %v2576, %v2575
        %v2584 = vpack.c.b16 %v2578, %v2577
        %v2592 = vsel %vm2045, %v2516, 0
        %v2595 = vsel %vm2045, %v2517, 0
        %v2598 = vsel %vm2045, %v2518, 0
        %v2601 = vsel %vm2045, %v2519, 0
        %v2604 = vsel %vm2045, %v2520, 0
        %v2607 = vsel %vm2045, %v2521, 0
        %v2610 = vsel %vm2045, %v2522, 0
        %v2613 = vsel %vm2045, %v2523, 0
        %v2616 = vsel %vm2045, %v2524, 0
        %v2619 = vsel %vm2045, %v2525, 0
        %v2622 = vsel %vm2045, %v2526, 0
        %v2625 = vsel %vm2045, %v2527, 0
        %v2628 = vsel %vm2045, %v2528, 0
        %v2631 = vsel %vm2045, %v2529, 0
        %v2634 = vsel %vm2045, %v2530, 0
        %v2637 = vsel %vm2045, %v2531, 0
        %v2640 = vsel %vm2045, %v2532, 0
        %v2643 = vsel %vm2045, %v2533, 0
        %v2646 = vsel %vm2045, %v2534, 0
        %v2649 = vsel %vm2045, %v2535, 0
        %v2652 = vsel %vm2045, %v2536, 0
        %v2655 = vsel %vm2045, %v2537, 0
        %v2658 = vsel %vm2045, %v2538, 0
        %v2661 = vsel %vm2045, %v2539, 0
        %v2664 = vsel %vm2045, %v2540, 0
        %v2667 = vsel %vm2045, %v2541, 0
        %v2670 = vsel %vm2045, %v2542, 0
        %v2673 = vsel %vm2045, %v2543, 0
        %v2676 = vsel %vm2045, %v2544, 0
        %v2679 = vsel %vm2045, %v2545, 0
        %v2682 = vsel %vm2045, %v2546, 0
        %v2685 = vsel %vm2045, %v2547, 0
        %v2688 = vsel %vm2045, %v2548, 0
        %v2691 = vsel %vm2045, %v2549, 0
        %v2694 = vsel %vm2045, %v2550, 0
        %v2697 = vsel %vm2045, %v2551, 0
        %v2700 = vsel %vm2045, %v2552, 0
        %v2703 = vsel %vm2045, %v2553, 0
        %v2706 = vsel %vm2045, %v2554, 0
        %2708 = vmatprep.subr.bf16.mxu0 0
        %2709 = vmatpush1.bf16.msra.mxu0 0
        %2710 = vmatprep.subr.bf16.mxu0 0
        %2711 = vmatpush1.bf16.msra.mxu0 0
        %2712 = vmatprep.subr.bf16.mxu0 0
        %2713 = vmatpush1.bf16.msra.mxu0 %v2584
        %2714 = vmatprep.subr.bf16.mxu0 0
        %2715 = vmatpush1.bf16.msra.mxu0 %v2583
        %2716 = vmatprep.subr.bf16.mxu0 0
        %2717 = vmatpush1.bf16.msra.mxu0 %v2582
        %2718 = vmatprep.subr.bf16.mxu0 0
        %2719 = vmatpush1.bf16.msra.mxu0 %v2581
        %2720 = vmatprep.subr.bf16.mxu0 0
        %2721 = vmatpush1.bf16.msra.mxu0 %v2580
        %2722 = vmatprep.subr.bf16.mxu0 0
        %2723 = vmatpush1.bf16.msra.mxu0 %v2579
        %2724 = vmatprep.subr.bf16.mxu0 0
        %2725 = vmatpush2.bf16.msra.mxu0 0
        %2726 = vmatprep.subr.bf16.mxu0 0
        %2727 = vmatpush2.bf16.msra.mxu0 0
        %2728 = vmatprep.subr.bf16.mxu0 0
        %2729 = vmatpush2.bf16.msra.mxu0 0
        %2730 = vmatprep.subr.bf16.mxu0 0
        %2731 = vmatpush2.bf16.msra.mxu0 0
        %2732 = vmatprep.subr.bf16.mxu0 0
        %2733 = vmatpush2.bf16.msra.mxu0 0
        %2734 = vmatprep.subr.bf16.mxu0 0
        %2735 = vmatpush2.bf16.msra.mxu0 0
        %2736 = vmatprep.subr.bf16.mxu0 0
        %2737 = vmatpush2.bf16.msra.mxu0 0
        %2738 = vmatprep.subr.bf16.mxu0 0
        %2739 = vmatpush2.bf16.msra.mxu0 0
        %2740 = vmatprep.mubr.bf16.mxu0 0
        %2741 = vmatmul.mubr.bf16.gmra.mxu0 %v2592
        %v2742 = vpop.f32.mrf.mxu0
        %v2743 = vadd.f32 %v2198, %v2742
        %v2744 = vpop.f32.mrf.mxu0
        %v2745 = vpop.f32.mrf.mxu0
        %v2746 = vadd.f32 %v2201, %v2745
        %v2747 = vpop.f32.mrf.mxu0
        %2748 = vmatprep.mubr.bf16.mxu0 0
        %2749 = vmatmul.mubr.bf16.gmra.mxu0 %v2595
        %v2750 = vpop.f32.mrf.mxu0
        %v2751 = vadd.f32 %v2206, %v2750
        %v2752 = vpop.f32.mrf.mxu0
        %v2753 = vpop.f32.mrf.mxu0
        %v2754 = vadd.f32 %v2209, %v2753
        %v2755 = vpop.f32.mrf.mxu0
        %2756 = vmatprep.mubr.bf16.mxu0 0
        %2757 = vmatmul.mubr.bf16.gmra.mxu0 %v2598
        %v2758 = vpop.f32.mrf.mxu0
        %v2759 = vadd.f32 %v2214, %v2758
        %v2760 = vpop.f32.mrf.mxu0
        %v2761 = vpop.f32.mrf.mxu0
        %v2762 = vadd.f32 %v2217, %v2761
        %v2763 = vpop.f32.mrf.mxu0
        %2764 = vmatprep.mubr.bf16.mxu0 0
        %2765 = vmatmul.mubr.bf16.gmra.mxu0 %v2601
        %v2766 = vpop.f32.mrf.mxu0
        %v2767 = vadd.f32 %v2222, %v2766
        %v2768 = vpop.f32.mrf.mxu0
        %v2769 = vpop.f32.mrf.mxu0
        %v2770 = vadd.f32 %v2225, %v2769
        %v2771 = vpop.f32.mrf.mxu0
        %2772 = vmatprep.mubr.bf16.mxu0 0
        %2773 = vmatmul.mubr.bf16.gmra.mxu0 %v2604
        %v2774 = vpop.f32.mrf.mxu0
        %v2775 = vadd.f32 %v2230, %v2774
        %v2776 = vpop.f32.mrf.mxu0
        %v2777 = vpop.f32.mrf.mxu0
        %v2778 = vadd.f32 %v2233, %v2777
        %v2779 = vpop.f32.mrf.mxu0
        %2780 = vmatprep.mubr.bf16.mxu0 0
        %2781 = vmatmul.mubr.bf16.gmra.mxu0 %v2607
        %v2782 = vpop.f32.mrf.mxu0
        %v2783 = vadd.f32 %v2238, %v2782
        %v2784 = vpop.f32.mrf.mxu0
        %v2785 = vpop.f32.mrf.mxu0
        %v2786 = vadd.f32 %v2241, %v2785
        %v2787 = vpop.f32.mrf.mxu0
        %2788 = vmatprep.mubr.bf16.mxu0 0
        %2789 = vmatmul.mubr.bf16.gmra.mxu0 %v2610
        %v2790 = vpop.f32.mrf.mxu0
        %v2791 = vadd.f32 %v2246, %v2790
        %v2792 = vpop.f32.mrf.mxu0
        %v2793 = vpop.f32.mrf.mxu0
        %v2794 = vadd.f32 %v2249, %v2793
        %v2795 = vpop.f32.mrf.mxu0
        %2796 = vmatprep.mubr.bf16.mxu0 0
        %2797 = vmatmul.mubr.bf16.gmra.mxu0 %v2613
        %v2798 = vpop.f32.mrf.mxu0
        %v2799 = vadd.f32 %v2254, %v2798
        %v2800 = vpop.f32.mrf.mxu0
        %v2801 = vpop.f32.mrf.mxu0
        %v2802 = vadd.f32 %v2257, %v2801
        %v2803 = vpop.f32.mrf.mxu0
        %2804 = vmatprep.mubr.bf16.mxu0 0
        %2805 = vmatmul.mubr.bf16.gmra.mxu0 %v2616
        %v2806 = vpop.f32.mrf.mxu0
        %v2807 = vadd.f32 %v2262, %v2806
        %v2808 = vpop.f32.mrf.mxu0
        %v2809 = vpop.f32.mrf.mxu0
        %v2810 = vadd.f32 %v2265, %v2809
        %v2811 = vpop.f32.mrf.mxu0
        %2812 = vmatprep.mubr.bf16.mxu0 0
        %2813 = vmatmul.mubr.bf16.gmra.mxu0 %v2619
        %v2814 = vpop.f32.mrf.mxu0
        %v2815 = vadd.f32 %v2270, %v2814
        %v2816 = vpop.f32.mrf.mxu0
        %v2817 = vpop.f32.mrf.mxu0
        %v2818 = vadd.f32 %v2273, %v2817
        %v2819 = vpop.f32.mrf.mxu0
        %2820 = vmatprep.mubr.bf16.mxu0 0
        %2821 = vmatmul.mubr.bf16.gmra.mxu0 %v2622
        %v2822 = vpop.f32.mrf.mxu0
        %v2823 = vadd.f32 %v2278, %v2822
        %v2824 = vpop.f32.mrf.mxu0
        %v2825 = vpop.f32.mrf.mxu0
        %v2826 = vadd.f32 %v2281, %v2825
        %v2827 = vpop.f32.mrf.mxu0
        %2828 = vmatprep.mubr.bf16.mxu0 0
        %2829 = vmatmul.mubr.bf16.gmra.mxu0 %v2625
        %v2830 = vpop.f32.mrf.mxu0
        %v2831 = vadd.f32 %v2286, %v2830
        %v2832 = vpop.f32.mrf.mxu0
        %v2833 = vpop.f32.mrf.mxu0
        %v2834 = vadd.f32 %v2289, %v2833
        %v2835 = vpop.f32.mrf.mxu0
        %2836 = vmatprep.mubr.bf16.mxu0 0
        %2837 = vmatmul.mubr.bf16.gmra.mxu0 %v2628
        %v2838 = vpop.f32.mrf.mxu0
        %v2839 = vadd.f32 %v2294, %v2838
        %v2840 = vpop.f32.mrf.mxu0
        %v2841 = vpop.f32.mrf.mxu0
        %v2842 = vadd.f32 %v2297, %v2841
        %v2843 = vpop.f32.mrf.mxu0
        %2844 = vmatprep.mubr.bf16.mxu0 0
        %2845 = vmatmul.mubr.bf16.gmra.mxu0 %v2631
        %v2846 = vpop.f32.mrf.mxu0
        %v2847 = vadd.f32 %v2302, %v2846
        %v2848 = vpop.f32.mrf.mxu0
        %v2849 = vpop.f32.mrf.mxu0
        %v2850 = vadd.f32 %v2305, %v2849
        %v2851 = vpop.f32.mrf.mxu0
        %2852 = vmatprep.mubr.bf16.mxu0 0
        %2853 = vmatmul.mubr.bf16.gmra.mxu0 %v2634
        %v2854 = vpop.f32.mrf.mxu0
        %v2855 = vadd.f32 %v2310, %v2854
        %v2856 = vpop.f32.mrf.mxu0
        %v2857 = vpop.f32.mrf.mxu0
        %v2858 = vadd.f32 %v2313, %v2857
        %v2859 = vpop.f32.mrf.mxu0
        %2860 = vmatprep.mubr.bf16.mxu0 0
        %2861 = vmatmul.mubr.bf16.gmra.mxu0 %v2637
        %v2862 = vpop.f32.mrf.mxu0
        %v2863 = vadd.f32 %v2318, %v2862
        %v2864 = vpop.f32.mrf.mxu0
        %v2865 = vpop.f32.mrf.mxu0
        %v2866 = vadd.f32 %v2321, %v2865
        %v2867 = vpop.f32.mrf.mxu0
        %2868 = vmatprep.mubr.bf16.mxu0 0
        %2869 = vmatmul.mubr.bf16.gmra.mxu0 %v2640
        %v2870 = vpop.f32.mrf.mxu0
        %v2871 = vadd.f32 %v2326, %v2870
        %v2872 = vpop.f32.mrf.mxu0
        %v2873 = vpop.f32.mrf.mxu0
        %v2874 = vadd.f32 %v2329, %v2873
        %v2875 = vpop.f32.mrf.mxu0
        %2876 = vmatprep.mubr.bf16.mxu0 0
        %2877 = vmatmul.mubr.bf16.gmra.mxu0 %v2643
        %v2878 = vpop.f32.mrf.mxu0
        %v2879 = vadd.f32 %v2334, %v2878
        %v2880 = vpop.f32.mrf.mxu0
        %v2881 = vpop.f32.mrf.mxu0
        %v2882 = vadd.f32 %v2337, %v2881
        %v2883 = vpop.f32.mrf.mxu0
        %2884 = vmatprep.mubr.bf16.mxu0 0
        %2885 = vmatmul.mubr.bf16.gmra.mxu0 %v2646
        %v2886 = vpop.f32.mrf.mxu0
        %v2887 = vadd.f32 %v2342, %v2886
        %v2888 = vpop.f32.mrf.mxu0
        %v2889 = vpop.f32.mrf.mxu0
        %v2890 = vadd.f32 %v2345, %v2889
        %v2891 = vpop.f32.mrf.mxu0
        %2892 = vmatprep.mubr.bf16.mxu0 0
        %2893 = vmatmul.mubr.bf16.gmra.mxu0 %v2649
        %v2894 = vpop.f32.mrf.mxu0
        %v2895 = vadd.f32 %v2350, %v2894
        %v2896 = vpop.f32.mrf.mxu0
        %v2897 = vpop.f32.mrf.mxu0
        %v2898 = vadd.f32 %v2353, %v2897
        %v2899 = vpop.f32.mrf.mxu0
        %2900 = vmatprep.mubr.bf16.mxu0 0
        %2901 = vmatmul.mubr.bf16.gmra.mxu0 %v2652
        %v2902 = vpop.f32.mrf.mxu0
        %v2903 = vadd.f32 %v2358, %v2902
        %v2904 = vpop.f32.mrf.mxu0
        %v2905 = vpop.f32.mrf.mxu0
        %v2906 = vadd.f32 %v2361, %v2905
        %v2907 = vpop.f32.mrf.mxu0
        %2908 = vmatprep.mubr.bf16.mxu0 0
        %2909 = vmatmul.mubr.bf16.gmra.mxu0 %v2655
        %v2910 = vpop.f32.mrf.mxu0
        %v2911 = vadd.f32 %v2366, %v2910
        %v2912 = vpop.f32.mrf.mxu0
        %v2913 = vpop.f32.mrf.mxu0
        %v2914 = vadd.f32 %v2369, %v2913
        %v2915 = vpop.f32.mrf.mxu0
        %2916 = vmatprep.mubr.bf16.mxu0 0
        %2917 = vmatmul.mubr.bf16.gmra.mxu0 %v2658
        %v2918 = vpop.f32.mrf.mxu0
        %v2919 = vadd.f32 %v2374, %v2918
        %v2920 = vpop.f32.mrf.mxu0
        %v2921 = vpop.f32.mrf.mxu0
        %v2922 = vadd.f32 %v2377, %v2921
        %v2923 = vpop.f32.mrf.mxu0
        %2924 = vmatprep.mubr.bf16.mxu0 0
        %2925 = vmatmul.mubr.bf16.gmra.mxu0 %v2661
        %v2926 = vpop.f32.mrf.mxu0
        %v2927 = vadd.f32 %v2382, %v2926
        %v2928 = vpop.f32.mrf.mxu0
        %v2929 = vpop.f32.mrf.mxu0
        %v2930 = vadd.f32 %v2385, %v2929
        %v2931 = vpop.f32.mrf.mxu0
        %2932 = vmatprep.mubr.bf16.mxu0 0
        %2933 = vmatmul.mubr.bf16.gmra.mxu0 %v2664
        %v2934 = vpop.f32.mrf.mxu0
        %v2935 = vadd.f32 %v2390, %v2934
        %v2936 = vpop.f32.mrf.mxu0
        %v2937 = vpop.f32.mrf.mxu0
        %v2938 = vadd.f32 %v2393, %v2937
        %v2939 = vpop.f32.mrf.mxu0
        %2940 = vmatprep.mubr.bf16.mxu0 0
        %2941 = vmatmul.mubr.bf16.gmra.mxu0 %v2667
        %v2942 = vpop.f32.mrf.mxu0
        %v2943 = vadd.f32 %v2398, %v2942
        %v2944 = vpop.f32.mrf.mxu0
        %v2945 = vpop.f32.mrf.mxu0
        %v2946 = vadd.f32 %v2401, %v2945
        %v2947 = vpop.f32.mrf.mxu0
        %2948 = vmatprep.mubr.bf16.mxu0 0
        %2949 = vmatmul.mubr.bf16.gmra.mxu0 %v2670
        %v2950 = vpop.f32.mrf.mxu0
        %v2951 = vadd.f32 %v2406, %v2950
        %v2952 = vpop.f32.mrf.mxu0
        %v2953 = vpop.f32.mrf.mxu0
        %v2954 = vadd.f32 %v2409, %v2953
        %v2955 = vpop.f32.mrf.mxu0
        %2956 = vmatprep.mubr.bf16.mxu0 0
        %2957 = vmatmul.mubr.bf16.gmra.mxu0 %v2673
        %v2958 = vpop.f32.mrf.mxu0
        %v2959 = vadd.f32 %v2414, %v2958
        %v2960 = vpop.f32.mrf.mxu0
        %v2961 = vpop.f32.mrf.mxu0
        %v2962 = vadd.f32 %v2417, %v2961
        %v2963 = vpop.f32.mrf.mxu0
        %2964 = vmatprep.mubr.bf16.mxu0 0
        %2965 = vmatmul.mubr.bf16.gmra.mxu0 %v2676
        %v2966 = vpop.f32.mrf.mxu0
        %v2967 = vadd.f32 %v2422, %v2966
        %v2968 = vpop.f32.mrf.mxu0
        %v2969 = vpop.f32.mrf.mxu0
        %v2970 = vadd.f32 %v2425, %v2969
        %v2971 = vpop.f32.mrf.mxu0
        %2972 = vmatprep.mubr.bf16.mxu0 0
        %2973 = vmatmul.mubr.bf16.gmra.mxu0 %v2679
        %v2974 = vpop.f32.mrf.mxu0
        %v2975 = vadd.f32 %v2430, %v2974
        %v2976 = vpop.f32.mrf.mxu0
        %v2977 = vpop.f32.mrf.mxu0
        %v2978 = vadd.f32 %v2433, %v2977
        %v2979 = vpop.f32.mrf.mxu0
        %2980 = vmatprep.mubr.bf16.mxu0 0
        %2981 = vmatmul.mubr.bf16.gmra.mxu0 %v2682
        %v2982 = vpop.f32.mrf.mxu0
        %v2983 = vadd.f32 %v2438, %v2982
        %v2984 = vpop.f32.mrf.mxu0
        %v2985 = vpop.f32.mrf.mxu0
        %v2986 = vadd.f32 %v2441, %v2985
        %v2987 = vpop.f32.mrf.mxu0
        %2988 = vmatprep.mubr.bf16.mxu0 0
        %2989 = vmatmul.mubr.bf16.gmra.mxu0 %v2685
        %v2990 = vpop.f32.mrf.mxu0
        %v2991 = vadd.f32 %v2446, %v2990
        %v2992 = vpop.f32.mrf.mxu0
        %v2993 = vpop.f32.mrf.mxu0
        %v2994 = vadd.f32 %v2449, %v2993
        %v2995 = vpop.f32.mrf.mxu0
        %2996 = vmatprep.mubr.bf16.mxu0 0
        %2997 = vmatmul.mubr.bf16.gmra.mxu0 %v2688
        %v2998 = vpop.f32.mrf.mxu0
        %v2999 = vadd.f32 %v2454, %v2998
        %v3000 = vpop.f32.mrf.mxu0
        %v3001 = vpop.f32.mrf.mxu0
        %v3002 = vadd.f32 %v2457, %v3001
        %v3003 = vpop.f32.mrf.mxu0
        %3004 = vmatprep.mubr.bf16.mxu0 0
        %3005 = vmatmul.mubr.bf16.gmra.mxu0 %v2691
        %v3006 = vpop.f32.mrf.mxu0
        %v3007 = vadd.f32 %v2462, %v3006
        %v3008 = vpop.f32.mrf.mxu0
        %v3009 = vpop.f32.mrf.mxu0
        %v3010 = vadd.f32 %v2465, %v3009
        %v3011 = vpop.f32.mrf.mxu0
        %3012 = vmatprep.mubr.bf16.mxu0 0
        %3013 = vmatmul.mubr.bf16.gmra.mxu0 %v2694
        %v3014 = vpop.f32.mrf.mxu0
        %v3015 = vadd.f32 %v2470, %v3014
        %v3016 = vpop.f32.mrf.mxu0
        %v3017 = vpop.f32.mrf.mxu0
        %v3018 = vadd.f32 %v2473, %v3017
        %v3019 = vpop.f32.mrf.mxu0
        %3020 = vmatprep.mubr.bf16.mxu0 0
        %3021 = vmatmul.mubr.bf16.gmra.mxu0 %v2697
        %v3022 = vpop.f32.mrf.mxu0
        %v3023 = vadd.f32 %v2478, %v3022
        %v3024 = vpop.f32.mrf.mxu0
        %v3025 = vpop.f32.mrf.mxu0
        %v3026 = vadd.f32 %v2481, %v3025
        %v3027 = vpop.f32.mrf.mxu0
        %3028 = vmatprep.mubr.bf16.mxu0 0
        %3029 = vmatmul.mubr.bf16.gmra.mxu0 %v2700
        %v3030 = vpop.f32.mrf.mxu0
        %v3031 = vadd.f32 %v2486, %v3030
        %v3032 = vpop.f32.mrf.mxu0
        %v3033 = vpop.f32.mrf.mxu0
        %v3034 = vadd.f32 %v2489, %v3033
        %v3035 = vpop.f32.mrf.mxu0
        %3036 = vmatprep.mubr.bf16.mxu0 0
        %3037 = vmatmul.mubr.bf16.gmra.mxu0 %v2703
        %v3038 = vpop.f32.mrf.mxu0
        %v3039 = vadd.f32 %v2494, %v3038
        %v3040 = vpop.f32.mrf.mxu0
        %v3041 = vpop.f32.mrf.mxu0
        %v3042 = vadd.f32 %v2497, %v3041
        %v3043 = vpop.f32.mrf.mxu0
        %3044 = vmatprep.mubr.bf16.mxu0 0
        %3045 = vmatmul.mubr.bf16.gmra.mxu0 %v2706
        %v3046 = vpop.f32.mrf.mxu0
        %v3047 = vadd.f32 %v2502, %v3046
        %v3048 = vpop.f32.mrf.mxu0
        %v3049 = vpop.f32.mrf.mxu0
        %v3050 = vadd.f32 %v2505, %v3049
        %v3051 = vpop.f32.mrf.mxu0
        %3052 = vdwg.mxu0
        %v3053 = vld [vmem:[#allocation2 + $0x18] sm:$0xc]
        %v3054 = vld [vmem:[#allocation2 + $0x1c] sm:$0xf]
        %v3055 = vld [vmem:[#allocation2 + $0x20] sm:$0xf]
        %v3056 = vld [vmem:[#allocation2 + $0x24] sm:$0xf]
        %v3057 = vld [vmem:[#allocation2 + $0x28] sm:$0xf]
        %v3058 = vld [vmem:[#allocation2 + $0x2c] sm:$0xf]
        %v3059 = vld [vmem:[#allocation2 + $0x30] sm:$0xf]
        %v3060 = vld [vmem:[#allocation2 + $0x34] sm:$0xf]
        %v3061 = vld [vmem:[#allocation2 + $0x38] sm:$0xf]
        %v3062 = vld [vmem:[#allocation2 + $0x3c] sm:$0xf]
        %v3063 = vld [vmem:[#allocation2 + $0x40] sm:$0xf]
        %v3064 = vld [vmem:[#allocation2 + $0x44] sm:$0xf]
        %v3065 = vld [vmem:[#allocation2 + $0x48] sm:$0xf]
        %v3066 = vld [vmem:[#allocation2 + $0x4c] sm:$0xf]
        %v3067 = vld [vmem:[#allocation2 + $0x50] sm:$0xf]
        %v3068 = vld [vmem:[#allocation2 + $0x54] sm:$0xf]
        %v3069 = vld [vmem:[#allocation2 + $0x58] sm:$0xf]
        %v3070 = vld [vmem:[#allocation2 + $0x5c] sm:$0xf]
        %v3071 = vld [vmem:[#allocation2 + $0x60] sm:$0xf]
        %v3072 = vld [vmem:[#allocation2 + $0x64] sm:$0xf]
        %v3073 = vld [vmem:[#allocation2 + $0x68] sm:$0xf]
        %v3074 = vld [vmem:[#allocation2 + $0x6c] sm:$0xf]
        %v3075 = vld [vmem:[#allocation2 + $0x70] sm:$0xf]
        %v3076 = vld [vmem:[#allocation2 + $0x74] sm:$0xf]
        %v3077 = vld [vmem:[#allocation2 + $0x78] sm:$0xf]
        %v3078 = vld [vmem:[#allocation2 + $0x7c] sm:$0xf]
        %v3079 = vld [vmem:[#allocation2 + $0x80] sm:$0xf]
        %v3080 = vld [vmem:[#allocation2 + $0x84] sm:$0xf]
        %v3081 = vld [vmem:[#allocation2 + $0x88] sm:$0xf]
        %v3082 = vld [vmem:[#allocation2 + $0x8c] sm:$0xf]
        %v3083 = vld [vmem:[#allocation2 + $0x90] sm:$0xf]
        %v3084 = vld [vmem:[#allocation2 + $0x94] sm:$0xf]
        %v3085 = vld [vmem:[#allocation2 + $0x98] sm:$0xf]
        %v3086 = vld [vmem:[#allocation2 + $0x9c] sm:$0xf]
        %v3087 = vld [vmem:[#allocation2 + $0xa0] sm:$0xf]
        %v3088 = vld [vmem:[#allocation2 + $0xa4] sm:$0xf]
        %v3089 = vld [vmem:[#allocation2 + $0xa8] sm:$0xf]
        %v3090 = vld [vmem:[#allocation2 + $0xac] sm:$0xf]
        %v3091 = vld [vmem:[#allocation2 + $0xb0] sm:$0xf]
        %v3092 = vld [vmem:[#allocation2 + $0xb4] sm:$0xf]
        %v3093 = vld [vmem:[#allocation2 + $0xb8] sm:$0xf]
        %v3094 = vld [vmem:[#allocation2 + $0xbc] sm:$0xf]
        %v3095 = vld [vmem:[#allocation2 + $0xc0] sm:$0xf]
        %v3096 = vld [vmem:[#allocation2 + $0xc4] sm:$0xf]
        %v3097 = vld [vmem:[#allocation2 + $0xc8] sm:$0xf]
        %v3098 = vld [vmem:[#allocation2 + $0xcc] sm:$0xf]
        %v3099 = vld [vmem:[#allocation2 + $0xd0] sm:$0xf]
        %v3100 = vld [vmem:[#allocation2 + $0xd4] sm:$0xf]
        %v3101 = vld [vmem:[#allocation2 + $0xd8] sm:$0xf]
        %v3102 = vld [vmem:[#allocation2 + $0xdc] sm:$0xf]
        %v3103 = vld [vmem:[#allocation2 + $0xe0] sm:$0xf]
        %v3104 = vld [vmem:[#allocation2 + $0xe4] sm:$0xf]
        %v3105 = vld [vmem:[#allocation2 + $0xe8] sm:$0xf]
        %v3106 = vld [vmem:[#allocation2 + $0xec] sm:$0xf]
        %v3107 = vld [vmem:[#allocation2 + $0xf0] sm:$0xf]
        %v3108 = vld [vmem:[#allocation2 + $0xf4] sm:$0xf]
        %v3109 = vld [vmem:[#allocation2 + $0xf8] sm:$0xf]
        %v3110 = vld [vmem:[#allocation2 + $0xfc] sm:$0xf]
        %v3111 = vld [vmem:[#allocation2 + $0x100] sm:$0xf]
        %v3112 = vld [vmem:[#allocation2 + $0x104] sm:$0xf]
        %v3113 = vld [vmem:[#allocation2 + $0x108] sm:$0xf]
        %v3114 = vld [vmem:[#allocation2 + $0x10c] sm:$0xf]
        %v3115 = vld [vmem:[#allocation2 + $0x110] sm:$0xf]
        %v3116 = vld [vmem:[#allocation2 + $0x114] sm:$0xf]
        %v3117 = vld [vmem:[#allocation2 + $0x118] sm:$0xf]
        %v3118 = vld [vmem:[#allocation2 + $0x11c] sm:$0xf]
        %v3119 = vld [vmem:[#allocation2 + $0x120] sm:$0xf]
        %v3120 = vld [vmem:[#allocation2 + $0x124] sm:$0xf]
        %v3121 = vld [vmem:[#allocation2 + $0x128] sm:$0xf]
        %v3122 = vld [vmem:[#allocation2 + $0x12c] sm:$0xf]
        %v3123 = vld [vmem:[#allocation2 + $0x130] sm:$0xf]
        %v3124 = vld [vmem:[#allocation2 + $0x134] sm:$0xf]
        %v3125 = vld [vmem:[#allocation2 + $0x138] sm:$0xf]
        %v3126 = vld [vmem:[#allocation2 + $0x13c] sm:$0xf]
        %v3127 = vld [vmem:[#allocation2 + $0x140] sm:$0xf]
        %v3128 = vld [vmem:[#allocation2 + $0x144] sm:$0xf]
        %v3129 = vld [vmem:[#allocation2 + $0x148] sm:$0xf]
        %v3130 = vld [vmem:[#allocation2 + $0x14c] sm:$0xf]
        %v3131 = vld [vmem:[#allocation2 + $0x150] sm:$0x3]
        %v3211 = vunpack.c.l.b16 %v3053
        %v3212 = vunpack.c.l.b16 %v3054
        %v3213 = vunpack.c.l.b16 %v3055
        %v3214 = vunpack.c.l.b16 %v3056
        %v3215 = vunpack.c.l.b16 %v3057
        %v3216 = vunpack.c.l.b16 %v3058
        %v3217 = vunpack.c.l.b16 %v3059
        %v3218 = vunpack.c.l.b16 %v3060
        %v3219 = vunpack.c.l.b16 %v3061
        %v3220 = vunpack.c.l.b16 %v3062
        %v3221 = vunpack.c.l.b16 %v3063
        %v3222 = vunpack.c.l.b16 %v3064
        %v3223 = vunpack.c.l.b16 %v3065
        %v3224 = vunpack.c.l.b16 %v3066
        %v3225 = vunpack.c.l.b16 %v3067
        %v3226 = vunpack.c.l.b16 %v3068
        %v3227 = vunpack.c.l.b16 %v3069
        %v3228 = vunpack.c.l.b16 %v3070
        %v3229 = vunpack.c.l.b16 %v3071
        %v3230 = vunpack.c.l.b16 %v3072
        %v3231 = vunpack.c.l.b16 %v3073
        %v3232 = vunpack.c.l.b16 %v3074
        %v3233 = vunpack.c.l.b16 %v3075
        %v3234 = vunpack.c.l.b16 %v3076
        %v3235 = vunpack.c.l.b16 %v3077
        %v3236 = vunpack.c.l.b16 %v3078
        %v3237 = vunpack.c.l.b16 %v3079
        %v3238 = vunpack.c.l.b16 %v3080
        %v3239 = vunpack.c.l.b16 %v3081
        %v3240 = vunpack.c.l.b16 %v3082
        %v3241 = vunpack.c.l.b16 %v3083
        %v3242 = vunpack.c.l.b16 %v3084
        %v3243 = vunpack.c.l.b16 %v3085
        %v3244 = vunpack.c.l.b16 %v3086
        %v3245 = vunpack.c.l.b16 %v3087
        %v3246 = vunpack.c.l.b16 %v3088
        %v3247 = vunpack.c.l.b16 %v3089
        %v3248 = vunpack.c.l.b16 %v3090
        %v3249 = vunpack.c.l.b16 %v3091
        %v3250 = vunpack.c.l.b16 %v3092
        %v3251 = vunpack.c.l.b16 %v3093
        %v3252 = vunpack.c.l.b16 %v3094
        %v3253 = vunpack.c.l.b16 %v3095
        %v3254 = vunpack.c.l.b16 %v3096
        %v3255 = vunpack.c.l.b16 %v3097
        %v3256 = vunpack.c.l.b16 %v3098
        %v3257 = vunpack.c.l.b16 %v3099
        %v3258 = vunpack.c.l.b16 %v3100
        %v3259 = vunpack.c.l.b16 %v3101
        %v3260 = vunpack.c.l.b16 %v3102
        %v3261 = vunpack.c.l.b16 %v3103
        %v3262 = vunpack.c.l.b16 %v3104
        %v3263 = vunpack.c.l.b16 %v3105
        %v3264 = vunpack.c.l.b16 %v3106
        %v3265 = vunpack.c.l.b16 %v3107
        %v3266 = vunpack.c.l.b16 %v3108
        %v3267 = vunpack.c.l.b16 %v3109
        %v3268 = vunpack.c.l.b16 %v3110
        %v3269 = vunpack.c.l.b16 %v3111
        %v3270 = vunpack.c.l.b16 %v3112
        %v3271 = vunpack.c.l.b16 %v3113
        %v3272 = vunpack.c.l.b16 %v3114
        %v3273 = vunpack.c.l.b16 %v3115
        %v3274 = vunpack.c.l.b16 %v3116
        %v3275 = vunpack.c.l.b16 %v3117
        %v3276 = vunpack.c.l.b16 %v3118
        %v3277 = vunpack.c.l.b16 %v3119
        %v3278 = vunpack.c.l.b16 %v3120
        %v3279 = vunpack.c.l.b16 %v3121
        %v3280 = vunpack.c.l.b16 %v3122
        %v3281 = vunpack.c.l.b16 %v3123
        %v3282 = vunpack.c.l.b16 %v3124
        %v3283 = vunpack.c.l.b16 %v3125
        %v3284 = vunpack.c.l.b16 %v3126
        %v3285 = vunpack.c.l.b16 %v3127
        %v3286 = vunpack.c.l.b16 %v3128
        %v3287 = vunpack.c.l.b16 %v3129
        %v3288 = vunpack.c.l.b16 %v3130
        %v3289 = vunpack.c.l.b16 %v3131
        %v3290 = vpack.c.b16 %v3212, %v3211
        %v3291 = vpack.c.b16 %v3214, %v3213
        %v3292 = vpack.c.b16 %v3216, %v3215
        %v3293 = vpack.c.b16 %v3218, %v3217
        %v3294 = vpack.c.b16 %v3220, %v3219
        %v3295 = vpack.c.b16 %v3222, %v3221
        %v3296 = vpack.c.b16 %v3224, %v3223
        %v3297 = vpack.c.b16 %v3226, %v3225
        %v3298 = vpack.c.b16 %v3228, %v3227
        %v3299 = vpack.c.b16 %v3230, %v3229
        %v3300 = vpack.c.b16 %v3232, %v3231
        %v3301 = vpack.c.b16 %v3234, %v3233
        %v3302 = vpack.c.b16 %v3236, %v3235
        %v3303 = vpack.c.b16 %v3238, %v3237
        %v3304 = vpack.c.b16 %v3240, %v3239
        %v3305 = vpack.c.b16 %v3242, %v3241
        %v3306 = vpack.c.b16 %v3244, %v3243
        %v3307 = vpack.c.b16 %v3246, %v3245
        %v3308 = vpack.c.b16 %v3248, %v3247
        %v3309 = vpack.c.b16 %v3250, %v3249
        %v3310 = vpack.c.b16 %v3252, %v3251
        %v3311 = vpack.c.b16 %v3254, %v3253
        %v3312 = vpack.c.b16 %v3256, %v3255
        %v3313 = vpack.c.b16 %v3258, %v3257
        %v3314 = vpack.c.b16 %v3260, %v3259
        %v3315 = vpack.c.b16 %v3262, %v3261
        %v3316 = vpack.c.b16 %v3264, %v3263
        %v3317 = vpack.c.b16 %v3266, %v3265
        %v3318 = vpack.c.b16 %v3268, %v3267
        %v3319 = vpack.c.b16 %v3270, %v3269
        %v3320 = vpack.c.b16 %v3272, %v3271
        %v3321 = vpack.c.b16 %v3274, %v3273
        %v3322 = vpack.c.b16 %v3276, %v3275
        %v3323 = vpack.c.b16 %v3278, %v3277
        %v3324 = vpack.c.b16 %v3280, %v3279
        %v3325 = vpack.c.b16 %v3282, %v3281
        %v3326 = vpack.c.b16 %v3284, %v3283
        %v3327 = vpack.c.b16 %v3286, %v3285
        %v3328 = vpack.c.b16 %v3288, %v3287
        %v3329 = vpack.c.b16 %v3289, %v3289
        %vm3330 = vcmask 1045504
        %v3331 = vrot.slane %v3290, 2
        %v3332 = vrot.slane %v3291, 2
        %v3333 = vsel %vm3330, %v3331, %v3332
        %v3334 = vrot.slane %v3292, 2
        %v3335 = vsel %vm3330, %v3332, %v3334
        %v3336 = vrot.slane %v3293, 2
        %v3337 = vsel %vm3330, %v3334, %v3336
        %v3338 = vrot.slane %v3294, 2
        %v3339 = vsel %vm3330, %v3336, %v3338
        %v3340 = vrot.slane %v3295, 2
        %v3341 = vsel %vm3330, %v3338, %v3340
        %v3342 = vrot.slane %v3296, 2
        %v3343 = vsel %vm3330, %v3340, %v3342
        %v3344 = vrot.slane %v3297, 2
        %v3345 = vsel %vm3330, %v3342, %v3344
        %v3346 = vrot.slane %v3298, 2
        %v3347 = vsel %vm3330, %v3344, %v3346
        %v3348 = vrot.slane %v3299, 2
        %v3349 = vsel %vm3330, %v3346, %v3348
        %v3350 = vrot.slane %v3300, 2
        %v3351 = vsel %vm3330, %v3348, %v3350
        %v3352 = vrot.slane %v3301, 2
        %v3353 = vsel %vm3330, %v3350, %v3352
        %v3354 = vrot.slane %v3302, 2
        %v3355 = vsel %vm3330, %v3352, %v3354
        %v3356 = vrot.slane %v3303, 2
        %v3357 = vsel %vm3330, %v3354, %v3356
        %v3358 = vrot.slane %v3304, 2
        %v3359 = vsel %vm3330, %v3356, %v3358
        %v3360 = vrot.slane %v3305, 2
        %v3361 = vsel %vm3330, %v3358, %v3360
        %v3362 = vrot.slane %v3306, 2
        %v3363 = vsel %vm3330, %v3360, %v3362
        %v3364 = vrot.slane %v3307, 2
        %v3365 = vsel %vm3330, %v3362, %v3364
        %v3366 = vrot.slane %v3308, 2
        %v3367 = vsel %vm3330, %v3364, %v3366
        %v3368 = vrot.slane %v3309, 2
        %v3369 = vsel %vm3330, %v3366, %v3368
        %v3370 = vrot.slane %v3310, 2
        %v3371 = vsel %vm3330, %v3368, %v3370
        %v3372 = vrot.slane %v3311, 2
        %v3373 = vsel %vm3330, %v3370, %v3372
        %v3374 = vrot.slane %v3312, 2
        %v3375 = vsel %vm3330, %v3372, %v3374
        %v3376 = vrot.slane %v3313, 2
        %v3377 = vsel %vm3330, %v3374, %v3376
        %v3378 = vrot.slane %v3314, 2
        %v3379 = vsel %vm3330, %v3376, %v3378
        %v3380 = vrot.slane %v3315, 2
        %v3381 = vsel %vm3330, %v3378, %v3380
        %v3382 = vrot.slane %v3316, 2
        %v3383 = vsel %vm3330, %v3380, %v3382
        %v3384 = vrot.slane %v3317, 2
        %v3385 = vsel %vm3330, %v3382, %v3384
        %v3386 = vrot.slane %v3318, 2
        %v3387 = vsel %vm3330, %v3384, %v3386
        %v3388 = vrot.slane %v3319, 2
        %v3389 = vsel %vm3330, %v3386, %v3388
        %v3390 = vrot.slane %v3320, 2
        %v3391 = vsel %vm3330, %v3388, %v3390
        %v3392 = vrot.slane %v3321, 2
        %v3393 = vsel %vm3330, %v3390, %v3392
        %v3394 = vrot.slane %v3322, 2
        %v3395 = vsel %vm3330, %v3392, %v3394
        %v3396 = vrot.slane %v3323, 2
        %v3397 = vsel %vm3330, %v3394, %v3396
        %v3398 = vrot.slane %v3324, 2
        %v3399 = vsel %vm3330, %v3396, %v3398
        %v3400 = vrot.slane %v3325, 2
        %v3401 = vsel %vm3330, %v3398, %v3400
        %v3402 = vrot.slane %v3326, 2
        %v3403 = vsel %vm3330, %v3400, %v3402
        %v3404 = vrot.slane %v3327, 2
        %v3405 = vsel %vm3330, %v3402, %v3404
        %v3406 = vrot.slane %v3328, 2
        %v3407 = vsel %vm3330, %v3404, %v3406
        %v3408 = vrot.slane %v3329, 2
        %v3409 = vsel %vm3330, %v3406, %v3408
        %v3422 = vunpack.c.l.b16 %v296
        %v3423 = vunpack.c.l.b16 %v297
        %v3424 = vunpack.c.l.b16 %v298
        %v3425 = vunpack.c.l.b16 %v299
        %v3426 = vunpack.c.l.b16 %v300
        %v3427 = vunpack.c.l.b16 %v301
        %v3428 = vunpack.c.l.b16 %v302
        %v3429 = vunpack.c.l.b16 %v303
        %v3430 = vunpack.c.l.b16 %v304
        %v3431 = vunpack.c.l.b16 %v305
        %v3432 = vunpack.c.l.b16 %v306
        %v3433 = vunpack.c.l.b16 %v307
        %v3434 = vpack.c.b16 %v3423, %v3422
        %v3435 = vpack.c.b16 %v3425, %v3424
        %v3436 = vpack.c.b16 %v3427, %v3426
        %v3437 = vpack.c.b16 %v3429, %v3428
        %v3438 = vpack.c.b16 %v3431, %v3430
        %v3439 = vpack.c.b16 %v3433, %v3432
        %v3447 = vsel %vm2045, %v3333, 0
        %v3450 = vsel %vm2045, %v3335, 0
        %v3453 = vsel %vm2045, %v3337, 0
        %v3456 = vsel %vm2045, %v3339, 0
        %v3459 = vsel %vm2045, %v3341, 0
        %v3462 = vsel %vm2045, %v3343, 0
        %v3465 = vsel %vm2045, %v3345, 0
        %v3468 = vsel %vm2045, %v3347, 0
        %v3471 = vsel %vm2045, %v3349, 0
        %v3474 = vsel %vm2045, %v3351, 0
        %v3477 = vsel %vm2045, %v3353, 0
        %v3480 = vsel %vm2045, %v3355, 0
        %v3483 = vsel %vm2045, %v3357, 0
        %v3486 = vsel %vm2045, %v3359, 0
        %v3489 = vsel %vm2045, %v3361, 0
        %v3492 = vsel %vm2045, %v3363, 0
        %v3495 = vsel %vm2045, %v3365, 0
        %v3498 = vsel %vm2045, %v3367, 0
        %v3501 = vsel %vm2045, %v3369, 0
        %v3504 = vsel %vm2045, %v3371, 0
        %v3507 = vsel %vm2045, %v3373, 0
        %v3510 = vsel %vm2045, %v3375, 0
        %v3513 = vsel %vm2045, %v3377, 0
        %v3516 = vsel %vm2045, %v3379, 0
        %v3519 = vsel %vm2045, %v3381, 0
        %v3522 = vsel %vm2045, %v3383, 0
        %v3525 = vsel %vm2045, %v3385, 0
        %v3528 = vsel %vm2045, %v3387, 0
        %v3531 = vsel %vm2045, %v3389, 0
        %v3534 = vsel %vm2045, %v3391, 0
        %v3537 = vsel %vm2045, %v3393, 0
        %v3540 = vsel %vm2045, %v3395, 0
        %v3543 = vsel %vm2045, %v3397, 0
        %v3546 = vsel %vm2045, %v3399, 0
        %v3549 = vsel %vm2045, %v3401, 0
        %v3552 = vsel %vm2045, %v3403, 0
        %v3555 = vsel %vm2045, %v3405, 0
        %v3558 = vsel %vm2045, %v3407, 0
        %v3561 = vsel %vm2045, %v3409, 0
        %3563 = vmatprep.subr.bf16.mxu0 0
        %3564 = vmatpush1.bf16.msra.mxu0 0
        %3565 = vmatprep.subr.bf16.mxu0 0
        %3566 = vmatpush1.bf16.msra.mxu0 0
        %3567 = vmatprep.subr.bf16.mxu0 0
        %3568 = vmatpush1.bf16.msra.mxu0 %v3439
        %3569 = vmatprep.subr.bf16.mxu0 0
        %3570 = vmatpush1.bf16.msra.mxu0 %v3438
        %3571 = vmatprep.subr.bf16.mxu0 0
        %3572 = vmatpush1.bf16.msra.mxu0 %v3437
        %3573 = vmatprep.subr.bf16.mxu0 0
        %3574 = vmatpush1.bf16.msra.mxu0 %v3436
        %3575 = vmatprep.subr.bf16.mxu0 0
        %3576 = vmatpush1.bf16.msra.mxu0 %v3435
        %3577 = vmatprep.subr.bf16.mxu0 0
        %3578 = vmatpush1.bf16.msra.mxu0 %v3434
        %3579 = vmatprep.subr.bf16.mxu0 0
        %3580 = vmatpush2.bf16.msra.mxu0 0
        %3581 = vmatprep.subr.bf16.mxu0 0
        %3582 = vmatpush2.bf16.msra.mxu0 0
        %3583 = vmatprep.subr.bf16.mxu0 0
        %3584 = vmatpush2.bf16.msra.mxu0 0
        %3585 = vmatprep.subr.bf16.mxu0 0
        %3586 = vmatpush2.bf16.msra.mxu0 0
        %3587 = vmatprep.subr.bf16.mxu0 0
        %3588 = vmatpush2.bf16.msra.mxu0 0
        %3589 = vmatprep.subr.bf16.mxu0 0
        %3590 = vmatpush2.bf16.msra.mxu0 0
        %3591 = vmatprep.subr.bf16.mxu0 0
        %3592 = vmatpush2.bf16.msra.mxu0 0
        %3593 = vmatprep.subr.bf16.mxu0 0
        %3594 = vmatpush2.bf16.msra.mxu0 0
        %3595 = vmatprep.mubr.bf16.mxu0 0
        %3596 = vmatmul.mubr.bf16.gmra.mxu0 %v3447
        %v3597 = vpop.f32.mrf.mxu0
        %v3598 = vadd.f32 0.0, %v3597
        %v3599 = vpop.f32.mrf.mxu0
        %v3600 = vpop.f32.mrf.mxu0
        %v3601 = vadd.f32 0.0, %v3600
        %v3602 = vpop.f32.mrf.mxu0
        %3603 = vmatprep.mubr.bf16.mxu0 0
        %3604 = vmatmul.mubr.bf16.gmra.mxu0 %v3450
        %v3605 = vpop.f32.mrf.mxu0
        %v3606 = vadd.f32 0.0, %v3605
        %v3607 = vpop.f32.mrf.mxu0
        %v3608 = vpop.f32.mrf.mxu0
        %v3609 = vadd.f32 0.0, %v3608
        %v3610 = vpop.f32.mrf.mxu0
        %3611 = vmatprep.mubr.bf16.mxu0 0
        %3612 = vmatmul.mubr.bf16.gmra.mxu0 %v3453
        %v3613 = vpop.f32.mrf.mxu0
        %v3614 = vadd.f32 0.0, %v3613
        %v3615 = vpop.f32.mrf.mxu0
        %v3616 = vpop.f32.mrf.mxu0
        %v3617 = vadd.f32 0.0, %v3616
        %v3618 = vpop.f32.mrf.mxu0
        %3619 = vmatprep.mubr.bf16.mxu0 0
        %3620 = vmatmul.mubr.bf16.gmra.mxu0 %v3456
        %v3621 = vpop.f32.mrf.mxu0
        %v3622 = vadd.f32 0.0, %v3621
        %v3623 = vpop.f32.mrf.mxu0
        %v3624 = vpop.f32.mrf.mxu0
        %v3625 = vadd.f32 0.0, %v3624
        %v3626 = vpop.f32.mrf.mxu0
        %3627 = vmatprep.mubr.bf16.mxu0 0
        %3628 = vmatmul.mubr.bf16.gmra.mxu0 %v3459
        %v3629 = vpop.f32.mrf.mxu0
        %v3630 = vadd.f32 0.0, %v3629
        %v3631 = vpop.f32.mrf.mxu0
        %v3632 = vpop.f32.mrf.mxu0
        %v3633 = vadd.f32 0.0, %v3632
        %v3634 = vpop.f32.mrf.mxu0
        %3635 = vmatprep.mubr.bf16.mxu0 0
        %3636 = vmatmul.mubr.bf16.gmra.mxu0 %v3462
        %v3637 = vpop.f32.mrf.mxu0
        %v3638 = vadd.f32 0.0, %v3637
        %v3639 = vpop.f32.mrf.mxu0
        %v3640 = vpop.f32.mrf.mxu0
        %v3641 = vadd.f32 0.0, %v3640
        %v3642 = vpop.f32.mrf.mxu0
        %3643 = vmatprep.mubr.bf16.mxu0 0
        %3644 = vmatmul.mubr.bf16.gmra.mxu0 %v3465
        %v3645 = vpop.f32.mrf.mxu0
        %v3646 = vadd.f32 0.0, %v3645
        %v3647 = vpop.f32.mrf.mxu0
        %v3648 = vpop.f32.mrf.mxu0
        %v3649 = vadd.f32 0.0, %v3648
        %v3650 = vpop.f32.mrf.mxu0
        %3651 = vmatprep.mubr.bf16.mxu0 0
        %3652 = vmatmul.mubr.bf16.gmra.mxu0 %v3468
        %v3653 = vpop.f32.mrf.mxu0
        %v3654 = vadd.f32 0.0, %v3653
        %v3655 = vpop.f32.mrf.mxu0
        %v3656 = vpop.f32.mrf.mxu0
        %v3657 = vadd.f32 0.0, %v3656
        %v3658 = vpop.f32.mrf.mxu0
        %3659 = vmatprep.mubr.bf16.mxu0 0
        %3660 = vmatmul.mubr.bf16.gmra.mxu0 %v3471
        %v3661 = vpop.f32.mrf.mxu0
        %v3662 = vadd.f32 0.0, %v3661
        %v3663 = vpop.f32.mrf.mxu0
        %v3664 = vpop.f32.mrf.mxu0
        %v3665 = vadd.f32 0.0, %v3664
        %v3666 = vpop.f32.mrf.mxu0
        %3667 = vmatprep.mubr.bf16.mxu0 0
        %3668 = vmatmul.mubr.bf16.gmra.mxu0 %v3474
        %v3669 = vpop.f32.mrf.mxu0
        %v3670 = vadd.f32 0.0, %v3669
        %v3671 = vpop.f32.mrf.mxu0
        %v3672 = vpop.f32.mrf.mxu0
        %v3673 = vadd.f32 0.0, %v3672
        %v3674 = vpop.f32.mrf.mxu0
        %3675 = vmatprep.mubr.bf16.mxu0 0
        %3676 = vmatmul.mubr.bf16.gmra.mxu0 %v3477
        %v3677 = vpop.f32.mrf.mxu0
        %v3678 = vadd.f32 0.0, %v3677
        %v3679 = vpop.f32.mrf.mxu0
        %v3680 = vpop.f32.mrf.mxu0
        %v3681 = vadd.f32 0.0, %v3680
        %v3682 = vpop.f32.mrf.mxu0
        %3683 = vmatprep.mubr.bf16.mxu0 0
        %3684 = vmatmul.mubr.bf16.gmra.mxu0 %v3480
        %v3685 = vpop.f32.mrf.mxu0
        %v3686 = vadd.f32 0.0, %v3685
        %v3687 = vpop.f32.mrf.mxu0
        %v3688 = vpop.f32.mrf.mxu0
        %v3689 = vadd.f32 0.0, %v3688
        %v3690 = vpop.f32.mrf.mxu0
        %3691 = vmatprep.mubr.bf16.mxu0 0
        %3692 = vmatmul.mubr.bf16.gmra.mxu0 %v3483
        %v3693 = vpop.f32.mrf.mxu0
        %v3694 = vadd.f32 0.0, %v3693
        %v3695 = vpop.f32.mrf.mxu0
        %v3696 = vpop.f32.mrf.mxu0
        %v3697 = vadd.f32 0.0, %v3696
        %v3698 = vpop.f32.mrf.mxu0
        %3699 = vmatprep.mubr.bf16.mxu0 0
        %3700 = vmatmul.mubr.bf16.gmra.mxu0 %v3486
        %v3701 = vpop.f32.mrf.mxu0
        %v3702 = vadd.f32 0.0, %v3701
        %v3703 = vpop.f32.mrf.mxu0
        %v3704 = vpop.f32.mrf.mxu0
        %v3705 = vadd.f32 0.0, %v3704
        %v3706 = vpop.f32.mrf.mxu0
        %3707 = vmatprep.mubr.bf16.mxu0 0
        %3708 = vmatmul.mubr.bf16.gmra.mxu0 %v3489
        %v3709 = vpop.f32.mrf.mxu0
        %v3710 = vadd.f32 0.0, %v3709
        %v3711 = vpop.f32.mrf.mxu0
        %v3712 = vpop.f32.mrf.mxu0
        %v3713 = vadd.f32 0.0, %v3712
        %v3714 = vpop.f32.mrf.mxu0
        %3715 = vmatprep.mubr.bf16.mxu0 0
        %3716 = vmatmul.mubr.bf16.gmra.mxu0 %v3492
        %v3717 = vpop.f32.mrf.mxu0
        %v3718 = vadd.f32 0.0, %v3717
        %v3719 = vpop.f32.mrf.mxu0
        %v3720 = vpop.f32.mrf.mxu0
        %v3721 = vadd.f32 0.0, %v3720
        %v3722 = vpop.f32.mrf.mxu0
        %3723 = vmatprep.mubr.bf16.mxu0 0
        %3724 = vmatmul.mubr.bf16.gmra.mxu0 %v3495
        %v3725 = vpop.f32.mrf.mxu0
        %v3726 = vadd.f32 0.0, %v3725
        %v3727 = vpop.f32.mrf.mxu0
        %v3728 = vpop.f32.mrf.mxu0
        %v3729 = vadd.f32 0.0, %v3728
        %v3730 = vpop.f32.mrf.mxu0
        %3731 = vmatprep.mubr.bf16.mxu0 0
        %3732 = vmatmul.mubr.bf16.gmra.mxu0 %v3498
        %v3733 = vpop.f32.mrf.mxu0
        %v3734 = vadd.f32 0.0, %v3733
        %v3735 = vpop.f32.mrf.mxu0
        %v3736 = vpop.f32.mrf.mxu0
        %v3737 = vadd.f32 0.0, %v3736
        %v3738 = vpop.f32.mrf.mxu0
        %3739 = vmatprep.mubr.bf16.mxu0 0
        %3740 = vmatmul.mubr.bf16.gmra.mxu0 %v3501
        %v3741 = vpop.f32.mrf.mxu0
        %v3742 = vadd.f32 0.0, %v3741
        %v3743 = vpop.f32.mrf.mxu0
        %v3744 = vpop.f32.mrf.mxu0
        %v3745 = vadd.f32 0.0, %v3744
        %v3746 = vpop.f32.mrf.mxu0
        %3747 = vmatprep.mubr.bf16.mxu0 0
        %3748 = vmatmul.mubr.bf16.gmra.mxu0 %v3504
        %v3749 = vpop.f32.mrf.mxu0
        %v3750 = vadd.f32 0.0, %v3749
        %v3751 = vpop.f32.mrf.mxu0
        %v3752 = vpop.f32.mrf.mxu0
        %v3753 = vadd.f32 0.0, %v3752
        %v3754 = vpop.f32.mrf.mxu0
        %3755 = vmatprep.mubr.bf16.mxu0 0
        %3756 = vmatmul.mubr.bf16.gmra.mxu0 %v3507
        %v3757 = vpop.f32.mrf.mxu0
        %v3758 = vadd.f32 0.0, %v3757
        %v3759 = vpop.f32.mrf.mxu0
        %v3760 = vpop.f32.mrf.mxu0
        %v3761 = vadd.f32 0.0, %v3760
        %v3762 = vpop.f32.mrf.mxu0
        %3763 = vmatprep.mubr.bf16.mxu0 0
        %3764 = vmatmul.mubr.bf16.gmra.mxu0 %v3510
        %v3765 = vpop.f32.mrf.mxu0
        %v3766 = vadd.f32 0.0, %v3765
        %v3767 = vpop.f32.mrf.mxu0
        %v3768 = vpop.f32.mrf.mxu0
        %v3769 = vadd.f32 0.0, %v3768
        %v3770 = vpop.f32.mrf.mxu0
        %3771 = vmatprep.mubr.bf16.mxu0 0
        %3772 = vmatmul.mubr.bf16.gmra.mxu0 %v3513
        %v3773 = vpop.f32.mrf.mxu0
        %v3774 = vadd.f32 0.0, %v3773
        %v3775 = vpop.f32.mrf.mxu0
        %v3776 = vpop.f32.mrf.mxu0
        %v3777 = vadd.f32 0.0, %v3776
        %v3778 = vpop.f32.mrf.mxu0
        %3779 = vmatprep.mubr.bf16.mxu0 0
        %3780 = vmatmul.mubr.bf16.gmra.mxu0 %v3516
        %v3781 = vpop.f32.mrf.mxu0
        %v3782 = vadd.f32 0.0, %v3781
        %v3783 = vpop.f32.mrf.mxu0
        %v3784 = vpop.f32.mrf.mxu0
        %v3785 = vadd.f32 0.0, %v3784
        %v3786 = vpop.f32.mrf.mxu0
        %3787 = vmatprep.mubr.bf16.mxu0 0
        %3788 = vmatmul.mubr.bf16.gmra.mxu0 %v3519
        %v3789 = vpop.f32.mrf.mxu0
        %v3790 = vadd.f32 0.0, %v3789
        %v3791 = vpop.f32.mrf.mxu0
        %v3792 = vpop.f32.mrf.mxu0
        %v3793 = vadd.f32 0.0, %v3792
        %v3794 = vpop.f32.mrf.mxu0
        %3795 = vmatprep.mubr.bf16.mxu0 0
        %3796 = vmatmul.mubr.bf16.gmra.mxu0 %v3522
        %v3797 = vpop.f32.mrf.mxu0
        %v3798 = vadd.f32 0.0, %v3797
        %v3799 = vpop.f32.mrf.mxu0
        %v3800 = vpop.f32.mrf.mxu0
        %v3801 = vadd.f32 0.0, %v3800
        %v3802 = vpop.f32.mrf.mxu0
        %3803 = vmatprep.mubr.bf16.mxu0 0
        %3804 = vmatmul.mubr.bf16.gmra.mxu0 %v3525
        %v3805 = vpop.f32.mrf.mxu0
        %v3806 = vadd.f32 0.0, %v3805
        %v3807 = vpop.f32.mrf.mxu0
        %v3808 = vpop.f32.mrf.mxu0
        %v3809 = vadd.f32 0.0, %v3808
        %v3810 = vpop.f32.mrf.mxu0
        %3811 = vmatprep.mubr.bf16.mxu0 0
        %3812 = vmatmul.mubr.bf16.gmra.mxu0 %v3528
        %v3813 = vpop.f32.mrf.mxu0
        %v3814 = vadd.f32 0.0, %v3813
        %v3815 = vpop.f32.mrf.mxu0
        %v3816 = vpop.f32.mrf.mxu0
        %v3817 = vadd.f32 0.0, %v3816
        %v3818 = vpop.f32.mrf.mxu0
        %3819 = vmatprep.mubr.bf16.mxu0 0
        %3820 = vmatmul.mubr.bf16.gmra.mxu0 %v3531
        %v3821 = vpop.f32.mrf.mxu0
        %v3822 = vadd.f32 0.0, %v3821
        %v3823 = vpop.f32.mrf.mxu0
        %v3824 = vpop.f32.mrf.mxu0
        %v3825 = vadd.f32 0.0, %v3824
        %v3826 = vpop.f32.mrf.mxu0
        %3827 = vmatprep.mubr.bf16.mxu0 0
        %3828 = vmatmul.mubr.bf16.gmra.mxu0 %v3534
        %v3829 = vpop.f32.mrf.mxu0
        %v3830 = vadd.f32 0.0, %v3829
        %v3831 = vpop.f32.mrf.mxu0
        %v3832 = vpop.f32.mrf.mxu0
        %v3833 = vadd.f32 0.0, %v3832
        %v3834 = vpop.f32.mrf.mxu0
        %3835 = vmatprep.mubr.bf16.mxu0 0
        %3836 = vmatmul.mubr.bf16.gmra.mxu0 %v3537
        %v3837 = vpop.f32.mrf.mxu0
        %v3838 = vadd.f32 0.0, %v3837
        %v3839 = vpop.f32.mrf.mxu0
        %v3840 = vpop.f32.mrf.mxu0
        %v3841 = vadd.f32 0.0, %v3840
        %v3842 = vpop.f32.mrf.mxu0
        %3843 = vmatprep.mubr.bf16.mxu0 0
        %3844 = vmatmul.mubr.bf16.gmra.mxu0 %v3540
        %v3845 = vpop.f32.mrf.mxu0
        %v3846 = vadd.f32 0.0, %v3845
        %v3847 = vpop.f32.mrf.mxu0
        %v3848 = vpop.f32.mrf.mxu0
        %v3849 = vadd.f32 0.0, %v3848
        %v3850 = vpop.f32.mrf.mxu0
        %3851 = vmatprep.mubr.bf16.mxu0 0
        %3852 = vmatmul.mubr.bf16.gmra.mxu0 %v3543
        %v3853 = vpop.f32.mrf.mxu0
        %v3854 = vadd.f32 0.0, %v3853
        %v3855 = vpop.f32.mrf.mxu0
        %v3856 = vpop.f32.mrf.mxu0
        %v3857 = vadd.f32 0.0, %v3856
        %v3858 = vpop.f32.mrf.mxu0
        %3859 = vmatprep.mubr.bf16.mxu0 0
        %3860 = vmatmul.mubr.bf16.gmra.mxu0 %v3546
        %v3861 = vpop.f32.mrf.mxu0
        %v3862 = vadd.f32 0.0, %v3861
        %v3863 = vpop.f32.mrf.mxu0
        %v3864 = vpop.f32.mrf.mxu0
        %v3865 = vadd.f32 0.0, %v3864
        %v3866 = vpop.f32.mrf.mxu0
        %3867 = vmatprep.mubr.bf16.mxu0 0
        %3868 = vmatmul.mubr.bf16.gmra.mxu0 %v3549
        %v3869 = vpop.f32.mrf.mxu0
        %v3870 = vadd.f32 0.0, %v3869
        %v3871 = vpop.f32.mrf.mxu0
        %v3872 = vpop.f32.mrf.mxu0
        %v3873 = vadd.f32 0.0, %v3872
        %v3874 = vpop.f32.mrf.mxu0
        %3875 = vmatprep.mubr.bf16.mxu0 0
        %3876 = vmatmul.mubr.bf16.gmra.mxu0 %v3552
        %v3877 = vpop.f32.mrf.mxu0
        %v3878 = vadd.f32 0.0, %v3877
        %v3879 = vpop.f32.mrf.mxu0
        %v3880 = vpop.f32.mrf.mxu0
        %v3881 = vadd.f32 0.0, %v3880
        %v3882 = vpop.f32.mrf.mxu0
        %3883 = vmatprep.mubr.bf16.mxu0 0
        %3884 = vmatmul.mubr.bf16.gmra.mxu0 %v3555
        %v3885 = vpop.f32.mrf.mxu0
        %v3886 = vadd.f32 0.0, %v3885
        %v3887 = vpop.f32.mrf.mxu0
        %v3888 = vpop.f32.mrf.mxu0
        %v3889 = vadd.f32 0.0, %v3888
        %v3890 = vpop.f32.mrf.mxu0
        %3891 = vmatprep.mubr.bf16.mxu0 0
        %3892 = vmatmul.mubr.bf16.gmra.mxu0 %v3558
        %v3893 = vpop.f32.mrf.mxu0
        %v3894 = vadd.f32 0.0, %v3893
        %v3895 = vpop.f32.mrf.mxu0
        %v3896 = vpop.f32.mrf.mxu0
        %v3897 = vadd.f32 0.0, %v3896
        %v3898 = vpop.f32.mrf.mxu0
        %3899 = vmatprep.mubr.bf16.mxu0 0
        %3900 = vmatmul.mubr.bf16.gmra.mxu0 %v3561
        %v3901 = vpop.f32.mrf.mxu0
        %v3902 = vadd.f32 0.0, %v3901
        %v3903 = vpop.f32.mrf.mxu0
        %v3904 = vpop.f32.mrf.mxu0
        %v3905 = vadd.f32 0.0, %v3904
        %v3906 = vpop.f32.mrf.mxu0
        %3907 = vdwg.mxu0
        %v3908 = vadd.f32 %v2743, %v3598
        %v3909 = vadd.f32 %v2746, %v3601
        %v3910 = vadd.f32 %v2751, %v3606
        %v3911 = vadd.f32 %v2754, %v3609
        %v3912 = vadd.f32 %v2759, %v3614
        %v3913 = vadd.f32 %v2762, %v3617
        %v3914 = vadd.f32 %v2767, %v3622
        %v3915 = vadd.f32 %v2770, %v3625
        %v3916 = vadd.f32 %v2775, %v3630
        %v3917 = vadd.f32 %v2778, %v3633
        %v3918 = vadd.f32 %v2783, %v3638
        %v3919 = vadd.f32 %v2786, %v3641
        %v3920 = vadd.f32 %v2791, %v3646
        %v3921 = vadd.f32 %v2794, %v3649
        %v3922 = vadd.f32 %v2799, %v3654
        %v3923 = vadd.f32 %v2802, %v3657
        %v3924 = vadd.f32 %v2807, %v3662
        %v3925 = vadd.f32 %v2810, %v3665
        %v3926 = vadd.f32 %v2815, %v3670
        %v3927 = vadd.f32 %v2818, %v3673
        %v3928 = vadd.f32 %v2823, %v3678
        %v3929 = vadd.f32 %v2826, %v3681
        %v3930 = vadd.f32 %v2831, %v3686
        %v3931 = vadd.f32 %v2834, %v3689
        %v3932 = vadd.f32 %v2839, %v3694
        %v3933 = vadd.f32 %v2842, %v3697
        %v3934 = vadd.f32 %v2847, %v3702
        %v3935 = vadd.f32 %v2850, %v3705
        %v3936 = vadd.f32 %v2855, %v3710
        %v3937 = vadd.f32 %v2858, %v3713
        %v3938 = vadd.f32 %v2863, %v3718
        %v3939 = vadd.f32 %v2866, %v3721
        %v3940 = vadd.f32 %v2871, %v3726
        %v3941 = vadd.f32 %v2874, %v3729
        %v3942 = vadd.f32 %v2879, %v3734
        %v3943 = vadd.f32 %v2882, %v3737
        %v3944 = vadd.f32 %v2887, %v3742
        %v3945 = vadd.f32 %v2890, %v3745
        %v3946 = vadd.f32 %v2895, %v3750
        %v3947 = vadd.f32 %v2898, %v3753
        %v3948 = vadd.f32 %v2903, %v3758
        %v3949 = vadd.f32 %v2906, %v3761
        %v3950 = vadd.f32 %v2911, %v3766
        %v3951 = vadd.f32 %v2914, %v3769
        %v3952 = vadd.f32 %v2919, %v3774
        %v3953 = vadd.f32 %v2922, %v3777
        %v3954 = vadd.f32 %v2927, %v3782
        %v3955 = vadd.f32 %v2930, %v3785
        %v3956 = vadd.f32 %v2935, %v3790
        %v3957 = vadd.f32 %v2938, %v3793
        %v3958 = vadd.f32 %v2943, %v3798
        %v3959 = vadd.f32 %v2946, %v3801
        %v3960 = vadd.f32 %v2951, %v3806
        %v3961 = vadd.f32 %v2954, %v3809
        %v3962 = vadd.f32 %v2959, %v3814
        %v3963 = vadd.f32 %v2962, %v3817
        %v3964 = vadd.f32 %v2967, %v3822
        %v3965 = vadd.f32 %v2970, %v3825
        %v3966 = vadd.f32 %v2975, %v3830
        %v3967 = vadd.f32 %v2978, %v3833
        %v3968 = vadd.f32 %v2983, %v3838
        %v3969 = vadd.f32 %v2986, %v3841
        %v3970 = vadd.f32 %v2991, %v3846
        %v3971 = vadd.f32 %v2994, %v3849
        %v3972 = vadd.f32 %v2999, %v3854
        %v3973 = vadd.f32 %v3002, %v3857
        %v3974 = vadd.f32 %v3007, %v3862
        %v3975 = vadd.f32 %v3010, %v3865
        %v3976 = vadd.f32 %v3015, %v3870
        %v3977 = vadd.f32 %v3018, %v3873
        %v3978 = vadd.f32 %v3023, %v3878
        %v3979 = vadd.f32 %v3026, %v3881
        %v3980 = vadd.f32 %v3031, %v3886
        %v3981 = vadd.f32 %v3034, %v3889
        %v3982 = vadd.f32 %v3039, %v3894
        %v3983 = vadd.f32 %v3042, %v3897
        %v3984 = vadd.f32 %v3047, %v3902
        %v3985 = vadd.f32 %v3050, %v3905
        %v3987 = vlaneseq
        %v3988 = vshrl.u32 %v3987, 7
        %v3989 = vsub.s32 0, %v3988
        %v3990 = vrot.slane %v271, %v3989
        %v3992 = vadd.f32 %v3908, %v3990
        %v3993 = vadd.f32 %v3909, %v3990
        %v3994 = vadd.f32 %v3910, %v3990
        %v3995 = vadd.f32 %v3911, %v3990
        %v3996 = vadd.f32 %v3912, %v3990
        %v3997 = vadd.f32 %v3913, %v3990
        %v3998 = vadd.f32 %v3914, %v3990
        %v3999 = vadd.f32 %v3915, %v3990
        %v4000 = vadd.f32 %v3916, %v3990
        %v4001 = vadd.f32 %v3917, %v3990
        %v4002 = vadd.f32 %v3918, %v3990
        %v4003 = vadd.f32 %v3919, %v3990
        %v4004 = vadd.f32 %v3920, %v3990
        %v4005 = vadd.f32 %v3921, %v3990
        %v4006 = vadd.f32 %v3922, %v3990
        %v4007 = vadd.f32 %v3923, %v3990
        %v4008 = vadd.f32 %v3924, %v3990
        %v4009 = vadd.f32 %v3925, %v3990
        %v4010 = vadd.f32 %v3926, %v3990
        %v4011 = vadd.f32 %v3927, %v3990
        %v4012 = vadd.f32 %v3928, %v3990
        %v4013 = vadd.f32 %v3929, %v3990
        %v4014 = vadd.f32 %v3930, %v3990
        %v4015 = vadd.f32 %v3931, %v3990
        %v4016 = vadd.f32 %v3932, %v3990
        %v4017 = vadd.f32 %v3933, %v3990
        %v4018 = vadd.f32 %v3934, %v3990
        %v4019 = vadd.f32 %v3935, %v3990
        %v4020 = vadd.f32 %v3936, %v3990
        %v4021 = vadd.f32 %v3937, %v3990
        %v4022 = vadd.f32 %v3938, %v3990
        %v4023 = vadd.f32 %v3939, %v3990
        %v4024 = vadd.f32 %v3940, %v3990
        %v4025 = vadd.f32 %v3941, %v3990
        %v4026 = vadd.f32 %v3942, %v3990
        %v4027 = vadd.f32 %v3943, %v3990
        %v4028 = vadd.f32 %v3944, %v3990
        %v4029 = vadd.f32 %v3945, %v3990
        %v4030 = vadd.f32 %v3946, %v3990
        %v4031 = vadd.f32 %v3947, %v3990
        %v4032 = vadd.f32 %v3948, %v3990
        %v4033 = vadd.f32 %v3949, %v3990
        %v4034 = vadd.f32 %v3950, %v3990
        %v4035 = vadd.f32 %v3951, %v3990
        %v4036 = vadd.f32 %v3952, %v3990
        %v4037 = vadd.f32 %v3953, %v3990
        %v4038 = vadd.f32 %v3954, %v3990
        %v4039 = vadd.f32 %v3955, %v3990
        %v4040 = vadd.f32 %v3956, %v3990
        %v4041 = vadd.f32 %v3957, %v3990
        %v4042 = vadd.f32 %v3958, %v3990
        %v4043 = vadd.f32 %v3959, %v3990
        %v4044 = vadd.f32 %v3960, %v3990
        %v4045 = vadd.f32 %v3961, %v3990
        %v4046 = vadd.f32 %v3962, %v3990
        %v4047 = vadd.f32 %v3963, %v3990
        %v4048 = vadd.f32 %v3964, %v3990
        %v4049 = vadd.f32 %v3965, %v3990
        %v4050 = vadd.f32 %v3966, %v3990
        %v4051 = vadd.f32 %v3967, %v3990
        %v4052 = vadd.f32 %v3968, %v3990
        %v4053 = vadd.f32 %v3969, %v3990
        %v4054 = vadd.f32 %v3970, %v3990
        %v4055 = vadd.f32 %v3971, %v3990
        %v4056 = vadd.f32 %v3972, %v3990
        %v4057 = vadd.f32 %v3973, %v3990
        %v4058 = vadd.f32 %v3974, %v3990
        %v4059 = vadd.f32 %v3975, %v3990
        %v4060 = vadd.f32 %v3976, %v3990
        %v4061 = vadd.f32 %v3977, %v3990
        %v4062 = vadd.f32 %v3978, %v3990
        %v4063 = vadd.f32 %v3979, %v3990
        %v4064 = vadd.f32 %v3980, %v3990
        %v4065 = vadd.f32 %v3981, %v3990
        %v4066 = vadd.f32 %v3982, %v3990
        %v4067 = vadd.f32 %v3983, %v3990
        %v4068 = vadd.f32 %v3984, %v3990
        %v4069 = vadd.f32 %v3985, %v3990
        %v4070 = vmax.f32 %v3992, 0.0
        %v4071 = vmax.f32 %v3993, 0.0
        %v4072 = vmax.f32 %v3994, 0.0
        %v4073 = vmax.f32 %v3995, 0.0
        %v4074 = vmax.f32 %v3996, 0.0
        %v4075 = vmax.f32 %v3997, 0.0
        %v4076 = vmax.f32 %v3998, 0.0
        %v4077 = vmax.f32 %v3999, 0.0
        %v4078 = vmax.f32 %v4000, 0.0
        %v4079 = vmax.f32 %v4001, 0.0
        %v4080 = vmax.f32 %v4002, 0.0
        %v4081 = vmax.f32 %v4003, 0.0
        %v4082 = vmax.f32 %v4004, 0.0
        %v4083 = vmax.f32 %v4005, 0.0
        %v4084 = vmax.f32 %v4006, 0.0
        %v4085 = vmax.f32 %v4007, 0.0
        %v4086 = vmax.f32 %v4008, 0.0
        %v4087 = vmax.f32 %v4009, 0.0
        %v4088 = vmax.f32 %v4010, 0.0
        %v4089 = vmax.f32 %v4011, 0.0
        %v4090 = vmax.f32 %v4012, 0.0
        %v4091 = vmax.f32 %v4013, 0.0
        %v4092 = vmax.f32 %v4014, 0.0
        %v4093 = vmax.f32 %v4015, 0.0
        %v4094 = vmax.f32 %v4016, 0.0
        %v4095 = vmax.f32 %v4017, 0.0
        %v4096 = vmax.f32 %v4018, 0.0
        %v4097 = vmax.f32 %v4019, 0.0
        %v4098 = vmax.f32 %v4020, 0.0
        %v4099 = vmax.f32 %v4021, 0.0
        %v4100 = vmax.f32 %v4022, 0.0
        %v4101 = vmax.f32 %v4023, 0.0
        %v4102 = vmax.f32 %v4024, 0.0
        %v4103 = vmax.f32 %v4025, 0.0
        %v4104 = vmax.f32 %v4026, 0.0
        %v4105 = vmax.f32 %v4027, 0.0
        %v4106 = vmax.f32 %v4028, 0.0
        %v4107 = vmax.f32 %v4029, 0.0
        %v4108 = vmax.f32 %v4030, 0.0
        %v4109 = vmax.f32 %v4031, 0.0
        %v4110 = vmax.f32 %v4032, 0.0
        %v4111 = vmax.f32 %v4033, 0.0
        %v4112 = vmax.f32 %v4034, 0.0
        %v4113 = vmax.f32 %v4035, 0.0
        %v4114 = vmax.f32 %v4036, 0.0
        %v4115 = vmax.f32 %v4037, 0.0
        %v4116 = vmax.f32 %v4038, 0.0
        %v4117 = vmax.f32 %v4039, 0.0
        %v4118 = vmax.f32 %v4040, 0.0
        %v4119 = vmax.f32 %v4041, 0.0
        %v4120 = vmax.f32 %v4042, 0.0
        %v4121 = vmax.f32 %v4043, 0.0
        %v4122 = vmax.f32 %v4044, 0.0
        %v4123 = vmax.f32 %v4045, 0.0
        %v4124 = vmax.f32 %v4046, 0.0
        %v4125 = vmax.f32 %v4047, 0.0
        %v4126 = vmax.f32 %v4048, 0.0
        %v4127 = vmax.f32 %v4049, 0.0
        %v4128 = vmax.f32 %v4050, 0.0
        %v4129 = vmax.f32 %v4051, 0.0
        %v4130 = vmax.f32 %v4052, 0.0
        %v4131 = vmax.f32 %v4053, 0.0
        %v4132 = vmax.f32 %v4054, 0.0
        %v4133 = vmax.f32 %v4055, 0.0
        %v4134 = vmax.f32 %v4056, 0.0
        %v4135 = vmax.f32 %v4057, 0.0
        %v4136 = vmax.f32 %v4058, 0.0
        %v4137 = vmax.f32 %v4059, 0.0
        %v4138 = vmax.f32 %v4060, 0.0
        %v4139 = vmax.f32 %v4061, 0.0
        %v4140 = vmax.f32 %v4062, 0.0
        %v4141 = vmax.f32 %v4063, 0.0
        %v4142 = vmax.f32 %v4064, 0.0
        %v4143 = vmax.f32 %v4065, 0.0
        %v4144 = vmax.f32 %v4066, 0.0
        %v4145 = vmax.f32 %v4067, 0.0
        %v4146 = vmax.f32 %v4068, 0.0
        %v4147 = vmax.f32 %v4069, 0.0
        %vm4148 = vcmask 523264
        %4149 = vst.msk [vmem:[#allocation3] sm:$0xff] %vm4148, %v4070
        %4150 = vst.msk [vmem:[#allocation3 + $0x8] sm:$0xff] %vm4148, %v4071
        %4151 = vst.msk [vmem:[#allocation3 + $0x10] sm:$0xff] %vm4148, %v4072
        %4152 = vst.msk [vmem:[#allocation3 + $0x18] sm:$0xff] %vm4148, %v4073
        %4153 = vst.msk [vmem:[#allocation3 + $0x20] sm:$0xff] %vm4148, %v4074
        %4154 = vst.msk [vmem:[#allocation3 + $0x28] sm:$0xff] %vm4148, %v4075
        %4155 = vst.msk [vmem:[#allocation3 + $0x30] sm:$0xff] %vm4148, %v4076
        %4156 = vst.msk [vmem:[#allocation3 + $0x38] sm:$0xff] %vm4148, %v4077
        %4157 = vst.msk [vmem:[#allocation3 + $0x40] sm:$0xff] %vm4148, %v4078
        %4158 = vst.msk [vmem:[#allocation3 + $0x48] sm:$0xff] %vm4148, %v4079
        %4159 = vst.msk [vmem:[#allocation3 + $0x50] sm:$0xff] %vm4148, %v4080
        %4160 = vst.msk [vmem:[#allocation3 + $0x58] sm:$0xff] %vm4148, %v4081
        %4161 = vst.msk [vmem:[#allocation3 + $0x60] sm:$0xff] %vm4148, %v4082
        %4162 = vst.msk [vmem:[#allocation3 + $0x68] sm:$0xff] %vm4148, %v4083
        %4163 = vst.msk [vmem:[#allocation3 + $0x70] sm:$0xff] %vm4148, %v4084
        %4164 = vst.msk [vmem:[#allocation3 + $0x78] sm:$0xff] %vm4148, %v4085
        %4165 = vst.msk [vmem:[#allocation3 + $0x80] sm:$0xff] %vm4148, %v4086
        %4166 = vst.msk [vmem:[#allocation3 + $0x88] sm:$0xff] %vm4148, %v4087
        %4167 = vst.msk [vmem:[#allocation3 + $0x90] sm:$0xff] %vm4148, %v4088
        %4168 = vst.msk [vmem:[#allocation3 + $0x98] sm:$0xff] %vm4148, %v4089
        %4169 = vst.msk [vmem:[#allocation3 + $0xa0] sm:$0xff] %vm4148, %v4090
        %4170 = vst.msk [vmem:[#allocation3 + $0xa8] sm:$0xff] %vm4148, %v4091
        %4171 = vst.msk [vmem:[#allocation3 + $0xb0] sm:$0xff] %vm4148, %v4092
        %4172 = vst.msk [vmem:[#allocation3 + $0xb8] sm:$0xff] %vm4148, %v4093
        %4173 = vst.msk [vmem:[#allocation3 + $0xc0] sm:$0xff] %vm4148, %v4094
        %4174 = vst.msk [vmem:[#allocation3 + $0xc8] sm:$0xff] %vm4148, %v4095
        %4175 = vst.msk [vmem:[#allocation3 + $0xd0] sm:$0xff] %vm4148, %v4096
        %4176 = vst.msk [vmem:[#allocation3 + $0xd8] sm:$0xff] %vm4148, %v4097
        %4177 = vst.msk [vmem:[#allocation3 + $0xe0] sm:$0xff] %vm4148, %v4098
        %4178 = vst.msk [vmem:[#allocation3 + $0xe8] sm:$0xff] %vm4148, %v4099
        %4179 = vst.msk [vmem:[#allocation3 + $0xf0] sm:$0xff] %vm4148, %v4100
        %4180 = vst.msk [vmem:[#allocation3 + $0xf8] sm:$0xff] %vm4148, %v4101
        %4181 = vst.msk [vmem:[#allocation3 + $0x100] sm:$0xff] %vm4148, %v4102
        %4182 = vst.msk [vmem:[#allocation3 + $0x108] sm:$0xff] %vm4148, %v4103
        %4183 = vst.msk [vmem:[#allocation3 + $0x110] sm:$0xff] %vm4148, %v4104
        %4184 = vst.msk [vmem:[#allocation3 + $0x118] sm:$0xff] %vm4148, %v4105
        %4185 = vst.msk [vmem:[#allocation3 + $0x120] sm:$0xff] %vm4148, %v4106
        %4186 = vst.msk [vmem:[#allocation3 + $0x128] sm:$0xff] %vm4148, %v4107
        %4187 = vst.msk [vmem:[#allocation3 + $0x130] sm:$0xff] %vm4148, %v4108
        %4188 = vst.msk [vmem:[#allocation3 + $0x138] sm:$0xff] %vm4148, %v4109
        %4189 = vst.msk [vmem:[#allocation3 + $0x140] sm:$0xff] %vm4148, %v4110
        %4190 = vst.msk [vmem:[#allocation3 + $0x148] sm:$0xff] %vm4148, %v4111
        %4191 = vst.msk [vmem:[#allocation3 + $0x150] sm:$0xff] %vm4148, %v4112
        %4192 = vst.msk [vmem:[#allocation3 + $0x158] sm:$0xff] %vm4148, %v4113
        %4193 = vst.msk [vmem:[#allocation3 + $0x160] sm:$0xff] %vm4148, %v4114
        %4194 = vst.msk [vmem:[#allocation3 + $0x168] sm:$0xff] %vm4148, %v4115
        %4195 = vst.msk [vmem:[#allocation3 + $0x170] sm:$0xff] %vm4148, %v4116
        %4196 = vst.msk [vmem:[#allocation3 + $0x178] sm:$0xff] %vm4148, %v4117
        %4197 = vst.msk [vmem:[#allocation3 + $0x180] sm:$0xff] %vm4148, %v4118
        %4198 = vst.msk [vmem:[#allocation3 + $0x188] sm:$0xff] %vm4148, %v4119
        %4199 = vst.msk [vmem:[#allocation3 + $0x190] sm:$0xff] %vm4148, %v4120
        %4200 = vst.msk [vmem:[#allocation3 + $0x198] sm:$0xff] %vm4148, %v4121
        %4201 = vst.msk [vmem:[#allocation3 + $0x1a0] sm:$0xff] %vm4148, %v4122
        %4202 = vst.msk [vmem:[#allocation3 + $0x1a8] sm:$0xff] %vm4148, %v4123
        %4203 = vst.msk [vmem:[#allocation3 + $0x1b0] sm:$0xff] %vm4148, %v4124
        %4204 = vst.msk [vmem:[#allocation3 + $0x1b8] sm:$0xff] %vm4148, %v4125
        %4205 = vst.msk [vmem:[#allocation3 + $0x1c0] sm:$0xff] %vm4148, %v4126
        %4206 = vst.msk [vmem:[#allocation3 + $0x1c8] sm:$0xff] %vm4148, %v4127
        %4207 = vst.msk [vmem:[#allocation3 + $0x1d0] sm:$0xff] %vm4148, %v4128
        %4208 = vst.msk [vmem:[#allocation3 + $0x1d8] sm:$0xff] %vm4148, %v4129
        %4209 = vst.msk [vmem:[#allocation3 + $0x1e0] sm:$0xff] %vm4148, %v4130
        %4210 = vst.msk [vmem:[#allocation3 + $0x1e8] sm:$0xff] %vm4148, %v4131
        %4211 = vst.msk [vmem:[#allocation3 + $0x1f0] sm:$0xff] %vm4148, %v4132
        %4212 = vst.msk [vmem:[#allocation3 + $0x1f8] sm:$0xff] %vm4148, %v4133
        %4213 = vst.msk [vmem:[#allocation3 + $0x200] sm:$0xff] %vm4148, %v4134
        %4214 = vst.msk [vmem:[#allocation3 + $0x208] sm:$0xff] %vm4148, %v4135
        %4215 = vst.msk [vmem:[#allocation3 + $0x210] sm:$0xff] %vm4148, %v4136
        %4216 = vst.msk [vmem:[#allocation3 + $0x218] sm:$0xff] %vm4148, %v4137
        %4217 = vst.msk [vmem:[#allocation3 + $0x220] sm:$0xff] %vm4148, %v4138
        %4218 = vst.msk [vmem:[#allocation3 + $0x228] sm:$0xff] %vm4148, %v4139
        %4219 = vst.msk [vmem:[#allocation3 + $0x230] sm:$0xff] %vm4148, %v4140
        %4220 = vst.msk [vmem:[#allocation3 + $0x238] sm:$0xff] %vm4148, %v4141
        %4221 = vst.msk [vmem:[#allocation3 + $0x240] sm:$0xff] %vm4148, %v4142
        %4222 = vst.msk [vmem:[#allocation3 + $0x248] sm:$0xff] %vm4148, %v4143
        %4223 = vst.msk [vmem:[#allocation3 + $0x250] sm:$0xff] %vm4148, %v4144
        %4224 = vst.msk [vmem:[#allocation3 + $0x258] sm:$0xff] %vm4148, %v4145
        %4225 = vst.msk [vmem:[#allocation3 + $0x260] sm:$0xff] %vm4148, %v4146
        %4226 = vst.msk [vmem:[#allocation3 + $0x268] sm:$0xff] %vm4148, %v4147
        %v4227 = vld [vmem:[#allocation3] ss:$2 sm:$0xff]
        %s4228 = scalar_lea.vmem [#allocation3], 16
        %v4229 = vld [vmem:[%s4228] ss:$2 sm:$0xf]
        %s4230 = scalar_lea.vmem [#allocation3], 1
        %v4231 = vld [vmem:[%s4230] ss:$2 sm:$0xff]
        %s4232 = scalar_lea.vmem [#allocation3], 17
        %v4233 = vld [vmem:[%s4232] ss:$2 sm:$0xf]
        %v4234 = vmax.f32 %v4227, %v4231
        %v4235 = vmax.f32 %v4229, %v4233
        %s4236 = scalar_lea.vmem [#allocation3], 26
        %v4237 = vld [vmem:[%s4236] ss:$2 sm:$0xff]
        %s4238 = scalar_lea.vmem [#allocation3], 42
        %v4239 = vld [vmem:[%s4238] ss:$2 sm:$0xf]
        %s4240 = scalar_lea.vmem [#allocation3], 27
        %v4241 = vld [vmem:[%s4240] ss:$2 sm:$0xff]
        %s4242 = scalar_lea.vmem [#allocation3], 43
        %v4243 = vld [vmem:[%s4242] ss:$2 sm:$0xf]
        %v4244 = vmax.f32 %v4237, %v4241
        %v4245 = vmax.f32 %v4239, %v4243
        %v4246 = vmax.f32 %v4234, %v4244
        %v4247 = vmax.f32 %v4235, %v4245
        %v4248 = vpack.c.bf16 %v4247, %v4246
        %v4250 = vunpack.c.l.b16 %v4248
        %v4251 = vunpack.c.h.b16 %v4248
        %v4252 = vpack.c.b16 %v4250, %v4250
        %v4253 = vpack.c.b16 %v4251, %v4251
        %vm4256 = vcmask 519168
        %4257 = vst.msk [vmem:[%s264] sm:$0xf] %vm4256, %v4252
        %vm4258 = vcmask 517120
        %4259 = vst.msk [vmem:[%s264 + $0x4] sm:$0x3] %vm4258, %v4253
        %s4260 = scalar_lea.vmem [#allocation3], 52
        %v4261 = vld [vmem:[%s4260] ss:$2 sm:$0xff]
        %s4262 = scalar_lea.vmem [#allocation3], 68
        %v4263 = vld [vmem:[%s4262] ss:$2 sm:$0xf]
        %s4264 = scalar_lea.vmem [#allocation3], 53
        %v4265 = vld [vmem:[%s4264] ss:$2 sm:$0xff]
        %s4266 = scalar_lea.vmem [#allocation3], 69
        %v4267 = vld [vmem:[%s4266] ss:$2 sm:$0xf]
        %v4268 = vmax.f32 %v4261, %v4265
        %v4269 = vmax.f32 %v4263, %v4267
        %s4270 = scalar_lea.vmem [#allocation3], 78
        %v4271 = vld [vmem:[%s4270] ss:$2 sm:$0xff]
        %s4272 = scalar_lea.vmem [#allocation3], 94
        %v4273 = vld [vmem:[%s4272] ss:$2 sm:$0xf]
        %s4274 = scalar_lea.vmem [#allocation3], 79
        %v4275 = vld [vmem:[%s4274] ss:$2 sm:$0xff]
        %s4276 = scalar_lea.vmem [#allocation3], 95
        %v4277 = vld [vmem:[%s4276] ss:$2 sm:$0xf]
        %v4278 = vmax.f32 %v4271, %v4275
        %v4279 = vmax.f32 %v4273, %v4277
        %v4280 = vmax.f32 %v4268, %v4278
        %v4281 = vmax.f32 %v4269, %v4279
        %v4282 = vpack.c.bf16 %v4281, %v4280
        %v4284 = vunpack.c.l.b16 %v4282
        %v4285 = vunpack.c.h.b16 %v4282
        %v4286 = vpack.c.b16 %v4284, %v4284
        %v4287 = vpack.c.b16 %v4285, %v4285
        %vm4288 = vcmask 1041408
        %vm4289 = vcmask 1045508
        %vm4290 = vmor %vm4288, %vm4289
        %v4291 = vrot.slane %v4286, 6
        %v4292 = vrot.slane %v4291, 4
        %v4293 = vrot.slane %v4287, 6
        %v4294 = vsel %vm4290, %v4292, %v4293
        %vm4297 = vcmask 519170
        %4298 = vst.msk [vmem:[%s264 + $0x4] sm:$0xc] %vm4297, %v4291
        %4299 = vst.msk [vmem:[%s264 + $0x8] sm:$0xf] %vm4256, %v4294
        %s4300 = scalar_lea.vmem [#allocation3], 104
        %v4301 = vld [vmem:[%s4300] ss:$2 sm:$0xff]
        %s4302 = scalar_lea.vmem [#allocation3], 120
        %v4303 = vld [vmem:[%s4302] ss:$2 sm:$0xf]
        %s4304 = scalar_lea.vmem [#allocation3], 105
        %v4305 = vld [vmem:[%s4304] ss:$2 sm:$0xff]
        %s4306 = scalar_lea.vmem [#allocation3], 121
        %v4307 = vld [vmem:[%s4306] ss:$2 sm:$0xf]
        %v4308 = vmax.f32 %v4301, %v4305
        %v4309 = vmax.f32 %v4303, %v4307
        %s4310 = scalar_lea.vmem [#allocation3], 130
        %v4311 = vld [vmem:[%s4310] ss:$2 sm:$0xff]
        %s4312 = scalar_lea.vmem [#allocation3], 146
        %v4313 = vld [vmem:[%s4312] ss:$2 sm:$0xf]
        %s4314 = scalar_lea.vmem [#allocation3], 131
        %v4315 = vld [vmem:[%s4314] ss:$2 sm:$0xff]
        %s4316 = scalar_lea.vmem [#allocation3], 147
        %v4317 = vld [vmem:[%s4316] ss:$2 sm:$0xf]
        %v4318 = vmax.f32 %v4311, %v4315
        %v4319 = vmax.f32 %v4313, %v4317
        %v4320 = vmax.f32 %v4308, %v4318
        %v4321 = vmax.f32 %v4309, %v4319
        %v4322 = vpack.c.bf16 %v4321, %v4320
        %v4324 = vunpack.c.l.b16 %v4322
        %v4325 = vunpack.c.h.b16 %v4322
        %v4326 = vpack.c.b16 %v4324, %v4324
        %v4327 = vpack.c.b16 %v4325, %v4325
        %4330 = vst.msk [vmem:[%s264 + $0xc] sm:$0xf] %vm4256, %v4326
        %4331 = vst.msk [vmem:[%s264 + $0x10] sm:$0x3] %vm4258, %v4327
        %s4332 = scalar_lea.vmem [#allocation3], 156
        %v4333 = vld [vmem:[%s4332] ss:$2 sm:$0xff]
        %s4334 = scalar_lea.vmem [#allocation3], 172
        %v4335 = vld [vmem:[%s4334] ss:$2 sm:$0xf]
        %s4336 = scalar_lea.vmem [#allocation3], 157
        %v4337 = vld [vmem:[%s4336] ss:$2 sm:$0xff]
        %s4338 = scalar_lea.vmem [#allocation3], 173
        %v4339 = vld [vmem:[%s4338] ss:$2 sm:$0xf]
        %v4340 = vmax.f32 %v4333, %v4337
        %v4341 = vmax.f32 %v4335, %v4339
        %s4342 = scalar_lea.vmem [#allocation3], 182
        %v4343 = vld [vmem:[%s4342] ss:$2 sm:$0xff]
        %s4344 = scalar_lea.vmem [#allocation3], 198
        %v4345 = vld [vmem:[%s4344] ss:$2 sm:$0xf]
        %s4346 = scalar_lea.vmem [#allocation3], 183
        %v4347 = vld [vmem:[%s4346] ss:$2 sm:$0xff]
        %s4348 = scalar_lea.vmem [#allocation3], 199
        %v4349 = vld [vmem:[%s4348] ss:$2 sm:$0xf]
        %v4350 = vmax.f32 %v4343, %v4347
        %v4351 = vmax.f32 %v4345, %v4349
        %v4352 = vmax.f32 %v4340, %v4350
        %v4353 = vmax.f32 %v4341, %v4351
        %v4354 = vpack.c.bf16 %v4353, %v4352
        %v4356 = vunpack.c.l.b16 %v4354
        %v4357 = vunpack.c.h.b16 %v4354
        %v4358 = vpack.c.b16 %v4356, %v4356
        %v4359 = vpack.c.b16 %v4357, %v4357
        %v4360 = vrot.slane %v4358, 6
        %v4361 = vrot.slane %v4360, 4
        %v4362 = vrot.slane %v4359, 6
        %v4363 = vsel %vm4290, %v4361, %v4362
        %4366 = vst.msk [vmem:[%s264 + $0x10] sm:$0xc] %vm4297, %v4360
        %4367 = vst.msk [vmem:[%s264 + $0x14] sm:$0xf] %vm4256, %v4363
        %s4368 = scalar_lea.vmem [#allocation3], 208
        %v4369 = vld [vmem:[%s4368] ss:$2 sm:$0xff]
        %s4370 = scalar_lea.vmem [#allocation3], 224
        %v4371 = vld [vmem:[%s4370] ss:$2 sm:$0xf]
        %s4372 = scalar_lea.vmem [#allocation3], 209
        %v4373 = vld [vmem:[%s4372] ss:$2 sm:$0xff]
        %s4374 = scalar_lea.vmem [#allocation3], 225
        %v4375 = vld [vmem:[%s4374] ss:$2 sm:$0xf]
        %v4376 = vmax.f32 %v4369, %v4373
        %v4377 = vmax.f32 %v4371, %v4375
        %s4378 = scalar_lea.vmem [#allocation3], 234
        %v4379 = vld [vmem:[%s4378] ss:$2 sm:$0xff]
        %s4380 = scalar_lea.vmem [#allocation3], 250
        %v4381 = vld [vmem:[%s4380] ss:$2 sm:$0xf]
        %s4382 = scalar_lea.vmem [#allocation3], 235
        %v4383 = vld [vmem:[%s4382] ss:$2 sm:$0xff]
        %s4384 = scalar_lea.vmem [#allocation3], 251
        %v4385 = vld [vmem:[%s4384] ss:$2 sm:$0xf]
        %v4386 = vmax.f32 %v4379, %v4383
        %v4387 = vmax.f32 %v4381, %v4385
        %v4388 = vmax.f32 %v4376, %v4386
        %v4389 = vmax.f32 %v4377, %v4387
        %v4390 = vpack.c.bf16 %v4389, %v4388
        %v4392 = vunpack.c.l.b16 %v4390
        %v4393 = vunpack.c.h.b16 %v4390
        %v4394 = vpack.c.b16 %v4392, %v4392
        %v4395 = vpack.c.b16 %v4393, %v4393
        %4398 = vst.msk [vmem:[%s264 + $0x18] sm:$0xf] %vm4256, %v4394
        %4399 = vst.msk [vmem:[%s264 + $0x1c] sm:$0x3] %vm4258, %v4395
        %s4400 = scalar_lea.vmem [#allocation3], 260
        %v4401 = vld [vmem:[%s4400] ss:$2 sm:$0xff]
        %s4402 = scalar_lea.vmem [#allocation3], 276
        %v4403 = vld [vmem:[%s4402] ss:$2 sm:$0xf]
        %s4404 = scalar_lea.vmem [#allocation3], 261
        %v4405 = vld [vmem:[%s4404] ss:$2 sm:$0xff]
        %s4406 = scalar_lea.vmem [#allocation3], 277
        %v4407 = vld [vmem:[%s4406] ss:$2 sm:$0xf]
        %v4408 = vmax.f32 %v4401, %v4405
        %v4409 = vmax.f32 %v4403, %v4407
        %s4410 = scalar_lea.vmem [#allocation3], 286
        %v4411 = vld [vmem:[%s4410] ss:$2 sm:$0xff]
        %s4412 = scalar_lea.vmem [#allocation3], 302
        %v4413 = vld [vmem:[%s4412] ss:$2 sm:$0xf]
        %s4414 = scalar_lea.vmem [#allocation3], 287
        %v4415 = vld [vmem:[%s4414] ss:$2 sm:$0xff]
        %s4416 = scalar_lea.vmem [#allocation3], 303
        %v4417 = vld [vmem:[%s4416] ss:$2 sm:$0xf]
        %v4418 = vmax.f32 %v4411, %v4415
        %v4419 = vmax.f32 %v4413, %v4417
        %v4420 = vmax.f32 %v4408, %v4418
        %v4421 = vmax.f32 %v4409, %v4419
        %v4422 = vpack.c.bf16 %v4421, %v4420
        %v4424 = vunpack.c.l.b16 %v4422
        %v4425 = vunpack.c.h.b16 %v4422
        %v4426 = vpack.c.b16 %v4424, %v4424
        %v4427 = vpack.c.b16 %v4425, %v4425
        %v4428 = vrot.slane %v4426, 6
        %v4429 = vrot.slane %v4428, 4
        %v4430 = vrot.slane %v4427, 6
        %v4431 = vsel %vm4290, %v4429, %v4430
        %4434 = vst.msk [vmem:[%s264 + $0x1c] sm:$0xc] %vm4297, %v4428
        %4435 = vst.msk [vmem:[%s264 + $0x20] sm:$0xf] %vm4256, %v4431
        %s4436 = scalar_lea.vmem [#allocation3], 312
        %v4437 = vld [vmem:[%s4436] ss:$2 sm:$0xff]
        %s4438 = scalar_lea.vmem [#allocation3], 328
        %v4439 = vld [vmem:[%s4438] ss:$2 sm:$0xf]
        %s4440 = scalar_lea.vmem [#allocation3], 313
        %v4441 = vld [vmem:[%s4440] ss:$2 sm:$0xff]
        %s4442 = scalar_lea.vmem [#allocation3], 329
        %v4443 = vld [vmem:[%s4442] ss:$2 sm:$0xf]
        %v4444 = vmax.f32 %v4437, %v4441
        %v4445 = vmax.f32 %v4439, %v4443
        %s4446 = scalar_lea.vmem [#allocation3], 338
        %v4447 = vld [vmem:[%s4446] ss:$2 sm:$0xff]
        %s4448 = scalar_lea.vmem [#allocation3], 354
        %v4449 = vld [vmem:[%s4448] ss:$2 sm:$0xf]
        %s4450 = scalar_lea.vmem [#allocation3], 339
        %v4451 = vld [vmem:[%s4450] ss:$2 sm:$0xff]
        %s4452 = scalar_lea.vmem [#allocation3], 355
        %v4453 = vld [vmem:[%s4452] ss:$2 sm:$0xf]
        %v4454 = vmax.f32 %v4447, %v4451
        %v4455 = vmax.f32 %v4449, %v4453
        %v4456 = vmax.f32 %v4444, %v4454
        %v4457 = vmax.f32 %v4445, %v4455
        %v4458 = vpack.c.bf16 %v4457, %v4456
        %v4460 = vunpack.c.l.b16 %v4458
        %v4461 = vunpack.c.h.b16 %v4458
        %v4462 = vpack.c.b16 %v4460, %v4460
        %v4463 = vpack.c.b16 %v4461, %v4461
        %4466 = vst.msk [vmem:[%s264 + $0x24] sm:$0xf] %vm4256, %v4462
        %4467 = vst.msk [vmem:[%s264 + $0x28] sm:$0x3] %vm4258, %v4463
        %s4468 = scalar_lea.vmem [#allocation3], 364
        %v4469 = vld [vmem:[%s4468] ss:$2 sm:$0xff]
        %s4470 = scalar_lea.vmem [#allocation3], 380
        %v4471 = vld [vmem:[%s4470] ss:$2 sm:$0xf]
        %s4472 = scalar_lea.vmem [#allocation3], 365
        %v4473 = vld [vmem:[%s4472] ss:$2 sm:$0xff]
        %s4474 = scalar_lea.vmem [#allocation3], 381
        %v4475 = vld [vmem:[%s4474] ss:$2 sm:$0xf]
        %v4476 = vmax.f32 %v4469, %v4473
        %v4477 = vmax.f32 %v4471, %v4475
        %s4478 = scalar_lea.vmem [#allocation3], 390
        %v4479 = vld [vmem:[%s4478] ss:$2 sm:$0xff]
        %s4480 = scalar_lea.vmem [#allocation3], 406
        %v4481 = vld [vmem:[%s4480] ss:$2 sm:$0xf]
        %s4482 = scalar_lea.vmem [#allocation3], 391
        %v4483 = vld [vmem:[%s4482] ss:$2 sm:$0xff]
        %s4484 = scalar_lea.vmem [#allocation3], 407
        %v4485 = vld [vmem:[%s4484] ss:$2 sm:$0xf]
        %v4486 = vmax.f32 %v4479, %v4483
        %v4487 = vmax.f32 %v4481, %v4485
        %v4488 = vmax.f32 %v4476, %v4486
        %v4489 = vmax.f32 %v4477, %v4487
        %v4490 = vpack.c.bf16 %v4489, %v4488
        %v4492 = vunpack.c.l.b16 %v4490
        %v4493 = vunpack.c.h.b16 %v4490
        %v4494 = vpack.c.b16 %v4492, %v4492
        %v4495 = vpack.c.b16 %v4493, %v4493
        %v4496 = vrot.slane %v4494, 6
        %v4497 = vrot.slane %v4496, 4
        %v4498 = vrot.slane %v4495, 6
        %v4499 = vsel %vm4290, %v4497, %v4498
        %4502 = vst.msk [vmem:[%s264 + $0x28] sm:$0xc] %vm4297, %v4496
        %4503 = vst.msk [vmem:[%s264 + $0x2c] sm:$0xf] %vm4256, %v4499
        %s4504 = scalar_lea.vmem [#allocation3], 416
        %v4505 = vld [vmem:[%s4504] ss:$2 sm:$0xff]
        %s4506 = scalar_lea.vmem [#allocation3], 432
        %v4507 = vld [vmem:[%s4506] ss:$2 sm:$0xf]
        %s4508 = scalar_lea.vmem [#allocation3], 417
        %v4509 = vld [vmem:[%s4508] ss:$2 sm:$0xff]
        %s4510 = scalar_lea.vmem [#allocation3], 433
        %v4511 = vld [vmem:[%s4510] ss:$2 sm:$0xf]
        %v4512 = vmax.f32 %v4505, %v4509
        %v4513 = vmax.f32 %v4507, %v4511
        %s4514 = scalar_lea.vmem [#allocation3], 442
        %v4515 = vld [vmem:[%s4514] ss:$2 sm:$0xff]
        %s4516 = scalar_lea.vmem [#allocation3], 458
        %v4517 = vld [vmem:[%s4516] ss:$2 sm:$0xf]
        %s4518 = scalar_lea.vmem [#allocation3], 443
        %v4519 = vld [vmem:[%s4518] ss:$2 sm:$0xff]
        %s4520 = scalar_lea.vmem [#allocation3], 459
        %v4521 = vld [vmem:[%s4520] ss:$2 sm:$0xf]
        %v4522 = vmax.f32 %v4515, %v4519
        %v4523 = vmax.f32 %v4517, %v4521
        %v4524 = vmax.f32 %v4512, %v4522
        %v4525 = vmax.f32 %v4513, %v4523
        %v4526 = vpack.c.bf16 %v4525, %v4524
        %v4528 = vunpack.c.l.b16 %v4526
        %v4529 = vunpack.c.h.b16 %v4526
        %v4530 = vpack.c.b16 %v4528, %v4528
        %v4531 = vpack.c.b16 %v4529, %v4529
        %4534 = vst.msk [vmem:[%s264 + $0x30] sm:$0xf] %vm4256, %v4530
        %4535 = vst.msk [vmem:[%s264 + $0x34] sm:$0x3] %vm4258, %v4531
        %s4536 = scalar_lea.vmem [#allocation3], 468
        %v4537 = vld [vmem:[%s4536] ss:$2 sm:$0xff]
        %s4538 = scalar_lea.vmem [#allocation3], 484
        %v4539 = vld [vmem:[%s4538] ss:$2 sm:$0xf]
        %s4540 = scalar_lea.vmem [#allocation3], 469
        %v4541 = vld [vmem:[%s4540] ss:$2 sm:$0xff]
        %s4542 = scalar_lea.vmem [#allocation3], 485
        %v4543 = vld [vmem:[%s4542] ss:$2 sm:$0xf]
        %v4544 = vmax.f32 %v4537, %v4541
        %v4545 = vmax.f32 %v4539, %v4543
        %s4546 = scalar_lea.vmem [#allocation3], 494
        %v4547 = vld [vmem:[%s4546] ss:$2 sm:$0xff]
        %s4548 = scalar_lea.vmem [#allocation3], 510
        %v4549 = vld [vmem:[%s4548] ss:$2 sm:$0xf]
        %s4550 = scalar_lea.vmem [#allocation3], 495
        %v4551 = vld [vmem:[%s4550] ss:$2 sm:$0xff]
        %s4552 = scalar_lea.vmem [#allocation3], 511
        %v4553 = vld [vmem:[%s4552] ss:$2 sm:$0xf]
        %v4554 = vmax.f32 %v4547, %v4551
        %v4555 = vmax.f32 %v4549, %v4553
        %v4556 = vmax.f32 %v4544, %v4554
        %v4557 = vmax.f32 %v4545, %v4555
        %v4558 = vpack.c.bf16 %v4557, %v4556
        %v4560 = vunpack.c.l.b16 %v4558
        %v4561 = vunpack.c.h.b16 %v4558
        %v4562 = vpack.c.b16 %v4560, %v4560
        %v4563 = vpack.c.b16 %v4561, %v4561
        %v4564 = vrot.slane %v4562, 6
        %v4565 = vrot.slane %v4564, 4
        %v4566 = vrot.slane %v4563, 6
        %v4567 = vsel %vm4290, %v4565, %v4566
        %4570 = vst.msk [vmem:[%s264 + $0x34] sm:$0xc] %vm4297, %v4564
        %4571 = vst.msk [vmem:[%s264 + $0x38] sm:$0xf] %vm4256, %v4567
        %s4572 = scalar_lea.vmem [#allocation3], 520
        %v4573 = vld [vmem:[%s4572] ss:$2 sm:$0xff]
        %s4574 = scalar_lea.vmem [#allocation3], 536
        %v4575 = vld [vmem:[%s4574] ss:$2 sm:$0xf]
        %s4576 = scalar_lea.vmem [#allocation3], 521
        %v4577 = vld [vmem:[%s4576] ss:$2 sm:$0xff]
        %s4578 = scalar_lea.vmem [#allocation3], 537
        %v4579 = vld [vmem:[%s4578] ss:$2 sm:$0xf]
        %v4580 = vmax.f32 %v4573, %v4577
        %v4581 = vmax.f32 %v4575, %v4579
        %s4582 = scalar_lea.vmem [#allocation3], 546
        %v4583 = vld [vmem:[%s4582] ss:$2 sm:$0xff]
        %s4584 = scalar_lea.vmem [#allocation3], 562
        %v4585 = vld [vmem:[%s4584] ss:$2 sm:$0xf]
        %s4586 = scalar_lea.vmem [#allocation3], 547
        %v4587 = vld [vmem:[%s4586] ss:$2 sm:$0xff]
        %s4588 = scalar_lea.vmem [#allocation3], 563
        %v4589 = vld [vmem:[%s4588] ss:$2 sm:$0xf]
        %v4590 = vmax.f32 %v4583, %v4587
        %v4591 = vmax.f32 %v4585, %v4589
        %v4592 = vmax.f32 %v4580, %v4590
        %v4593 = vmax.f32 %v4581, %v4591
        %v4594 = vpack.c.bf16 %v4593, %v4592
        %v4596 = vunpack.c.l.b16 %v4594
        %v4597 = vunpack.c.h.b16 %v4594
        %v4598 = vpack.c.b16 %v4596, %v4596
        %v4599 = vpack.c.b16 %v4597, %v4597
        %4602 = vst.msk [vmem:[%s264 + $0x3c] sm:$0xf] %vm4256, %v4598
        %4603 = vst.msk [vmem:[%s264 + $0x40] sm:$0x3] %vm4258, %v4599
        %s4604 = scalar_lea.vmem [#allocation3], 572
        %v4605 = vld [vmem:[%s4604] ss:$2 sm:$0xff]
        %s4606 = scalar_lea.vmem [#allocation3], 588
        %v4607 = vld [vmem:[%s4606] ss:$2 sm:$0xf]
        %s4608 = scalar_lea.vmem [#allocation3], 573
        %v4609 = vld [vmem:[%s4608] ss:$2 sm:$0xff]
        %s4610 = scalar_lea.vmem [#allocation3], 589
        %v4611 = vld [vmem:[%s4610] ss:$2 sm:$0xf]
        %v4612 = vmax.f32 %v4605, %v4609
        %v4613 = vmax.f32 %v4607, %v4611
        %s4614 = scalar_lea.vmem [#allocation3], 598
        %v4615 = vld [vmem:[%s4614] ss:$2 sm:$0xff]
        %s4616 = scalar_lea.vmem [#allocation3], 614
        %v4617 = vld [vmem:[%s4616] ss:$2 sm:$0xf]
        %s4618 = scalar_lea.vmem [#allocation3], 599
        %v4619 = vld [vmem:[%s4618] ss:$2 sm:$0xff]
        %s4620 = scalar_lea.vmem [#allocation3], 615
        %v4621 = vld [vmem:[%s4620] ss:$2 sm:$0xf]
        %v4622 = vmax.f32 %v4615, %v4619
        %v4623 = vmax.f32 %v4617, %v4621
        %v4624 = vmax.f32 %v4612, %v4622
        %v4625 = vmax.f32 %v4613, %v4623
        %v4626 = vpack.c.bf16 %v4625, %v4624
        %v4628 = vunpack.c.l.b16 %v4626
        %v4629 = vunpack.c.h.b16 %v4626
        %v4630 = vpack.c.b16 %v4628, %v4628
        %v4631 = vpack.c.b16 %v4629, %v4629
        %v4632 = vrot.slane %v4630, 6
        %v4633 = vrot.slane %v4632, 4
        %v4634 = vrot.slane %v4631, 6
        %v4635 = vsel %vm4290, %v4633, %v4634
        %4638 = vst.msk [vmem:[%s264 + $0x40] sm:$0xc] %vm4297, %v4632
        %4639 = vst.msk [vmem:[%s264 + $0x44] sm:$0xf] %vm4256, %v4635
        %p4640 = scmp.lt.s32.totalorder %s18, 1
        %s4641 = scalar_select %p4640, %s18, 1
        %s4642 = smul.addr %s4641, 18
        %s4643 = smul.addr %s4642, 4
        %s4644 = scalar_lea.vmem %s5, %s4643
        // Predicated region
        $region53: #{simple_cnn_forward.2} parent=39 // pred_check
          %p4645 = pneg %p146
        $region54: #{simple_cnn_forward.2} parent=39 // pred_check_branch
          %4647 = sbr.rel (%p4645) target = $region56
        $region55: #{simple_cnn_forward.2} parent=39 // pred_region
          _
        $region56: #{simple_cnn_forward.2} parent=39 // pred_fallthru
          _
      $region40: #{simple_cnn_forward.2} parent=5 // pred_fallthru
        _
      %p4648 = scmp.le.s32.totalorder 2, %s13
      // Predicated region
      $region57: #{simple_cnn_forward.2} parent=5 // pred_check
        %p4649 = pneg %p4648
      $region58: #{simple_cnn_forward.2} parent=5 // pred_check_branch
        %4651 = sbr.rel (%p4649) target = $region60
      $region59: #{simple_cnn_forward.2} parent=5 // pred_region
        %s4652 = ssub.s32 %s13, 2
        // Predicated region
        $region61: #{simple_cnn_forward.2} parent=59 // pred_check
          %p4653 = pneg %p152
        $region62: #{simple_cnn_forward.2} parent=59 // pred_check_branch
          %4655 = sbr.rel (%p4653) target = $region64
        $region63: #{simple_cnn_forward.2} parent=59 // pred_region
          %p4656 = scmp.lt.s32.totalorder %s19, 1
          %s4657 = scalar_select %p4656, %s19, 1
          %s4658 = smul.addr %s4657, 18
          %s4659 = smul.addr %s4658, 4
          %s4660 = scalar_lea.vmem %s5, %s4659
        $region64: #{simple_cnn_forward.2} parent=59 // pred_fallthru
          _
      $region60: #{simple_cnn_forward.2} parent=5 // pred_fallthru
        _
    $region6: #{simple_cnn_forward.2} parent=1 // loop_footer
      %s17 = sadd.s32 1, %s13
    $region7: #{simple_cnn_forward.2} parent=1 // loop_footer_branch
      %12 = sbr.rel target = $region3
    $region8: #{simple_cnn_forward.2} parent=1 // loop_exit
      _
    %4661 = vsyncpa [#allocation5], 1
    %s4662 = scalar_lea.sflag [#allocation5], 1
    %4663 = vsyncpa %s4662, 1
    %4664 = vsyncpa [#allocation7], 1

// kernel: simple_cnn_forward.3
$region0: #{simple_cnn_forward.3}
  #allocation0 [shape = 'u32[]', space=smem, size = 0x4, offset = 0x4, fixed_abs, tag = 'smem constant byte address 0x4 - core index']
  #allocation1 [shape = 'u32[144,128]{1,0:T(1,128)}', space=vmem, size = 0x12000, scoped, tag = 'internal scratch']
  %s0 = inlined_call_operand.vmem [shape: bf16[2,9216], index: 0, kind: input, shape index: {}]
  %s1 = inlined_call_operand.hbm [shape: bf16[9216,128], index: 1, kind: input, shape index: {}]
  %s2 = inlined_call_operand.hbm [shape: f32[1,128], index: 2, kind: input, shape index: {}]
  %s3 = inlined_call_operand.vmem [shape: bf16[128,10], index: 3, kind: input, shape index: {}]
  %s4 = inlined_call_operand.hbm [shape: f32[1,10], index: 4, kind: input, shape index: {}]
  %s5 = inlined_call_operand.hbm [shape: f32[2,10], index: 5, kind: output, shape index: {}]
  %s6 = sld [smem:[#allocation0]]
  $region42: #{simple_cnn_forward.3} parent=0
    _
  %s8 = ssub.s32 1, %s6
  %s9 = scalar_select 0, %s8, %s6
  $region1: #{simple_cnn_forward.3} parent=0
    #allocation2 [shape = 'u8[2359296]{0}', space=vmem, size = 0x240000, scoped, tag = 'input window, operand 1, single buffered']
    #allocation3 [shape = 's32[1]{0}', space=sflag, size = 0x4, scoped, tag = 'scoped memory for simple_cnn_forward.3']
    #allocation4 [shape = 's32[1]{0}', space=sflag, size = 0x4, scoped, tag = 'scoped memory for simple_cnn_forward.3']
    #allocation5 [shape = 'u8[512]{0}', space=vmem, size = 0x400, scoped, tag = 'input window, operand 2, single buffered']
    #allocation6 [shape = 's32[1]{0}', space=sflag, size = 0x4, scoped, tag = 'scoped memory for simple_cnn_forward.3']
    #allocation7 [shape = 'u8[512]{0}', space=vmem, size = 0x400, scoped, tag = 'input window, operand 4, single buffered']
    #allocation8 [shape = 'u8[1024]{0}', space=vmem, size = 0x400, scoped, tag = 'output window, operand 0, single buffered']
    %10 = vsyncpa [#allocation3], 0
    %11 = vsyncpa [#allocation6], 0
    %12 = vsyncpa [#allocation4], 0
    // Predicated region
    $region2: #{simple_cnn_forward.3} parent=1 // pred_check
      _
    $region3: #{simple_cnn_forward.3} parent=1 // pred_check_branch
      %14 = sbr.rel (0) target = $region5
    $region4: #{simple_cnn_forward.3} parent=1 // pred_region
      _
    $region5: #{simple_cnn_forward.3} parent=1 // pred_fallthru
      _
    // Predicated region
    $region6: #{simple_cnn_forward.3} parent=1 // pred_check
      _
    $region7: #{simple_cnn_forward.3} parent=1 // pred_check_branch
      %16 = sbr.rel (0) target = $region9
    $region8: #{simple_cnn_forward.3} parent=1 // pred_region
      %s18 = ssub.s32 73728, 73728
      %19 = vsyncadd [#allocation3], %s18
      %s20 = sshll.u32 [#allocation2], 4
      %s21 = int_to_ptr.vmem [resolvable:$true] %s20
      %26 = dma.hbm_to_vmem [thread:$0]  %s1, 73728, %s21, [#allocation3], 64, 64, 4
    $region9: #{simple_cnn_forward.3} parent=1 // pred_fallthru
      _
    // Predicated region
    $region10: #{simple_cnn_forward.3} parent=1 // pred_check
      _
    $region11: #{simple_cnn_forward.3} parent=1 // pred_check_branch
      %28 = sbr.rel (0) target = $region13
    $region12: #{simple_cnn_forward.3} parent=1 // pred_region
      %s30 = ssub.s32 16, 16
      %31 = vsyncadd [#allocation6], %s30
      %s33 = sshll.u32 [#allocation5], 4
      %s34 = int_to_ptr.vmem [resolvable:$true] %s33
      %36 = dma.hbm_to_vmem [thread:$0]  %s2, 16, %s34, [#allocation6]
    $region13: #{simple_cnn_forward.3} parent=1 // pred_fallthru
      _
    // Predicated region
    $region14: #{simple_cnn_forward.3} parent=1 // pred_check
      _
    $region15: #{simple_cnn_forward.3} parent=1 // pred_check_branch
      %38 = sbr.rel (0) target = $region17
    $region16: #{simple_cnn_forward.3} parent=1 // pred_region
      _
    $region17: #{simple_cnn_forward.3} parent=1 // pred_fallthru
      _
    // Predicated region
    $region18: #{simple_cnn_forward.3} parent=1 // pred_check
      _
    $region19: #{simple_cnn_forward.3} parent=1 // pred_check_branch
      %40 = sbr.rel (0) target = $region21
    $region20: #{simple_cnn_forward.3} parent=1 // pred_region
      %s42 = ssub.s32 16, 16
      %43 = vsyncadd [#allocation6], %s42
      %s45 = sshll.u32 [#allocation7], 4
      %s46 = int_to_ptr.vmem [resolvable:$true] %s45
      %48 = dma.hbm_to_vmem [thread:$0]  %s4, 16, %s46, [#allocation6]
    $region21: #{simple_cnn_forward.3} parent=1 // pred_fallthru
      _
    // Predicated region
    $region22: #{simple_cnn_forward.3} parent=1 // pred_check
      _
    $region23: #{simple_cnn_forward.3} parent=1 // pred_check_branch
      %50 = sbr.rel (0) target = $region25
    $region24: #{simple_cnn_forward.3} parent=1 // pred_region
      %51 = dma.done [#allocation3], 73728
    $region25: #{simple_cnn_forward.3} parent=1 // pred_fallthru
      _
    // Predicated region
    $region26: #{simple_cnn_forward.3} parent=1 // pred_check
      _
    $region27: #{simple_cnn_forward.3} parent=1 // pred_check_branch
      %53 = sbr.rel (0) target = $region29
    $region28: #{simple_cnn_forward.3} parent=1 // pred_region
      %54 = dma.done [#allocation6], 16
    $region29: #{simple_cnn_forward.3} parent=1 // pred_fallthru
      _
    // Predicated region
    $region30: #{simple_cnn_forward.3} parent=1 // pred_check
      _
    $region31: #{simple_cnn_forward.3} parent=1 // pred_check_branch
      %56 = sbr.rel (0) target = $region33
    $region32: #{simple_cnn_forward.3} parent=1 // pred_region
      %57 = dma.done [#allocation6], 16
    $region33: #{simple_cnn_forward.3} parent=1 // pred_fallthru
      _
    %v59 = vld [vmem:[%s0] sm:$0xff]
    %v60 = vld [vmem:[%s0 + $0x8] sm:$0xff]
    %v61 = vld [vmem:[%s0 + $0x10] sm:$0xff]
    %v62 = vld [vmem:[%s0 + $0x18] sm:$0xff]
    %v63 = vld [vmem:[%s0 + $0x20] sm:$0xff]
    %v64 = vld [vmem:[%s0 + $0x28] sm:$0xff]
    %v65 = vld [vmem:[%s0 + $0x30] sm:$0xff]
    %v66 = vld [vmem:[%s0 + $0x38] sm:$0xff]
    %v67 = vld [vmem:[%s0 + $0x40] sm:$0xff]
    %v68 = vld [vmem:[#allocation2] sm:$0xf]
    %v69 = vld [vmem:[#allocation2 + $0x4] sm:$0xf]
    %v70 = vld [vmem:[#allocation2 + $0x8] sm:$0xf]
    %v71 = vld [vmem:[#allocation2 + $0xc] sm:$0xf]
    %v72 = vld [vmem:[#allocation2 + $0x10] sm:$0xf]
    %v73 = vld [vmem:[#allocation2 + $0x14] sm:$0xf]
    %v74 = vld [vmem:[#allocation2 + $0x18] sm:$0xf]
    %v75 = vld [vmem:[#allocation2 + $0x1c] sm:$0xf]
    %v76 = vld [vmem:[#allocation2 + $0x20] sm:$0xf]
    %v77 = vld [vmem:[#allocation2 + $0x24] sm:$0xf]
    %v78 = vld [vmem:[#allocation2 + $0x28] sm:$0xf]
    %v79 = vld [vmem:[#allocation2 + $0x2c] sm:$0xf]
    %v80 = vld [vmem:[#allocation2 + $0x30] sm:$0xf]
    %v81 = vld [vmem:[#allocation2 + $0x34] sm:$0xf]
    %v82 = vld [vmem:[#allocation2 + $0x38] sm:$0xf]
    %v83 = vld [vmem:[#allocation2 + $0x3c] sm:$0xf]
    %v84 = vld [vmem:[#allocation2 + $0x40] sm:$0xf]
    %v85 = vld [vmem:[#allocation2 + $0x44] sm:$0xf]
    %v86 = vld [vmem:[#allocation2 + $0x48] sm:$0xf]
    %v87 = vld [vmem:[#allocation2 + $0x4c] sm:$0xf]
    %v88 = vld [vmem:[#allocation2 + $0x50] sm:$0xf]
    %v89 = vld [vmem:[#allocation2 + $0x54] sm:$0xf]
    %v90 = vld [vmem:[#allocation2 + $0x58] sm:$0xf]
    %v91 = vld [vmem:[#allocation2 + $0x5c] sm:$0xf]
    %v92 = vld [vmem:[#allocation2 + $0x60] sm:$0xf]
    %v93 = vld [vmem:[#allocation2 + $0x64] sm:$0xf]
    %v94 = vld [vmem:[#allocation2 + $0x68] sm:$0xf]
    %v95 = vld [vmem:[#allocation2 + $0x6c] sm:$0xf]
    %v96 = vld [vmem:[#allocation2 + $0x70] sm:$0xf]
    %v97 = vld [vmem:[#allocation2 + $0x74] sm:$0xf]
    %v98 = vld [vmem:[#allocation2 + $0x78] sm:$0xf]
    %v99 = vld [vmem:[#allocation2 + $0x7c] sm:$0xf]
    %v100 = vld [vmem:[#allocation2 + $0x80] sm:$0xf]
    %v101 = vld [vmem:[#allocation2 + $0x84] sm:$0xf]
    %v102 = vld [vmem:[#allocation2 + $0x88] sm:$0xf]
    %v103 = vld [vmem:[#allocation2 + $0x8c] sm:$0xf]
    %v104 = vld [vmem:[#allocation2 + $0x90] sm:$0xf]
    %v105 = vld [vmem:[#allocation2 + $0x94] sm:$0xf]
    %v106 = vld [vmem:[#allocation2 + $0x98] sm:$0xf]
    %v107 = vld [vmem:[#allocation2 + $0x9c] sm:$0xf]
    %v108 = vld [vmem:[#allocation2 + $0xa0] sm:$0xf]
    %v109 = vld [vmem:[#allocation2 + $0xa4] sm:$0xf]
    %v110 = vld [vmem:[#allocation2 + $0xa8] sm:$0xf]
    %v111 = vld [vmem:[#allocation2 + $0xac] sm:$0xf]
    %v112 = vld [vmem:[#allocation2 + $0xb0] sm:$0xf]
    %v113 = vld [vmem:[#allocation2 + $0xb4] sm:$0xf]
    %v114 = vld [vmem:[#allocation2 + $0xb8] sm:$0xf]
    %v115 = vld [vmem:[#allocation2 + $0xbc] sm:$0xf]
    %v116 = vld [vmem:[#allocation2 + $0xc0] sm:$0xf]
    %v117 = vld [vmem:[#allocation2 + $0xc4] sm:$0xf]
    %v118 = vld [vmem:[#allocation2 + $0xc8] sm:$0xf]
    %v119 = vld [vmem:[#allocation2 + $0xcc] sm:$0xf]
    %v120 = vld [vmem:[#allocation2 + $0xd0] sm:$0xf]
    %v121 = vld [vmem:[#allocation2 + $0xd4] sm:$0xf]
    %v122 = vld [vmem:[#allocation2 + $0xd8] sm:$0xf]
    %v123 = vld [vmem:[#allocation2 + $0xdc] sm:$0xf]
    %v124 = vld [vmem:[#allocation2 + $0xe0] sm:$0xf]
    %v125 = vld [vmem:[#allocation2 + $0xe4] sm:$0xf]
    %v126 = vld [vmem:[#allocation2 + $0xe8] sm:$0xf]
    %v127 = vld [vmem:[#allocation2 + $0xec] sm:$0xf]
    %v128 = vld [vmem:[#allocation2 + $0xf0] sm:$0xf]
    %v129 = vld [vmem:[#allocation2 + $0xf4] sm:$0xf]
    %v130 = vld [vmem:[#allocation2 + $0xf8] sm:$0xf]
    %v131 = vld [vmem:[#allocation2 + $0xfc] sm:$0xf]
    %v132 = vld [vmem:[#allocation2 + $0x100] sm:$0xf]
    %v133 = vld [vmem:[#allocation2 + $0x104] sm:$0xf]
    %v134 = vld [vmem:[#allocation2 + $0x108] sm:$0xf]
    %v135 = vld [vmem:[#allocation2 + $0x10c] sm:$0xf]
    %v136 = vld [vmem:[#allocation2 + $0x110] sm:$0xf]
    %v137 = vld [vmem:[#allocation2 + $0x114] sm:$0xf]
    %v138 = vld [vmem:[#allocation2 + $0x118] sm:$0xf]
    %v139 = vld [vmem:[#allocation2 + $0x11c] sm:$0xf]
    %v140 = vld [vmem:[#allocation2 + $0x120] sm:$0xf]
    %v141 = vld [vmem:[#allocation2 + $0x124] sm:$0xf]
    %v142 = vld [vmem:[#allocation2 + $0x128] sm:$0xf]
    %v143 = vld [vmem:[#allocation2 + $0x12c] sm:$0xf]
    %v144 = vld [vmem:[#allocation2 + $0x130] sm:$0xf]
    %v145 = vld [vmem:[#allocation2 + $0x134] sm:$0xf]
    %v146 = vld [vmem:[#allocation2 + $0x138] sm:$0xf]
    %v147 = vld [vmem:[#allocation2 + $0x13c] sm:$0xf]
    %v148 = vld [vmem:[#allocation2 + $0x140] sm:$0xf]
    %v149 = vld [vmem:[#allocation2 + $0x144] sm:$0xf]
    %v150 = vld [vmem:[#allocation2 + $0x148] sm:$0xf]
    %v151 = vld [vmem:[#allocation2 + $0x14c] sm:$0xf]
    %v152 = vld [vmem:[#allocation2 + $0x150] sm:$0xf]
    %v153 = vld [vmem:[#allocation2 + $0x154] sm:$0xf]
    %v154 = vld [vmem:[#allocation2 + $0x158] sm:$0xf]
    %v155 = vld [vmem:[#allocation2 + $0x15c] sm:$0xf]
    %v156 = vld [vmem:[#allocation2 + $0x160] sm:$0xf]
    %v157 = vld [vmem:[#allocation2 + $0x164] sm:$0xf]
    %v158 = vld [vmem:[#allocation2 + $0x168] sm:$0xf]
    %v159 = vld [vmem:[#allocation2 + $0x16c] sm:$0xf]
    %v160 = vld [vmem:[#allocation2 + $0x170] sm:$0xf]
    %v161 = vld [vmem:[#allocation2 + $0x174] sm:$0xf]
    %v162 = vld [vmem:[#allocation2 + $0x178] sm:$0xf]
    %v163 = vld [vmem:[#allocation2 + $0x17c] sm:$0xf]
    %v164 = vld [vmem:[#allocation2 + $0x180] sm:$0xf]
    %v165 = vld [vmem:[#allocation2 + $0x184] sm:$0xf]
    %v166 = vld [vmem:[#allocation2 + $0x188] sm:$0xf]
    %v167 = vld [vmem:[#allocation2 + $0x18c] sm:$0xf]
    %v168 = vld [vmem:[#allocation2 + $0x190] sm:$0xf]
    %v169 = vld [vmem:[#allocation2 + $0x194] sm:$0xf]
    %v170 = vld [vmem:[#allocation2 + $0x198] sm:$0xf]
    %v171 = vld [vmem:[#allocation2 + $0x19c] sm:$0xf]
    %v172 = vld [vmem:[#allocation2 + $0x1a0] sm:$0xf]
    %v173 = vld [vmem:[#allocation2 + $0x1a4] sm:$0xf]
    %v174 = vld [vmem:[#allocation2 + $0x1a8] sm:$0xf]
    %v175 = vld [vmem:[#allocation2 + $0x1ac] sm:$0xf]
    %v176 = vld [vmem:[#allocation2 + $0x1b0] sm:$0xf]
    %v177 = vld [vmem:[#allocation2 + $0x1b4] sm:$0xf]
    %v178 = vld [vmem:[#allocation2 + $0x1b8] sm:$0xf]
    %v179 = vld [vmem:[#allocation2 + $0x1bc] sm:$0xf]
    %v180 = vld [vmem:[#allocation2 + $0x1c0] sm:$0xf]
    %v181 = vld [vmem:[#allocation2 + $0x1c4] sm:$0xf]
    %v182 = vld [vmem:[#allocation2 + $0x1c8] sm:$0xf]
    %v183 = vld [vmem:[#allocation2 + $0x1cc] sm:$0xf]
    %v184 = vld [vmem:[#allocation2 + $0x1d0] sm:$0xf]
    %v185 = vld [vmem:[#allocation2 + $0x1d4] sm:$0xf]
    %v186 = vld [vmem:[#allocation2 + $0x1d8] sm:$0xf]
    %v187 = vld [vmem:[#allocation2 + $0x1dc] sm:$0xf]
    %v188 = vld [vmem:[#allocation2 + $0x1e0] sm:$0xf]
    %v189 = vld [vmem:[#allocation2 + $0x1e4] sm:$0xf]
    %v190 = vld [vmem:[#allocation2 + $0x1e8] sm:$0xf]
    %v191 = vld [vmem:[#allocation2 + $0x1ec] sm:$0xf]
    %v192 = vld [vmem:[#allocation2 + $0x1f0] sm:$0xf]
    %v193 = vld [vmem:[#allocation2 + $0x1f4] sm:$0xf]
    %v194 = vld [vmem:[#allocation2 + $0x1f8] sm:$0xf]
    %v195 = vld [vmem:[#allocation2 + $0x1fc] sm:$0xf]
    %v196 = vld [vmem:[#allocation2 + $0x200] sm:$0xf]
    %v197 = vld [vmem:[#allocation2 + $0x204] sm:$0xf]
    %v198 = vld [vmem:[#allocation2 + $0x208] sm:$0xf]
    %v199 = vld [vmem:[#allocation2 + $0x20c] sm:$0xf]
    %v200 = vld [vmem:[#allocation2 + $0x210] sm:$0xf]
    %v201 = vld [vmem:[#allocation2 + $0x214] sm:$0xf]
    %v202 = vld [vmem:[#allocation2 + $0x218] sm:$0xf]
    %v203 = vld [vmem:[#allocation2 + $0x21c] sm:$0xf]
    %v204 = vld [vmem:[#allocation2 + $0x220] sm:$0xf]
    %v205 = vld [vmem:[#allocation2 + $0x224] sm:$0xf]
    %v206 = vld [vmem:[#allocation2 + $0x228] sm:$0xf]
    %v207 = vld [vmem:[#allocation2 + $0x22c] sm:$0xf]
    %v208 = vld [vmem:[#allocation2 + $0x230] sm:$0xf]
    %v209 = vld [vmem:[#allocation2 + $0x234] sm:$0xf]
    %v210 = vld [vmem:[#allocation2 + $0x238] sm:$0xf]
    %v211 = vld [vmem:[#allocation2 + $0x23c] sm:$0xf]
    %v212 = vld [vmem:[#allocation2 + $0x240] sm:$0xf]
    %v213 = vld [vmem:[#allocation2 + $0x244] sm:$0xf]
    %v214 = vld [vmem:[#allocation2 + $0x248] sm:$0xf]
    %v215 = vld [vmem:[#allocation2 + $0x24c] sm:$0xf]
    %v216 = vld [vmem:[#allocation2 + $0x250] sm:$0xf]
    %v217 = vld [vmem:[#allocation2 + $0x254] sm:$0xf]
    %v218 = vld [vmem:[#allocation2 + $0x258] sm:$0xf]
    %v219 = vld [vmem:[#allocation2 + $0x25c] sm:$0xf]
    %v220 = vld [vmem:[#allocation2 + $0x260] sm:$0xf]
    %v221 = vld [vmem:[#allocation2 + $0x264] sm:$0xf]
    %v222 = vld [vmem:[#allocation2 + $0x268] sm:$0xf]
    %v223 = vld [vmem:[#allocation2 + $0x26c] sm:$0xf]
    %v224 = vld [vmem:[#allocation2 + $0x270] sm:$0xf]
    %v225 = vld [vmem:[#allocation2 + $0x274] sm:$0xf]
    %v226 = vld [vmem:[#allocation2 + $0x278] sm:$0xf]
    %v227 = vld [vmem:[#allocation2 + $0x27c] sm:$0xf]
    %v228 = vld [vmem:[#allocation2 + $0x280] sm:$0xf]
    %v229 = vld [vmem:[#allocation2 + $0x284] sm:$0xf]
    %v230 = vld [vmem:[#allocation2 + $0x288] sm:$0xf]
    %v231 = vld [vmem:[#allocation2 + $0x28c] sm:$0xf]
    %v232 = vld [vmem:[#allocation2 + $0x290] sm:$0xf]
    %v233 = vld [vmem:[#allocation2 + $0x294] sm:$0xf]
    %v234 = vld [vmem:[#allocation2 + $0x298] sm:$0xf]
    %v235 = vld [vmem:[#allocation2 + $0x29c] sm:$0xf]
    %v236 = vld [vmem:[#allocation2 + $0x2a0] sm:$0xf]
    %v237 = vld [vmem:[#allocation2 + $0x2a4] sm:$0xf]
    %v238 = vld [vmem:[#allocation2 + $0x2a8] sm:$0xf]
    %v239 = vld [vmem:[#allocation2 + $0x2ac] sm:$0xf]
    %v240 = vld [vmem:[#allocation2 + $0x2b0] sm:$0xf]
    %v241 = vld [vmem:[#allocation2 + $0x2b4] sm:$0xf]
    %v242 = vld [vmem:[#allocation2 + $0x2b8] sm:$0xf]
    %v243 = vld [vmem:[#allocation2 + $0x2bc] sm:$0xf]
    %v244 = vld [vmem:[#allocation2 + $0x2c0] sm:$0xf]
    %v245 = vld [vmem:[#allocation2 + $0x2c4] sm:$0xf]
    %v246 = vld [vmem:[#allocation2 + $0x2c8] sm:$0xf]
    %v247 = vld [vmem:[#allocation2 + $0x2cc] sm:$0xf]
    %v248 = vld [vmem:[#allocation2 + $0x2d0] sm:$0xf]
    %v249 = vld [vmem:[#allocation2 + $0x2d4] sm:$0xf]
    %v250 = vld [vmem:[#allocation2 + $0x2d8] sm:$0xf]
    %v251 = vld [vmem:[#allocation2 + $0x2dc] sm:$0xf]
    %v252 = vld [vmem:[#allocation2 + $0x2e0] sm:$0xf]
    %v253 = vld [vmem:[#allocation2 + $0x2e4] sm:$0xf]
    %v254 = vld [vmem:[#allocation2 + $0x2e8] sm:$0xf]
    %v255 = vld [vmem:[#allocation2 + $0x2ec] sm:$0xf]
    %v256 = vld [vmem:[#allocation2 + $0x2f0] sm:$0xf]
    %v257 = vld [vmem:[#allocation2 + $0x2f4] sm:$0xf]
    %v258 = vld [vmem:[#allocation2 + $0x2f8] sm:$0xf]
    %v259 = vld [vmem:[#allocation2 + $0x2fc] sm:$0xf]
    %v260 = vld [vmem:[#allocation2 + $0x300] sm:$0xf]
    %v261 = vld [vmem:[#allocation2 + $0x304] sm:$0xf]
    %v262 = vld [vmem:[#allocation2 + $0x308] sm:$0xf]
    %v263 = vld [vmem:[#allocation2 + $0x30c] sm:$0xf]
    %v264 = vld [vmem:[#allocation2 + $0x310] sm:$0xf]
    %v265 = vld [vmem:[#allocation2 + $0x314] sm:$0xf]
    %v266 = vld [vmem:[#allocation2 + $0x318] sm:$0xf]
    %v267 = vld [vmem:[#allocation2 + $0x31c] sm:$0xf]
    %v268 = vld [vmem:[#allocation2 + $0x320] sm:$0xf]
    %v269 = vld [vmem:[#allocation2 + $0x324] sm:$0xf]
    %v270 = vld [vmem:[#allocation2 + $0x328] sm:$0xf]
    %v271 = vld [vmem:[#allocation2 + $0x32c] sm:$0xf]
    %v272 = vld [vmem:[#allocation2 + $0x330] sm:$0xf]
    %v273 = vld [vmem:[#allocation2 + $0x334] sm:$0xf]
    %v274 = vld [vmem:[#allocation2 + $0x338] sm:$0xf]
    %v275 = vld [vmem:[#allocation2 + $0x33c] sm:$0xf]
    %v276 = vld [vmem:[#allocation2 + $0x340] sm:$0xf]
    %v277 = vld [vmem:[#allocation2 + $0x344] sm:$0xf]
    %v278 = vld [vmem:[#allocation2 + $0x348] sm:$0xf]
    %v279 = vld [vmem:[#allocation2 + $0x34c] sm:$0xf]
    %v280 = vld [vmem:[#allocation2 + $0x350] sm:$0xf]
    %v281 = vld [vmem:[#allocation2 + $0x354] sm:$0xf]
    %v282 = vld [vmem:[#allocation2 + $0x358] sm:$0xf]
    %v283 = vld [vmem:[#allocation2 + $0x35c] sm:$0xf]
    %v284 = vld [vmem:[#allocation2 + $0x360] sm:$0xf]
    %v285 = vld [vmem:[#allocation2 + $0x364] sm:$0xf]
    %v286 = vld [vmem:[#allocation2 + $0x368] sm:$0xf]
    %v287 = vld [vmem:[#allocation2 + $0x36c] sm:$0xf]
    %v288 = vld [vmem:[#allocation2 + $0x370] sm:$0xf]
    %v289 = vld [vmem:[#allocation2 + $0x374] sm:$0xf]
    %v290 = vld [vmem:[#allocation2 + $0x378] sm:$0xf]
    %v291 = vld [vmem:[#allocation2 + $0x37c] sm:$0xf]
    %v292 = vld [vmem:[#allocation2 + $0x380] sm:$0xf]
    %v293 = vld [vmem:[#allocation2 + $0x384] sm:$0xf]
    %v294 = vld [vmem:[#allocation2 + $0x388] sm:$0xf]
    %v295 = vld [vmem:[#allocation2 + $0x38c] sm:$0xf]
    %v296 = vld [vmem:[#allocation2 + $0x390] sm:$0xf]
    %v297 = vld [vmem:[#allocation2 + $0x394] sm:$0xf]
    %v298 = vld [vmem:[#allocation2 + $0x398] sm:$0xf]
    %v299 = vld [vmem:[#allocation2 + $0x39c] sm:$0xf]
    %v300 = vld [vmem:[#allocation2 + $0x3a0] sm:$0xf]
    %v301 = vld [vmem:[#allocation2 + $0x3a4] sm:$0xf]
    %v302 = vld [vmem:[#allocation2 + $0x3a8] sm:$0xf]
    %v303 = vld [vmem:[#allocation2 + $0x3ac] sm:$0xf]
    %v304 = vld [vmem:[#allocation2 + $0x3b0] sm:$0xf]
    %v305 = vld [vmem:[#allocation2 + $0x3b4] sm:$0xf]
    %v306 = vld [vmem:[#allocation2 + $0x3b8] sm:$0xf]
    %v307 = vld [vmem:[#allocation2 + $0x3bc] sm:$0xf]
    %v308 = vld [vmem:[#allocation2 + $0x3c0] sm:$0xf]
    %v309 = vld [vmem:[#allocation2 + $0x3c4] sm:$0xf]
    %v310 = vld [vmem:[#allocation2 + $0x3c8] sm:$0xf]
    %v311 = vld [vmem:[#allocation2 + $0x3cc] sm:$0xf]
    %v312 = vld [vmem:[#allocation2 + $0x3d0] sm:$0xf]
    %v313 = vld [vmem:[#allocation2 + $0x3d4] sm:$0xf]
    %v314 = vld [vmem:[#allocation2 + $0x3d8] sm:$0xf]
    %v315 = vld [vmem:[#allocation2 + $0x3dc] sm:$0xf]
    %v316 = vld [vmem:[#allocation2 + $0x3e0] sm:$0xf]
    %v317 = vld [vmem:[#allocation2 + $0x3e4] sm:$0xf]
    %v318 = vld [vmem:[#allocation2 + $0x3e8] sm:$0xf]
    %v319 = vld [vmem:[#allocation2 + $0x3ec] sm:$0xf]
    %v320 = vld [vmem:[#allocation2 + $0x3f0] sm:$0xf]
    %v321 = vld [vmem:[#allocation2 + $0x3f4] sm:$0xf]
    %v322 = vld [vmem:[#allocation2 + $0x3f8] sm:$0xf]
    %v323 = vld [vmem:[#allocation2 + $0x3fc] sm:$0xf]
    %v324 = vld [vmem:[#allocation2 + $0x400] sm:$0xf]
    %v325 = vld [vmem:[#allocation2 + $0x404] sm:$0xf]
    %v326 = vld [vmem:[#allocation2 + $0x408] sm:$0xf]
    %v327 = vld [vmem:[#allocation2 + $0x40c] sm:$0xf]
    %v328 = vld [vmem:[#allocation2 + $0x410] sm:$0xf]
    %v329 = vld [vmem:[#allocation2 + $0x414] sm:$0xf]
    %v330 = vld [vmem:[#allocation2 + $0x418] sm:$0xf]
    %v331 = vld [vmem:[#allocation2 + $0x41c] sm:$0xf]
    %v332 = vld [vmem:[#allocation2 + $0x420] sm:$0xf]
    %v333 = vld [vmem:[#allocation2 + $0x424] sm:$0xf]
    %v334 = vld [vmem:[#allocation2 + $0x428] sm:$0xf]
    %v335 = vld [vmem:[#allocation2 + $0x42c] sm:$0xf]
    %v336 = vld [vmem:[#allocation2 + $0x430] sm:$0xf]
    %v337 = vld [vmem:[#allocation2 + $0x434] sm:$0xf]
    %v338 = vld [vmem:[#allocation2 + $0x438] sm:$0xf]
    %v339 = vld [vmem:[#allocation2 + $0x43c] sm:$0xf]
    %v340 = vld [vmem:[#allocation2 + $0x440] sm:$0xf]
    %v341 = vld [vmem:[#allocation2 + $0x444] sm:$0xf]
    %v342 = vld [vmem:[#allocation2 + $0x448] sm:$0xf]
    %v343 = vld [vmem:[#allocation2 + $0x44c] sm:$0xf]
    %v344 = vld [vmem:[#allocation2 + $0x450] sm:$0xf]
    %v345 = vld [vmem:[#allocation2 + $0x454] sm:$0xf]
    %v346 = vld [vmem:[#allocation2 + $0x458] sm:$0xf]
    %v347 = vld [vmem:[#allocation2 + $0x45c] sm:$0xf]
    %v348 = vld [vmem:[#allocation2 + $0x460] sm:$0xf]
    %v349 = vld [vmem:[#allocation2 + $0x464] sm:$0xf]
    %v350 = vld [vmem:[#allocation2 + $0x468] sm:$0xf]
    %v351 = vld [vmem:[#allocation2 + $0x46c] sm:$0xf]
    %v352 = vld [vmem:[#allocation2 + $0x470] sm:$0xf]
    %v353 = vld [vmem:[#allocation2 + $0x474] sm:$0xf]
    %v354 = vld [vmem:[#allocation2 + $0x478] sm:$0xf]
    %v355 = vld [vmem:[#allocation2 + $0x47c] sm:$0xf]
    %v356 = vld [vmem:[#allocation2 + $0x480] sm:$0xf]
    %v357 = vld [vmem:[#allocation2 + $0x484] sm:$0xf]
    %v358 = vld [vmem:[#allocation2 + $0x488] sm:$0xf]
    %v359 = vld [vmem:[#allocation2 + $0x48c] sm:$0xf]
    %v360 = vld [vmem:[#allocation2 + $0x490] sm:$0xf]
    %v361 = vld [vmem:[#allocation2 + $0x494] sm:$0xf]
    %v362 = vld [vmem:[#allocation2 + $0x498] sm:$0xf]
    %v363 = vld [vmem:[#allocation2 + $0x49c] sm:$0xf]
    %v364 = vld [vmem:[#allocation2 + $0x4a0] sm:$0xf]
    %v365 = vld [vmem:[#allocation2 + $0x4a4] sm:$0xf]
    %v366 = vld [vmem:[#allocation2 + $0x4a8] sm:$0xf]
    %v367 = vld [vmem:[#allocation2 + $0x4ac] sm:$0xf]
    %v368 = vld [vmem:[#allocation2 + $0x4b0] sm:$0xf]
    %v369 = vld [vmem:[#allocation2 + $0x4b4] sm:$0xf]
    %v370 = vld [vmem:[#allocation2 + $0x4b8] sm:$0xf]
    %v371 = vld [vmem:[#allocation2 + $0x4bc] sm:$0xf]
    %v372 = vld [vmem:[#allocation2 + $0x4c0] sm:$0xf]
    %v373 = vld [vmem:[#allocation2 + $0x4c4] sm:$0xf]
    %v374 = vld [vmem:[#allocation2 + $0x4c8] sm:$0xf]
    %v375 = vld [vmem:[#allocation2 + $0x4cc] sm:$0xf]
    %v376 = vld [vmem:[#allocation2 + $0x4d0] sm:$0xf]
    %v377 = vld [vmem:[#allocation2 + $0x4d4] sm:$0xf]
    %v378 = vld [vmem:[#allocation2 + $0x4d8] sm:$0xf]
    %v379 = vld [vmem:[#allocation2 + $0x4dc] sm:$0xf]
    %v380 = vld [vmem:[#allocation2 + $0x4e0] sm:$0xf]
    %v381 = vld [vmem:[#allocation2 + $0x4e4] sm:$0xf]
    %v382 = vld [vmem:[#allocation2 + $0x4e8] sm:$0xf]
    %v383 = vld [vmem:[#allocation2 + $0x4ec] sm:$0xf]
    %v384 = vld [vmem:[#allocation2 + $0x4f0] sm:$0xf]
    %v385 = vld [vmem:[#allocation2 + $0x4f4] sm:$0xf]
    %v386 = vld [vmem:[#allocation2 + $0x4f8] sm:$0xf]
    %v387 = vld [vmem:[#allocation2 + $0x4fc] sm:$0xf]
    %v388 = vld [vmem:[#allocation2 + $0x500] sm:$0xf]
    %v389 = vld [vmem:[#allocation2 + $0x504] sm:$0xf]
    %v390 = vld [vmem:[#allocation2 + $0x508] sm:$0xf]
    %v391 = vld [vmem:[#allocation2 + $0x50c] sm:$0xf]
    %v392 = vld [vmem:[#allocation2 + $0x510] sm:$0xf]
    %v393 = vld [vmem:[#allocation2 + $0x514] sm:$0xf]
    %v394 = vld [vmem:[#allocation2 + $0x518] sm:$0xf]
    %v395 = vld [vmem:[#allocation2 + $0x51c] sm:$0xf]
    %v396 = vld [vmem:[#allocation2 + $0x520] sm:$0xf]
    %v397 = vld [vmem:[#allocation2 + $0x524] sm:$0xf]
    %v398 = vld [vmem:[#allocation2 + $0x528] sm:$0xf]
    %v399 = vld [vmem:[#allocation2 + $0x52c] sm:$0xf]
    %v400 = vld [vmem:[#allocation2 + $0x530] sm:$0xf]
    %v401 = vld [vmem:[#allocation2 + $0x534] sm:$0xf]
    %v402 = vld [vmem:[#allocation2 + $0x538] sm:$0xf]
    %v403 = vld [vmem:[#allocation2 + $0x53c] sm:$0xf]
    %v404 = vld [vmem:[#allocation2 + $0x540] sm:$0xf]
    %v405 = vld [vmem:[#allocation2 + $0x544] sm:$0xf]
    %v406 = vld [vmem:[#allocation2 + $0x548] sm:$0xf]
    %v407 = vld [vmem:[#allocation2 + $0x54c] sm:$0xf]
    %v408 = vld [vmem:[#allocation2 + $0x550] sm:$0xf]
    %v409 = vld [vmem:[#allocation2 + $0x554] sm:$0xf]
    %v410 = vld [vmem:[#allocation2 + $0x558] sm:$0xf]
    %v411 = vld [vmem:[#allocation2 + $0x55c] sm:$0xf]
    %v412 = vld [vmem:[#allocation2 + $0x560] sm:$0xf]
    %v413 = vld [vmem:[#allocation2 + $0x564] sm:$0xf]
    %v414 = vld [vmem:[#allocation2 + $0x568] sm:$0xf]
    %v415 = vld [vmem:[#allocation2 + $0x56c] sm:$0xf]
    %v416 = vld [vmem:[#allocation2 + $0x570] sm:$0xf]
    %v417 = vld [vmem:[#allocation2 + $0x574] sm:$0xf]
    %v418 = vld [vmem:[#allocation2 + $0x578] sm:$0xf]
    %v419 = vld [vmem:[#allocation2 + $0x57c] sm:$0xf]
    %v420 = vld [vmem:[#allocation2 + $0x580] sm:$0xf]
    %v421 = vld [vmem:[#allocation2 + $0x584] sm:$0xf]
    %v422 = vld [vmem:[#allocation2 + $0x588] sm:$0xf]
    %v423 = vld [vmem:[#allocation2 + $0x58c] sm:$0xf]
    %v424 = vld [vmem:[#allocation2 + $0x590] sm:$0xf]
    %v425 = vld [vmem:[#allocation2 + $0x594] sm:$0xf]
    %v426 = vld [vmem:[#allocation2 + $0x598] sm:$0xf]
    %v427 = vld [vmem:[#allocation2 + $0x59c] sm:$0xf]
    %v428 = vld [vmem:[#allocation2 + $0x5a0] sm:$0xf]
    %v429 = vld [vmem:[#allocation2 + $0x5a4] sm:$0xf]
    %v430 = vld [vmem:[#allocation2 + $0x5a8] sm:$0xf]
    %v431 = vld [vmem:[#allocation2 + $0x5ac] sm:$0xf]
    %v432 = vld [vmem:[#allocation2 + $0x5b0] sm:$0xf]
    %v433 = vld [vmem:[#allocation2 + $0x5b4] sm:$0xf]
    %v434 = vld [vmem:[#allocation2 + $0x5b8] sm:$0xf]
    %v435 = vld [vmem:[#allocation2 + $0x5bc] sm:$0xf]
    %v436 = vld [vmem:[#allocation2 + $0x5c0] sm:$0xf]
    %v437 = vld [vmem:[#allocation2 + $0x5c4] sm:$0xf]
    %v438 = vld [vmem:[#allocation2 + $0x5c8] sm:$0xf]
    %v439 = vld [vmem:[#allocation2 + $0x5cc] sm:$0xf]
    %v440 = vld [vmem:[#allocation2 + $0x5d0] sm:$0xf]
    %v441 = vld [vmem:[#allocation2 + $0x5d4] sm:$0xf]
    %v442 = vld [vmem:[#allocation2 + $0x5d8] sm:$0xf]
    %v443 = vld [vmem:[#allocation2 + $0x5dc] sm:$0xf]
    %v444 = vld [vmem:[#allocation2 + $0x5e0] sm:$0xf]
    %v445 = vld [vmem:[#allocation2 + $0x5e4] sm:$0xf]
    %v446 = vld [vmem:[#allocation2 + $0x5e8] sm:$0xf]
    %v447 = vld [vmem:[#allocation2 + $0x5ec] sm:$0xf]
    %v448 = vld [vmem:[#allocation2 + $0x5f0] sm:$0xf]
    %v449 = vld [vmem:[#allocation2 + $0x5f4] sm:$0xf]
    %v450 = vld [vmem:[#allocation2 + $0x5f8] sm:$0xf]
    %v451 = vld [vmem:[#allocation2 + $0x5fc] sm:$0xf]
    %v452 = vld [vmem:[#allocation2 + $0x600] sm:$0xf]
    %v453 = vld [vmem:[#allocation2 + $0x604] sm:$0xf]
    %v454 = vld [vmem:[#allocation2 + $0x608] sm:$0xf]
    %v455 = vld [vmem:[#allocation2 + $0x60c] sm:$0xf]
    %v456 = vld [vmem:[#allocation2 + $0x610] sm:$0xf]
    %v457 = vld [vmem:[#allocation2 + $0x614] sm:$0xf]
    %v458 = vld [vmem:[#allocation2 + $0x618] sm:$0xf]
    %v459 = vld [vmem:[#allocation2 + $0x61c] sm:$0xf]
    %v460 = vld [vmem:[#allocation2 + $0x620] sm:$0xf]
    %v461 = vld [vmem:[#allocation2 + $0x624] sm:$0xf]
    %v462 = vld [vmem:[#allocation2 + $0x628] sm:$0xf]
    %v463 = vld [vmem:[#allocation2 + $0x62c] sm:$0xf]
    %v464 = vld [vmem:[#allocation2 + $0x630] sm:$0xf]
    %v465 = vld [vmem:[#allocation2 + $0x634] sm:$0xf]
    %v466 = vld [vmem:[#allocation2 + $0x638] sm:$0xf]
    %v467 = vld [vmem:[#allocation2 + $0x63c] sm:$0xf]
    %v468 = vld [vmem:[#allocation2 + $0x640] sm:$0xf]
    %v469 = vld [vmem:[#allocation2 + $0x644] sm:$0xf]
    %v470 = vld [vmem:[#allocation2 + $0x648] sm:$0xf]
    %v471 = vld [vmem:[#allocation2 + $0x64c] sm:$0xf]
    %v472 = vld [vmem:[#allocation2 + $0x650] sm:$0xf]
    %v473 = vld [vmem:[#allocation2 + $0x654] sm:$0xf]
    %v474 = vld [vmem:[#allocation2 + $0x658] sm:$0xf]
    %v475 = vld [vmem:[#allocation2 + $0x65c] sm:$0xf]
    %v476 = vld [vmem:[#allocation2 + $0x660] sm:$0xf]
    %v477 = vld [vmem:[#allocation2 + $0x664] sm:$0xf]
    %v478 = vld [vmem:[#allocation2 + $0x668] sm:$0xf]
    %v479 = vld [vmem:[#allocation2 + $0x66c] sm:$0xf]
    %v480 = vld [vmem:[#allocation2 + $0x670] sm:$0xf]
    %v481 = vld [vmem:[#allocation2 + $0x674] sm:$0xf]
    %v482 = vld [vmem:[#allocation2 + $0x678] sm:$0xf]
    %v483 = vld [vmem:[#allocation2 + $0x67c] sm:$0xf]
    %v484 = vld [vmem:[#allocation2 + $0x680] sm:$0xf]
    %v485 = vld [vmem:[#allocation2 + $0x684] sm:$0xf]
    %v486 = vld [vmem:[#allocation2 + $0x688] sm:$0xf]
    %v487 = vld [vmem:[#allocation2 + $0x68c] sm:$0xf]
    %v488 = vld [vmem:[#allocation2 + $0x690] sm:$0xf]
    %v489 = vld [vmem:[#allocation2 + $0x694] sm:$0xf]
    %v490 = vld [vmem:[#allocation2 + $0x698] sm:$0xf]
    %v491 = vld [vmem:[#allocation2 + $0x69c] sm:$0xf]
    %v492 = vld [vmem:[#allocation2 + $0x6a0] sm:$0xf]
    %v493 = vld [vmem:[#allocation2 + $0x6a4] sm:$0xf]
    %v494 = vld [vmem:[#allocation2 + $0x6a8] sm:$0xf]
    %v495 = vld [vmem:[#allocation2 + $0x6ac] sm:$0xf]
    %v496 = vld [vmem:[#allocation2 + $0x6b0] sm:$0xf]
    %v497 = vld [vmem:[#allocation2 + $0x6b4] sm:$0xf]
    %v498 = vld [vmem:[#allocation2 + $0x6b8] sm:$0xf]
    %v499 = vld [vmem:[#allocation2 + $0x6bc] sm:$0xf]
    %v500 = vld [vmem:[#allocation2 + $0x6c0] sm:$0xf]
    %v501 = vld [vmem:[#allocation2 + $0x6c4] sm:$0xf]
    %v502 = vld [vmem:[#allocation2 + $0x6c8] sm:$0xf]
    %v503 = vld [vmem:[#allocation2 + $0x6cc] sm:$0xf]
    %v504 = vld [vmem:[#allocation2 + $0x6d0] sm:$0xf]
    %v505 = vld [vmem:[#allocation2 + $0x6d4] sm:$0xf]
    %v506 = vld [vmem:[#allocation2 + $0x6d8] sm:$0xf]
    %v507 = vld [vmem:[#allocation2 + $0x6dc] sm:$0xf]
    %v508 = vld [vmem:[#allocation2 + $0x6e0] sm:$0xf]
    %v509 = vld [vmem:[#allocation2 + $0x6e4] sm:$0xf]
    %v510 = vld [vmem:[#allocation2 + $0x6e8] sm:$0xf]
    %v511 = vld [vmem:[#allocation2 + $0x6ec] sm:$0xf]
    %v512 = vld [vmem:[#allocation2 + $0x6f0] sm:$0xf]
    %v513 = vld [vmem:[#allocation2 + $0x6f4] sm:$0xf]
    %v514 = vld [vmem:[#allocation2 + $0x6f8] sm:$0xf]
    %v515 = vld [vmem:[#allocation2 + $0x6fc] sm:$0xf]
    %v516 = vld [vmem:[#allocation2 + $0x700] sm:$0xf]
    %v517 = vld [vmem:[#allocation2 + $0x704] sm:$0xf]
    %v518 = vld [vmem:[#allocation2 + $0x708] sm:$0xf]
    %v519 = vld [vmem:[#allocation2 + $0x70c] sm:$0xf]
    %v520 = vld [vmem:[#allocation2 + $0x710] sm:$0xf]
    %v521 = vld [vmem:[#allocation2 + $0x714] sm:$0xf]
    %v522 = vld [vmem:[#allocation2 + $0x718] sm:$0xf]
    %v523 = vld [vmem:[#allocation2 + $0x71c] sm:$0xf]
    %v524 = vld [vmem:[#allocation2 + $0x720] sm:$0xf]
    %v525 = vld [vmem:[#allocation2 + $0x724] sm:$0xf]
    %v526 = vld [vmem:[#allocation2 + $0x728] sm:$0xf]
    %v527 = vld [vmem:[#allocation2 + $0x72c] sm:$0xf]
    %v528 = vld [vmem:[#allocation2 + $0x730] sm:$0xf]
    %v529 = vld [vmem:[#allocation2 + $0x734] sm:$0xf]
    %v530 = vld [vmem:[#allocation2 + $0x738] sm:$0xf]
    %v531 = vld [vmem:[#allocation2 + $0x73c] sm:$0xf]
    %v532 = vld [vmem:[#allocation2 + $0x740] sm:$0xf]
    %v533 = vld [vmem:[#allocation2 + $0x744] sm:$0xf]
    %v534 = vld [vmem:[#allocation2 + $0x748] sm:$0xf]
    %v535 = vld [vmem:[#allocation2 + $0x74c] sm:$0xf]
    %v536 = vld [vmem:[#allocation2 + $0x750] sm:$0xf]
    %v537 = vld [vmem:[#allocation2 + $0x754] sm:$0xf]
    %v538 = vld [vmem:[#allocation2 + $0x758] sm:$0xf]
    %v539 = vld [vmem:[#allocation2 + $0x75c] sm:$0xf]
    %v540 = vld [vmem:[#allocation2 + $0x760] sm:$0xf]
    %v541 = vld [vmem:[#allocation2 + $0x764] sm:$0xf]
    %v542 = vld [vmem:[#allocation2 + $0x768] sm:$0xf]
    %v543 = vld [vmem:[#allocation2 + $0x76c] sm:$0xf]
    %v544 = vld [vmem:[#allocation2 + $0x770] sm:$0xf]
    %v545 = vld [vmem:[#allocation2 + $0x774] sm:$0xf]
    %v546 = vld [vmem:[#allocation2 + $0x778] sm:$0xf]
    %v547 = vld [vmem:[#allocation2 + $0x77c] sm:$0xf]
    %v548 = vld [vmem:[#allocation2 + $0x780] sm:$0xf]
    %v549 = vld [vmem:[#allocation2 + $0x784] sm:$0xf]
    %v550 = vld [vmem:[#allocation2 + $0x788] sm:$0xf]
    %v551 = vld [vmem:[#allocation2 + $0x78c] sm:$0xf]
    %v552 = vld [vmem:[#allocation2 + $0x790] sm:$0xf]
    %v553 = vld [vmem:[#allocation2 + $0x794] sm:$0xf]
    %v554 = vld [vmem:[#allocation2 + $0x798] sm:$0xf]
    %v555 = vld [vmem:[#allocation2 + $0x79c] sm:$0xf]
    %v556 = vld [vmem:[#allocation2 + $0x7a0] sm:$0xf]
    %v557 = vld [vmem:[#allocation2 + $0x7a4] sm:$0xf]
    %v558 = vld [vmem:[#allocation2 + $0x7a8] sm:$0xf]
    %v559 = vld [vmem:[#allocation2 + $0x7ac] sm:$0xf]
    %v560 = vld [vmem:[#allocation2 + $0x7b0] sm:$0xf]
    %v561 = vld [vmem:[#allocation2 + $0x7b4] sm:$0xf]
    %v562 = vld [vmem:[#allocation2 + $0x7b8] sm:$0xf]
    %v563 = vld [vmem:[#allocation2 + $0x7bc] sm:$0xf]
    %v564 = vld [vmem:[#allocation2 + $0x7c0] sm:$0xf]
    %v565 = vld [vmem:[#allocation2 + $0x7c4] sm:$0xf]
    %v566 = vld [vmem:[#allocation2 + $0x7c8] sm:$0xf]
    %v567 = vld [vmem:[#allocation2 + $0x7cc] sm:$0xf]
    %v568 = vld [vmem:[#allocation2 + $0x7d0] sm:$0xf]
    %v569 = vld [vmem:[#allocation2 + $0x7d4] sm:$0xf]
    %v570 = vld [vmem:[#allocation2 + $0x7d8] sm:$0xf]
    %v571 = vld [vmem:[#allocation2 + $0x7dc] sm:$0xf]
    %v572 = vld [vmem:[#allocation2 + $0x7e0] sm:$0xf]
    %v573 = vld [vmem:[#allocation2 + $0x7e4] sm:$0xf]
    %v574 = vld [vmem:[#allocation2 + $0x7e8] sm:$0xf]
    %v575 = vld [vmem:[#allocation2 + $0x7ec] sm:$0xf]
    %v576 = vld [vmem:[#allocation2 + $0x7f0] sm:$0xf]
    %v577 = vld [vmem:[#allocation2 + $0x7f4] sm:$0xf]
    %v578 = vld [vmem:[#allocation2 + $0x7f8] sm:$0xf]
    %v579 = vld [vmem:[#allocation2 + $0x7fc] sm:$0xf]
    %v580 = vld [vmem:[#allocation2 + $0x800] sm:$0xf]
    %v581 = vld [vmem:[#allocation2 + $0x804] sm:$0xf]
    %v582 = vld [vmem:[#allocation2 + $0x808] sm:$0xf]
    %v583 = vld [vmem:[#allocation2 + $0x80c] sm:$0xf]
    %v584 = vld [vmem:[#allocation2 + $0x810] sm:$0xf]
    %v585 = vld [vmem:[#allocation2 + $0x814] sm:$0xf]
    %v586 = vld [vmem:[#allocation2 + $0x818] sm:$0xf]
    %v587 = vld [vmem:[#allocation2 + $0x81c] sm:$0xf]
    %v588 = vld [vmem:[#allocation2 + $0x820] sm:$0xf]
    %v589 = vld [vmem:[#allocation2 + $0x824] sm:$0xf]
    %v590 = vld [vmem:[#allocation2 + $0x828] sm:$0xf]
    %v591 = vld [vmem:[#allocation2 + $0x82c] sm:$0xf]
    %v592 = vld [vmem:[#allocation2 + $0x830] sm:$0xf]
    %v593 = vld [vmem:[#allocation2 + $0x834] sm:$0xf]
    %v594 = vld [vmem:[#allocation2 + $0x838] sm:$0xf]
    %v595 = vld [vmem:[#allocation2 + $0x83c] sm:$0xf]
    %v596 = vld [vmem:[#allocation2 + $0x840] sm:$0xf]
    %v597 = vld [vmem:[#allocation2 + $0x844] sm:$0xf]
    %v598 = vld [vmem:[#allocation2 + $0x848] sm:$0xf]
    %v599 = vld [vmem:[#allocation2 + $0x84c] sm:$0xf]
    %v600 = vld [vmem:[#allocation2 + $0x850] sm:$0xf]
    %v601 = vld [vmem:[#allocation2 + $0x854] sm:$0xf]
    %v602 = vld [vmem:[#allocation2 + $0x858] sm:$0xf]
    %v603 = vld [vmem:[#allocation2 + $0x85c] sm:$0xf]
    %v604 = vld [vmem:[#allocation2 + $0x860] sm:$0xf]
    %v605 = vld [vmem:[#allocation2 + $0x864] sm:$0xf]
    %v606 = vld [vmem:[#allocation2 + $0x868] sm:$0xf]
    %v607 = vld [vmem:[#allocation2 + $0x86c] sm:$0xf]
    %v608 = vld [vmem:[#allocation2 + $0x870] sm:$0xf]
    %v609 = vld [vmem:[#allocation2 + $0x874] sm:$0xf]
    %v610 = vld [vmem:[#allocation2 + $0x878] sm:$0xf]
    %v611 = vld [vmem:[#allocation2 + $0x87c] sm:$0xf]
    %v612 = vld [vmem:[#allocation2 + $0x880] sm:$0xf]
    %v613 = vld [vmem:[#allocation2 + $0x884] sm:$0xf]
    %v614 = vld [vmem:[#allocation2 + $0x888] sm:$0xf]
    %v615 = vld [vmem:[#allocation2 + $0x88c] sm:$0xf]
    %v616 = vld [vmem:[#allocation2 + $0x890] sm:$0xf]
    %v617 = vld [vmem:[#allocation2 + $0x894] sm:$0xf]
    %v618 = vld [vmem:[#allocation2 + $0x898] sm:$0xf]
    %v619 = vld [vmem:[#allocation2 + $0x89c] sm:$0xf]
    %v620 = vld [vmem:[#allocation2 + $0x8a0] sm:$0xf]
    %v621 = vld [vmem:[#allocation2 + $0x8a4] sm:$0xf]
    %v622 = vld [vmem:[#allocation2 + $0x8a8] sm:$0xf]
    %v623 = vld [vmem:[#allocation2 + $0x8ac] sm:$0xf]
    %v624 = vld [vmem:[#allocation2 + $0x8b0] sm:$0xf]
    %v625 = vld [vmem:[#allocation2 + $0x8b4] sm:$0xf]
    %v626 = vld [vmem:[#allocation2 + $0x8b8] sm:$0xf]
    %v627 = vld [vmem:[#allocation2 + $0x8bc] sm:$0xf]
    %v628 = vld [vmem:[#allocation2 + $0x8c0] sm:$0xf]
    %v629 = vld [vmem:[#allocation2 + $0x8c4] sm:$0xf]
    %v630 = vld [vmem:[#allocation2 + $0x8c8] sm:$0xf]
    %v631 = vld [vmem:[#allocation2 + $0x8cc] sm:$0xf]
    %v632 = vld [vmem:[#allocation2 + $0x8d0] sm:$0xf]
    %v633 = vld [vmem:[#allocation2 + $0x8d4] sm:$0xf]
    %v634 = vld [vmem:[#allocation2 + $0x8d8] sm:$0xf]
    %v635 = vld [vmem:[#allocation2 + $0x8dc] sm:$0xf]
    %v636 = vld [vmem:[#allocation2 + $0x8e0] sm:$0xf]
    %v637 = vld [vmem:[#allocation2 + $0x8e4] sm:$0xf]
    %v638 = vld [vmem:[#allocation2 + $0x8e8] sm:$0xf]
    %v639 = vld [vmem:[#allocation2 + $0x8ec] sm:$0xf]
    %v640 = vld [vmem:[#allocation2 + $0x8f0] sm:$0xf]
    %v641 = vld [vmem:[#allocation2 + $0x8f4] sm:$0xf]
    %v642 = vld [vmem:[#allocation2 + $0x8f8] sm:$0xf]
    %v643 = vld [vmem:[#allocation2 + $0x8fc] sm:$0xf]
    %v644 = vld [vmem:[#allocation2 + $0x900] sm:$0xf]
    %v645 = vld [vmem:[#allocation2 + $0x904] sm:$0xf]
    %v646 = vld [vmem:[#allocation2 + $0x908] sm:$0xf]
    %v647 = vld [vmem:[#allocation2 + $0x90c] sm:$0xf]
    %v648 = vld [vmem:[#allocation2 + $0x910] sm:$0xf]
    %v649 = vld [vmem:[#allocation2 + $0x914] sm:$0xf]
    %v650 = vld [vmem:[#allocation2 + $0x918] sm:$0xf]
    %v651 = vld [vmem:[#allocation2 + $0x91c] sm:$0xf]
    %v652 = vld [vmem:[#allocation2 + $0x920] sm:$0xf]
    %v653 = vld [vmem:[#allocation2 + $0x924] sm:$0xf]
    %v654 = vld [vmem:[#allocation2 + $0x928] sm:$0xf]
    %v655 = vld [vmem:[#allocation2 + $0x92c] sm:$0xf]
    %v656 = vld [vmem:[#allocation2 + $0x930] sm:$0xf]
    %v657 = vld [vmem:[#allocation2 + $0x934] sm:$0xf]
    %v658 = vld [vmem:[#allocation2 + $0x938] sm:$0xf]
    %v659 = vld [vmem:[#allocation2 + $0x93c] sm:$0xf]
    %v660 = vld [vmem:[#allocation2 + $0x940] sm:$0xf]
    %v661 = vld [vmem:[#allocation2 + $0x944] sm:$0xf]
    %v662 = vld [vmem:[#allocation2 + $0x948] sm:$0xf]
    %v663 = vld [vmem:[#allocation2 + $0x94c] sm:$0xf]
    %v664 = vld [vmem:[#allocation2 + $0x950] sm:$0xf]
    %v665 = vld [vmem:[#allocation2 + $0x954] sm:$0xf]
    %v666 = vld [vmem:[#allocation2 + $0x958] sm:$0xf]
    %v667 = vld [vmem:[#allocation2 + $0x95c] sm:$0xf]
    %v668 = vld [vmem:[#allocation2 + $0x960] sm:$0xf]
    %v669 = vld [vmem:[#allocation2 + $0x964] sm:$0xf]
    %v670 = vld [vmem:[#allocation2 + $0x968] sm:$0xf]
    %v671 = vld [vmem:[#allocation2 + $0x96c] sm:$0xf]
    %v672 = vld [vmem:[#allocation2 + $0x970] sm:$0xf]
    %v673 = vld [vmem:[#allocation2 + $0x974] sm:$0xf]
    %v674 = vld [vmem:[#allocation2 + $0x978] sm:$0xf]
    %v675 = vld [vmem:[#allocation2 + $0x97c] sm:$0xf]
    %v676 = vld [vmem:[#allocation2 + $0x980] sm:$0xf]
    %v677 = vld [vmem:[#allocation2 + $0x984] sm:$0xf]
    %v678 = vld [vmem:[#allocation2 + $0x988] sm:$0xf]
    %v679 = vld [vmem:[#allocation2 + $0x98c] sm:$0xf]
    %v680 = vld [vmem:[#allocation2 + $0x990] sm:$0xf]
    %v681 = vld [vmem:[#allocation2 + $0x994] sm:$0xf]
    %v682 = vld [vmem:[#allocation2 + $0x998] sm:$0xf]
    %v683 = vld [vmem:[#allocation2 + $0x99c] sm:$0xf]
    %v684 = vld [vmem:[#allocation2 + $0x9a0] sm:$0xf]
    %v685 = vld [vmem:[#allocation2 + $0x9a4] sm:$0xf]
    %v686 = vld [vmem:[#allocation2 + $0x9a8] sm:$0xf]
    %v687 = vld [vmem:[#allocation2 + $0x9ac] sm:$0xf]
    %v688 = vld [vmem:[#allocation2 + $0x9b0] sm:$0xf]
    %v689 = vld [vmem:[#allocation2 + $0x9b4] sm:$0xf]
    %v690 = vld [vmem:[#allocation2 + $0x9b8] sm:$0xf]
    %v691 = vld [vmem:[#allocation2 + $0x9bc] sm:$0xf]
    %v692 = vld [vmem:[#allocation2 + $0x9c0] sm:$0xf]
    %v693 = vld [vmem:[#allocation2 + $0x9c4] sm:$0xf]
    %v694 = vld [vmem:[#allocation2 + $0x9c8] sm:$0xf]
    %v695 = vld [vmem:[#allocation2 + $0x9cc] sm:$0xf]
    %v696 = vld [vmem:[#allocation2 + $0x9d0] sm:$0xf]
    %v697 = vld [vmem:[#allocation2 + $0x9d4] sm:$0xf]
    %v698 = vld [vmem:[#allocation2 + $0x9d8] sm:$0xf]
    %v699 = vld [vmem:[#allocation2 + $0x9dc] sm:$0xf]
    %v700 = vld [vmem:[#allocation2 + $0x9e0] sm:$0xf]
    %v701 = vld [vmem:[#allocation2 + $0x9e4] sm:$0xf]
    %v702 = vld [vmem:[#allocation2 + $0x9e8] sm:$0xf]
    %v703 = vld [vmem:[#allocation2 + $0x9ec] sm:$0xf]
    %v704 = vld [vmem:[#allocation2 + $0x9f0] sm:$0xf]
    %v705 = vld [vmem:[#allocation2 + $0x9f4] sm:$0xf]
    %v706 = vld [vmem:[#allocation2 + $0x9f8] sm:$0xf]
    %v707 = vld [vmem:[#allocation2 + $0x9fc] sm:$0xf]
    %v708 = vld [vmem:[#allocation2 + $0xa00] sm:$0xf]
    %v709 = vld [vmem:[#allocation2 + $0xa04] sm:$0xf]
    %v710 = vld [vmem:[#allocation2 + $0xa08] sm:$0xf]
    %v711 = vld [vmem:[#allocation2 + $0xa0c] sm:$0xf]
    %v712 = vld [vmem:[#allocation2 + $0xa10] sm:$0xf]
    %v713 = vld [vmem:[#allocation2 + $0xa14] sm:$0xf]
    %v714 = vld [vmem:[#allocation2 + $0xa18] sm:$0xf]
    %v715 = vld [vmem:[#allocation2 + $0xa1c] sm:$0xf]
    %v716 = vld [vmem:[#allocation2 + $0xa20] sm:$0xf]
    %v717 = vld [vmem:[#allocation2 + $0xa24] sm:$0xf]
    %v718 = vld [vmem:[#allocation2 + $0xa28] sm:$0xf]
    %v719 = vld [vmem:[#allocation2 + $0xa2c] sm:$0xf]
    %v720 = vld [vmem:[#allocation2 + $0xa30] sm:$0xf]
    %v721 = vld [vmem:[#allocation2 + $0xa34] sm:$0xf]
    %v722 = vld [vmem:[#allocation2 + $0xa38] sm:$0xf]
    %v723 = vld [vmem:[#allocation2 + $0xa3c] sm:$0xf]
    %v724 = vld [vmem:[#allocation2 + $0xa40] sm:$0xf]
    %v725 = vld [vmem:[#allocation2 + $0xa44] sm:$0xf]
    %v726 = vld [vmem:[#allocation2 + $0xa48] sm:$0xf]
    %v727 = vld [vmem:[#allocation2 + $0xa4c] sm:$0xf]
    %v728 = vld [vmem:[#allocation2 + $0xa50] sm:$0xf]
    %v729 = vld [vmem:[#allocation2 + $0xa54] sm:$0xf]
    %v730 = vld [vmem:[#allocation2 + $0xa58] sm:$0xf]
    %v731 = vld [vmem:[#allocation2 + $0xa5c] sm:$0xf]
    %v732 = vld [vmem:[#allocation2 + $0xa60] sm:$0xf]
    %v733 = vld [vmem:[#allocation2 + $0xa64] sm:$0xf]
    %v734 = vld [vmem:[#allocation2 + $0xa68] sm:$0xf]
    %v735 = vld [vmem:[#allocation2 + $0xa6c] sm:$0xf]
    %v736 = vld [vmem:[#allocation2 + $0xa70] sm:$0xf]
    %v737 = vld [vmem:[#allocation2 + $0xa74] sm:$0xf]
    %v738 = vld [vmem:[#allocation2 + $0xa78] sm:$0xf]
    %v739 = vld [vmem:[#allocation2 + $0xa7c] sm:$0xf]
    %v740 = vld [vmem:[#allocation2 + $0xa80] sm:$0xf]
    %v741 = vld [vmem:[#allocation2 + $0xa84] sm:$0xf]
    %v742 = vld [vmem:[#allocation2 + $0xa88] sm:$0xf]
    %v743 = vld [vmem:[#allocation2 + $0xa8c] sm:$0xf]
    %v744 = vld [vmem:[#allocation2 + $0xa90] sm:$0xf]
    %v745 = vld [vmem:[#allocation2 + $0xa94] sm:$0xf]
    %v746 = vld [vmem:[#allocation2 + $0xa98] sm:$0xf]
    %v747 = vld [vmem:[#allocation2 + $0xa9c] sm:$0xf]
    %v748 = vld [vmem:[#allocation2 + $0xaa0] sm:$0xf]
    %v749 = vld [vmem:[#allocation2 + $0xaa4] sm:$0xf]
    %v750 = vld [vmem:[#allocation2 + $0xaa8] sm:$0xf]
    %v751 = vld [vmem:[#allocation2 + $0xaac] sm:$0xf]
    %v752 = vld [vmem:[#allocation2 + $0xab0] sm:$0xf]
    %v753 = vld [vmem:[#allocation2 + $0xab4] sm:$0xf]
    %v754 = vld [vmem:[#allocation2 + $0xab8] sm:$0xf]
    %v755 = vld [vmem:[#allocation2 + $0xabc] sm:$0xf]
    %v756 = vld [vmem:[#allocation2 + $0xac0] sm:$0xf]
    %v757 = vld [vmem:[#allocation2 + $0xac4] sm:$0xf]
    %v758 = vld [vmem:[#allocation2 + $0xac8] sm:$0xf]
    %v759 = vld [vmem:[#allocation2 + $0xacc] sm:$0xf]
    %v760 = vld [vmem:[#allocation2 + $0xad0] sm:$0xf]
    %v761 = vld [vmem:[#allocation2 + $0xad4] sm:$0xf]
    %v762 = vld [vmem:[#allocation2 + $0xad8] sm:$0xf]
    %v763 = vld [vmem:[#allocation2 + $0xadc] sm:$0xf]
    %v764 = vld [vmem:[#allocation2 + $0xae0] sm:$0xf]
    %v765 = vld [vmem:[#allocation2 + $0xae4] sm:$0xf]
    %v766 = vld [vmem:[#allocation2 + $0xae8] sm:$0xf]
    %v767 = vld [vmem:[#allocation2 + $0xaec] sm:$0xf]
    %v768 = vld [vmem:[#allocation2 + $0xaf0] sm:$0xf]
    %v769 = vld [vmem:[#allocation2 + $0xaf4] sm:$0xf]
    %v770 = vld [vmem:[#allocation2 + $0xaf8] sm:$0xf]
    %v771 = vld [vmem:[#allocation2 + $0xafc] sm:$0xf]
    %v772 = vld [vmem:[#allocation2 + $0xb00] sm:$0xf]
    %v773 = vld [vmem:[#allocation2 + $0xb04] sm:$0xf]
    %v774 = vld [vmem:[#allocation2 + $0xb08] sm:$0xf]
    %v775 = vld [vmem:[#allocation2 + $0xb0c] sm:$0xf]
    %v776 = vld [vmem:[#allocation2 + $0xb10] sm:$0xf]
    %v777 = vld [vmem:[#allocation2 + $0xb14] sm:$0xf]
    %v778 = vld [vmem:[#allocation2 + $0xb18] sm:$0xf]
    %v779 = vld [vmem:[#allocation2 + $0xb1c] sm:$0xf]
    %v780 = vld [vmem:[#allocation2 + $0xb20] sm:$0xf]
    %v781 = vld [vmem:[#allocation2 + $0xb24] sm:$0xf]
    %v782 = vld [vmem:[#allocation2 + $0xb28] sm:$0xf]
    %v783 = vld [vmem:[#allocation2 + $0xb2c] sm:$0xf]
    %v784 = vld [vmem:[#allocation2 + $0xb30] sm:$0xf]
    %v785 = vld [vmem:[#allocation2 + $0xb34] sm:$0xf]
    %v786 = vld [vmem:[#allocation2 + $0xb38] sm:$0xf]
    %v787 = vld [vmem:[#allocation2 + $0xb3c] sm:$0xf]
    %v788 = vld [vmem:[#allocation2 + $0xb40] sm:$0xf]
    %v789 = vld [vmem:[#allocation2 + $0xb44] sm:$0xf]
    %v790 = vld [vmem:[#allocation2 + $0xb48] sm:$0xf]
    %v791 = vld [vmem:[#allocation2 + $0xb4c] sm:$0xf]
    %v792 = vld [vmem:[#allocation2 + $0xb50] sm:$0xf]
    %v793 = vld [vmem:[#allocation2 + $0xb54] sm:$0xf]
    %v794 = vld [vmem:[#allocation2 + $0xb58] sm:$0xf]
    %v795 = vld [vmem:[#allocation2 + $0xb5c] sm:$0xf]
    %v796 = vld [vmem:[#allocation2 + $0xb60] sm:$0xf]
    %v797 = vld [vmem:[#allocation2 + $0xb64] sm:$0xf]
    %v798 = vld [vmem:[#allocation2 + $0xb68] sm:$0xf]
    %v799 = vld [vmem:[#allocation2 + $0xb6c] sm:$0xf]
    %v800 = vld [vmem:[#allocation2 + $0xb70] sm:$0xf]
    %v801 = vld [vmem:[#allocation2 + $0xb74] sm:$0xf]
    %v802 = vld [vmem:[#allocation2 + $0xb78] sm:$0xf]
    %v803 = vld [vmem:[#allocation2 + $0xb7c] sm:$0xf]
    %v804 = vld [vmem:[#allocation2 + $0xb80] sm:$0xf]
    %v805 = vld [vmem:[#allocation2 + $0xb84] sm:$0xf]
    %v806 = vld [vmem:[#allocation2 + $0xb88] sm:$0xf]
    %v807 = vld [vmem:[#allocation2 + $0xb8c] sm:$0xf]
    %v808 = vld [vmem:[#allocation2 + $0xb90] sm:$0xf]
    %v809 = vld [vmem:[#allocation2 + $0xb94] sm:$0xf]
    %v810 = vld [vmem:[#allocation2 + $0xb98] sm:$0xf]
    %v811 = vld [vmem:[#allocation2 + $0xb9c] sm:$0xf]
    %v812 = vld [vmem:[#allocation2 + $0xba0] sm:$0xf]
    %v813 = vld [vmem:[#allocation2 + $0xba4] sm:$0xf]
    %v814 = vld [vmem:[#allocation2 + $0xba8] sm:$0xf]
    %v815 = vld [vmem:[#allocation2 + $0xbac] sm:$0xf]
    %v816 = vld [vmem:[#allocation2 + $0xbb0] sm:$0xf]
    %v817 = vld [vmem:[#allocation2 + $0xbb4] sm:$0xf]
    %v818 = vld [vmem:[#allocation2 + $0xbb8] sm:$0xf]
    %v819 = vld [vmem:[#allocation2 + $0xbbc] sm:$0xf]
    %v820 = vld [vmem:[#allocation2 + $0xbc0] sm:$0xf]
    %v821 = vld [vmem:[#allocation2 + $0xbc4] sm:$0xf]
    %v822 = vld [vmem:[#allocation2 + $0xbc8] sm:$0xf]
    %v823 = vld [vmem:[#allocation2 + $0xbcc] sm:$0xf]
    %v824 = vld [vmem:[#allocation2 + $0xbd0] sm:$0xf]
    %v825 = vld [vmem:[#allocation2 + $0xbd4] sm:$0xf]
    %v826 = vld [vmem:[#allocation2 + $0xbd8] sm:$0xf]
    %v827 = vld [vmem:[#allocation2 + $0xbdc] sm:$0xf]
    %v828 = vld [vmem:[#allocation2 + $0xbe0] sm:$0xf]
    %v829 = vld [vmem:[#allocation2 + $0xbe4] sm:$0xf]
    %v830 = vld [vmem:[#allocation2 + $0xbe8] sm:$0xf]
    %v831 = vld [vmem:[#allocation2 + $0xbec] sm:$0xf]
    %v832 = vld [vmem:[#allocation2 + $0xbf0] sm:$0xf]
    %v833 = vld [vmem:[#allocation2 + $0xbf4] sm:$0xf]
    %v834 = vld [vmem:[#allocation2 + $0xbf8] sm:$0xf]
    %v835 = vld [vmem:[#allocation2 + $0xbfc] sm:$0xf]
    %v836 = vld [vmem:[#allocation2 + $0xc00] sm:$0xf]
    %v837 = vld [vmem:[#allocation2 + $0xc04] sm:$0xf]
    %v838 = vld [vmem:[#allocation2 + $0xc08] sm:$0xf]
    %v839 = vld [vmem:[#allocation2 + $0xc0c] sm:$0xf]
    %v840 = vld [vmem:[#allocation2 + $0xc10] sm:$0xf]
    %v841 = vld [vmem:[#allocation2 + $0xc14] sm:$0xf]
    %v842 = vld [vmem:[#allocation2 + $0xc18] sm:$0xf]
    %v843 = vld [vmem:[#allocation2 + $0xc1c] sm:$0xf]
    %v844 = vld [vmem:[#allocation2 + $0xc20] sm:$0xf]
    %v845 = vld [vmem:[#allocation2 + $0xc24] sm:$0xf]
    %v846 = vld [vmem:[#allocation2 + $0xc28] sm:$0xf]
    %v847 = vld [vmem:[#allocation2 + $0xc2c] sm:$0xf]
    %v848 = vld [vmem:[#allocation2 + $0xc30] sm:$0xf]
    %v849 = vld [vmem:[#allocation2 + $0xc34] sm:$0xf]
    %v850 = vld [vmem:[#allocation2 + $0xc38] sm:$0xf]
    %v851 = vld [vmem:[#allocation2 + $0xc3c] sm:$0xf]
    %v852 = vld [vmem:[#allocation2 + $0xc40] sm:$0xf]
    %v853 = vld [vmem:[#allocation2 + $0xc44] sm:$0xf]
    %v854 = vld [vmem:[#allocation2 + $0xc48] sm:$0xf]
    %v855 = vld [vmem:[#allocation2 + $0xc4c] sm:$0xf]
    %v856 = vld [vmem:[#allocation2 + $0xc50] sm:$0xf]
    %v857 = vld [vmem:[#allocation2 + $0xc54] sm:$0xf]
    %v858 = vld [vmem:[#allocation2 + $0xc58] sm:$0xf]
    %v859 = vld [vmem:[#allocation2 + $0xc5c] sm:$0xf]
    %v860 = vld [vmem:[#allocation2 + $0xc60] sm:$0xf]
    %v861 = vld [vmem:[#allocation2 + $0xc64] sm:$0xf]
    %v862 = vld [vmem:[#allocation2 + $0xc68] sm:$0xf]
    %v863 = vld [vmem:[#allocation2 + $0xc6c] sm:$0xf]
    %v864 = vld [vmem:[#allocation2 + $0xc70] sm:$0xf]
    %v865 = vld [vmem:[#allocation2 + $0xc74] sm:$0xf]
    %v866 = vld [vmem:[#allocation2 + $0xc78] sm:$0xf]
    %v867 = vld [vmem:[#allocation2 + $0xc7c] sm:$0xf]
    %v868 = vld [vmem:[#allocation2 + $0xc80] sm:$0xf]
    %v869 = vld [vmem:[#allocation2 + $0xc84] sm:$0xf]
    %v870 = vld [vmem:[#allocation2 + $0xc88] sm:$0xf]
    %v871 = vld [vmem:[#allocation2 + $0xc8c] sm:$0xf]
    %v872 = vld [vmem:[#allocation2 + $0xc90] sm:$0xf]
    %v873 = vld [vmem:[#allocation2 + $0xc94] sm:$0xf]
    %v874 = vld [vmem:[#allocation2 + $0xc98] sm:$0xf]
    %v875 = vld [vmem:[#allocation2 + $0xc9c] sm:$0xf]
    %v876 = vld [vmem:[#allocation2 + $0xca0] sm:$0xf]
    %v877 = vld [vmem:[#allocation2 + $0xca4] sm:$0xf]
    %v878 = vld [vmem:[#allocation2 + $0xca8] sm:$0xf]
    %v879 = vld [vmem:[#allocation2 + $0xcac] sm:$0xf]
    %v880 = vld [vmem:[#allocation2 + $0xcb0] sm:$0xf]
    %v881 = vld [vmem:[#allocation2 + $0xcb4] sm:$0xf]
    %v882 = vld [vmem:[#allocation2 + $0xcb8] sm:$0xf]
    %v883 = vld [vmem:[#allocation2 + $0xcbc] sm:$0xf]
    %v884 = vld [vmem:[#allocation2 + $0xcc0] sm:$0xf]
    %v885 = vld [vmem:[#allocation2 + $0xcc4] sm:$0xf]
    %v886 = vld [vmem:[#allocation2 + $0xcc8] sm:$0xf]
    %v887 = vld [vmem:[#allocation2 + $0xccc] sm:$0xf]
    %v888 = vld [vmem:[#allocation2 + $0xcd0] sm:$0xf]
    %v889 = vld [vmem:[#allocation2 + $0xcd4] sm:$0xf]
    %v890 = vld [vmem:[#allocation2 + $0xcd8] sm:$0xf]
    %v891 = vld [vmem:[#allocation2 + $0xcdc] sm:$0xf]
    %v892 = vld [vmem:[#allocation2 + $0xce0] sm:$0xf]
    %v893 = vld [vmem:[#allocation2 + $0xce4] sm:$0xf]
    %v894 = vld [vmem:[#allocation2 + $0xce8] sm:$0xf]
    %v895 = vld [vmem:[#allocation2 + $0xcec] sm:$0xf]
    %v896 = vld [vmem:[#allocation2 + $0xcf0] sm:$0xf]
    %v897 = vld [vmem:[#allocation2 + $0xcf4] sm:$0xf]
    %v898 = vld [vmem:[#allocation2 + $0xcf8] sm:$0xf]
    %v899 = vld [vmem:[#allocation2 + $0xcfc] sm:$0xf]
    %v900 = vld [vmem:[#allocation2 + $0xd00] sm:$0xf]
    %v901 = vld [vmem:[#allocation2 + $0xd04] sm:$0xf]
    %v902 = vld [vmem:[#allocation2 + $0xd08] sm:$0xf]
    %v903 = vld [vmem:[#allocation2 + $0xd0c] sm:$0xf]
    %v904 = vld [vmem:[#allocation2 + $0xd10] sm:$0xf]
    %v905 = vld [vmem:[#allocation2 + $0xd14] sm:$0xf]
    %v906 = vld [vmem:[#allocation2 + $0xd18] sm:$0xf]
    %v907 = vld [vmem:[#allocation2 + $0xd1c] sm:$0xf]
    %v908 = vld [vmem:[#allocation2 + $0xd20] sm:$0xf]
    %v909 = vld [vmem:[#allocation2 + $0xd24] sm:$0xf]
    %v910 = vld [vmem:[#allocation2 + $0xd28] sm:$0xf]
    %v911 = vld [vmem:[#allocation2 + $0xd2c] sm:$0xf]
    %v912 = vld [vmem:[#allocation2 + $0xd30] sm:$0xf]
    %v913 = vld [vmem:[#allocation2 + $0xd34] sm:$0xf]
    %v914 = vld [vmem:[#allocation2 + $0xd38] sm:$0xf]
    %v915 = vld [vmem:[#allocation2 + $0xd3c] sm:$0xf]
    %v916 = vld [vmem:[#allocation2 + $0xd40] sm:$0xf]
    %v917 = vld [vmem:[#allocation2 + $0xd44] sm:$0xf]
    %v918 = vld [vmem:[#allocation2 + $0xd48] sm:$0xf]
    %v919 = vld [vmem:[#allocation2 + $0xd4c] sm:$0xf]
    %v920 = vld [vmem:[#allocation2 + $0xd50] sm:$0xf]
    %v921 = vld [vmem:[#allocation2 + $0xd54] sm:$0xf]
    %v922 = vld [vmem:[#allocation2 + $0xd58] sm:$0xf]
    %v923 = vld [vmem:[#allocation2 + $0xd5c] sm:$0xf]
    %v924 = vld [vmem:[#allocation2 + $0xd60] sm:$0xf]
    %v925 = vld [vmem:[#allocation2 + $0xd64] sm:$0xf]
    %v926 = vld [vmem:[#allocation2 + $0xd68] sm:$0xf]
    %v927 = vld [vmem:[#allocation2 + $0xd6c] sm:$0xf]
    %v928 = vld [vmem:[#allocation2 + $0xd70] sm:$0xf]
    %v929 = vld [vmem:[#allocation2 + $0xd74] sm:$0xf]
    %v930 = vld [vmem:[#allocation2 + $0xd78] sm:$0xf]
    %v931 = vld [vmem:[#allocation2 + $0xd7c] sm:$0xf]
    %v932 = vld [vmem:[#allocation2 + $0xd80] sm:$0xf]
    %v933 = vld [vmem:[#allocation2 + $0xd84] sm:$0xf]
    %v934 = vld [vmem:[#allocation2 + $0xd88] sm:$0xf]
    %v935 = vld [vmem:[#allocation2 + $0xd8c] sm:$0xf]
    %v936 = vld [vmem:[#allocation2 + $0xd90] sm:$0xf]
    %v937 = vld [vmem:[#allocation2 + $0xd94] sm:$0xf]
    %v938 = vld [vmem:[#allocation2 + $0xd98] sm:$0xf]
    %v939 = vld [vmem:[#allocation2 + $0xd9c] sm:$0xf]
    %v940 = vld [vmem:[#allocation2 + $0xda0] sm:$0xf]
    %v941 = vld [vmem:[#allocation2 + $0xda4] sm:$0xf]
    %v942 = vld [vmem:[#allocation2 + $0xda8] sm:$0xf]
    %v943 = vld [vmem:[#allocation2 + $0xdac] sm:$0xf]
    %v944 = vld [vmem:[#allocation2 + $0xdb0] sm:$0xf]
    %v945 = vld [vmem:[#allocation2 + $0xdb4] sm:$0xf]
    %v946 = vld [vmem:[#allocation2 + $0xdb8] sm:$0xf]
    %v947 = vld [vmem:[#allocation2 + $0xdbc] sm:$0xf]
    %v948 = vld [vmem:[#allocation2 + $0xdc0] sm:$0xf]
    %v949 = vld [vmem:[#allocation2 + $0xdc4] sm:$0xf]
    %v950 = vld [vmem:[#allocation2 + $0xdc8] sm:$0xf]
    %v951 = vld [vmem:[#allocation2 + $0xdcc] sm:$0xf]
    %v952 = vld [vmem:[#allocation2 + $0xdd0] sm:$0xf]
    %v953 = vld [vmem:[#allocation2 + $0xdd4] sm:$0xf]
    %v954 = vld [vmem:[#allocation2 + $0xdd8] sm:$0xf]
    %v955 = vld [vmem:[#allocation2 + $0xddc] sm:$0xf]
    %v956 = vld [vmem:[#allocation2 + $0xde0] sm:$0xf]
    %v957 = vld [vmem:[#allocation2 + $0xde4] sm:$0xf]
    %v958 = vld [vmem:[#allocation2 + $0xde8] sm:$0xf]
    %v959 = vld [vmem:[#allocation2 + $0xdec] sm:$0xf]
    %v960 = vld [vmem:[#allocation2 + $0xdf0] sm:$0xf]
    %v961 = vld [vmem:[#allocation2 + $0xdf4] sm:$0xf]
    %v962 = vld [vmem:[#allocation2 + $0xdf8] sm:$0xf]
    %v963 = vld [vmem:[#allocation2 + $0xdfc] sm:$0xf]
    %v964 = vld [vmem:[#allocation2 + $0xe00] sm:$0xf]
    %v965 = vld [vmem:[#allocation2 + $0xe04] sm:$0xf]
    %v966 = vld [vmem:[#allocation2 + $0xe08] sm:$0xf]
    %v967 = vld [vmem:[#allocation2 + $0xe0c] sm:$0xf]
    %v968 = vld [vmem:[#allocation2 + $0xe10] sm:$0xf]
    %v969 = vld [vmem:[#allocation2 + $0xe14] sm:$0xf]
    %v970 = vld [vmem:[#allocation2 + $0xe18] sm:$0xf]
    %v971 = vld [vmem:[#allocation2 + $0xe1c] sm:$0xf]
    %v972 = vld [vmem:[#allocation2 + $0xe20] sm:$0xf]
    %v973 = vld [vmem:[#allocation2 + $0xe24] sm:$0xf]
    %v974 = vld [vmem:[#allocation2 + $0xe28] sm:$0xf]
    %v975 = vld [vmem:[#allocation2 + $0xe2c] sm:$0xf]
    %v976 = vld [vmem:[#allocation2 + $0xe30] sm:$0xf]
    %v977 = vld [vmem:[#allocation2 + $0xe34] sm:$0xf]
    %v978 = vld [vmem:[#allocation2 + $0xe38] sm:$0xf]
    %v979 = vld [vmem:[#allocation2 + $0xe3c] sm:$0xf]
    %v980 = vld [vmem:[#allocation2 + $0xe40] sm:$0xf]
    %v981 = vld [vmem:[#allocation2 + $0xe44] sm:$0xf]
    %v982 = vld [vmem:[#allocation2 + $0xe48] sm:$0xf]
    %v983 = vld [vmem:[#allocation2 + $0xe4c] sm:$0xf]
    %v984 = vld [vmem:[#allocation2 + $0xe50] sm:$0xf]
    %v985 = vld [vmem:[#allocation2 + $0xe54] sm:$0xf]
    %v986 = vld [vmem:[#allocation2 + $0xe58] sm:$0xf]
    %v987 = vld [vmem:[#allocation2 + $0xe5c] sm:$0xf]
    %v988 = vld [vmem:[#allocation2 + $0xe60] sm:$0xf]
    %v989 = vld [vmem:[#allocation2 + $0xe64] sm:$0xf]
    %v990 = vld [vmem:[#allocation2 + $0xe68] sm:$0xf]
    %v991 = vld [vmem:[#allocation2 + $0xe6c] sm:$0xf]
    %v992 = vld [vmem:[#allocation2 + $0xe70] sm:$0xf]
    %v993 = vld [vmem:[#allocation2 + $0xe74] sm:$0xf]
    %v994 = vld [vmem:[#allocation2 + $0xe78] sm:$0xf]
    %v995 = vld [vmem:[#allocation2 + $0xe7c] sm:$0xf]
    %v996 = vld [vmem:[#allocation2 + $0xe80] sm:$0xf]
    %v997 = vld [vmem:[#allocation2 + $0xe84] sm:$0xf]
    %v998 = vld [vmem:[#allocation2 + $0xe88] sm:$0xf]
    %v999 = vld [vmem:[#allocation2 + $0xe8c] sm:$0xf]
    %v1000 = vld [vmem:[#allocation2 + $0xe90] sm:$0xf]
    %v1001 = vld [vmem:[#allocation2 + $0xe94] sm:$0xf]
    %v1002 = vld [vmem:[#allocation2 + $0xe98] sm:$0xf]
    %v1003 = vld [vmem:[#allocation2 + $0xe9c] sm:$0xf]
    %v1004 = vld [vmem:[#allocation2 + $0xea0] sm:$0xf]
    %v1005 = vld [vmem:[#allocation2 + $0xea4] sm:$0xf]
    %v1006 = vld [vmem:[#allocation2 + $0xea8] sm:$0xf]
    %v1007 = vld [vmem:[#allocation2 + $0xeac] sm:$0xf]
    %v1008 = vld [vmem:[#allocation2 + $0xeb0] sm:$0xf]
    %v1009 = vld [vmem:[#allocation2 + $0xeb4] sm:$0xf]
    %v1010 = vld [vmem:[#allocation2 + $0xeb8] sm:$0xf]
    %v1011 = vld [vmem:[#allocation2 + $0xebc] sm:$0xf]
    %v1012 = vld [vmem:[#allocation2 + $0xec0] sm:$0xf]
    %v1013 = vld [vmem:[#allocation2 + $0xec4] sm:$0xf]
    %v1014 = vld [vmem:[#allocation2 + $0xec8] sm:$0xf]
    %v1015 = vld [vmem:[#allocation2 + $0xecc] sm:$0xf]
    %v1016 = vld [vmem:[#allocation2 + $0xed0] sm:$0xf]
    %v1017 = vld [vmem:[#allocation2 + $0xed4] sm:$0xf]
    %v1018 = vld [vmem:[#allocation2 + $0xed8] sm:$0xf]
    %v1019 = vld [vmem:[#allocation2 + $0xedc] sm:$0xf]
    %v1020 = vld [vmem:[#allocation2 + $0xee0] sm:$0xf]
    %v1021 = vld [vmem:[#allocation2 + $0xee4] sm:$0xf]
    %v1022 = vld [vmem:[#allocation2 + $0xee8] sm:$0xf]
    %v1023 = vld [vmem:[#allocation2 + $0xeec] sm:$0xf]
    %v1024 = vld [vmem:[#allocation2 + $0xef0] sm:$0xf]
    %v1025 = vld [vmem:[#allocation2 + $0xef4] sm:$0xf]
    %v1026 = vld [vmem:[#allocation2 + $0xef8] sm:$0xf]
    %v1027 = vld [vmem:[#allocation2 + $0xefc] sm:$0xf]
    %v1028 = vld [vmem:[#allocation2 + $0xf00] sm:$0xf]
    %v1029 = vld [vmem:[#allocation2 + $0xf04] sm:$0xf]
    %v1030 = vld [vmem:[#allocation2 + $0xf08] sm:$0xf]
    %v1031 = vld [vmem:[#allocation2 + $0xf0c] sm:$0xf]
    %v1032 = vld [vmem:[#allocation2 + $0xf10] sm:$0xf]
    %v1033 = vld [vmem:[#allocation2 + $0xf14] sm:$0xf]
    %v1034 = vld [vmem:[#allocation2 + $0xf18] sm:$0xf]
    %v1035 = vld [vmem:[#allocation2 + $0xf1c] sm:$0xf]
    %v1036 = vld [vmem:[#allocation2 + $0xf20] sm:$0xf]
    %v1037 = vld [vmem:[#allocation2 + $0xf24] sm:$0xf]
    %v1038 = vld [vmem:[#allocation2 + $0xf28] sm:$0xf]
    %v1039 = vld [vmem:[#allocation2 + $0xf2c] sm:$0xf]
    %v1040 = vld [vmem:[#allocation2 + $0xf30] sm:$0xf]
    %v1041 = vld [vmem:[#allocation2 + $0xf34] sm:$0xf]
    %v1042 = vld [vmem:[#allocation2 + $0xf38] sm:$0xf]
    %v1043 = vld [vmem:[#allocation2 + $0xf3c] sm:$0xf]
    %v1044 = vld [vmem:[#allocation2 + $0xf40] sm:$0xf]
    %v1045 = vld [vmem:[#allocation2 + $0xf44] sm:$0xf]
    %v1046 = vld [vmem:[#allocation2 + $0xf48] sm:$0xf]
    %v1047 = vld [vmem:[#allocation2 + $0xf4c] sm:$0xf]
    %v1048 = vld [vmem:[#allocation2 + $0xf50] sm:$0xf]
    %v1049 = vld [vmem:[#allocation2 + $0xf54] sm:$0xf]
    %v1050 = vld [vmem:[#allocation2 + $0xf58] sm:$0xf]
    %v1051 = vld [vmem:[#allocation2 + $0xf5c] sm:$0xf]
    %v1052 = vld [vmem:[#allocation2 + $0xf60] sm:$0xf]
    %v1053 = vld [vmem:[#allocation2 + $0xf64] sm:$0xf]
    %v1054 = vld [vmem:[#allocation2 + $0xf68] sm:$0xf]
    %v1055 = vld [vmem:[#allocation2 + $0xf6c] sm:$0xf]
    %v1056 = vld [vmem:[#allocation2 + $0xf70] sm:$0xf]
    %v1057 = vld [vmem:[#allocation2 + $0xf74] sm:$0xf]
    %v1058 = vld [vmem:[#allocation2 + $0xf78] sm:$0xf]
    %v1059 = vld [vmem:[#allocation2 + $0xf7c] sm:$0xf]
    %v1060 = vld [vmem:[#allocation2 + $0xf80] sm:$0xf]
    %v1061 = vld [vmem:[#allocation2 + $0xf84] sm:$0xf]
    %v1062 = vld [vmem:[#allocation2 + $0xf88] sm:$0xf]
    %v1063 = vld [vmem:[#allocation2 + $0xf8c] sm:$0xf]
    %v1064 = vld [vmem:[#allocation2 + $0xf90] sm:$0xf]
    %v1065 = vld [vmem:[#allocation2 + $0xf94] sm:$0xf]
    %v1066 = vld [vmem:[#allocation2 + $0xf98] sm:$0xf]
    %v1067 = vld [vmem:[#allocation2 + $0xf9c] sm:$0xf]
    %v1068 = vld [vmem:[#allocation2 + $0xfa0] sm:$0xf]
    %v1069 = vld [vmem:[#allocation2 + $0xfa4] sm:$0xf]
    %v1070 = vld [vmem:[#allocation2 + $0xfa8] sm:$0xf]
    %v1071 = vld [vmem:[#allocation2 + $0xfac] sm:$0xf]
    %v1072 = vld [vmem:[#allocation2 + $0xfb0] sm:$0xf]
    %v1073 = vld [vmem:[#allocation2 + $0xfb4] sm:$0xf]
    %v1074 = vld [vmem:[#allocation2 + $0xfb8] sm:$0xf]
    %v1075 = vld [vmem:[#allocation2 + $0xfbc] sm:$0xf]
    %v1076 = vld [vmem:[#allocation2 + $0xfc0] sm:$0xf]
    %v1077 = vld [vmem:[#allocation2 + $0xfc4] sm:$0xf]
    %v1078 = vld [vmem:[#allocation2 + $0xfc8] sm:$0xf]
    %v1079 = vld [vmem:[#allocation2 + $0xfcc] sm:$0xf]
    %v1080 = vld [vmem:[#allocation2 + $0xfd0] sm:$0xf]
    %v1081 = vld [vmem:[#allocation2 + $0xfd4] sm:$0xf]
    %v1082 = vld [vmem:[#allocation2 + $0xfd8] sm:$0xf]
    %v1083 = vld [vmem:[#allocation2 + $0xfdc] sm:$0xf]
    %v1084 = vld [vmem:[#allocation2 + $0xfe0] sm:$0xf]
    %v1085 = vld [vmem:[#allocation2 + $0xfe4] sm:$0xf]
    %v1086 = vld [vmem:[#allocation2 + $0xfe8] sm:$0xf]
    %v1087 = vld [vmem:[#allocation2 + $0xfec] sm:$0xf]
    %v1088 = vld [vmem:[#allocation2 + $0xff0] sm:$0xf]
    %v1089 = vld [vmem:[#allocation2 + $0xff4] sm:$0xf]
    %v1090 = vld [vmem:[#allocation2 + $0xff8] sm:$0xf]
    %v1091 = vld [vmem:[#allocation2 + $0xffc] sm:$0xf]
    %v1092 = vld [vmem:[#allocation2 + $0x1000] sm:$0xf]
    %v1093 = vld [vmem:[#allocation2 + $0x1004] sm:$0xf]
    %v1094 = vld [vmem:[#allocation2 + $0x1008] sm:$0xf]
    %v1095 = vld [vmem:[#allocation2 + $0x100c] sm:$0xf]
    %v1096 = vld [vmem:[#allocation2 + $0x1010] sm:$0xf]
    %v1097 = vld [vmem:[#allocation2 + $0x1014] sm:$0xf]
    %v1098 = vld [vmem:[#allocation2 + $0x1018] sm:$0xf]
    %v1099 = vld [vmem:[#allocation2 + $0x101c] sm:$0xf]
    %v1100 = vld [vmem:[#allocation2 + $0x1020] sm:$0xf]
    %v1101 = vld [vmem:[#allocation2 + $0x1024] sm:$0xf]
    %v1102 = vld [vmem:[#allocation2 + $0x1028] sm:$0xf]
    %v1103 = vld [vmem:[#allocation2 + $0x102c] sm:$0xf]
    %v1104 = vld [vmem:[#allocation2 + $0x1030] sm:$0xf]
    %v1105 = vld [vmem:[#allocation2 + $0x1034] sm:$0xf]
    %v1106 = vld [vmem:[#allocation2 + $0x1038] sm:$0xf]
    %v1107 = vld [vmem:[#allocation2 + $0x103c] sm:$0xf]
    %v1108 = vld [vmem:[#allocation2 + $0x1040] sm:$0xf]
    %v1109 = vld [vmem:[#allocation2 + $0x1044] sm:$0xf]
    %v1110 = vld [vmem:[#allocation2 + $0x1048] sm:$0xf]
    %v1111 = vld [vmem:[#allocation2 + $0x104c] sm:$0xf]
    %v1112 = vld [vmem:[#allocation2 + $0x1050] sm:$0xf]
    %v1113 = vld [vmem:[#allocation2 + $0x1054] sm:$0xf]
    %v1114 = vld [vmem:[#allocation2 + $0x1058] sm:$0xf]
    %v1115 = vld [vmem:[#allocation2 + $0x105c] sm:$0xf]
    %v1116 = vld [vmem:[#allocation2 + $0x1060] sm:$0xf]
    %v1117 = vld [vmem:[#allocation2 + $0x1064] sm:$0xf]
    %v1118 = vld [vmem:[#allocation2 + $0x1068] sm:$0xf]
    %v1119 = vld [vmem:[#allocation2 + $0x106c] sm:$0xf]
    %v1120 = vld [vmem:[#allocation2 + $0x1070] sm:$0xf]
    %v1121 = vld [vmem:[#allocation2 + $0x1074] sm:$0xf]
    %v1122 = vld [vmem:[#allocation2 + $0x1078] sm:$0xf]
    %v1123 = vld [vmem:[#allocation2 + $0x107c] sm:$0xf]
    %v1124 = vld [vmem:[#allocation2 + $0x1080] sm:$0xf]
    %v1125 = vld [vmem:[#allocation2 + $0x1084] sm:$0xf]
    %v1126 = vld [vmem:[#allocation2 + $0x1088] sm:$0xf]
    %v1127 = vld [vmem:[#allocation2 + $0x108c] sm:$0xf]
    %v1128 = vld [vmem:[#allocation2 + $0x1090] sm:$0xf]
    %v1129 = vld [vmem:[#allocation2 + $0x1094] sm:$0xf]
    %v1130 = vld [vmem:[#allocation2 + $0x1098] sm:$0xf]
    %v1131 = vld [vmem:[#allocation2 + $0x109c] sm:$0xf]
    %v1132 = vld [vmem:[#allocation2 + $0x10a0] sm:$0xf]
    %v1133 = vld [vmem:[#allocation2 + $0x10a4] sm:$0xf]
    %v1134 = vld [vmem:[#allocation2 + $0x10a8] sm:$0xf]
    %v1135 = vld [vmem:[#allocation2 + $0x10ac] sm:$0xf]
    %v1136 = vld [vmem:[#allocation2 + $0x10b0] sm:$0xf]
    %v1137 = vld [vmem:[#allocation2 + $0x10b4] sm:$0xf]
    %v1138 = vld [vmem:[#allocation2 + $0x10b8] sm:$0xf]
    %v1139 = vld [vmem:[#allocation2 + $0x10bc] sm:$0xf]
    %v1140 = vld [vmem:[#allocation2 + $0x10c0] sm:$0xf]
    %v1141 = vld [vmem:[#allocation2 + $0x10c4] sm:$0xf]
    %v1142 = vld [vmem:[#allocation2 + $0x10c8] sm:$0xf]
    %v1143 = vld [vmem:[#allocation2 + $0x10cc] sm:$0xf]
    %v1144 = vld [vmem:[#allocation2 + $0x10d0] sm:$0xf]
    %v1145 = vld [vmem:[#allocation2 + $0x10d4] sm:$0xf]
    %v1146 = vld [vmem:[#allocation2 + $0x10d8] sm:$0xf]
    %v1147 = vld [vmem:[#allocation2 + $0x10dc] sm:$0xf]
    %v1148 = vld [vmem:[#allocation2 + $0x10e0] sm:$0xf]
    %v1149 = vld [vmem:[#allocation2 + $0x10e4] sm:$0xf]
    %v1150 = vld [vmem:[#allocation2 + $0x10e8] sm:$0xf]
    %v1151 = vld [vmem:[#allocation2 + $0x10ec] sm:$0xf]
    %v1152 = vld [vmem:[#allocation2 + $0x10f0] sm:$0xf]
    %v1153 = vld [vmem:[#allocation2 + $0x10f4] sm:$0xf]
    %v1154 = vld [vmem:[#allocation2 + $0x10f8] sm:$0xf]
    %v1155 = vld [vmem:[#allocation2 + $0x10fc] sm:$0xf]
    %v1156 = vld [vmem:[#allocation2 + $0x1100] sm:$0xf]
    %v1157 = vld [vmem:[#allocation2 + $0x1104] sm:$0xf]
    %v1158 = vld [vmem:[#allocation2 + $0x1108] sm:$0xf]
    %v1159 = vld [vmem:[#allocation2 + $0x110c] sm:$0xf]
    %v1160 = vld [vmem:[#allocation2 + $0x1110] sm:$0xf]
    %v1161 = vld [vmem:[#allocation2 + $0x1114] sm:$0xf]
    %v1162 = vld [vmem:[#allocation2 + $0x1118] sm:$0xf]
    %v1163 = vld [vmem:[#allocation2 + $0x111c] sm:$0xf]
    %v1164 = vld [vmem:[#allocation2 + $0x1120] sm:$0xf]
    %v1165 = vld [vmem:[#allocation2 + $0x1124] sm:$0xf]
    %v1166 = vld [vmem:[#allocation2 + $0x1128] sm:$0xf]
    %v1167 = vld [vmem:[#allocation2 + $0x112c] sm:$0xf]
    %v1168 = vld [vmem:[#allocation2 + $0x1130] sm:$0xf]
    %v1169 = vld [vmem:[#allocation2 + $0x1134] sm:$0xf]
    %v1170 = vld [vmem:[#allocation2 + $0x1138] sm:$0xf]
    %v1171 = vld [vmem:[#allocation2 + $0x113c] sm:$0xf]
    %v1172 = vld [vmem:[#allocation2 + $0x1140] sm:$0xf]
    %v1173 = vld [vmem:[#allocation2 + $0x1144] sm:$0xf]
    %v1174 = vld [vmem:[#allocation2 + $0x1148] sm:$0xf]
    %v1175 = vld [vmem:[#allocation2 + $0x114c] sm:$0xf]
    %v1176 = vld [vmem:[#allocation2 + $0x1150] sm:$0xf]
    %v1177 = vld [vmem:[#allocation2 + $0x1154] sm:$0xf]
    %v1178 = vld [vmem:[#allocation2 + $0x1158] sm:$0xf]
    %v1179 = vld [vmem:[#allocation2 + $0x115c] sm:$0xf]
    %v1180 = vld [vmem:[#allocation2 + $0x1160] sm:$0xf]
    %v1181 = vld [vmem:[#allocation2 + $0x1164] sm:$0xf]
    %v1182 = vld [vmem:[#allocation2 + $0x1168] sm:$0xf]
    %v1183 = vld [vmem:[#allocation2 + $0x116c] sm:$0xf]
    %v1184 = vld [vmem:[#allocation2 + $0x1170] sm:$0xf]
    %v1185 = vld [vmem:[#allocation2 + $0x1174] sm:$0xf]
    %v1186 = vld [vmem:[#allocation2 + $0x1178] sm:$0xf]
    %v1187 = vld [vmem:[#allocation2 + $0x117c] sm:$0xf]
    %v1188 = vld [vmem:[#allocation2 + $0x1180] sm:$0xf]
    %v1189 = vld [vmem:[#allocation2 + $0x1184] sm:$0xf]
    %v1190 = vld [vmem:[#allocation2 + $0x1188] sm:$0xf]
    %v1191 = vld [vmem:[#allocation2 + $0x118c] sm:$0xf]
    %v1192 = vld [vmem:[#allocation2 + $0x1190] sm:$0xf]
    %v1193 = vld [vmem:[#allocation2 + $0x1194] sm:$0xf]
    %v1194 = vld [vmem:[#allocation2 + $0x1198] sm:$0xf]
    %v1195 = vld [vmem:[#allocation2 + $0x119c] sm:$0xf]
    %v1196 = vld [vmem:[#allocation2 + $0x11a0] sm:$0xf]
    %v1197 = vld [vmem:[#allocation2 + $0x11a4] sm:$0xf]
    %v1198 = vld [vmem:[#allocation2 + $0x11a8] sm:$0xf]
    %v1199 = vld [vmem:[#allocation2 + $0x11ac] sm:$0xf]
    %v1200 = vld [vmem:[#allocation2 + $0x11b0] sm:$0xf]
    %v1201 = vld [vmem:[#allocation2 + $0x11b4] sm:$0xf]
    %v1202 = vld [vmem:[#allocation2 + $0x11b8] sm:$0xf]
    %v1203 = vld [vmem:[#allocation2 + $0x11bc] sm:$0xf]
    %v1204 = vld [vmem:[#allocation2 + $0x11c0] sm:$0xf]
    %v1205 = vld [vmem:[#allocation2 + $0x11c4] sm:$0xf]
    %v1206 = vld [vmem:[#allocation2 + $0x11c8] sm:$0xf]
    %v1207 = vld [vmem:[#allocation2 + $0x11cc] sm:$0xf]
    %v1208 = vld [vmem:[#allocation2 + $0x11d0] sm:$0xf]
    %v1209 = vld [vmem:[#allocation2 + $0x11d4] sm:$0xf]
    %v1210 = vld [vmem:[#allocation2 + $0x11d8] sm:$0xf]
    %v1211 = vld [vmem:[#allocation2 + $0x11dc] sm:$0xf]
    %v1212 = vld [vmem:[#allocation2 + $0x11e0] sm:$0xf]
    %v1213 = vld [vmem:[#allocation2 + $0x11e4] sm:$0xf]
    %v1214 = vld [vmem:[#allocation2 + $0x11e8] sm:$0xf]
    %v1215 = vld [vmem:[#allocation2 + $0x11ec] sm:$0xf]
    %v1216 = vld [vmem:[#allocation2 + $0x11f0] sm:$0xf]
    %v1217 = vld [vmem:[#allocation2 + $0x11f4] sm:$0xf]
    %v1218 = vld [vmem:[#allocation2 + $0x11f8] sm:$0xf]
    %v1219 = vld [vmem:[#allocation2 + $0x11fc] sm:$0xf]
    %v1220 = vld [vmem:[#allocation5] sm:$0x1]
    %v1222 = vlaneseq
    %v1223 = vshrl.u32 %v1222, 7
    %v1224 = vsub.s32 0, %v1223
    %v1225 = vrot.slane %v1220, %v1224
    %v1236 = vcombine.high %v59, %v59
    %v1238 = vunpack.c.l.s4 1966171168
    %v1239 = vunpack.c.0.s8 %v1238
    %v1240 = vlaneseq
    %v1241 = vshrl.u32 %v1240, 7
    %v1242 = vsub.s32 %v1239, %v1241
    %v1243 = vrot.slane %v59, %v1242
    %v1245 = vunpack.c.l.s4 1966171168
    %v1246 = vunpack.c.0.s8 %v1245
    %v1247 = vlaneseq
    %v1248 = vshrl.u32 %v1247, 7
    %v1249 = vsub.s32 %v1246, %v1248
    %v1250 = vrot.slane %v1236, %v1249
    %v1251 = vcombine.high %v1243, %v1243
    %v1252 = vcombine.high %v1250, %v1250
    %v1254 = vunpack.c.l.s4 1966171168
    %v1255 = vunpack.c.0.s8 %v1254
    %v1256 = vlaneseq
    %v1257 = vshrl.u32 %v1256, 7
    %v1258 = vsub.s32 %v1255, %v1257
    %v1259 = vrot.slane %v1243, %v1258
    %v1261 = vunpack.c.l.s4 1966171168
    %v1262 = vunpack.c.0.s8 %v1261
    %v1263 = vlaneseq
    %v1264 = vshrl.u32 %v1263, 7
    %v1265 = vsub.s32 %v1262, %v1264
    %v1266 = vrot.slane %v1250, %v1265
    %v1268 = vunpack.c.l.s4 1966171168
    %v1269 = vunpack.c.0.s8 %v1268
    %v1270 = vlaneseq
    %v1271 = vshrl.u32 %v1270, 7
    %v1272 = vsub.s32 %v1269, %v1271
    %v1273 = vrot.slane %v1251, %v1272
    %v1275 = vunpack.c.l.s4 1966171168
    %v1276 = vunpack.c.0.s8 %v1275
    %v1277 = vlaneseq
    %v1278 = vshrl.u32 %v1277, 7
    %v1279 = vsub.s32 %v1276, %v1278
    %v1280 = vrot.slane %v1252, %v1279
    %v1281 = vcombine.high %v1259, %v1259
    %v1282 = vcombine.high %v1266, %v1266
    %v1283 = vcombine.high %v1273, %v1273
    %v1284 = vcombine.high %v1280, %v1280
    %v1285 = vcombine.high %v60, %v60
    %v1287 = vunpack.c.l.s4 1966171168
    %v1288 = vunpack.c.0.s8 %v1287
    %v1289 = vlaneseq
    %v1290 = vshrl.u32 %v1289, 7
    %v1291 = vsub.s32 %v1288, %v1290
    %v1292 = vrot.slane %v60, %v1291
    %v1294 = vunpack.c.l.s4 1966171168
    %v1295 = vunpack.c.0.s8 %v1294
    %v1296 = vlaneseq
    %v1297 = vshrl.u32 %v1296, 7
    %v1298 = vsub.s32 %v1295, %v1297
    %v1299 = vrot.slane %v1285, %v1298
    %v1300 = vcombine.high %v1292, %v1292
    %v1301 = vcombine.high %v1299, %v1299
    %v1303 = vunpack.c.l.s4 1966171168
    %v1304 = vunpack.c.0.s8 %v1303
    %v1305 = vlaneseq
    %v1306 = vshrl.u32 %v1305, 7
    %v1307 = vsub.s32 %v1304, %v1306
    %v1308 = vrot.slane %v1292, %v1307
    %v1310 = vunpack.c.l.s4 1966171168
    %v1311 = vunpack.c.0.s8 %v1310
    %v1312 = vlaneseq
    %v1313 = vshrl.u32 %v1312, 7
    %v1314 = vsub.s32 %v1311, %v1313
    %v1315 = vrot.slane %v1299, %v1314
    %v1317 = vunpack.c.l.s4 1966171168
    %v1318 = vunpack.c.0.s8 %v1317
    %v1319 = vlaneseq
    %v1320 = vshrl.u32 %v1319, 7
    %v1321 = vsub.s32 %v1318, %v1320
    %v1322 = vrot.slane %v1300, %v1321
    %v1324 = vunpack.c.l.s4 1966171168
    %v1325 = vunpack.c.0.s8 %v1324
    %v1326 = vlaneseq
    %v1327 = vshrl.u32 %v1326, 7
    %v1328 = vsub.s32 %v1325, %v1327
    %v1329 = vrot.slane %v1301, %v1328
    %v1330 = vcombine.high %v1308, %v1308
    %v1331 = vcombine.high %v1315, %v1315
    %v1332 = vcombine.high %v1322, %v1322
    %v1333 = vcombine.high %v1329, %v1329
    %v1334 = vcombine.high %v61, %v61
    %v1336 = vunpack.c.l.s4 1966171168
    %v1337 = vunpack.c.0.s8 %v1336
    %v1338 = vlaneseq
    %v1339 = vshrl.u32 %v1338, 7
    %v1340 = vsub.s32 %v1337, %v1339
    %v1341 = vrot.slane %v61, %v1340
    %v1343 = vunpack.c.l.s4 1966171168
    %v1344 = vunpack.c.0.s8 %v1343
    %v1345 = vlaneseq
    %v1346 = vshrl.u32 %v1345, 7
    %v1347 = vsub.s32 %v1344, %v1346
    %v1348 = vrot.slane %v1334, %v1347
    %v1349 = vcombine.high %v1341, %v1341
    %v1350 = vcombine.high %v1348, %v1348
    %v1352 = vunpack.c.l.s4 1966171168
    %v1353 = vunpack.c.0.s8 %v1352
    %v1354 = vlaneseq
    %v1355 = vshrl.u32 %v1354, 7
    %v1356 = vsub.s32 %v1353, %v1355
    %v1357 = vrot.slane %v1341, %v1356
    %v1359 = vunpack.c.l.s4 1966171168
    %v1360 = vunpack.c.0.s8 %v1359
    %v1361 = vlaneseq
    %v1362 = vshrl.u32 %v1361, 7
    %v1363 = vsub.s32 %v1360, %v1362
    %v1364 = vrot.slane %v1348, %v1363
    %v1366 = vunpack.c.l.s4 1966171168
    %v1367 = vunpack.c.0.s8 %v1366
    %v1368 = vlaneseq
    %v1369 = vshrl.u32 %v1368, 7
    %v1370 = vsub.s32 %v1367, %v1369
    %v1371 = vrot.slane %v1349, %v1370
    %v1373 = vunpack.c.l.s4 1966171168
    %v1374 = vunpack.c.0.s8 %v1373
    %v1375 = vlaneseq
    %v1376 = vshrl.u32 %v1375, 7
    %v1377 = vsub.s32 %v1374, %v1376
    %v1378 = vrot.slane %v1350, %v1377
    %v1379 = vcombine.high %v1357, %v1357
    %v1380 = vcombine.high %v1364, %v1364
    %v1381 = vcombine.high %v1371, %v1371
    %v1382 = vcombine.high %v1378, %v1378
    %v1383 = vcombine.high %v62, %v62
    %v1385 = vunpack.c.l.s4 1966171168
    %v1386 = vunpack.c.0.s8 %v1385
    %v1387 = vlaneseq
    %v1388 = vshrl.u32 %v1387, 7
    %v1389 = vsub.s32 %v1386, %v1388
    %v1390 = vrot.slane %v62, %v1389
    %v1392 = vunpack.c.l.s4 1966171168
    %v1393 = vunpack.c.0.s8 %v1392
    %v1394 = vlaneseq
    %v1395 = vshrl.u32 %v1394, 7
    %v1396 = vsub.s32 %v1393, %v1395
    %v1397 = vrot.slane %v1383, %v1396
    %v1398 = vcombine.high %v1390, %v1390
    %v1399 = vcombine.high %v1397, %v1397
    %v1401 = vunpack.c.l.s4 1966171168
    %v1402 = vunpack.c.0.s8 %v1401
    %v1403 = vlaneseq
    %v1404 = vshrl.u32 %v1403, 7
    %v1405 = vsub.s32 %v1402, %v1404
    %v1406 = vrot.slane %v1390, %v1405
    %v1408 = vunpack.c.l.s4 1966171168
    %v1409 = vunpack.c.0.s8 %v1408
    %v1410 = vlaneseq
    %v1411 = vshrl.u32 %v1410, 7
    %v1412 = vsub.s32 %v1409, %v1411
    %v1413 = vrot.slane %v1397, %v1412
    %v1415 = vunpack.c.l.s4 1966171168
    %v1416 = vunpack.c.0.s8 %v1415
    %v1417 = vlaneseq
    %v1418 = vshrl.u32 %v1417, 7
    %v1419 = vsub.s32 %v1416, %v1418
    %v1420 = vrot.slane %v1398, %v1419
    %v1422 = vunpack.c.l.s4 1966171168
    %v1423 = vunpack.c.0.s8 %v1422
    %v1424 = vlaneseq
    %v1425 = vshrl.u32 %v1424, 7
    %v1426 = vsub.s32 %v1423, %v1425
    %v1427 = vrot.slane %v1399, %v1426
    %v1428 = vcombine.high %v1406, %v1406
    %v1429 = vcombine.high %v1413, %v1413
    %v1430 = vcombine.high %v1420, %v1420
    %v1431 = vcombine.high %v1427, %v1427
    %v1432 = vcombine.high %v63, %v63
    %v1434 = vunpack.c.l.s4 1966171168
    %v1435 = vunpack.c.0.s8 %v1434
    %v1436 = vlaneseq
    %v1437 = vshrl.u32 %v1436, 7
    %v1438 = vsub.s32 %v1435, %v1437
    %v1439 = vrot.slane %v63, %v1438
    %v1441 = vunpack.c.l.s4 1966171168
    %v1442 = vunpack.c.0.s8 %v1441
    %v1443 = vlaneseq
    %v1444 = vshrl.u32 %v1443, 7
    %v1445 = vsub.s32 %v1442, %v1444
    %v1446 = vrot.slane %v1432, %v1445
    %v1447 = vcombine.high %v1439, %v1439
    %v1448 = vcombine.high %v1446, %v1446
    %v1450 = vunpack.c.l.s4 1966171168
    %v1451 = vunpack.c.0.s8 %v1450
    %v1452 = vlaneseq
    %v1453 = vshrl.u32 %v1452, 7
    %v1454 = vsub.s32 %v1451, %v1453
    %v1455 = vrot.slane %v1439, %v1454
    %v1457 = vunpack.c.l.s4 1966171168
    %v1458 = vunpack.c.0.s8 %v1457
    %v1459 = vlaneseq
    %v1460 = vshrl.u32 %v1459, 7
    %v1461 = vsub.s32 %v1458, %v1460
    %v1462 = vrot.slane %v1446, %v1461
    %v1464 = vunpack.c.l.s4 1966171168
    %v1465 = vunpack.c.0.s8 %v1464
    %v1466 = vlaneseq
    %v1467 = vshrl.u32 %v1466, 7
    %v1468 = vsub.s32 %v1465, %v1467
    %v1469 = vrot.slane %v1447, %v1468
    %v1471 = vunpack.c.l.s4 1966171168
    %v1472 = vunpack.c.0.s8 %v1471
    %v1473 = vlaneseq
    %v1474 = vshrl.u32 %v1473, 7
    %v1475 = vsub.s32 %v1472, %v1474
    %v1476 = vrot.slane %v1448, %v1475
    %v1477 = vcombine.high %v1455, %v1455
    %v1478 = vcombine.high %v1462, %v1462
    %v1479 = vcombine.high %v1469, %v1469
    %v1480 = vcombine.high %v1476, %v1476
    %v1481 = vcombine.high %v64, %v64
    %v1483 = vunpack.c.l.s4 1966171168
    %v1484 = vunpack.c.0.s8 %v1483
    %v1485 = vlaneseq
    %v1486 = vshrl.u32 %v1485, 7
    %v1487 = vsub.s32 %v1484, %v1486
    %v1488 = vrot.slane %v64, %v1487
    %v1490 = vunpack.c.l.s4 1966171168
    %v1491 = vunpack.c.0.s8 %v1490
    %v1492 = vlaneseq
    %v1493 = vshrl.u32 %v1492, 7
    %v1494 = vsub.s32 %v1491, %v1493
    %v1495 = vrot.slane %v1481, %v1494
    %v1496 = vcombine.high %v1488, %v1488
    %v1497 = vcombine.high %v1495, %v1495
    %v1499 = vunpack.c.l.s4 1966171168
    %v1500 = vunpack.c.0.s8 %v1499
    %v1501 = vlaneseq
    %v1502 = vshrl.u32 %v1501, 7
    %v1503 = vsub.s32 %v1500, %v1502
    %v1504 = vrot.slane %v1488, %v1503
    %v1506 = vunpack.c.l.s4 1966171168
    %v1507 = vunpack.c.0.s8 %v1506
    %v1508 = vlaneseq
    %v1509 = vshrl.u32 %v1508, 7
    %v1510 = vsub.s32 %v1507, %v1509
    %v1511 = vrot.slane %v1495, %v1510
    %v1513 = vunpack.c.l.s4 1966171168
    %v1514 = vunpack.c.0.s8 %v1513
    %v1515 = vlaneseq
    %v1516 = vshrl.u32 %v1515, 7
    %v1517 = vsub.s32 %v1514, %v1516
    %v1518 = vrot.slane %v1496, %v1517
    %v1520 = vunpack.c.l.s4 1966171168
    %v1521 = vunpack.c.0.s8 %v1520
    %v1522 = vlaneseq
    %v1523 = vshrl.u32 %v1522, 7
    %v1524 = vsub.s32 %v1521, %v1523
    %v1525 = vrot.slane %v1497, %v1524
    %v1526 = vcombine.high %v1504, %v1504
    %v1527 = vcombine.high %v1511, %v1511
    %v1528 = vcombine.high %v1518, %v1518
    %v1529 = vcombine.high %v1525, %v1525
    %v1530 = vcombine.high %v65, %v65
    %v1532 = vunpack.c.l.s4 1966171168
    %v1533 = vunpack.c.0.s8 %v1532
    %v1534 = vlaneseq
    %v1535 = vshrl.u32 %v1534, 7
    %v1536 = vsub.s32 %v1533, %v1535
    %v1537 = vrot.slane %v65, %v1536
    %v1539 = vunpack.c.l.s4 1966171168
    %v1540 = vunpack.c.0.s8 %v1539
    %v1541 = vlaneseq
    %v1542 = vshrl.u32 %v1541, 7
    %v1543 = vsub.s32 %v1540, %v1542
    %v1544 = vrot.slane %v1530, %v1543
    %v1545 = vcombine.high %v1537, %v1537
    %v1546 = vcombine.high %v1544, %v1544
    %v1548 = vunpack.c.l.s4 1966171168
    %v1549 = vunpack.c.0.s8 %v1548
    %v1550 = vlaneseq
    %v1551 = vshrl.u32 %v1550, 7
    %v1552 = vsub.s32 %v1549, %v1551
    %v1553 = vrot.slane %v1537, %v1552
    %v1555 = vunpack.c.l.s4 1966171168
    %v1556 = vunpack.c.0.s8 %v1555
    %v1557 = vlaneseq
    %v1558 = vshrl.u32 %v1557, 7
    %v1559 = vsub.s32 %v1556, %v1558
    %v1560 = vrot.slane %v1544, %v1559
    %v1562 = vunpack.c.l.s4 1966171168
    %v1563 = vunpack.c.0.s8 %v1562
    %v1564 = vlaneseq
    %v1565 = vshrl.u32 %v1564, 7
    %v1566 = vsub.s32 %v1563, %v1565
    %v1567 = vrot.slane %v1545, %v1566
    %v1569 = vunpack.c.l.s4 1966171168
    %v1570 = vunpack.c.0.s8 %v1569
    %v1571 = vlaneseq
    %v1572 = vshrl.u32 %v1571, 7
    %v1573 = vsub.s32 %v1570, %v1572
    %v1574 = vrot.slane %v1546, %v1573
    %v1575 = vcombine.high %v1553, %v1553
    %v1576 = vcombine.high %v1560, %v1560
    %v1577 = vcombine.high %v1567, %v1567
    %v1578 = vcombine.high %v1574, %v1574
    %v1579 = vcombine.high %v66, %v66
    %v1581 = vunpack.c.l.s4 1966171168
    %v1582 = vunpack.c.0.s8 %v1581
    %v1583 = vlaneseq
    %v1584 = vshrl.u32 %v1583, 7
    %v1585 = vsub.s32 %v1582, %v1584
    %v1586 = vrot.slane %v66, %v1585
    %v1588 = vunpack.c.l.s4 1966171168
    %v1589 = vunpack.c.0.s8 %v1588
    %v1590 = vlaneseq
    %v1591 = vshrl.u32 %v1590, 7
    %v1592 = vsub.s32 %v1589, %v1591
    %v1593 = vrot.slane %v1579, %v1592
    %v1594 = vcombine.high %v1586, %v1586
    %v1595 = vcombine.high %v1593, %v1593
    %v1597 = vunpack.c.l.s4 1966171168
    %v1598 = vunpack.c.0.s8 %v1597
    %v1599 = vlaneseq
    %v1600 = vshrl.u32 %v1599, 7
    %v1601 = vsub.s32 %v1598, %v1600
    %v1602 = vrot.slane %v1586, %v1601
    %v1604 = vunpack.c.l.s4 1966171168
    %v1605 = vunpack.c.0.s8 %v1604
    %v1606 = vlaneseq
    %v1607 = vshrl.u32 %v1606, 7
    %v1608 = vsub.s32 %v1605, %v1607
    %v1609 = vrot.slane %v1593, %v1608
    %v1611 = vunpack.c.l.s4 1966171168
    %v1612 = vunpack.c.0.s8 %v1611
    %v1613 = vlaneseq
    %v1614 = vshrl.u32 %v1613, 7
    %v1615 = vsub.s32 %v1612, %v1614
    %v1616 = vrot.slane %v1594, %v1615
    %v1618 = vunpack.c.l.s4 1966171168
    %v1619 = vunpack.c.0.s8 %v1618
    %v1620 = vlaneseq
    %v1621 = vshrl.u32 %v1620, 7
    %v1622 = vsub.s32 %v1619, %v1621
    %v1623 = vrot.slane %v1595, %v1622
    %v1624 = vcombine.high %v1602, %v1602
    %v1625 = vcombine.high %v1609, %v1609
    %v1626 = vcombine.high %v1616, %v1616
    %v1627 = vcombine.high %v1623, %v1623
    %v1628 = vcombine.high %v67, %v67
    %v1630 = vunpack.c.l.s4 1966171168
    %v1631 = vunpack.c.0.s8 %v1630
    %v1632 = vlaneseq
    %v1633 = vshrl.u32 %v1632, 7
    %v1634 = vsub.s32 %v1631, %v1633
    %v1635 = vrot.slane %v67, %v1634
    %v1637 = vunpack.c.l.s4 1966171168
    %v1638 = vunpack.c.0.s8 %v1637
    %v1639 = vlaneseq
    %v1640 = vshrl.u32 %v1639, 7
    %v1641 = vsub.s32 %v1638, %v1640
    %v1642 = vrot.slane %v1628, %v1641
    %v1643 = vcombine.high %v1635, %v1635
    %v1644 = vcombine.high %v1642, %v1642
    %v1646 = vunpack.c.l.s4 1966171168
    %v1647 = vunpack.c.0.s8 %v1646
    %v1648 = vlaneseq
    %v1649 = vshrl.u32 %v1648, 7
    %v1650 = vsub.s32 %v1647, %v1649
    %v1651 = vrot.slane %v1635, %v1650
    %v1653 = vunpack.c.l.s4 1966171168
    %v1654 = vunpack.c.0.s8 %v1653
    %v1655 = vlaneseq
    %v1656 = vshrl.u32 %v1655, 7
    %v1657 = vsub.s32 %v1654, %v1656
    %v1658 = vrot.slane %v1642, %v1657
    %v1660 = vunpack.c.l.s4 1966171168
    %v1661 = vunpack.c.0.s8 %v1660
    %v1662 = vlaneseq
    %v1663 = vshrl.u32 %v1662, 7
    %v1664 = vsub.s32 %v1661, %v1663
    %v1665 = vrot.slane %v1643, %v1664
    %v1667 = vunpack.c.l.s4 1966171168
    %v1668 = vunpack.c.0.s8 %v1667
    %v1669 = vlaneseq
    %v1670 = vshrl.u32 %v1669, 7
    %v1671 = vsub.s32 %v1668, %v1670
    %v1672 = vrot.slane %v1644, %v1671
    %v1673 = vcombine.high %v1651, %v1651
    %v1674 = vcombine.high %v1658, %v1658
    %v1675 = vcombine.high %v1665, %v1665
    %v1676 = vcombine.high %v1672, %v1672
    %v2901 = vunpack.c.l.b16 %v68
    %v2902 = vunpack.c.l.b16 %v69
    %v2903 = vunpack.c.l.b16 %v70
    %v2904 = vunpack.c.l.b16 %v71
    %v2905 = vunpack.c.l.b16 %v72
    %v2906 = vunpack.c.l.b16 %v73
    %v2907 = vunpack.c.l.b16 %v74
    %v2908 = vunpack.c.l.b16 %v75
    %v2909 = vunpack.c.l.b16 %v76
    %v2910 = vunpack.c.l.b16 %v77
    %v2911 = vunpack.c.l.b16 %v78
    %v2912 = vunpack.c.l.b16 %v79
    %v2913 = vunpack.c.l.b16 %v80
    %v2914 = vunpack.c.l.b16 %v81
    %v2915 = vunpack.c.l.b16 %v82
    %v2916 = vunpack.c.l.b16 %v83
    %v2917 = vunpack.c.l.b16 %v84
    %v2918 = vunpack.c.l.b16 %v85
    %v2919 = vunpack.c.l.b16 %v86
    %v2920 = vunpack.c.l.b16 %v87
    %v2921 = vunpack.c.l.b16 %v88
    %v2922 = vunpack.c.l.b16 %v89
    %v2923 = vunpack.c.l.b16 %v90
    %v2924 = vunpack.c.l.b16 %v91
    %v2925 = vunpack.c.l.b16 %v92
    %v2926 = vunpack.c.l.b16 %v93
    %v2927 = vunpack.c.l.b16 %v94
    %v2928 = vunpack.c.l.b16 %v95
    %v2929 = vunpack.c.l.b16 %v96
    %v2930 = vunpack.c.l.b16 %v97
    %v2931 = vunpack.c.l.b16 %v98
    %v2932 = vunpack.c.l.b16 %v99
    %v2933 = vunpack.c.l.b16 %v100
    %v2934 = vunpack.c.l.b16 %v101
    %v2935 = vunpack.c.l.b16 %v102
    %v2936 = vunpack.c.l.b16 %v103
    %v2937 = vunpack.c.l.b16 %v104
    %v2938 = vunpack.c.l.b16 %v105
    %v2939 = vunpack.c.l.b16 %v106
    %v2940 = vunpack.c.l.b16 %v107
    %v2941 = vunpack.c.l.b16 %v108
    %v2942 = vunpack.c.l.b16 %v109
    %v2943 = vunpack.c.l.b16 %v110
    %v2944 = vunpack.c.l.b16 %v111
    %v2945 = vunpack.c.l.b16 %v112
    %v2946 = vunpack.c.l.b16 %v113
    %v2947 = vunpack.c.l.b16 %v114
    %v2948 = vunpack.c.l.b16 %v115
    %v2949 = vunpack.c.l.b16 %v116
    %v2950 = vunpack.c.l.b16 %v117
    %v2951 = vunpack.c.l.b16 %v118
    %v2952 = vunpack.c.l.b16 %v119
    %v2953 = vunpack.c.l.b16 %v120
    %v2954 = vunpack.c.l.b16 %v121
    %v2955 = vunpack.c.l.b16 %v122
    %v2956 = vunpack.c.l.b16 %v123
    %v2957 = vunpack.c.l.b16 %v124
    %v2958 = vunpack.c.l.b16 %v125
    %v2959 = vunpack.c.l.b16 %v126
    %v2960 = vunpack.c.l.b16 %v127
    %v2961 = vunpack.c.l.b16 %v128
    %v2962 = vunpack.c.l.b16 %v129
    %v2963 = vunpack.c.l.b16 %v130
    %v2964 = vunpack.c.l.b16 %v131
    %v2965 = vunpack.c.l.b16 %v132
    %v2966 = vunpack.c.l.b16 %v133
    %v2967 = vunpack.c.l.b16 %v134
    %v2968 = vunpack.c.l.b16 %v135
    %v2969 = vunpack.c.l.b16 %v136
    %v2970 = vunpack.c.l.b16 %v137
    %v2971 = vunpack.c.l.b16 %v138
    %v2972 = vunpack.c.l.b16 %v139
    %v2973 = vunpack.c.l.b16 %v140
    %v2974 = vunpack.c.l.b16 %v141
    %v2975 = vunpack.c.l.b16 %v142
    %v2976 = vunpack.c.l.b16 %v143
    %v2977 = vunpack.c.l.b16 %v144
    %v2978 = vunpack.c.l.b16 %v145
    %v2979 = vunpack.c.l.b16 %v146
    %v2980 = vunpack.c.l.b16 %v147
    %v2981 = vunpack.c.l.b16 %v148
    %v2982 = vunpack.c.l.b16 %v149
    %v2983 = vunpack.c.l.b16 %v150
    %v2984 = vunpack.c.l.b16 %v151
    %v2985 = vunpack.c.l.b16 %v152
    %v2986 = vunpack.c.l.b16 %v153
    %v2987 = vunpack.c.l.b16 %v154
    %v2988 = vunpack.c.l.b16 %v155
    %v2989 = vunpack.c.l.b16 %v156
    %v2990 = vunpack.c.l.b16 %v157
    %v2991 = vunpack.c.l.b16 %v158
    %v2992 = vunpack.c.l.b16 %v159
    %v2993 = vunpack.c.l.b16 %v160
    %v2994 = vunpack.c.l.b16 %v161
    %v2995 = vunpack.c.l.b16 %v162
    %v2996 = vunpack.c.l.b16 %v163
    %v2997 = vunpack.c.l.b16 %v164
    %v2998 = vunpack.c.l.b16 %v165
    %v2999 = vunpack.c.l.b16 %v166
    %v3000 = vunpack.c.l.b16 %v167
    %v3001 = vunpack.c.l.b16 %v168
    %v3002 = vunpack.c.l.b16 %v169
    %v3003 = vunpack.c.l.b16 %v170
    %v3004 = vunpack.c.l.b16 %v171
    %v3005 = vunpack.c.l.b16 %v172
    %v3006 = vunpack.c.l.b16 %v173
    %v3007 = vunpack.c.l.b16 %v174
    %v3008 = vunpack.c.l.b16 %v175
    %v3009 = vunpack.c.l.b16 %v176
    %v3010 = vunpack.c.l.b16 %v177
    %v3011 = vunpack.c.l.b16 %v178
    %v3012 = vunpack.c.l.b16 %v179
    %v3013 = vunpack.c.l.b16 %v180
    %v3014 = vunpack.c.l.b16 %v181
    %v3015 = vunpack.c.l.b16 %v182
    %v3016 = vunpack.c.l.b16 %v183
    %v3017 = vunpack.c.l.b16 %v184
    %v3018 = vunpack.c.l.b16 %v185
    %v3019 = vunpack.c.l.b16 %v186
    %v3020 = vunpack.c.l.b16 %v187
    %v3021 = vunpack.c.l.b16 %v188
    %v3022 = vunpack.c.l.b16 %v189
    %v3023 = vunpack.c.l.b16 %v190
    %v3024 = vunpack.c.l.b16 %v191
    %v3025 = vunpack.c.l.b16 %v192
    %v3026 = vunpack.c.l.b16 %v193
    %v3027 = vunpack.c.l.b16 %v194
    %v3028 = vunpack.c.l.b16 %v195
    %v3029 = vunpack.c.l.b16 %v196
    %v3030 = vunpack.c.l.b16 %v197
    %v3031 = vunpack.c.l.b16 %v198
    %v3032 = vunpack.c.l.b16 %v199
    %v3033 = vunpack.c.l.b16 %v200
    %v3034 = vunpack.c.l.b16 %v201
    %v3035 = vunpack.c.l.b16 %v202
    %v3036 = vunpack.c.l.b16 %v203
    %v3037 = vunpack.c.l.b16 %v204
    %v3038 = vunpack.c.l.b16 %v205
    %v3039 = vunpack.c.l.b16 %v206
    %v3040 = vunpack.c.l.b16 %v207
    %v3041 = vunpack.c.l.b16 %v208
    %v3042 = vunpack.c.l.b16 %v209
    %v3043 = vunpack.c.l.b16 %v210
    %v3044 = vunpack.c.l.b16 %v211
    %v3045 = vunpack.c.l.b16 %v212
    %v3046 = vunpack.c.l.b16 %v213
    %v3047 = vunpack.c.l.b16 %v214
    %v3048 = vunpack.c.l.b16 %v215
    %v3049 = vunpack.c.l.b16 %v216
    %v3050 = vunpack.c.l.b16 %v217
    %v3051 = vunpack.c.l.b16 %v218
    %v3052 = vunpack.c.l.b16 %v219
    %v3053 = vunpack.c.l.b16 %v220
    %v3054 = vunpack.c.l.b16 %v221
    %v3055 = vunpack.c.l.b16 %v222
    %v3056 = vunpack.c.l.b16 %v223
    %v3057 = vunpack.c.l.b16 %v224
    %v3058 = vunpack.c.l.b16 %v225
    %v3059 = vunpack.c.l.b16 %v226
    %v3060 = vunpack.c.l.b16 %v227
    %v3061 = vunpack.c.l.b16 %v228
    %v3062 = vunpack.c.l.b16 %v229
    %v3063 = vunpack.c.l.b16 %v230
    %v3064 = vunpack.c.l.b16 %v231
    %v3065 = vunpack.c.l.b16 %v232
    %v3066 = vunpack.c.l.b16 %v233
    %v3067 = vunpack.c.l.b16 %v234
    %v3068 = vunpack.c.l.b16 %v235
    %v3069 = vunpack.c.l.b16 %v236
    %v3070 = vunpack.c.l.b16 %v237
    %v3071 = vunpack.c.l.b16 %v238
    %v3072 = vunpack.c.l.b16 %v239
    %v3073 = vunpack.c.l.b16 %v240
    %v3074 = vunpack.c.l.b16 %v241
    %v3075 = vunpack.c.l.b16 %v242
    %v3076 = vunpack.c.l.b16 %v243
    %v3077 = vunpack.c.l.b16 %v244
    %v3078 = vunpack.c.l.b16 %v245
    %v3079 = vunpack.c.l.b16 %v246
    %v3080 = vunpack.c.l.b16 %v247
    %v3081 = vunpack.c.l.b16 %v248
    %v3082 = vunpack.c.l.b16 %v249
    %v3083 = vunpack.c.l.b16 %v250
    %v3084 = vunpack.c.l.b16 %v251
    %v3085 = vunpack.c.l.b16 %v252
    %v3086 = vunpack.c.l.b16 %v253
    %v3087 = vunpack.c.l.b16 %v254
    %v3088 = vunpack.c.l.b16 %v255
    %v3089 = vunpack.c.l.b16 %v256
    %v3090 = vunpack.c.l.b16 %v257
    %v3091 = vunpack.c.l.b16 %v258
    %v3092 = vunpack.c.l.b16 %v259
    %v3093 = vunpack.c.l.b16 %v260
    %v3094 = vunpack.c.l.b16 %v261
    %v3095 = vunpack.c.l.b16 %v262
    %v3096 = vunpack.c.l.b16 %v263
    %v3097 = vunpack.c.l.b16 %v264
    %v3098 = vunpack.c.l.b16 %v265
    %v3099 = vunpack.c.l.b16 %v266
    %v3100 = vunpack.c.l.b16 %v267
    %v3101 = vunpack.c.l.b16 %v268
    %v3102 = vunpack.c.l.b16 %v269
    %v3103 = vunpack.c.l.b16 %v270
    %v3104 = vunpack.c.l.b16 %v271
    %v3105 = vunpack.c.l.b16 %v272
    %v3106 = vunpack.c.l.b16 %v273
    %v3107 = vunpack.c.l.b16 %v274
    %v3108 = vunpack.c.l.b16 %v275
    %v3109 = vunpack.c.l.b16 %v276
    %v3110 = vunpack.c.l.b16 %v277
    %v3111 = vunpack.c.l.b16 %v278
    %v3112 = vunpack.c.l.b16 %v279
    %v3113 = vunpack.c.l.b16 %v280
    %v3114 = vunpack.c.l.b16 %v281
    %v3115 = vunpack.c.l.b16 %v282
    %v3116 = vunpack.c.l.b16 %v283
    %v3117 = vunpack.c.l.b16 %v284
    %v3118 = vunpack.c.l.b16 %v285
    %v3119 = vunpack.c.l.b16 %v286
    %v3120 = vunpack.c.l.b16 %v287
    %v3121 = vunpack.c.l.b16 %v288
    %v3122 = vunpack.c.l.b16 %v289
    %v3123 = vunpack.c.l.b16 %v290
    %v3124 = vunpack.c.l.b16 %v291
    %v3125 = vunpack.c.l.b16 %v292
    %v3126 = vunpack.c.l.b16 %v293
    %v3127 = vunpack.c.l.b16 %v294
    %v3128 = vunpack.c.l.b16 %v295
    %v3129 = vunpack.c.l.b16 %v296
    %v3130 = vunpack.c.l.b16 %v297
    %v3131 = vunpack.c.l.b16 %v298
    %v3132 = vunpack.c.l.b16 %v299
    %v3133 = vunpack.c.l.b16 %v300
    %v3134 = vunpack.c.l.b16 %v301
    %v3135 = vunpack.c.l.b16 %v302
    %v3136 = vunpack.c.l.b16 %v303
    %v3137 = vunpack.c.l.b16 %v304
    %v3138 = vunpack.c.l.b16 %v305
    %v3139 = vunpack.c.l.b16 %v306
    %v3140 = vunpack.c.l.b16 %v307
    %v3141 = vunpack.c.l.b16 %v308
    %v3142 = vunpack.c.l.b16 %v309
    %v3143 = vunpack.c.l.b16 %v310
    %v3144 = vunpack.c.l.b16 %v311
    %v3145 = vunpack.c.l.b16 %v312
    %v3146 = vunpack.c.l.b16 %v313
    %v3147 = vunpack.c.l.b16 %v314
    %v3148 = vunpack.c.l.b16 %v315
    %v3149 = vunpack.c.l.b16 %v316
    %v3150 = vunpack.c.l.b16 %v317
    %v3151 = vunpack.c.l.b16 %v318
    %v3152 = vunpack.c.l.b16 %v319
    %v3153 = vunpack.c.l.b16 %v320
    %v3154 = vunpack.c.l.b16 %v321
    %v3155 = vunpack.c.l.b16 %v322
    %v3156 = vunpack.c.l.b16 %v323
    %v3157 = vunpack.c.l.b16 %v324
    %v3158 = vunpack.c.l.b16 %v325
    %v3159 = vunpack.c.l.b16 %v326
    %v3160 = vunpack.c.l.b16 %v327
    %v3161 = vunpack.c.l.b16 %v328
    %v3162 = vunpack.c.l.b16 %v329
    %v3163 = vunpack.c.l.b16 %v330
    %v3164 = vunpack.c.l.b16 %v331
    %v3165 = vunpack.c.l.b16 %v332
    %v3166 = vunpack.c.l.b16 %v333
    %v3167 = vunpack.c.l.b16 %v334
    %v3168 = vunpack.c.l.b16 %v335
    %v3169 = vunpack.c.l.b16 %v336
    %v3170 = vunpack.c.l.b16 %v337
    %v3171 = vunpack.c.l.b16 %v338
    %v3172 = vunpack.c.l.b16 %v339
    %v3173 = vunpack.c.l.b16 %v340
    %v3174 = vunpack.c.l.b16 %v341
    %v3175 = vunpack.c.l.b16 %v342
    %v3176 = vunpack.c.l.b16 %v343
    %v3177 = vunpack.c.l.b16 %v344
    %v3178 = vunpack.c.l.b16 %v345
    %v3179 = vunpack.c.l.b16 %v346
    %v3180 = vunpack.c.l.b16 %v347
    %v3181 = vunpack.c.l.b16 %v348
    %v3182 = vunpack.c.l.b16 %v349
    %v3183 = vunpack.c.l.b16 %v350
    %v3184 = vunpack.c.l.b16 %v351
    %v3185 = vunpack.c.l.b16 %v352
    %v3186 = vunpack.c.l.b16 %v353
    %v3187 = vunpack.c.l.b16 %v354
    %v3188 = vunpack.c.l.b16 %v355
    %v3189 = vunpack.c.l.b16 %v356
    %v3190 = vunpack.c.l.b16 %v357
    %v3191 = vunpack.c.l.b16 %v358
    %v3192 = vunpack.c.l.b16 %v359
    %v3193 = vunpack.c.l.b16 %v360
    %v3194 = vunpack.c.l.b16 %v361
    %v3195 = vunpack.c.l.b16 %v362
    %v3196 = vunpack.c.l.b16 %v363
    %v3197 = vunpack.c.l.b16 %v364
    %v3198 = vunpack.c.l.b16 %v365
    %v3199 = vunpack.c.l.b16 %v366
    %v3200 = vunpack.c.l.b16 %v367
    %v3201 = vunpack.c.l.b16 %v368
    %v3202 = vunpack.c.l.b16 %v369
    %v3203 = vunpack.c.l.b16 %v370
    %v3204 = vunpack.c.l.b16 %v371
    %v3205 = vunpack.c.l.b16 %v372
    %v3206 = vunpack.c.l.b16 %v373
    %v3207 = vunpack.c.l.b16 %v374
    %v3208 = vunpack.c.l.b16 %v375
    %v3209 = vunpack.c.l.b16 %v376
    %v3210 = vunpack.c.l.b16 %v377
    %v3211 = vunpack.c.l.b16 %v378
    %v3212 = vunpack.c.l.b16 %v379
    %v3213 = vunpack.c.l.b16 %v380
    %v3214 = vunpack.c.l.b16 %v381
    %v3215 = vunpack.c.l.b16 %v382
    %v3216 = vunpack.c.l.b16 %v383
    %v3217 = vunpack.c.l.b16 %v384
    %v3218 = vunpack.c.l.b16 %v385
    %v3219 = vunpack.c.l.b16 %v386
    %v3220 = vunpack.c.l.b16 %v387
    %v3221 = vunpack.c.l.b16 %v388
    %v3222 = vunpack.c.l.b16 %v389
    %v3223 = vunpack.c.l.b16 %v390
    %v3224 = vunpack.c.l.b16 %v391
    %v3225 = vunpack.c.l.b16 %v392
    %v3226 = vunpack.c.l.b16 %v393
    %v3227 = vunpack.c.l.b16 %v394
    %v3228 = vunpack.c.l.b16 %v395
    %v3229 = vunpack.c.l.b16 %v396
    %v3230 = vunpack.c.l.b16 %v397
    %v3231 = vunpack.c.l.b16 %v398
    %v3232 = vunpack.c.l.b16 %v399
    %v3233 = vunpack.c.l.b16 %v400
    %v3234 = vunpack.c.l.b16 %v401
    %v3235 = vunpack.c.l.b16 %v402
    %v3236 = vunpack.c.l.b16 %v403
    %v3237 = vunpack.c.l.b16 %v404
    %v3238 = vunpack.c.l.b16 %v405
    %v3239 = vunpack.c.l.b16 %v406
    %v3240 = vunpack.c.l.b16 %v407
    %v3241 = vunpack.c.l.b16 %v408
    %v3242 = vunpack.c.l.b16 %v409
    %v3243 = vunpack.c.l.b16 %v410
    %v3244 = vunpack.c.l.b16 %v411
    %v3245 = vunpack.c.l.b16 %v412
    %v3246 = vunpack.c.l.b16 %v413
    %v3247 = vunpack.c.l.b16 %v414
    %v3248 = vunpack.c.l.b16 %v415
    %v3249 = vunpack.c.l.b16 %v416
    %v3250 = vunpack.c.l.b16 %v417
    %v3251 = vunpack.c.l.b16 %v418
    %v3252 = vunpack.c.l.b16 %v419
    %v3253 = vunpack.c.l.b16 %v420
    %v3254 = vunpack.c.l.b16 %v421
    %v3255 = vunpack.c.l.b16 %v422
    %v3256 = vunpack.c.l.b16 %v423
    %v3257 = vunpack.c.l.b16 %v424
    %v3258 = vunpack.c.l.b16 %v425
    %v3259 = vunpack.c.l.b16 %v426
    %v3260 = vunpack.c.l.b16 %v427
    %v3261 = vunpack.c.l.b16 %v428
    %v3262 = vunpack.c.l.b16 %v429
    %v3263 = vunpack.c.l.b16 %v430
    %v3264 = vunpack.c.l.b16 %v431
    %v3265 = vunpack.c.l.b16 %v432
    %v3266 = vunpack.c.l.b16 %v433
    %v3267 = vunpack.c.l.b16 %v434
    %v3268 = vunpack.c.l.b16 %v435
    %v3269 = vunpack.c.l.b16 %v436
    %v3270 = vunpack.c.l.b16 %v437
    %v3271 = vunpack.c.l.b16 %v438
    %v3272 = vunpack.c.l.b16 %v439
    %v3273 = vunpack.c.l.b16 %v440
    %v3274 = vunpack.c.l.b16 %v441
    %v3275 = vunpack.c.l.b16 %v442
    %v3276 = vunpack.c.l.b16 %v443
    %v3277 = vunpack.c.l.b16 %v444
    %v3278 = vunpack.c.l.b16 %v445
    %v3279 = vunpack.c.l.b16 %v446
    %v3280 = vunpack.c.l.b16 %v447
    %v3281 = vunpack.c.l.b16 %v448
    %v3282 = vunpack.c.l.b16 %v449
    %v3283 = vunpack.c.l.b16 %v450
    %v3284 = vunpack.c.l.b16 %v451
    %v3285 = vunpack.c.l.b16 %v452
    %v3286 = vunpack.c.l.b16 %v453
    %v3287 = vunpack.c.l.b16 %v454
    %v3288 = vunpack.c.l.b16 %v455
    %v3289 = vunpack.c.l.b16 %v456
    %v3290 = vunpack.c.l.b16 %v457
    %v3291 = vunpack.c.l.b16 %v458
    %v3292 = vunpack.c.l.b16 %v459
    %v3293 = vunpack.c.l.b16 %v460
    %v3294 = vunpack.c.l.b16 %v461
    %v3295 = vunpack.c.l.b16 %v462
    %v3296 = vunpack.c.l.b16 %v463
    %v3297 = vunpack.c.l.b16 %v464
    %v3298 = vunpack.c.l.b16 %v465
    %v3299 = vunpack.c.l.b16 %v466
    %v3300 = vunpack.c.l.b16 %v467
    %v3301 = vunpack.c.l.b16 %v468
    %v3302 = vunpack.c.l.b16 %v469
    %v3303 = vunpack.c.l.b16 %v470
    %v3304 = vunpack.c.l.b16 %v471
    %v3305 = vunpack.c.l.b16 %v472
    %v3306 = vunpack.c.l.b16 %v473
    %v3307 = vunpack.c.l.b16 %v474
    %v3308 = vunpack.c.l.b16 %v475
    %v3309 = vunpack.c.l.b16 %v476
    %v3310 = vunpack.c.l.b16 %v477
    %v3311 = vunpack.c.l.b16 %v478
    %v3312 = vunpack.c.l.b16 %v479
    %v3313 = vunpack.c.l.b16 %v480
    %v3314 = vunpack.c.l.b16 %v481
    %v3315 = vunpack.c.l.b16 %v482
    %v3316 = vunpack.c.l.b16 %v483
    %v3317 = vunpack.c.l.b16 %v484
    %v3318 = vunpack.c.l.b16 %v485
    %v3319 = vunpack.c.l.b16 %v486
    %v3320 = vunpack.c.l.b16 %v487
    %v3321 = vunpack.c.l.b16 %v488
    %v3322 = vunpack.c.l.b16 %v489
    %v3323 = vunpack.c.l.b16 %v490
    %v3324 = vunpack.c.l.b16 %v491
    %v3325 = vunpack.c.l.b16 %v492
    %v3326 = vunpack.c.l.b16 %v493
    %v3327 = vunpack.c.l.b16 %v494
    %v3328 = vunpack.c.l.b16 %v495
    %v3329 = vunpack.c.l.b16 %v496
    %v3330 = vunpack.c.l.b16 %v497
    %v3331 = vunpack.c.l.b16 %v498
    %v3332 = vunpack.c.l.b16 %v499
    %v3333 = vunpack.c.l.b16 %v500
    %v3334 = vunpack.c.l.b16 %v501
    %v3335 = vunpack.c.l.b16 %v502
    %v3336 = vunpack.c.l.b16 %v503
    %v3337 = vunpack.c.l.b16 %v504
    %v3338 = vunpack.c.l.b16 %v505
    %v3339 = vunpack.c.l.b16 %v506
    %v3340 = vunpack.c.l.b16 %v507
    %v3341 = vunpack.c.l.b16 %v508
    %v3342 = vunpack.c.l.b16 %v509
    %v3343 = vunpack.c.l.b16 %v510
    %v3344 = vunpack.c.l.b16 %v511
    %v3345 = vunpack.c.l.b16 %v512
    %v3346 = vunpack.c.l.b16 %v513
    %v3347 = vunpack.c.l.b16 %v514
    %v3348 = vunpack.c.l.b16 %v515
    %v3349 = vunpack.c.l.b16 %v516
    %v3350 = vunpack.c.l.b16 %v517
    %v3351 = vunpack.c.l.b16 %v518
    %v3352 = vunpack.c.l.b16 %v519
    %v3353 = vunpack.c.l.b16 %v520
    %v3354 = vunpack.c.l.b16 %v521
    %v3355 = vunpack.c.l.b16 %v522
    %v3356 = vunpack.c.l.b16 %v523
    %v3357 = vunpack.c.l.b16 %v524
    %v3358 = vunpack.c.l.b16 %v525
    %v3359 = vunpack.c.l.b16 %v526
    %v3360 = vunpack.c.l.b16 %v527
    %v3361 = vunpack.c.l.b16 %v528
    %v3362 = vunpack.c.l.b16 %v529
    %v3363 = vunpack.c.l.b16 %v530
    %v3364 = vunpack.c.l.b16 %v531
    %v3365 = vunpack.c.l.b16 %v532
    %v3366 = vunpack.c.l.b16 %v533
    %v3367 = vunpack.c.l.b16 %v534
    %v3368 = vunpack.c.l.b16 %v535
    %v3369 = vunpack.c.l.b16 %v536
    %v3370 = vunpack.c.l.b16 %v537
    %v3371 = vunpack.c.l.b16 %v538
    %v3372 = vunpack.c.l.b16 %v539
    %v3373 = vunpack.c.l.b16 %v540
    %v3374 = vunpack.c.l.b16 %v541
    %v3375 = vunpack.c.l.b16 %v542
    %v3376 = vunpack.c.l.b16 %v543
    %v3377 = vunpack.c.l.b16 %v544
    %v3378 = vunpack.c.l.b16 %v545
    %v3379 = vunpack.c.l.b16 %v546
    %v3380 = vunpack.c.l.b16 %v547
    %v3381 = vunpack.c.l.b16 %v548
    %v3382 = vunpack.c.l.b16 %v549
    %v3383 = vunpack.c.l.b16 %v550
    %v3384 = vunpack.c.l.b16 %v551
    %v3385 = vunpack.c.l.b16 %v552
    %v3386 = vunpack.c.l.b16 %v553
    %v3387 = vunpack.c.l.b16 %v554
    %v3388 = vunpack.c.l.b16 %v555
    %v3389 = vunpack.c.l.b16 %v556
    %v3390 = vunpack.c.l.b16 %v557
    %v3391 = vunpack.c.l.b16 %v558
    %v3392 = vunpack.c.l.b16 %v559
    %v3393 = vunpack.c.l.b16 %v560
    %v3394 = vunpack.c.l.b16 %v561
    %v3395 = vunpack.c.l.b16 %v562
    %v3396 = vunpack.c.l.b16 %v563
    %v3397 = vunpack.c.l.b16 %v564
    %v3398 = vunpack.c.l.b16 %v565
    %v3399 = vunpack.c.l.b16 %v566
    %v3400 = vunpack.c.l.b16 %v567
    %v3401 = vunpack.c.l.b16 %v568
    %v3402 = vunpack.c.l.b16 %v569
    %v3403 = vunpack.c.l.b16 %v570
    %v3404 = vunpack.c.l.b16 %v571
    %v3405 = vunpack.c.l.b16 %v572
    %v3406 = vunpack.c.l.b16 %v573
    %v3407 = vunpack.c.l.b16 %v574
    %v3408 = vunpack.c.l.b16 %v575
    %v3409 = vunpack.c.l.b16 %v576
    %v3410 = vunpack.c.l.b16 %v577
    %v3411 = vunpack.c.l.b16 %v578
    %v3412 = vunpack.c.l.b16 %v579
    %v3413 = vunpack.c.l.b16 %v580
    %v3414 = vunpack.c.l.b16 %v581
    %v3415 = vunpack.c.l.b16 %v582
    %v3416 = vunpack.c.l.b16 %v583
    %v3417 = vunpack.c.l.b16 %v584
    %v3418 = vunpack.c.l.b16 %v585
    %v3419 = vunpack.c.l.b16 %v586
    %v3420 = vunpack.c.l.b16 %v587
    %v3421 = vunpack.c.l.b16 %v588
    %v3422 = vunpack.c.l.b16 %v589
    %v3423 = vunpack.c.l.b16 %v590
    %v3424 = vunpack.c.l.b16 %v591
    %v3425 = vunpack.c.l.b16 %v592
    %v3426 = vunpack.c.l.b16 %v593
    %v3427 = vunpack.c.l.b16 %v594
    %v3428 = vunpack.c.l.b16 %v595
    %v3429 = vunpack.c.l.b16 %v596
    %v3430 = vunpack.c.l.b16 %v597
    %v3431 = vunpack.c.l.b16 %v598
    %v3432 = vunpack.c.l.b16 %v599
    %v3433 = vunpack.c.l.b16 %v600
    %v3434 = vunpack.c.l.b16 %v601
    %v3435 = vunpack.c.l.b16 %v602
    %v3436 = vunpack.c.l.b16 %v603
    %v3437 = vunpack.c.l.b16 %v604
    %v3438 = vunpack.c.l.b16 %v605
    %v3439 = vunpack.c.l.b16 %v606
    %v3440 = vunpack.c.l.b16 %v607
    %v3441 = vunpack.c.l.b16 %v608
    %v3442 = vunpack.c.l.b16 %v609
    %v3443 = vunpack.c.l.b16 %v610
    %v3444 = vunpack.c.l.b16 %v611
    %v3445 = vunpack.c.l.b16 %v612
    %v3446 = vunpack.c.l.b16 %v613
    %v3447 = vunpack.c.l.b16 %v614
    %v3448 = vunpack.c.l.b16 %v615
    %v3449 = vunpack.c.l.b16 %v616
    %v3450 = vunpack.c.l.b16 %v617
    %v3451 = vunpack.c.l.b16 %v618
    %v3452 = vunpack.c.l.b16 %v619
    %v3453 = vunpack.c.l.b16 %v620
    %v3454 = vunpack.c.l.b16 %v621
    %v3455 = vunpack.c.l.b16 %v622
    %v3456 = vunpack.c.l.b16 %v623
    %v3457 = vunpack.c.l.b16 %v624
    %v3458 = vunpack.c.l.b16 %v625
    %v3459 = vunpack.c.l.b16 %v626
    %v3460 = vunpack.c.l.b16 %v627
    %v3461 = vunpack.c.l.b16 %v628
    %v3462 = vunpack.c.l.b16 %v629
    %v3463 = vunpack.c.l.b16 %v630
    %v3464 = vunpack.c.l.b16 %v631
    %v3465 = vunpack.c.l.b16 %v632
    %v3466 = vunpack.c.l.b16 %v633
    %v3467 = vunpack.c.l.b16 %v634
    %v3468 = vunpack.c.l.b16 %v635
    %v3469 = vunpack.c.l.b16 %v636
    %v3470 = vunpack.c.l.b16 %v637
    %v3471 = vunpack.c.l.b16 %v638
    %v3472 = vunpack.c.l.b16 %v639
    %v3473 = vunpack.c.l.b16 %v640
    %v3474 = vunpack.c.l.b16 %v641
    %v3475 = vunpack.c.l.b16 %v642
    %v3476 = vunpack.c.l.b16 %v643
    %v3477 = vunpack.c.l.b16 %v644
    %v3478 = vunpack.c.l.b16 %v645
    %v3479 = vunpack.c.l.b16 %v646
    %v3480 = vunpack.c.l.b16 %v647
    %v3481 = vunpack.c.l.b16 %v648
    %v3482 = vunpack.c.l.b16 %v649
    %v3483 = vunpack.c.l.b16 %v650
    %v3484 = vunpack.c.l.b16 %v651
    %v3485 = vunpack.c.l.b16 %v652
    %v3486 = vunpack.c.l.b16 %v653
    %v3487 = vunpack.c.l.b16 %v654
    %v3488 = vunpack.c.l.b16 %v655
    %v3489 = vunpack.c.l.b16 %v656
    %v3490 = vunpack.c.l.b16 %v657
    %v3491 = vunpack.c.l.b16 %v658
    %v3492 = vunpack.c.l.b16 %v659
    %v3493 = vunpack.c.l.b16 %v660
    %v3494 = vunpack.c.l.b16 %v661
    %v3495 = vunpack.c.l.b16 %v662
    %v3496 = vunpack.c.l.b16 %v663
    %v3497 = vunpack.c.l.b16 %v664
    %v3498 = vunpack.c.l.b16 %v665
    %v3499 = vunpack.c.l.b16 %v666
    %v3500 = vunpack.c.l.b16 %v667
    %v3501 = vunpack.c.l.b16 %v668
    %v3502 = vunpack.c.l.b16 %v669
    %v3503 = vunpack.c.l.b16 %v670
    %v3504 = vunpack.c.l.b16 %v671
    %v3505 = vunpack.c.l.b16 %v672
    %v3506 = vunpack.c.l.b16 %v673
    %v3507 = vunpack.c.l.b16 %v674
    %v3508 = vunpack.c.l.b16 %v675
    %v3509 = vunpack.c.l.b16 %v676
    %v3510 = vunpack.c.l.b16 %v677
    %v3511 = vunpack.c.l.b16 %v678
    %v3512 = vunpack.c.l.b16 %v679
    %v3513 = vunpack.c.l.b16 %v680
    %v3514 = vunpack.c.l.b16 %v681
    %v3515 = vunpack.c.l.b16 %v682
    %v3516 = vunpack.c.l.b16 %v683
    %v3517 = vunpack.c.l.b16 %v684
    %v3518 = vunpack.c.l.b16 %v685
    %v3519 = vunpack.c.l.b16 %v686
    %v3520 = vunpack.c.l.b16 %v687
    %v3521 = vunpack.c.l.b16 %v688
    %v3522 = vunpack.c.l.b16 %v689
    %v3523 = vunpack.c.l.b16 %v690
    %v3524 = vunpack.c.l.b16 %v691
    %v3525 = vunpack.c.l.b16 %v692
    %v3526 = vunpack.c.l.b16 %v693
    %v3527 = vunpack.c.l.b16 %v694
    %v3528 = vunpack.c.l.b16 %v695
    %v3529 = vunpack.c.l.b16 %v696
    %v3530 = vunpack.c.l.b16 %v697
    %v3531 = vunpack.c.l.b16 %v698
    %v3532 = vunpack.c.l.b16 %v699
    %v3533 = vunpack.c.l.b16 %v700
    %v3534 = vunpack.c.l.b16 %v701
    %v3535 = vunpack.c.l.b16 %v702
    %v3536 = vunpack.c.l.b16 %v703
    %v3537 = vunpack.c.l.b16 %v704
    %v3538 = vunpack.c.l.b16 %v705
    %v3539 = vunpack.c.l.b16 %v706
    %v3540 = vunpack.c.l.b16 %v707
    %v3541 = vunpack.c.l.b16 %v708
    %v3542 = vunpack.c.l.b16 %v709
    %v3543 = vunpack.c.l.b16 %v710
    %v3544 = vunpack.c.l.b16 %v711
    %v3545 = vunpack.c.l.b16 %v712
    %v3546 = vunpack.c.l.b16 %v713
    %v3547 = vunpack.c.l.b16 %v714
    %v3548 = vunpack.c.l.b16 %v715
    %v3549 = vunpack.c.l.b16 %v716
    %v3550 = vunpack.c.l.b16 %v717
    %v3551 = vunpack.c.l.b16 %v718
    %v3552 = vunpack.c.l.b16 %v719
    %v3553 = vunpack.c.l.b16 %v720
    %v3554 = vunpack.c.l.b16 %v721
    %v3555 = vunpack.c.l.b16 %v722
    %v3556 = vunpack.c.l.b16 %v723
    %v3557 = vunpack.c.l.b16 %v724
    %v3558 = vunpack.c.l.b16 %v725
    %v3559 = vunpack.c.l.b16 %v726
    %v3560 = vunpack.c.l.b16 %v727
    %v3561 = vunpack.c.l.b16 %v728
    %v3562 = vunpack.c.l.b16 %v729
    %v3563 = vunpack.c.l.b16 %v730
    %v3564 = vunpack.c.l.b16 %v731
    %v3565 = vunpack.c.l.b16 %v732
    %v3566 = vunpack.c.l.b16 %v733
    %v3567 = vunpack.c.l.b16 %v734
    %v3568 = vunpack.c.l.b16 %v735
    %v3569 = vunpack.c.l.b16 %v736
    %v3570 = vunpack.c.l.b16 %v737
    %v3571 = vunpack.c.l.b16 %v738
    %v3572 = vunpack.c.l.b16 %v739
    %v3573 = vunpack.c.l.b16 %v740
    %v3574 = vunpack.c.l.b16 %v741
    %v3575 = vunpack.c.l.b16 %v742
    %v3576 = vunpack.c.l.b16 %v743
    %v3577 = vunpack.c.l.b16 %v744
    %v3578 = vunpack.c.l.b16 %v745
    %v3579 = vunpack.c.l.b16 %v746
    %v3580 = vunpack.c.l.b16 %v747
    %v3581 = vunpack.c.l.b16 %v748
    %v3582 = vunpack.c.l.b16 %v749
    %v3583 = vunpack.c.l.b16 %v750
    %v3584 = vunpack.c.l.b16 %v751
    %v3585 = vunpack.c.l.b16 %v752
    %v3586 = vunpack.c.l.b16 %v753
    %v3587 = vunpack.c.l.b16 %v754
    %v3588 = vunpack.c.l.b16 %v755
    %v3589 = vunpack.c.l.b16 %v756
    %v3590 = vunpack.c.l.b16 %v757
    %v3591 = vunpack.c.l.b16 %v758
    %v3592 = vunpack.c.l.b16 %v759
    %v3593 = vunpack.c.l.b16 %v760
    %v3594 = vunpack.c.l.b16 %v761
    %v3595 = vunpack.c.l.b16 %v762
    %v3596 = vunpack.c.l.b16 %v763
    %v3597 = vunpack.c.l.b16 %v764
    %v3598 = vunpack.c.l.b16 %v765
    %v3599 = vunpack.c.l.b16 %v766
    %v3600 = vunpack.c.l.b16 %v767
    %v3601 = vunpack.c.l.b16 %v768
    %v3602 = vunpack.c.l.b16 %v769
    %v3603 = vunpack.c.l.b16 %v770
    %v3604 = vunpack.c.l.b16 %v771
    %v3605 = vunpack.c.l.b16 %v772
    %v3606 = vunpack.c.l.b16 %v773
    %v3607 = vunpack.c.l.b16 %v774
    %v3608 = vunpack.c.l.b16 %v775
    %v3609 = vunpack.c.l.b16 %v776
    %v3610 = vunpack.c.l.b16 %v777
    %v3611 = vunpack.c.l.b16 %v778
    %v3612 = vunpack.c.l.b16 %v779
    %v3613 = vunpack.c.l.b16 %v780
    %v3614 = vunpack.c.l.b16 %v781
    %v3615 = vunpack.c.l.b16 %v782
    %v3616 = vunpack.c.l.b16 %v783
    %v3617 = vunpack.c.l.b16 %v784
    %v3618 = vunpack.c.l.b16 %v785
    %v3619 = vunpack.c.l.b16 %v786
    %v3620 = vunpack.c.l.b16 %v787
    %v3621 = vunpack.c.l.b16 %v788
    %v3622 = vunpack.c.l.b16 %v789
    %v3623 = vunpack.c.l.b16 %v790
    %v3624 = vunpack.c.l.b16 %v791
    %v3625 = vunpack.c.l.b16 %v792
    %v3626 = vunpack.c.l.b16 %v793
    %v3627 = vunpack.c.l.b16 %v794
    %v3628 = vunpack.c.l.b16 %v795
    %v3629 = vunpack.c.l.b16 %v796
    %v3630 = vunpack.c.l.b16 %v797
    %v3631 = vunpack.c.l.b16 %v798
    %v3632 = vunpack.c.l.b16 %v799
    %v3633 = vunpack.c.l.b16 %v800
    %v3634 = vunpack.c.l.b16 %v801
    %v3635 = vunpack.c.l.b16 %v802
    %v3636 = vunpack.c.l.b16 %v803
    %v3637 = vunpack.c.l.b16 %v804
    %v3638 = vunpack.c.l.b16 %v805
    %v3639 = vunpack.c.l.b16 %v806
    %v3640 = vunpack.c.l.b16 %v807
    %v3641 = vunpack.c.l.b16 %v808
    %v3642 = vunpack.c.l.b16 %v809
    %v3643 = vunpack.c.l.b16 %v810
    %v3644 = vunpack.c.l.b16 %v811
    %v3645 = vunpack.c.l.b16 %v812
    %v3646 = vunpack.c.l.b16 %v813
    %v3647 = vunpack.c.l.b16 %v814
    %v3648 = vunpack.c.l.b16 %v815
    %v3649 = vunpack.c.l.b16 %v816
    %v3650 = vunpack.c.l.b16 %v817
    %v3651 = vunpack.c.l.b16 %v818
    %v3652 = vunpack.c.l.b16 %v819
    %v3653 = vunpack.c.l.b16 %v820
    %v3654 = vunpack.c.l.b16 %v821
    %v3655 = vunpack.c.l.b16 %v822
    %v3656 = vunpack.c.l.b16 %v823
    %v3657 = vunpack.c.l.b16 %v824
    %v3658 = vunpack.c.l.b16 %v825
    %v3659 = vunpack.c.l.b16 %v826
    %v3660 = vunpack.c.l.b16 %v827
    %v3661 = vunpack.c.l.b16 %v828
    %v3662 = vunpack.c.l.b16 %v829
    %v3663 = vunpack.c.l.b16 %v830
    %v3664 = vunpack.c.l.b16 %v831
    %v3665 = vunpack.c.l.b16 %v832
    %v3666 = vunpack.c.l.b16 %v833
    %v3667 = vunpack.c.l.b16 %v834
    %v3668 = vunpack.c.l.b16 %v835
    %v3669 = vunpack.c.l.b16 %v836
    %v3670 = vunpack.c.l.b16 %v837
    %v3671 = vunpack.c.l.b16 %v838
    %v3672 = vunpack.c.l.b16 %v839
    %v3673 = vunpack.c.l.b16 %v840
    %v3674 = vunpack.c.l.b16 %v841
    %v3675 = vunpack.c.l.b16 %v842
    %v3676 = vunpack.c.l.b16 %v843
    %v3677 = vunpack.c.l.b16 %v844
    %v3678 = vunpack.c.l.b16 %v845
    %v3679 = vunpack.c.l.b16 %v846
    %v3680 = vunpack.c.l.b16 %v847
    %v3681 = vunpack.c.l.b16 %v848
    %v3682 = vunpack.c.l.b16 %v849
    %v3683 = vunpack.c.l.b16 %v850
    %v3684 = vunpack.c.l.b16 %v851
    %v3685 = vunpack.c.l.b16 %v852
    %v3686 = vunpack.c.l.b16 %v853
    %v3687 = vunpack.c.l.b16 %v854
    %v3688 = vunpack.c.l.b16 %v855
    %v3689 = vunpack.c.l.b16 %v856
    %v3690 = vunpack.c.l.b16 %v857
    %v3691 = vunpack.c.l.b16 %v858
    %v3692 = vunpack.c.l.b16 %v859
    %v3693 = vunpack.c.l.b16 %v860
    %v3694 = vunpack.c.l.b16 %v861
    %v3695 = vunpack.c.l.b16 %v862
    %v3696 = vunpack.c.l.b16 %v863
    %v3697 = vunpack.c.l.b16 %v864
    %v3698 = vunpack.c.l.b16 %v865
    %v3699 = vunpack.c.l.b16 %v866
    %v3700 = vunpack.c.l.b16 %v867
    %v3701 = vunpack.c.l.b16 %v868
    %v3702 = vunpack.c.l.b16 %v869
    %v3703 = vunpack.c.l.b16 %v870
    %v3704 = vunpack.c.l.b16 %v871
    %v3705 = vunpack.c.l.b16 %v872
    %v3706 = vunpack.c.l.b16 %v873
    %v3707 = vunpack.c.l.b16 %v874
    %v3708 = vunpack.c.l.b16 %v875
    %v3709 = vunpack.c.l.b16 %v876
    %v3710 = vunpack.c.l.b16 %v877
    %v3711 = vunpack.c.l.b16 %v878
    %v3712 = vunpack.c.l.b16 %v879
    %v3713 = vunpack.c.l.b16 %v880
    %v3714 = vunpack.c.l.b16 %v881
    %v3715 = vunpack.c.l.b16 %v882
    %v3716 = vunpack.c.l.b16 %v883
    %v3717 = vunpack.c.l.b16 %v884
    %v3718 = vunpack.c.l.b16 %v885
    %v3719 = vunpack.c.l.b16 %v886
    %v3720 = vunpack.c.l.b16 %v887
    %v3721 = vunpack.c.l.b16 %v888
    %v3722 = vunpack.c.l.b16 %v889
    %v3723 = vunpack.c.l.b16 %v890
    %v3724 = vunpack.c.l.b16 %v891
    %v3725 = vunpack.c.l.b16 %v892
    %v3726 = vunpack.c.l.b16 %v893
    %v3727 = vunpack.c.l.b16 %v894
    %v3728 = vunpack.c.l.b16 %v895
    %v3729 = vunpack.c.l.b16 %v896
    %v3730 = vunpack.c.l.b16 %v897
    %v3731 = vunpack.c.l.b16 %v898
    %v3732 = vunpack.c.l.b16 %v899
    %v3733 = vunpack.c.l.b16 %v900
    %v3734 = vunpack.c.l.b16 %v901
    %v3735 = vunpack.c.l.b16 %v902
    %v3736 = vunpack.c.l.b16 %v903
    %v3737 = vunpack.c.l.b16 %v904
    %v3738 = vunpack.c.l.b16 %v905
    %v3739 = vunpack.c.l.b16 %v906
    %v3740 = vunpack.c.l.b16 %v907
    %v3741 = vunpack.c.l.b16 %v908
    %v3742 = vunpack.c.l.b16 %v909
    %v3743 = vunpack.c.l.b16 %v910
    %v3744 = vunpack.c.l.b16 %v911
    %v3745 = vunpack.c.l.b16 %v912
    %v3746 = vunpack.c.l.b16 %v913
    %v3747 = vunpack.c.l.b16 %v914
    %v3748 = vunpack.c.l.b16 %v915
    %v3749 = vunpack.c.l.b16 %v916
    %v3750 = vunpack.c.l.b16 %v917
    %v3751 = vunpack.c.l.b16 %v918
    %v3752 = vunpack.c.l.b16 %v919
    %v3753 = vunpack.c.l.b16 %v920
    %v3754 = vunpack.c.l.b16 %v921
    %v3755 = vunpack.c.l.b16 %v922
    %v3756 = vunpack.c.l.b16 %v923
    %v3757 = vunpack.c.l.b16 %v924
    %v3758 = vunpack.c.l.b16 %v925
    %v3759 = vunpack.c.l.b16 %v926
    %v3760 = vunpack.c.l.b16 %v927
    %v3761 = vunpack.c.l.b16 %v928
    %v3762 = vunpack.c.l.b16 %v929
    %v3763 = vunpack.c.l.b16 %v930
    %v3764 = vunpack.c.l.b16 %v931
    %v3765 = vunpack.c.l.b16 %v932
    %v3766 = vunpack.c.l.b16 %v933
    %v3767 = vunpack.c.l.b16 %v934
    %v3768 = vunpack.c.l.b16 %v935
    %v3769 = vunpack.c.l.b16 %v936
    %v3770 = vunpack.c.l.b16 %v937
    %v3771 = vunpack.c.l.b16 %v938
    %v3772 = vunpack.c.l.b16 %v939
    %v3773 = vunpack.c.l.b16 %v940
    %v3774 = vunpack.c.l.b16 %v941
    %v3775 = vunpack.c.l.b16 %v942
    %v3776 = vunpack.c.l.b16 %v943
    %v3777 = vunpack.c.l.b16 %v944
    %v3778 = vunpack.c.l.b16 %v945
    %v3779 = vunpack.c.l.b16 %v946
    %v3780 = vunpack.c.l.b16 %v947
    %v3781 = vunpack.c.l.b16 %v948
    %v3782 = vunpack.c.l.b16 %v949
    %v3783 = vunpack.c.l.b16 %v950
    %v3784 = vunpack.c.l.b16 %v951
    %v3785 = vunpack.c.l.b16 %v952
    %v3786 = vunpack.c.l.b16 %v953
    %v3787 = vunpack.c.l.b16 %v954
    %v3788 = vunpack.c.l.b16 %v955
    %v3789 = vunpack.c.l.b16 %v956
    %v3790 = vunpack.c.l.b16 %v957
    %v3791 = vunpack.c.l.b16 %v958
    %v3792 = vunpack.c.l.b16 %v959
    %v3793 = vunpack.c.l.b16 %v960
    %v3794 = vunpack.c.l.b16 %v961
    %v3795 = vunpack.c.l.b16 %v962
    %v3796 = vunpack.c.l.b16 %v963
    %v3797 = vunpack.c.l.b16 %v964
    %v3798 = vunpack.c.l.b16 %v965
    %v3799 = vunpack.c.l.b16 %v966
    %v3800 = vunpack.c.l.b16 %v967
    %v3801 = vunpack.c.l.b16 %v968
    %v3802 = vunpack.c.l.b16 %v969
    %v3803 = vunpack.c.l.b16 %v970
    %v3804 = vunpack.c.l.b16 %v971
    %v3805 = vunpack.c.l.b16 %v972
    %v3806 = vunpack.c.l.b16 %v973
    %v3807 = vunpack.c.l.b16 %v974
    %v3808 = vunpack.c.l.b16 %v975
    %v3809 = vunpack.c.l.b16 %v976
    %v3810 = vunpack.c.l.b16 %v977
    %v3811 = vunpack.c.l.b16 %v978
    %v3812 = vunpack.c.l.b16 %v979
    %v3813 = vunpack.c.l.b16 %v980
    %v3814 = vunpack.c.l.b16 %v981
    %v3815 = vunpack.c.l.b16 %v982
    %v3816 = vunpack.c.l.b16 %v983
    %v3817 = vunpack.c.l.b16 %v984
    %v3818 = vunpack.c.l.b16 %v985
    %v3819 = vunpack.c.l.b16 %v986
    %v3820 = vunpack.c.l.b16 %v987
    %v3821 = vunpack.c.l.b16 %v988
    %v3822 = vunpack.c.l.b16 %v989
    %v3823 = vunpack.c.l.b16 %v990
    %v3824 = vunpack.c.l.b16 %v991
    %v3825 = vunpack.c.l.b16 %v992
    %v3826 = vunpack.c.l.b16 %v993
    %v3827 = vunpack.c.l.b16 %v994
    %v3828 = vunpack.c.l.b16 %v995
    %v3829 = vunpack.c.l.b16 %v996
    %v3830 = vunpack.c.l.b16 %v997
    %v3831 = vunpack.c.l.b16 %v998
    %v3832 = vunpack.c.l.b16 %v999
    %v3833 = vunpack.c.l.b16 %v1000
    %v3834 = vunpack.c.l.b16 %v1001
    %v3835 = vunpack.c.l.b16 %v1002
    %v3836 = vunpack.c.l.b16 %v1003
    %v3837 = vunpack.c.l.b16 %v1004
    %v3838 = vunpack.c.l.b16 %v1005
    %v3839 = vunpack.c.l.b16 %v1006
    %v3840 = vunpack.c.l.b16 %v1007
    %v3841 = vunpack.c.l.b16 %v1008
    %v3842 = vunpack.c.l.b16 %v1009
    %v3843 = vunpack.c.l.b16 %v1010
    %v3844 = vunpack.c.l.b16 %v1011
    %v3845 = vunpack.c.l.b16 %v1012
    %v3846 = vunpack.c.l.b16 %v1013
    %v3847 = vunpack.c.l.b16 %v1014
    %v3848 = vunpack.c.l.b16 %v1015
    %v3849 = vunpack.c.l.b16 %v1016
    %v3850 = vunpack.c.l.b16 %v1017
    %v3851 = vunpack.c.l.b16 %v1018
    %v3852 = vunpack.c.l.b16 %v1019
    %v3853 = vunpack.c.l.b16 %v1020
    %v3854 = vunpack.c.l.b16 %v1021
    %v3855 = vunpack.c.l.b16 %v1022
    %v3856 = vunpack.c.l.b16 %v1023
    %v3857 = vunpack.c.l.b16 %v1024
    %v3858 = vunpack.c.l.b16 %v1025
    %v3859 = vunpack.c.l.b16 %v1026
    %v3860 = vunpack.c.l.b16 %v1027
    %v3861 = vunpack.c.l.b16 %v1028
    %v3862 = vunpack.c.l.b16 %v1029
    %v3863 = vunpack.c.l.b16 %v1030
    %v3864 = vunpack.c.l.b16 %v1031
    %v3865 = vunpack.c.l.b16 %v1032
    %v3866 = vunpack.c.l.b16 %v1033
    %v3867 = vunpack.c.l.b16 %v1034
    %v3868 = vunpack.c.l.b16 %v1035
    %v3869 = vunpack.c.l.b16 %v1036
    %v3870 = vunpack.c.l.b16 %v1037
    %v3871 = vunpack.c.l.b16 %v1038
    %v3872 = vunpack.c.l.b16 %v1039
    %v3873 = vunpack.c.l.b16 %v1040
    %v3874 = vunpack.c.l.b16 %v1041
    %v3875 = vunpack.c.l.b16 %v1042
    %v3876 = vunpack.c.l.b16 %v1043
    %v3877 = vunpack.c.l.b16 %v1044
    %v3878 = vunpack.c.l.b16 %v1045
    %v3879 = vunpack.c.l.b16 %v1046
    %v3880 = vunpack.c.l.b16 %v1047
    %v3881 = vunpack.c.l.b16 %v1048
    %v3882 = vunpack.c.l.b16 %v1049
    %v3883 = vunpack.c.l.b16 %v1050
    %v3884 = vunpack.c.l.b16 %v1051
    %v3885 = vunpack.c.l.b16 %v1052
    %v3886 = vunpack.c.l.b16 %v1053
    %v3887 = vunpack.c.l.b16 %v1054
    %v3888 = vunpack.c.l.b16 %v1055
    %v3889 = vunpack.c.l.b16 %v1056
    %v3890 = vunpack.c.l.b16 %v1057
    %v3891 = vunpack.c.l.b16 %v1058
    %v3892 = vunpack.c.l.b16 %v1059
    %v3893 = vunpack.c.l.b16 %v1060
    %v3894 = vunpack.c.l.b16 %v1061
    %v3895 = vunpack.c.l.b16 %v1062
    %v3896 = vunpack.c.l.b16 %v1063
    %v3897 = vunpack.c.l.b16 %v1064
    %v3898 = vunpack.c.l.b16 %v1065
    %v3899 = vunpack.c.l.b16 %v1066
    %v3900 = vunpack.c.l.b16 %v1067
    %v3901 = vunpack.c.l.b16 %v1068
    %v3902 = vunpack.c.l.b16 %v1069
    %v3903 = vunpack.c.l.b16 %v1070
    %v3904 = vunpack.c.l.b16 %v1071
    %v3905 = vunpack.c.l.b16 %v1072
    %v3906 = vunpack.c.l.b16 %v1073
    %v3907 = vunpack.c.l.b16 %v1074
    %v3908 = vunpack.c.l.b16 %v1075
    %v3909 = vunpack.c.l.b16 %v1076
    %v3910 = vunpack.c.l.b16 %v1077
    %v3911 = vunpack.c.l.b16 %v1078
    %v3912 = vunpack.c.l.b16 %v1079
    %v3913 = vunpack.c.l.b16 %v1080
    %v3914 = vunpack.c.l.b16 %v1081
    %v3915 = vunpack.c.l.b16 %v1082
    %v3916 = vunpack.c.l.b16 %v1083
    %v3917 = vunpack.c.l.b16 %v1084
    %v3918 = vunpack.c.l.b16 %v1085
    %v3919 = vunpack.c.l.b16 %v1086
    %v3920 = vunpack.c.l.b16 %v1087
    %v3921 = vunpack.c.l.b16 %v1088
    %v3922 = vunpack.c.l.b16 %v1089
    %v3923 = vunpack.c.l.b16 %v1090
    %v3924 = vunpack.c.l.b16 %v1091
    %v3925 = vunpack.c.l.b16 %v1092
    %v3926 = vunpack.c.l.b16 %v1093
    %v3927 = vunpack.c.l.b16 %v1094
    %v3928 = vunpack.c.l.b16 %v1095
    %v3929 = vunpack.c.l.b16 %v1096
    %v3930 = vunpack.c.l.b16 %v1097
    %v3931 = vunpack.c.l.b16 %v1098
    %v3932 = vunpack.c.l.b16 %v1099
    %v3933 = vunpack.c.l.b16 %v1100
    %v3934 = vunpack.c.l.b16 %v1101
    %v3935 = vunpack.c.l.b16 %v1102
    %v3936 = vunpack.c.l.b16 %v1103
    %v3937 = vunpack.c.l.b16 %v1104
    %v3938 = vunpack.c.l.b16 %v1105
    %v3939 = vunpack.c.l.b16 %v1106
    %v3940 = vunpack.c.l.b16 %v1107
    %v3941 = vunpack.c.l.b16 %v1108
    %v3942 = vunpack.c.l.b16 %v1109
    %v3943 = vunpack.c.l.b16 %v1110
    %v3944 = vunpack.c.l.b16 %v1111
    %v3945 = vunpack.c.l.b16 %v1112
    %v3946 = vunpack.c.l.b16 %v1113
    %v3947 = vunpack.c.l.b16 %v1114
    %v3948 = vunpack.c.l.b16 %v1115
    %v3949 = vunpack.c.l.b16 %v1116
    %v3950 = vunpack.c.l.b16 %v1117
    %v3951 = vunpack.c.l.b16 %v1118
    %v3952 = vunpack.c.l.b16 %v1119
    %v3953 = vunpack.c.l.b16 %v1120
    %v3954 = vunpack.c.l.b16 %v1121
    %v3955 = vunpack.c.l.b16 %v1122
    %v3956 = vunpack.c.l.b16 %v1123
    %v3957 = vunpack.c.l.b16 %v1124
    %v3958 = vunpack.c.l.b16 %v1125
    %v3959 = vunpack.c.l.b16 %v1126
    %v3960 = vunpack.c.l.b16 %v1127
    %v3961 = vunpack.c.l.b16 %v1128
    %v3962 = vunpack.c.l.b16 %v1129
    %v3963 = vunpack.c.l.b16 %v1130
    %v3964 = vunpack.c.l.b16 %v1131
    %v3965 = vunpack.c.l.b16 %v1132
    %v3966 = vunpack.c.l.b16 %v1133
    %v3967 = vunpack.c.l.b16 %v1134
    %v3968 = vunpack.c.l.b16 %v1135
    %v3969 = vunpack.c.l.b16 %v1136
    %v3970 = vunpack.c.l.b16 %v1137
    %v3971 = vunpack.c.l.b16 %v1138
    %v3972 = vunpack.c.l.b16 %v1139
    %v3973 = vunpack.c.l.b16 %v1140
    %v3974 = vunpack.c.l.b16 %v1141
    %v3975 = vunpack.c.l.b16 %v1142
    %v3976 = vunpack.c.l.b16 %v1143
    %v3977 = vunpack.c.l.b16 %v1144
    %v3978 = vunpack.c.l.b16 %v1145
    %v3979 = vunpack.c.l.b16 %v1146
    %v3980 = vunpack.c.l.b16 %v1147
    %v3981 = vunpack.c.l.b16 %v1148
    %v3982 = vunpack.c.l.b16 %v1149
    %v3983 = vunpack.c.l.b16 %v1150
    %v3984 = vunpack.c.l.b16 %v1151
    %v3985 = vunpack.c.l.b16 %v1152
    %v3986 = vunpack.c.l.b16 %v1153
    %v3987 = vunpack.c.l.b16 %v1154
    %v3988 = vunpack.c.l.b16 %v1155
    %v3989 = vunpack.c.l.b16 %v1156
    %v3990 = vunpack.c.l.b16 %v1157
    %v3991 = vunpack.c.l.b16 %v1158
    %v3992 = vunpack.c.l.b16 %v1159
    %v3993 = vunpack.c.l.b16 %v1160
    %v3994 = vunpack.c.l.b16 %v1161
    %v3995 = vunpack.c.l.b16 %v1162
    %v3996 = vunpack.c.l.b16 %v1163
    %v3997 = vunpack.c.l.b16 %v1164
    %v3998 = vunpack.c.l.b16 %v1165
    %v3999 = vunpack.c.l.b16 %v1166
    %v4000 = vunpack.c.l.b16 %v1167
    %v4001 = vunpack.c.l.b16 %v1168
    %v4002 = vunpack.c.l.b16 %v1169
    %v4003 = vunpack.c.l.b16 %v1170
    %v4004 = vunpack.c.l.b16 %v1171
    %v4005 = vunpack.c.l.b16 %v1172
    %v4006 = vunpack.c.l.b16 %v1173
    %v4007 = vunpack.c.l.b16 %v1174
    %v4008 = vunpack.c.l.b16 %v1175
    %v4009 = vunpack.c.l.b16 %v1176
    %v4010 = vunpack.c.l.b16 %v1177
    %v4011 = vunpack.c.l.b16 %v1178
    %v4012 = vunpack.c.l.b16 %v1179
    %v4013 = vunpack.c.l.b16 %v1180
    %v4014 = vunpack.c.l.b16 %v1181
    %v4015 = vunpack.c.l.b16 %v1182
    %v4016 = vunpack.c.l.b16 %v1183
    %v4017 = vunpack.c.l.b16 %v1184
    %v4018 = vunpack.c.l.b16 %v1185
    %v4019 = vunpack.c.l.b16 %v1186
    %v4020 = vunpack.c.l.b16 %v1187
    %v4021 = vunpack.c.l.b16 %v1188
    %v4022 = vunpack.c.l.b16 %v1189
    %v4023 = vunpack.c.l.b16 %v1190
    %v4024 = vunpack.c.l.b16 %v1191
    %v4025 = vunpack.c.l.b16 %v1192
    %v4026 = vunpack.c.l.b16 %v1193
    %v4027 = vunpack.c.l.b16 %v1194
    %v4028 = vunpack.c.l.b16 %v1195
    %v4029 = vunpack.c.l.b16 %v1196
    %v4030 = vunpack.c.l.b16 %v1197
    %v4031 = vunpack.c.l.b16 %v1198
    %v4032 = vunpack.c.l.b16 %v1199
    %v4033 = vunpack.c.l.b16 %v1200
    %v4034 = vunpack.c.l.b16 %v1201
    %v4035 = vunpack.c.l.b16 %v1202
    %v4036 = vunpack.c.l.b16 %v1203
    %v4037 = vunpack.c.l.b16 %v1204
    %v4038 = vunpack.c.l.b16 %v1205
    %v4039 = vunpack.c.l.b16 %v1206
    %v4040 = vunpack.c.l.b16 %v1207
    %v4041 = vunpack.c.l.b16 %v1208
    %v4042 = vunpack.c.l.b16 %v1209
    %v4043 = vunpack.c.l.b16 %v1210
    %v4044 = vunpack.c.l.b16 %v1211
    %v4045 = vunpack.c.l.b16 %v1212
    %v4046 = vunpack.c.l.b16 %v1213
    %v4047 = vunpack.c.l.b16 %v1214
    %v4048 = vunpack.c.l.b16 %v1215
    %v4049 = vunpack.c.l.b16 %v1216
    %v4050 = vunpack.c.l.b16 %v1217
    %v4051 = vunpack.c.l.b16 %v1218
    %v4052 = vunpack.c.l.b16 %v1219
    %v4053 = vpack.c.b16 %v2902, %v2901
    %v4054 = vpack.c.b16 %v2904, %v2903
    %v4055 = vpack.c.b16 %v2906, %v2905
    %v4056 = vpack.c.b16 %v2908, %v2907
    %v4057 = vpack.c.b16 %v2910, %v2909
    %v4058 = vpack.c.b16 %v2912, %v2911
    %v4059 = vpack.c.b16 %v2914, %v2913
    %v4060 = vpack.c.b16 %v2916, %v2915
    %v4061 = vpack.c.b16 %v2918, %v2917
    %v4062 = vpack.c.b16 %v2920, %v2919
    %v4063 = vpack.c.b16 %v2922, %v2921
    %v4064 = vpack.c.b16 %v2924, %v2923
    %v4065 = vpack.c.b16 %v2926, %v2925
    %v4066 = vpack.c.b16 %v2928, %v2927
    %v4067 = vpack.c.b16 %v2930, %v2929
    %v4068 = vpack.c.b16 %v2932, %v2931
    %v4069 = vpack.c.b16 %v2934, %v2933
    %v4070 = vpack.c.b16 %v2936, %v2935
    %v4071 = vpack.c.b16 %v2938, %v2937
    %v4072 = vpack.c.b16 %v2940, %v2939
    %v4073 = vpack.c.b16 %v2942, %v2941
    %v4074 = vpack.c.b16 %v2944, %v2943
    %v4075 = vpack.c.b16 %v2946, %v2945
    %v4076 = vpack.c.b16 %v2948, %v2947
    %v4077 = vpack.c.b16 %v2950, %v2949
    %v4078 = vpack.c.b16 %v2952, %v2951
    %v4079 = vpack.c.b16 %v2954, %v2953
    %v4080 = vpack.c.b16 %v2956, %v2955
    %v4081 = vpack.c.b16 %v2958, %v2957
    %v4082 = vpack.c.b16 %v2960, %v2959
    %v4083 = vpack.c.b16 %v2962, %v2961
    %v4084 = vpack.c.b16 %v2964, %v2963
    %v4085 = vpack.c.b16 %v2966, %v2965
    %v4086 = vpack.c.b16 %v2968, %v2967
    %v4087 = vpack.c.b16 %v2970, %v2969
    %v4088 = vpack.c.b16 %v2972, %v2971
    %v4089 = vpack.c.b16 %v2974, %v2973
    %v4090 = vpack.c.b16 %v2976, %v2975
    %v4091 = vpack.c.b16 %v2978, %v2977
    %v4092 = vpack.c.b16 %v2980, %v2979
    %v4093 = vpack.c.b16 %v2982, %v2981
    %v4094 = vpack.c.b16 %v2984, %v2983
    %v4095 = vpack.c.b16 %v2986, %v2985
    %v4096 = vpack.c.b16 %v2988, %v2987
    %v4097 = vpack.c.b16 %v2990, %v2989
    %v4098 = vpack.c.b16 %v2992, %v2991
    %v4099 = vpack.c.b16 %v2994, %v2993
    %v4100 = vpack.c.b16 %v2996, %v2995
    %v4101 = vpack.c.b16 %v2998, %v2997
    %v4102 = vpack.c.b16 %v3000, %v2999
    %v4103 = vpack.c.b16 %v3002, %v3001
    %v4104 = vpack.c.b16 %v3004, %v3003
    %v4105 = vpack.c.b16 %v3006, %v3005
    %v4106 = vpack.c.b16 %v3008, %v3007
    %v4107 = vpack.c.b16 %v3010, %v3009
    %v4108 = vpack.c.b16 %v3012, %v3011
    %v4109 = vpack.c.b16 %v3014, %v3013
    %v4110 = vpack.c.b16 %v3016, %v3015
    %v4111 = vpack.c.b16 %v3018, %v3017
    %v4112 = vpack.c.b16 %v3020, %v3019
    %v4113 = vpack.c.b16 %v3022, %v3021
    %v4114 = vpack.c.b16 %v3024, %v3023
    %v4115 = vpack.c.b16 %v3026, %v3025
    %v4116 = vpack.c.b16 %v3028, %v3027
    %v4117 = vpack.c.b16 %v3030, %v3029
    %v4118 = vpack.c.b16 %v3032, %v3031
    %v4119 = vpack.c.b16 %v3034, %v3033
    %v4120 = vpack.c.b16 %v3036, %v3035
    %v4121 = vpack.c.b16 %v3038, %v3037
    %v4122 = vpack.c.b16 %v3040, %v3039
    %v4123 = vpack.c.b16 %v3042, %v3041
    %v4124 = vpack.c.b16 %v3044, %v3043
    %v4125 = vpack.c.b16 %v3046, %v3045
    %v4126 = vpack.c.b16 %v3048, %v3047
    %v4127 = vpack.c.b16 %v3050, %v3049
    %v4128 = vpack.c.b16 %v3052, %v3051
    %v4129 = vpack.c.b16 %v3054, %v3053
    %v4130 = vpack.c.b16 %v3056, %v3055
    %v4131 = vpack.c.b16 %v3058, %v3057
    %v4132 = vpack.c.b16 %v3060, %v3059
    %v4133 = vpack.c.b16 %v3062, %v3061
    %v4134 = vpack.c.b16 %v3064, %v3063
    %v4135 = vpack.c.b16 %v3066, %v3065
    %v4136 = vpack.c.b16 %v3068, %v3067
    %v4137 = vpack.c.b16 %v3070, %v3069
    %v4138 = vpack.c.b16 %v3072, %v3071
    %v4139 = vpack.c.b16 %v3074, %v3073
    %v4140 = vpack.c.b16 %v3076, %v3075
    %v4141 = vpack.c.b16 %v3078, %v3077
    %v4142 = vpack.c.b16 %v3080, %v3079
    %v4143 = vpack.c.b16 %v3082, %v3081
    %v4144 = vpack.c.b16 %v3084, %v3083
    %v4145 = vpack.c.b16 %v3086, %v3085
    %v4146 = vpack.c.b16 %v3088, %v3087
    %v4147 = vpack.c.b16 %v3090, %v3089
    %v4148 = vpack.c.b16 %v3092, %v3091
    %v4149 = vpack.c.b16 %v3094, %v3093
    %v4150 = vpack.c.b16 %v3096, %v3095
    %v4151 = vpack.c.b16 %v3098, %v3097
    %v4152 = vpack.c.b16 %v3100, %v3099
    %v4153 = vpack.c.b16 %v3102, %v3101
    %v4154 = vpack.c.b16 %v3104, %v3103
    %v4155 = vpack.c.b16 %v3106, %v3105
    %v4156 = vpack.c.b16 %v3108, %v3107
    %v4157 = vpack.c.b16 %v3110, %v3109
    %v4158 = vpack.c.b16 %v3112, %v3111
    %v4159 = vpack.c.b16 %v3114, %v3113
    %v4160 = vpack.c.b16 %v3116, %v3115
    %v4161 = vpack.c.b16 %v3118, %v3117
    %v4162 = vpack.c.b16 %v3120, %v3119
    %v4163 = vpack.c.b16 %v3122, %v3121
    %v4164 = vpack.c.b16 %v3124, %v3123
    %v4165 = vpack.c.b16 %v3126, %v3125
    %v4166 = vpack.c.b16 %v3128, %v3127
    %v4167 = vpack.c.b16 %v3130, %v3129
    %v4168 = vpack.c.b16 %v3132, %v3131
    %v4169 = vpack.c.b16 %v3134, %v3133
    %v4170 = vpack.c.b16 %v3136, %v3135
    %v4171 = vpack.c.b16 %v3138, %v3137
    %v4172 = vpack.c.b16 %v3140, %v3139
    %v4173 = vpack.c.b16 %v3142, %v3141
    %v4174 = vpack.c.b16 %v3144, %v3143
    %v4175 = vpack.c.b16 %v3146, %v3145
    %v4176 = vpack.c.b16 %v3148, %v3147
    %v4177 = vpack.c.b16 %v3150, %v3149
    %v4178 = vpack.c.b16 %v3152, %v3151
    %v4179 = vpack.c.b16 %v3154, %v3153
    %v4180 = vpack.c.b16 %v3156, %v3155
    %v4181 = vpack.c.b16 %v3158, %v3157
    %v4182 = vpack.c.b16 %v3160, %v3159
    %v4183 = vpack.c.b16 %v3162, %v3161
    %v4184 = vpack.c.b16 %v3164, %v3163
    %v4185 = vpack.c.b16 %v3166, %v3165
    %v4186 = vpack.c.b16 %v3168, %v3167
    %v4187 = vpack.c.b16 %v3170, %v3169
    %v4188 = vpack.c.b16 %v3172, %v3171
    %v4189 = vpack.c.b16 %v3174, %v3173
    %v4190 = vpack.c.b16 %v3176, %v3175
    %v4191 = vpack.c.b16 %v3178, %v3177
    %v4192 = vpack.c.b16 %v3180, %v3179
    %v4193 = vpack.c.b16 %v3182, %v3181
    %v4194 = vpack.c.b16 %v3184, %v3183
    %v4195 = vpack.c.b16 %v3186, %v3185
    %v4196 = vpack.c.b16 %v3188, %v3187
    %v4197 = vpack.c.b16 %v3190, %v3189
    %v4198 = vpack.c.b16 %v3192, %v3191
    %v4199 = vpack.c.b16 %v3194, %v3193
    %v4200 = vpack.c.b16 %v3196, %v3195
    %v4201 = vpack.c.b16 %v3198, %v3197
    %v4202 = vpack.c.b16 %v3200, %v3199
    %v4203 = vpack.c.b16 %v3202, %v3201
    %v4204 = vpack.c.b16 %v3204, %v3203
    %v4205 = vpack.c.b16 %v3206, %v3205
    %v4206 = vpack.c.b16 %v3208, %v3207
    %v4207 = vpack.c.b16 %v3210, %v3209
    %v4208 = vpack.c.b16 %v3212, %v3211
    %v4209 = vpack.c.b16 %v3214, %v3213
    %v4210 = vpack.c.b16 %v3216, %v3215
    %v4211 = vpack.c.b16 %v3218, %v3217
    %v4212 = vpack.c.b16 %v3220, %v3219
    %v4213 = vpack.c.b16 %v3222, %v3221
    %v4214 = vpack.c.b16 %v3224, %v3223
    %v4215 = vpack.c.b16 %v3226, %v3225
    %v4216 = vpack.c.b16 %v3228, %v3227
    %v4217 = vpack.c.b16 %v3230, %v3229
    %v4218 = vpack.c.b16 %v3232, %v3231
    %v4219 = vpack.c.b16 %v3234, %v3233
    %v4220 = vpack.c.b16 %v3236, %v3235
    %v4221 = vpack.c.b16 %v3238, %v3237
    %v4222 = vpack.c.b16 %v3240, %v3239
    %v4223 = vpack.c.b16 %v3242, %v3241
    %v4224 = vpack.c.b16 %v3244, %v3243
    %v4225 = vpack.c.b16 %v3246, %v3245
    %v4226 = vpack.c.b16 %v3248, %v3247
    %v4227 = vpack.c.b16 %v3250, %v3249
    %v4228 = vpack.c.b16 %v3252, %v3251
    %v4229 = vpack.c.b16 %v3254, %v3253
    %v4230 = vpack.c.b16 %v3256, %v3255
    %v4231 = vpack.c.b16 %v3258, %v3257
    %v4232 = vpack.c.b16 %v3260, %v3259
    %v4233 = vpack.c.b16 %v3262, %v3261
    %v4234 = vpack.c.b16 %v3264, %v3263
    %v4235 = vpack.c.b16 %v3266, %v3265
    %v4236 = vpack.c.b16 %v3268, %v3267
    %v4237 = vpack.c.b16 %v3270, %v3269
    %v4238 = vpack.c.b16 %v3272, %v3271
    %v4239 = vpack.c.b16 %v3274, %v3273
    %v4240 = vpack.c.b16 %v3276, %v3275
    %v4241 = vpack.c.b16 %v3278, %v3277
    %v4242 = vpack.c.b16 %v3280, %v3279
    %v4243 = vpack.c.b16 %v3282, %v3281
    %v4244 = vpack.c.b16 %v3284, %v3283
    %v4245 = vpack.c.b16 %v3286, %v3285
    %v4246 = vpack.c.b16 %v3288, %v3287
    %v4247 = vpack.c.b16 %v3290, %v3289
    %v4248 = vpack.c.b16 %v3292, %v3291
    %v4249 = vpack.c.b16 %v3294, %v3293
    %v4250 = vpack.c.b16 %v3296, %v3295
    %v4251 = vpack.c.b16 %v3298, %v3297
    %v4252 = vpack.c.b16 %v3300, %v3299
    %v4253 = vpack.c.b16 %v3302, %v3301
    %v4254 = vpack.c.b16 %v3304, %v3303
    %v4255 = vpack.c.b16 %v3306, %v3305
    %v4256 = vpack.c.b16 %v3308, %v3307
    %v4257 = vpack.c.b16 %v3310, %v3309
    %v4258 = vpack.c.b16 %v3312, %v3311
    %v4259 = vpack.c.b16 %v3314, %v3313
    %v4260 = vpack.c.b16 %v3316, %v3315
    %v4261 = vpack.c.b16 %v3318, %v3317
    %v4262 = vpack.c.b16 %v3320, %v3319
    %v4263 = vpack.c.b16 %v3322, %v3321
    %v4264 = vpack.c.b16 %v3324, %v3323
    %v4265 = vpack.c.b16 %v3326, %v3325
    %v4266 = vpack.c.b16 %v3328, %v3327
    %v4267 = vpack.c.b16 %v3330, %v3329
    %v4268 = vpack.c.b16 %v3332, %v3331
    %v4269 = vpack.c.b16 %v3334, %v3333
    %v4270 = vpack.c.b16 %v3336, %v3335
    %v4271 = vpack.c.b16 %v3338, %v3337
    %v4272 = vpack.c.b16 %v3340, %v3339
    %v4273 = vpack.c.b16 %v3342, %v3341
    %v4274 = vpack.c.b16 %v3344, %v3343
    %v4275 = vpack.c.b16 %v3346, %v3345
    %v4276 = vpack.c.b16 %v3348, %v3347
    %v4277 = vpack.c.b16 %v3350, %v3349
    %v4278 = vpack.c.b16 %v3352, %v3351
    %v4279 = vpack.c.b16 %v3354, %v3353
    %v4280 = vpack.c.b16 %v3356, %v3355
    %v4281 = vpack.c.b16 %v3358, %v3357
    %v4282 = vpack.c.b16 %v3360, %v3359
    %v4283 = vpack.c.b16 %v3362, %v3361
    %v4284 = vpack.c.b16 %v3364, %v3363
    %v4285 = vpack.c.b16 %v3366, %v3365
    %v4286 = vpack.c.b16 %v3368, %v3367
    %v4287 = vpack.c.b16 %v3370, %v3369
    %v4288 = vpack.c.b16 %v3372, %v3371
    %v4289 = vpack.c.b16 %v3374, %v3373
    %v4290 = vpack.c.b16 %v3376, %v3375
    %v4291 = vpack.c.b16 %v3378, %v3377
    %v4292 = vpack.c.b16 %v3380, %v3379
    %v4293 = vpack.c.b16 %v3382, %v3381
    %v4294 = vpack.c.b16 %v3384, %v3383
    %v4295 = vpack.c.b16 %v3386, %v3385
    %v4296 = vpack.c.b16 %v3388, %v3387
    %v4297 = vpack.c.b16 %v3390, %v3389
    %v4298 = vpack.c.b16 %v3392, %v3391
    %v4299 = vpack.c.b16 %v3394, %v3393
    %v4300 = vpack.c.b16 %v3396, %v3395
    %v4301 = vpack.c.b16 %v3398, %v3397
    %v4302 = vpack.c.b16 %v3400, %v3399
    %v4303 = vpack.c.b16 %v3402, %v3401
    %v4304 = vpack.c.b16 %v3404, %v3403
    %v4305 = vpack.c.b16 %v3406, %v3405
    %v4306 = vpack.c.b16 %v3408, %v3407
    %v4307 = vpack.c.b16 %v3410, %v3409
    %v4308 = vpack.c.b16 %v3412, %v3411
    %v4309 = vpack.c.b16 %v3414, %v3413
    %v4310 = vpack.c.b16 %v3416, %v3415
    %v4311 = vpack.c.b16 %v3418, %v3417
    %v4312 = vpack.c.b16 %v3420, %v3419
    %v4313 = vpack.c.b16 %v3422, %v3421
    %v4314 = vpack.c.b16 %v3424, %v3423
    %v4315 = vpack.c.b16 %v3426, %v3425
    %v4316 = vpack.c.b16 %v3428, %v3427
    %v4317 = vpack.c.b16 %v3430, %v3429
    %v4318 = vpack.c.b16 %v3432, %v3431
    %v4319 = vpack.c.b16 %v3434, %v3433
    %v4320 = vpack.c.b16 %v3436, %v3435
    %v4321 = vpack.c.b16 %v3438, %v3437
    %v4322 = vpack.c.b16 %v3440, %v3439
    %v4323 = vpack.c.b16 %v3442, %v3441
    %v4324 = vpack.c.b16 %v3444, %v3443
    %v4325 = vpack.c.b16 %v3446, %v3445
    %v4326 = vpack.c.b16 %v3448, %v3447
    %v4327 = vpack.c.b16 %v3450, %v3449
    %v4328 = vpack.c.b16 %v3452, %v3451
    %v4329 = vpack.c.b16 %v3454, %v3453
    %v4330 = vpack.c.b16 %v3456, %v3455
    %v4331 = vpack.c.b16 %v3458, %v3457
    %v4332 = vpack.c.b16 %v3460, %v3459
    %v4333 = vpack.c.b16 %v3462, %v3461
    %v4334 = vpack.c.b16 %v3464, %v3463
    %v4335 = vpack.c.b16 %v3466, %v3465
    %v4336 = vpack.c.b16 %v3468, %v3467
    %v4337 = vpack.c.b16 %v3470, %v3469
    %v4338 = vpack.c.b16 %v3472, %v3471
    %v4339 = vpack.c.b16 %v3474, %v3473
    %v4340 = vpack.c.b16 %v3476, %v3475
    %v4341 = vpack.c.b16 %v3478, %v3477
    %v4342 = vpack.c.b16 %v3480, %v3479
    %v4343 = vpack.c.b16 %v3482, %v3481
    %v4344 = vpack.c.b16 %v3484, %v3483
    %v4345 = vpack.c.b16 %v3486, %v3485
    %v4346 = vpack.c.b16 %v3488, %v3487
    %v4347 = vpack.c.b16 %v3490, %v3489
    %v4348 = vpack.c.b16 %v3492, %v3491
    %v4349 = vpack.c.b16 %v3494, %v3493
    %v4350 = vpack.c.b16 %v3496, %v3495
    %v4351 = vpack.c.b16 %v3498, %v3497
    %v4352 = vpack.c.b16 %v3500, %v3499
    %v4353 = vpack.c.b16 %v3502, %v3501
    %v4354 = vpack.c.b16 %v3504, %v3503
    %v4355 = vpack.c.b16 %v3506, %v3505
    %v4356 = vpack.c.b16 %v3508, %v3507
    %v4357 = vpack.c.b16 %v3510, %v3509
    %v4358 = vpack.c.b16 %v3512, %v3511
    %v4359 = vpack.c.b16 %v3514, %v3513
    %v4360 = vpack.c.b16 %v3516, %v3515
    %v4361 = vpack.c.b16 %v3518, %v3517
    %v4362 = vpack.c.b16 %v3520, %v3519
    %v4363 = vpack.c.b16 %v3522, %v3521
    %v4364 = vpack.c.b16 %v3524, %v3523
    %v4365 = vpack.c.b16 %v3526, %v3525
    %v4366 = vpack.c.b16 %v3528, %v3527
    %v4367 = vpack.c.b16 %v3530, %v3529
    %v4368 = vpack.c.b16 %v3532, %v3531
    %v4369 = vpack.c.b16 %v3534, %v3533
    %v4370 = vpack.c.b16 %v3536, %v3535
    %v4371 = vpack.c.b16 %v3538, %v3537
    %v4372 = vpack.c.b16 %v3540, %v3539
    %v4373 = vpack.c.b16 %v3542, %v3541
    %v4374 = vpack.c.b16 %v3544, %v3543
    %v4375 = vpack.c.b16 %v3546, %v3545
    %v4376 = vpack.c.b16 %v3548, %v3547
    %v4377 = vpack.c.b16 %v3550, %v3549
    %v4378 = vpack.c.b16 %v3552, %v3551
    %v4379 = vpack.c.b16 %v3554, %v3553
    %v4380 = vpack.c.b16 %v3556, %v3555
    %v4381 = vpack.c.b16 %v3558, %v3557
    %v4382 = vpack.c.b16 %v3560, %v3559
    %v4383 = vpack.c.b16 %v3562, %v3561
    %v4384 = vpack.c.b16 %v3564, %v3563
    %v4385 = vpack.c.b16 %v3566, %v3565
    %v4386 = vpack.c.b16 %v3568, %v3567
    %v4387 = vpack.c.b16 %v3570, %v3569
    %v4388 = vpack.c.b16 %v3572, %v3571
    %v4389 = vpack.c.b16 %v3574, %v3573
    %v4390 = vpack.c.b16 %v3576, %v3575
    %v4391 = vpack.c.b16 %v3578, %v3577
    %v4392 = vpack.c.b16 %v3580, %v3579
    %v4393 = vpack.c.b16 %v3582, %v3581
    %v4394 = vpack.c.b16 %v3584, %v3583
    %v4395 = vpack.c.b16 %v3586, %v3585
    %v4396 = vpack.c.b16 %v3588, %v3587
    %v4397 = vpack.c.b16 %v3590, %v3589
    %v4398 = vpack.c.b16 %v3592, %v3591
    %v4399 = vpack.c.b16 %v3594, %v3593
    %v4400 = vpack.c.b16 %v3596, %v3595
    %v4401 = vpack.c.b16 %v3598, %v3597
    %v4402 = vpack.c.b16 %v3600, %v3599
    %v4403 = vpack.c.b16 %v3602, %v3601
    %v4404 = vpack.c.b16 %v3604, %v3603
    %v4405 = vpack.c.b16 %v3606, %v3605
    %v4406 = vpack.c.b16 %v3608, %v3607
    %v4407 = vpack.c.b16 %v3610, %v3609
    %v4408 = vpack.c.b16 %v3612, %v3611
    %v4409 = vpack.c.b16 %v3614, %v3613
    %v4410 = vpack.c.b16 %v3616, %v3615
    %v4411 = vpack.c.b16 %v3618, %v3617
    %v4412 = vpack.c.b16 %v3620, %v3619
    %v4413 = vpack.c.b16 %v3622, %v3621
    %v4414 = vpack.c.b16 %v3624, %v3623
    %v4415 = vpack.c.b16 %v3626, %v3625
    %v4416 = vpack.c.b16 %v3628, %v3627
    %v4417 = vpack.c.b16 %v3630, %v3629
    %v4418 = vpack.c.b16 %v3632, %v3631
    %v4419 = vpack.c.b16 %v3634, %v3633
    %v4420 = vpack.c.b16 %v3636, %v3635
    %v4421 = vpack.c.b16 %v3638, %v3637
    %v4422 = vpack.c.b16 %v3640, %v3639
    %v4423 = vpack.c.b16 %v3642, %v3641
    %v4424 = vpack.c.b16 %v3644, %v3643
    %v4425 = vpack.c.b16 %v3646, %v3645
    %v4426 = vpack.c.b16 %v3648, %v3647
    %v4427 = vpack.c.b16 %v3650, %v3649
    %v4428 = vpack.c.b16 %v3652, %v3651
    %v4429 = vpack.c.b16 %v3654, %v3653
    %v4430 = vpack.c.b16 %v3656, %v3655
    %v4431 = vpack.c.b16 %v3658, %v3657
    %v4432 = vpack.c.b16 %v3660, %v3659
    %v4433 = vpack.c.b16 %v3662, %v3661
    %v4434 = vpack.c.b16 %v3664, %v3663
    %v4435 = vpack.c.b16 %v3666, %v3665
    %v4436 = vpack.c.b16 %v3668, %v3667
    %v4437 = vpack.c.b16 %v3670, %v3669
    %v4438 = vpack.c.b16 %v3672, %v3671
    %v4439 = vpack.c.b16 %v3674, %v3673
    %v4440 = vpack.c.b16 %v3676, %v3675
    %v4441 = vpack.c.b16 %v3678, %v3677
    %v4442 = vpack.c.b16 %v3680, %v3679
    %v4443 = vpack.c.b16 %v3682, %v3681
    %v4444 = vpack.c.b16 %v3684, %v3683
    %v4445 = vpack.c.b16 %v3686, %v3685
    %v4446 = vpack.c.b16 %v3688, %v3687
    %v4447 = vpack.c.b16 %v3690, %v3689
    %v4448 = vpack.c.b16 %v3692, %v3691
    %v4449 = vpack.c.b16 %v3694, %v3693
    %v4450 = vpack.c.b16 %v3696, %v3695
    %v4451 = vpack.c.b16 %v3698, %v3697
    %v4452 = vpack.c.b16 %v3700, %v3699
    %v4453 = vpack.c.b16 %v3702, %v3701
    %v4454 = vpack.c.b16 %v3704, %v3703
    %v4455 = vpack.c.b16 %v3706, %v3705
    %v4456 = vpack.c.b16 %v3708, %v3707
    %v4457 = vpack.c.b16 %v3710, %v3709
    %v4458 = vpack.c.b16 %v3712, %v3711
    %v4459 = vpack.c.b16 %v3714, %v3713
    %v4460 = vpack.c.b16 %v3716, %v3715
    %v4461 = vpack.c.b16 %v3718, %v3717
    %v4462 = vpack.c.b16 %v3720, %v3719
    %v4463 = vpack.c.b16 %v3722, %v3721
    %v4464 = vpack.c.b16 %v3724, %v3723
    %v4465 = vpack.c.b16 %v3726, %v3725
    %v4466 = vpack.c.b16 %v3728, %v3727
    %v4467 = vpack.c.b16 %v3730, %v3729
    %v4468 = vpack.c.b16 %v3732, %v3731
    %v4469 = vpack.c.b16 %v3734, %v3733
    %v4470 = vpack.c.b16 %v3736, %v3735
    %v4471 = vpack.c.b16 %v3738, %v3737
    %v4472 = vpack.c.b16 %v3740, %v3739
    %v4473 = vpack.c.b16 %v3742, %v3741
    %v4474 = vpack.c.b16 %v3744, %v3743
    %v4475 = vpack.c.b16 %v3746, %v3745
    %v4476 = vpack.c.b16 %v3748, %v3747
    %v4477 = vpack.c.b16 %v3750, %v3749
    %v4478 = vpack.c.b16 %v3752, %v3751
    %v4479 = vpack.c.b16 %v3754, %v3753
    %v4480 = vpack.c.b16 %v3756, %v3755
    %v4481 = vpack.c.b16 %v3758, %v3757
    %v4482 = vpack.c.b16 %v3760, %v3759
    %v4483 = vpack.c.b16 %v3762, %v3761
    %v4484 = vpack.c.b16 %v3764, %v3763
    %v4485 = vpack.c.b16 %v3766, %v3765
    %v4486 = vpack.c.b16 %v3768, %v3767
    %v4487 = vpack.c.b16 %v3770, %v3769
    %v4488 = vpack.c.b16 %v3772, %v3771
    %v4489 = vpack.c.b16 %v3774, %v3773
    %v4490 = vpack.c.b16 %v3776, %v3775
    %v4491 = vpack.c.b16 %v3778, %v3777
    %v4492 = vpack.c.b16 %v3780, %v3779
    %v4493 = vpack.c.b16 %v3782, %v3781
    %v4494 = vpack.c.b16 %v3784, %v3783
    %v4495 = vpack.c.b16 %v3786, %v3785
    %v4496 = vpack.c.b16 %v3788, %v3787
    %v4497 = vpack.c.b16 %v3790, %v3789
    %v4498 = vpack.c.b16 %v3792, %v3791
    %v4499 = vpack.c.b16 %v3794, %v3793
    %v4500 = vpack.c.b16 %v3796, %v3795
    %v4501 = vpack.c.b16 %v3798, %v3797
    %v4502 = vpack.c.b16 %v3800, %v3799
    %v4503 = vpack.c.b16 %v3802, %v3801
    %v4504 = vpack.c.b16 %v3804, %v3803
    %v4505 = vpack.c.b16 %v3806, %v3805
    %v4506 = vpack.c.b16 %v3808, %v3807
    %v4507 = vpack.c.b16 %v3810, %v3809
    %v4508 = vpack.c.b16 %v3812, %v3811
    %v4509 = vpack.c.b16 %v3814, %v3813
    %v4510 = vpack.c.b16 %v3816, %v3815
    %v4511 = vpack.c.b16 %v3818, %v3817
    %v4512 = vpack.c.b16 %v3820, %v3819
    %v4513 = vpack.c.b16 %v3822, %v3821
    %v4514 = vpack.c.b16 %v3824, %v3823
    %v4515 = vpack.c.b16 %v3826, %v3825
    %v4516 = vpack.c.b16 %v3828, %v3827
    %v4517 = vpack.c.b16 %v3830, %v3829
    %v4518 = vpack.c.b16 %v3832, %v3831
    %v4519 = vpack.c.b16 %v3834, %v3833
    %v4520 = vpack.c.b16 %v3836, %v3835
    %v4521 = vpack.c.b16 %v3838, %v3837
    %v4522 = vpack.c.b16 %v3840, %v3839
    %v4523 = vpack.c.b16 %v3842, %v3841
    %v4524 = vpack.c.b16 %v3844, %v3843
    %v4525 = vpack.c.b16 %v3846, %v3845
    %v4526 = vpack.c.b16 %v3848, %v3847
    %v4527 = vpack.c.b16 %v3850, %v3849
    %v4528 = vpack.c.b16 %v3852, %v3851
    %v4529 = vpack.c.b16 %v3854, %v3853
    %v4530 = vpack.c.b16 %v3856, %v3855
    %v4531 = vpack.c.b16 %v3858, %v3857
    %v4532 = vpack.c.b16 %v3860, %v3859
    %v4533 = vpack.c.b16 %v3862, %v3861
    %v4534 = vpack.c.b16 %v3864, %v3863
    %v4535 = vpack.c.b16 %v3866, %v3865
    %v4536 = vpack.c.b16 %v3868, %v3867
    %v4537 = vpack.c.b16 %v3870, %v3869
    %v4538 = vpack.c.b16 %v3872, %v3871
    %v4539 = vpack.c.b16 %v3874, %v3873
    %v4540 = vpack.c.b16 %v3876, %v3875
    %v4541 = vpack.c.b16 %v3878, %v3877
    %v4542 = vpack.c.b16 %v3880, %v3879
    %v4543 = vpack.c.b16 %v3882, %v3881
    %v4544 = vpack.c.b16 %v3884, %v3883
    %v4545 = vpack.c.b16 %v3886, %v3885
    %v4546 = vpack.c.b16 %v3888, %v3887
    %v4547 = vpack.c.b16 %v3890, %v3889
    %v4548 = vpack.c.b16 %v3892, %v3891
    %v4549 = vpack.c.b16 %v3894, %v3893
    %v4550 = vpack.c.b16 %v3896, %v3895
    %v4551 = vpack.c.b16 %v3898, %v3897
    %v4552 = vpack.c.b16 %v3900, %v3899
    %v4553 = vpack.c.b16 %v3902, %v3901
    %v4554 = vpack.c.b16 %v3904, %v3903
    %v4555 = vpack.c.b16 %v3906, %v3905
    %v4556 = vpack.c.b16 %v3908, %v3907
    %v4557 = vpack.c.b16 %v3910, %v3909
    %v4558 = vpack.c.b16 %v3912, %v3911
    %v4559 = vpack.c.b16 %v3914, %v3913
    %v4560 = vpack.c.b16 %v3916, %v3915
    %v4561 = vpack.c.b16 %v3918, %v3917
    %v4562 = vpack.c.b16 %v3920, %v3919
    %v4563 = vpack.c.b16 %v3922, %v3921
    %v4564 = vpack.c.b16 %v3924, %v3923
    %v4565 = vpack.c.b16 %v3926, %v3925
    %v4566 = vpack.c.b16 %v3928, %v3927
    %v4567 = vpack.c.b16 %v3930, %v3929
    %v4568 = vpack.c.b16 %v3932, %v3931
    %v4569 = vpack.c.b16 %v3934, %v3933
    %v4570 = vpack.c.b16 %v3936, %v3935
    %v4571 = vpack.c.b16 %v3938, %v3937
    %v4572 = vpack.c.b16 %v3940, %v3939
    %v4573 = vpack.c.b16 %v3942, %v3941
    %v4574 = vpack.c.b16 %v3944, %v3943
    %v4575 = vpack.c.b16 %v3946, %v3945
    %v4576 = vpack.c.b16 %v3948, %v3947
    %v4577 = vpack.c.b16 %v3950, %v3949
    %v4578 = vpack.c.b16 %v3952, %v3951
    %v4579 = vpack.c.b16 %v3954, %v3953
    %v4580 = vpack.c.b16 %v3956, %v3955
    %v4581 = vpack.c.b16 %v3958, %v3957
    %v4582 = vpack.c.b16 %v3960, %v3959
    %v4583 = vpack.c.b16 %v3962, %v3961
    %v4584 = vpack.c.b16 %v3964, %v3963
    %v4585 = vpack.c.b16 %v3966, %v3965
    %v4586 = vpack.c.b16 %v3968, %v3967
    %v4587 = vpack.c.b16 %v3970, %v3969
    %v4588 = vpack.c.b16 %v3972, %v3971
    %v4589 = vpack.c.b16 %v3974, %v3973
    %v4590 = vpack.c.b16 %v3976, %v3975
    %v4591 = vpack.c.b16 %v3978, %v3977
    %v4592 = vpack.c.b16 %v3980, %v3979
    %v4593 = vpack.c.b16 %v3982, %v3981
    %v4594 = vpack.c.b16 %v3984, %v3983
    %v4595 = vpack.c.b16 %v3986, %v3985
    %v4596 = vpack.c.b16 %v3988, %v3987
    %v4597 = vpack.c.b16 %v3990, %v3989
    %v4598 = vpack.c.b16 %v3992, %v3991
    %v4599 = vpack.c.b16 %v3994, %v3993
    %v4600 = vpack.c.b16 %v3996, %v3995
    %v4601 = vpack.c.b16 %v3998, %v3997
    %v4602 = vpack.c.b16 %v4000, %v3999
    %v4603 = vpack.c.b16 %v4002, %v4001
    %v4604 = vpack.c.b16 %v4004, %v4003
    %v4605 = vpack.c.b16 %v4006, %v4005
    %v4606 = vpack.c.b16 %v4008, %v4007
    %v4607 = vpack.c.b16 %v4010, %v4009
    %v4608 = vpack.c.b16 %v4012, %v4011
    %v4609 = vpack.c.b16 %v4014, %v4013
    %v4610 = vpack.c.b16 %v4016, %v4015
    %v4611 = vpack.c.b16 %v4018, %v4017
    %v4612 = vpack.c.b16 %v4020, %v4019
    %v4613 = vpack.c.b16 %v4022, %v4021
    %v4614 = vpack.c.b16 %v4024, %v4023
    %v4615 = vpack.c.b16 %v4026, %v4025
    %v4616 = vpack.c.b16 %v4028, %v4027
    %v4617 = vpack.c.b16 %v4030, %v4029
    %v4618 = vpack.c.b16 %v4032, %v4031
    %v4619 = vpack.c.b16 %v4034, %v4033
    %v4620 = vpack.c.b16 %v4036, %v4035
    %v4621 = vpack.c.b16 %v4038, %v4037
    %v4622 = vpack.c.b16 %v4040, %v4039
    %v4623 = vpack.c.b16 %v4042, %v4041
    %v4624 = vpack.c.b16 %v4044, %v4043
    %v4625 = vpack.c.b16 %v4046, %v4045
    %v4626 = vpack.c.b16 %v4048, %v4047
    %v4627 = vpack.c.b16 %v4050, %v4049
    %v4628 = vpack.c.b16 %v4052, %v4051
    %5205 = vmatprep.subr.bf16.mxu0 0
    %5206 = vmatpush1.bf16.msra.mxu0 %v4060
    %5207 = vmatprep.subr.bf16.mxu0 0
    %5208 = vmatpush1.bf16.msra.mxu0 %v4059
    %5209 = vmatprep.subr.bf16.mxu0 0
    %5210 = vmatpush1.bf16.msra.mxu0 %v4058
    %5211 = vmatprep.subr.bf16.mxu0 0
    %5212 = vmatpush1.bf16.msra.mxu0 %v4057
    %5213 = vmatprep.subr.bf16.mxu0 0
    %5214 = vmatpush1.bf16.msra.mxu0 %v4056
    %5215 = vmatprep.subr.bf16.mxu0 0
    %5216 = vmatpush1.bf16.msra.mxu0 %v4055
    %5217 = vmatprep.subr.bf16.mxu0 0
    %5218 = vmatpush1.bf16.msra.mxu0 %v4054
    %5219 = vmatprep.subr.bf16.mxu0 0
    %5220 = vmatpush1.bf16.msra.mxu0 %v4053
    %5221 = vmatprep.subr.bf16.mxu0 0
    %5222 = vmatpush2.bf16.msra.mxu0 %v4068
    %5223 = vmatprep.subr.bf16.mxu0 0
    %5224 = vmatpush2.bf16.msra.mxu0 %v4067
    %5225 = vmatprep.subr.bf16.mxu0 0
    %5226 = vmatpush2.bf16.msra.mxu0 %v4066
    %5227 = vmatprep.subr.bf16.mxu0 0
    %5228 = vmatpush2.bf16.msra.mxu0 %v4065
    %5229 = vmatprep.subr.bf16.mxu0 0
    %5230 = vmatpush2.bf16.msra.mxu0 %v4064
    %5231 = vmatprep.subr.bf16.mxu0 0
    %5232 = vmatpush2.bf16.msra.mxu0 %v4063
    %5233 = vmatprep.subr.bf16.mxu0 0
    %5234 = vmatpush2.bf16.msra.mxu0 %v4062
    %5235 = vmatprep.subr.bf16.mxu0 0
    %5236 = vmatpush2.bf16.msra.mxu0 %v4061
    %5237 = vmatprep.mubr.bf16.mxu0 %v1273
    %5238 = vmatmul.mubr.bf16.gmra.mxu0 %v1259
    %v5239 = vpop.f32.mrf.mxu0
    %v5240 = vadd.f32 %v1225, %v5239
    %v5241 = vpop.f32.mrf.mxu0
    %v5242 = vpop.f32.mrf.mxu0
    %v5243 = vpop.f32.mrf.mxu0
    %5244 = vdwg.mxu0
    %5245 = vmatprep.subr.bf16.mxu0 0
    %5246 = vmatpush1.bf16.msra.mxu0 %v4076
    %5247 = vmatprep.subr.bf16.mxu0 0
    %5248 = vmatpush1.bf16.msra.mxu0 %v4075
    %5249 = vmatprep.subr.bf16.mxu0 0
    %5250 = vmatpush1.bf16.msra.mxu0 %v4074
    %5251 = vmatprep.subr.bf16.mxu0 0
    %5252 = vmatpush1.bf16.msra.mxu0 %v4073
    %5253 = vmatprep.subr.bf16.mxu0 0
    %5254 = vmatpush1.bf16.msra.mxu0 %v4072
    %5255 = vmatprep.subr.bf16.mxu0 0
    %5256 = vmatpush1.bf16.msra.mxu0 %v4071
    %5257 = vmatprep.subr.bf16.mxu0 0
    %5258 = vmatpush1.bf16.msra.mxu0 %v4070
    %5259 = vmatprep.subr.bf16.mxu0 0
    %5260 = vmatpush1.bf16.msra.mxu0 %v4069
    %5261 = vmatprep.subr.bf16.mxu0 0
    %5262 = vmatpush2.bf16.msra.mxu0 %v4084
    %5263 = vmatprep.subr.bf16.mxu0 0
    %5264 = vmatpush2.bf16.msra.mxu0 %v4083
    %5265 = vmatprep.subr.bf16.mxu0 0
    %5266 = vmatpush2.bf16.msra.mxu0 %v4082
    %5267 = vmatprep.subr.bf16.mxu0 0
    %5268 = vmatpush2.bf16.msra.mxu0 %v4081
    %5269 = vmatprep.subr.bf16.mxu0 0
    %5270 = vmatpush2.bf16.msra.mxu0 %v4080
    %5271 = vmatprep.subr.bf16.mxu0 0
    %5272 = vmatpush2.bf16.msra.mxu0 %v4079
    %5273 = vmatprep.subr.bf16.mxu0 0
    %5274 = vmatpush2.bf16.msra.mxu0 %v4078
    %5275 = vmatprep.subr.bf16.mxu0 0
    %5276 = vmatpush2.bf16.msra.mxu0 %v4077
    %5277 = vmatprep.mubr.bf16.mxu0 %v1283
    %5278 = vmatmul.mubr.bf16.gmra.mxu0 %v1281
    %v5279 = vpop.f32.mrf.mxu0
    %v5280 = vadd.f32 %v5240, %v5279
    %v5281 = vpop.f32.mrf.mxu0
    %v5282 = vpop.f32.mrf.mxu0
    %v5283 = vpop.f32.mrf.mxu0
    %5284 = vdwg.mxu0
    %5285 = vmatprep.subr.bf16.mxu0 0
    %5286 = vmatpush1.bf16.msra.mxu0 %v4092
    %5287 = vmatprep.subr.bf16.mxu0 0
    %5288 = vmatpush1.bf16.msra.mxu0 %v4091
    %5289 = vmatprep.subr.bf16.mxu0 0
    %5290 = vmatpush1.bf16.msra.mxu0 %v4090
    %5291 = vmatprep.subr.bf16.mxu0 0
    %5292 = vmatpush1.bf16.msra.mxu0 %v4089
    %5293 = vmatprep.subr.bf16.mxu0 0
    %5294 = vmatpush1.bf16.msra.mxu0 %v4088
    %5295 = vmatprep.subr.bf16.mxu0 0
    %5296 = vmatpush1.bf16.msra.mxu0 %v4087
    %5297 = vmatprep.subr.bf16.mxu0 0
    %5298 = vmatpush1.bf16.msra.mxu0 %v4086
    %5299 = vmatprep.subr.bf16.mxu0 0
    %5300 = vmatpush1.bf16.msra.mxu0 %v4085
    %5301 = vmatprep.subr.bf16.mxu0 0
    %5302 = vmatpush2.bf16.msra.mxu0 %v4100
    %5303 = vmatprep.subr.bf16.mxu0 0
    %5304 = vmatpush2.bf16.msra.mxu0 %v4099
    %5305 = vmatprep.subr.bf16.mxu0 0
    %5306 = vmatpush2.bf16.msra.mxu0 %v4098
    %5307 = vmatprep.subr.bf16.mxu0 0
    %5308 = vmatpush2.bf16.msra.mxu0 %v4097
    %5309 = vmatprep.subr.bf16.mxu0 0
    %5310 = vmatpush2.bf16.msra.mxu0 %v4096
    %5311 = vmatprep.subr.bf16.mxu0 0
    %5312 = vmatpush2.bf16.msra.mxu0 %v4095
    %5313 = vmatprep.subr.bf16.mxu0 0
    %5314 = vmatpush2.bf16.msra.mxu0 %v4094
    %5315 = vmatprep.subr.bf16.mxu0 0
    %5316 = vmatpush2.bf16.msra.mxu0 %v4093
    %5317 = vmatprep.mubr.bf16.mxu0 %v1280
    %5318 = vmatmul.mubr.bf16.gmra.mxu0 %v1266
    %v5319 = vpop.f32.mrf.mxu0
    %v5320 = vadd.f32 %v5280, %v5319
    %v5321 = vpop.f32.mrf.mxu0
    %v5322 = vpop.f32.mrf.mxu0
    %v5323 = vpop.f32.mrf.mxu0
    %5324 = vdwg.mxu0
    %5325 = vmatprep.subr.bf16.mxu0 0
    %5326 = vmatpush1.bf16.msra.mxu0 %v4108
    %5327 = vmatprep.subr.bf16.mxu0 0
    %5328 = vmatpush1.bf16.msra.mxu0 %v4107
    %5329 = vmatprep.subr.bf16.mxu0 0
    %5330 = vmatpush1.bf16.msra.mxu0 %v4106
    %5331 = vmatprep.subr.bf16.mxu0 0
    %5332 = vmatpush1.bf16.msra.mxu0 %v4105
    %5333 = vmatprep.subr.bf16.mxu0 0
    %5334 = vmatpush1.bf16.msra.mxu0 %v4104
    %5335 = vmatprep.subr.bf16.mxu0 0
    %5336 = vmatpush1.bf16.msra.mxu0 %v4103
    %5337 = vmatprep.subr.bf16.mxu0 0
    %5338 = vmatpush1.bf16.msra.mxu0 %v4102
    %5339 = vmatprep.subr.bf16.mxu0 0
    %5340 = vmatpush1.bf16.msra.mxu0 %v4101
    %5341 = vmatprep.subr.bf16.mxu0 0
    %5342 = vmatpush2.bf16.msra.mxu0 %v4116
    %5343 = vmatprep.subr.bf16.mxu0 0
    %5344 = vmatpush2.bf16.msra.mxu0 %v4115
    %5345 = vmatprep.subr.bf16.mxu0 0
    %5346 = vmatpush2.bf16.msra.mxu0 %v4114
    %5347 = vmatprep.subr.bf16.mxu0 0
    %5348 = vmatpush2.bf16.msra.mxu0 %v4113
    %5349 = vmatprep.subr.bf16.mxu0 0
    %5350 = vmatpush2.bf16.msra.mxu0 %v4112
    %5351 = vmatprep.subr.bf16.mxu0 0
    %5352 = vmatpush2.bf16.msra.mxu0 %v4111
    %5353 = vmatprep.subr.bf16.mxu0 0
    %5354 = vmatpush2.bf16.msra.mxu0 %v4110
    %5355 = vmatprep.subr.bf16.mxu0 0
    %5356 = vmatpush2.bf16.msra.mxu0 %v4109
    %5357 = vmatprep.mubr.bf16.mxu0 %v1284
    %5358 = vmatmul.mubr.bf16.gmra.mxu0 %v1282
    %v5359 = vpop.f32.mrf.mxu0
    %v5360 = vadd.f32 %v5320, %v5359
    %v5361 = vpop.f32.mrf.mxu0
    %v5362 = vpop.f32.mrf.mxu0
    %v5363 = vpop.f32.mrf.mxu0
    %5364 = vdwg.mxu0
    %5365 = vmatprep.subr.bf16.mxu0 0
    %5366 = vmatpush1.bf16.msra.mxu0 %v4124
    %5367 = vmatprep.subr.bf16.mxu0 0
    %5368 = vmatpush1.bf16.msra.mxu0 %v4123
    %5369 = vmatprep.subr.bf16.mxu0 0
    %5370 = vmatpush1.bf16.msra.mxu0 %v4122
    %5371 = vmatprep.subr.bf16.mxu0 0
    %5372 = vmatpush1.bf16.msra.mxu0 %v4121
    %5373 = vmatprep.subr.bf16.mxu0 0
    %5374 = vmatpush1.bf16.msra.mxu0 %v4120
    %5375 = vmatprep.subr.bf16.mxu0 0
    %5376 = vmatpush1.bf16.msra.mxu0 %v4119
    %5377 = vmatprep.subr.bf16.mxu0 0
    %5378 = vmatpush1.bf16.msra.mxu0 %v4118
    %5379 = vmatprep.subr.bf16.mxu0 0
    %5380 = vmatpush1.bf16.msra.mxu0 %v4117
    %5381 = vmatprep.subr.bf16.mxu0 0
    %5382 = vmatpush2.bf16.msra.mxu0 %v4132
    %5383 = vmatprep.subr.bf16.mxu0 0
    %5384 = vmatpush2.bf16.msra.mxu0 %v4131
    %5385 = vmatprep.subr.bf16.mxu0 0
    %5386 = vmatpush2.bf16.msra.mxu0 %v4130
    %5387 = vmatprep.subr.bf16.mxu0 0
    %5388 = vmatpush2.bf16.msra.mxu0 %v4129
    %5389 = vmatprep.subr.bf16.mxu0 0
    %5390 = vmatpush2.bf16.msra.mxu0 %v4128
    %5391 = vmatprep.subr.bf16.mxu0 0
    %5392 = vmatpush2.bf16.msra.mxu0 %v4127
    %5393 = vmatprep.subr.bf16.mxu0 0
    %5394 = vmatpush2.bf16.msra.mxu0 %v4126
    %5395 = vmatprep.subr.bf16.mxu0 0
    %5396 = vmatpush2.bf16.msra.mxu0 %v4125
    %5397 = vmatprep.mubr.bf16.mxu0 %v1322
    %5398 = vmatmul.mubr.bf16.gmra.mxu0 %v1308
    %v5399 = vpop.f32.mrf.mxu0
    %v5400 = vadd.f32 %v5360, %v5399
    %v5401 = vpop.f32.mrf.mxu0
    %v5402 = vpop.f32.mrf.mxu0
    %v5403 = vpop.f32.mrf.mxu0
    %5404 = vdwg.mxu0
    %5405 = vmatprep.subr.bf16.mxu0 0
    %5406 = vmatpush1.bf16.msra.mxu0 %v4140
    %5407 = vmatprep.subr.bf16.mxu0 0
    %5408 = vmatpush1.bf16.msra.mxu0 %v4139
    %5409 = vmatprep.subr.bf16.mxu0 0
    %5410 = vmatpush1.bf16.msra.mxu0 %v4138
    %5411 = vmatprep.subr.bf16.mxu0 0
    %5412 = vmatpush1.bf16.msra.mxu0 %v4137
    %5413 = vmatprep.subr.bf16.mxu0 0
    %5414 = vmatpush1.bf16.msra.mxu0 %v4136
    %5415 = vmatprep.subr.bf16.mxu0 0
    %5416 = vmatpush1.bf16.msra.mxu0 %v4135
    %5417 = vmatprep.subr.bf16.mxu0 0
    %5418 = vmatpush1.bf16.msra.mxu0 %v4134
    %5419 = vmatprep.subr.bf16.mxu0 0
    %5420 = vmatpush1.bf16.msra.mxu0 %v4133
    %5421 = vmatprep.subr.bf16.mxu0 0
    %5422 = vmatpush2.bf16.msra.mxu0 %v4148
    %5423 = vmatprep.subr.bf16.mxu0 0
    %5424 = vmatpush2.bf16.msra.mxu0 %v4147
    %5425 = vmatprep.subr.bf16.mxu0 0
    %5426 = vmatpush2.bf16.msra.mxu0 %v4146
    %5427 = vmatprep.subr.bf16.mxu0 0
    %5428 = vmatpush2.bf16.msra.mxu0 %v4145
    %5429 = vmatprep.subr.bf16.mxu0 0
    %5430 = vmatpush2.bf16.msra.mxu0 %v4144
    %5431 = vmatprep.subr.bf16.mxu0 0
    %5432 = vmatpush2.bf16.msra.mxu0 %v4143
    %5433 = vmatprep.subr.bf16.mxu0 0
    %5434 = vmatpush2.bf16.msra.mxu0 %v4142
    %5435 = vmatprep.subr.bf16.mxu0 0
    %5436 = vmatpush2.bf16.msra.mxu0 %v4141
    %5437 = vmatprep.mubr.bf16.mxu0 %v1332
    %5438 = vmatmul.mubr.bf16.gmra.mxu0 %v1330
    %v5439 = vpop.f32.mrf.mxu0
    %v5440 = vadd.f32 %v5400, %v5439
    %v5441 = vpop.f32.mrf.mxu0
    %v5442 = vpop.f32.mrf.mxu0
    %v5443 = vpop.f32.mrf.mxu0
    %5444 = vdwg.mxu0
    %5445 = vmatprep.subr.bf16.mxu0 0
    %5446 = vmatpush1.bf16.msra.mxu0 %v4156
    %5447 = vmatprep.subr.bf16.mxu0 0
    %5448 = vmatpush1.bf16.msra.mxu0 %v4155
    %5449 = vmatprep.subr.bf16.mxu0 0
    %5450 = vmatpush1.bf16.msra.mxu0 %v4154
    %5451 = vmatprep.subr.bf16.mxu0 0
    %5452 = vmatpush1.bf16.msra.mxu0 %v4153
    %5453 = vmatprep.subr.bf16.mxu0 0
    %5454 = vmatpush1.bf16.msra.mxu0 %v4152
    %5455 = vmatprep.subr.bf16.mxu0 0
    %5456 = vmatpush1.bf16.msra.mxu0 %v4151
    %5457 = vmatprep.subr.bf16.mxu0 0
    %5458 = vmatpush1.bf16.msra.mxu0 %v4150
    %5459 = vmatprep.subr.bf16.mxu0 0
    %5460 = vmatpush1.bf16.msra.mxu0 %v4149
    %5461 = vmatprep.subr.bf16.mxu0 0
    %5462 = vmatpush2.bf16.msra.mxu0 %v4164
    %5463 = vmatprep.subr.bf16.mxu0 0
    %5464 = vmatpush2.bf16.msra.mxu0 %v4163
    %5465 = vmatprep.subr.bf16.mxu0 0
    %5466 = vmatpush2.bf16.msra.mxu0 %v4162
    %5467 = vmatprep.subr.bf16.mxu0 0
    %5468 = vmatpush2.bf16.msra.mxu0 %v4161
    %5469 = vmatprep.subr.bf16.mxu0 0
    %5470 = vmatpush2.bf16.msra.mxu0 %v4160
    %5471 = vmatprep.subr.bf16.mxu0 0
    %5472 = vmatpush2.bf16.msra.mxu0 %v4159
    %5473 = vmatprep.subr.bf16.mxu0 0
    %5474 = vmatpush2.bf16.msra.mxu0 %v4158
    %5475 = vmatprep.subr.bf16.mxu0 0
    %5476 = vmatpush2.bf16.msra.mxu0 %v4157
    %5477 = vmatprep.mubr.bf16.mxu0 %v1329
    %5478 = vmatmul.mubr.bf16.gmra.mxu0 %v1315
    %v5479 = vpop.f32.mrf.mxu0
    %v5480 = vadd.f32 %v5440, %v5479
    %v5481 = vpop.f32.mrf.mxu0
    %v5482 = vpop.f32.mrf.mxu0
    %v5483 = vpop.f32.mrf.mxu0
    %5484 = vdwg.mxu0
    %5485 = vmatprep.subr.bf16.mxu0 0
    %5486 = vmatpush1.bf16.msra.mxu0 %v4172
    %5487 = vmatprep.subr.bf16.mxu0 0
    %5488 = vmatpush1.bf16.msra.mxu0 %v4171
    %5489 = vmatprep.subr.bf16.mxu0 0
    %5490 = vmatpush1.bf16.msra.mxu0 %v4170
    %5491 = vmatprep.subr.bf16.mxu0 0
    %5492 = vmatpush1.bf16.msra.mxu0 %v4169
    %5493 = vmatprep.subr.bf16.mxu0 0
    %5494 = vmatpush1.bf16.msra.mxu0 %v4168
    %5495 = vmatprep.subr.bf16.mxu0 0
    %5496 = vmatpush1.bf16.msra.mxu0 %v4167
    %5497 = vmatprep.subr.bf16.mxu0 0
    %5498 = vmatpush1.bf16.msra.mxu0 %v4166
    %5499 = vmatprep.subr.bf16.mxu0 0
    %5500 = vmatpush1.bf16.msra.mxu0 %v4165
    %5501 = vmatprep.subr.bf16.mxu0 0
    %5502 = vmatpush2.bf16.msra.mxu0 %v4180
    %5503 = vmatprep.subr.bf16.mxu0 0
    %5504 = vmatpush2.bf16.msra.mxu0 %v4179
    %5505 = vmatprep.subr.bf16.mxu0 0
    %5506 = vmatpush2.bf16.msra.mxu0 %v4178
    %5507 = vmatprep.subr.bf16.mxu0 0
    %5508 = vmatpush2.bf16.msra.mxu0 %v4177
    %5509 = vmatprep.subr.bf16.mxu0 0
    %5510 = vmatpush2.bf16.msra.mxu0 %v4176
    %5511 = vmatprep.subr.bf16.mxu0 0
    %5512 = vmatpush2.bf16.msra.mxu0 %v4175
    %5513 = vmatprep.subr.bf16.mxu0 0
    %5514 = vmatpush2.bf16.msra.mxu0 %v4174
    %5515 = vmatprep.subr.bf16.mxu0 0
    %5516 = vmatpush2.bf16.msra.mxu0 %v4173
    %5517 = vmatprep.mubr.bf16.mxu0 %v1333
    %5518 = vmatmul.mubr.bf16.gmra.mxu0 %v1331
    %v5519 = vpop.f32.mrf.mxu0
    %v5520 = vadd.f32 %v5480, %v5519
    %v5521 = vpop.f32.mrf.mxu0
    %v5522 = vpop.f32.mrf.mxu0
    %v5523 = vpop.f32.mrf.mxu0
    %5524 = vdwg.mxu0
    %5525 = vmatprep.subr.bf16.mxu0 0
    %5526 = vmatpush1.bf16.msra.mxu0 %v4188
    %5527 = vmatprep.subr.bf16.mxu0 0
    %5528 = vmatpush1.bf16.msra.mxu0 %v4187
    %5529 = vmatprep.subr.bf16.mxu0 0
    %5530 = vmatpush1.bf16.msra.mxu0 %v4186
    %5531 = vmatprep.subr.bf16.mxu0 0
    %5532 = vmatpush1.bf16.msra.mxu0 %v4185
    %5533 = vmatprep.subr.bf16.mxu0 0
    %5534 = vmatpush1.bf16.msra.mxu0 %v4184
    %5535 = vmatprep.subr.bf16.mxu0 0
    %5536 = vmatpush1.bf16.msra.mxu0 %v4183
    %5537 = vmatprep.subr.bf16.mxu0 0
    %5538 = vmatpush1.bf16.msra.mxu0 %v4182
    %5539 = vmatprep.subr.bf16.mxu0 0
    %5540 = vmatpush1.bf16.msra.mxu0 %v4181
    %5541 = vmatprep.subr.bf16.mxu0 0
    %5542 = vmatpush2.bf16.msra.mxu0 %v4196
    %5543 = vmatprep.subr.bf16.mxu0 0
    %5544 = vmatpush2.bf16.msra.mxu0 %v4195
    %5545 = vmatprep.subr.bf16.mxu0 0
    %5546 = vmatpush2.bf16.msra.mxu0 %v4194
    %5547 = vmatprep.subr.bf16.mxu0 0
    %5548 = vmatpush2.bf16.msra.mxu0 %v4193
    %5549 = vmatprep.subr.bf16.mxu0 0
    %5550 = vmatpush2.bf16.msra.mxu0 %v4192
    %5551 = vmatprep.subr.bf16.mxu0 0
    %5552 = vmatpush2.bf16.msra.mxu0 %v4191
    %5553 = vmatprep.subr.bf16.mxu0 0
    %5554 = vmatpush2.bf16.msra.mxu0 %v4190
    %5555 = vmatprep.subr.bf16.mxu0 0
    %5556 = vmatpush2.bf16.msra.mxu0 %v4189
    %5557 = vmatprep.mubr.bf16.mxu0 %v1371
    %5558 = vmatmul.mubr.bf16.gmra.mxu0 %v1357
    %v5559 = vpop.f32.mrf.mxu0
    %v5560 = vadd.f32 %v5520, %v5559
    %v5561 = vpop.f32.mrf.mxu0
    %v5562 = vpop.f32.mrf.mxu0
    %v5563 = vpop.f32.mrf.mxu0
    %5564 = vdwg.mxu0
    %5565 = vmatprep.subr.bf16.mxu0 0
    %5566 = vmatpush1.bf16.msra.mxu0 %v4204
    %5567 = vmatprep.subr.bf16.mxu0 0
    %5568 = vmatpush1.bf16.msra.mxu0 %v4203
    %5569 = vmatprep.subr.bf16.mxu0 0
    %5570 = vmatpush1.bf16.msra.mxu0 %v4202
    %5571 = vmatprep.subr.bf16.mxu0 0
    %5572 = vmatpush1.bf16.msra.mxu0 %v4201
    %5573 = vmatprep.subr.bf16.mxu0 0
    %5574 = vmatpush1.bf16.msra.mxu0 %v4200
    %5575 = vmatprep.subr.bf16.mxu0 0
    %5576 = vmatpush1.bf16.msra.mxu0 %v4199
    %5577 = vmatprep.subr.bf16.mxu0 0
    %5578 = vmatpush1.bf16.msra.mxu0 %v4198
    %5579 = vmatprep.subr.bf16.mxu0 0
    %5580 = vmatpush1.bf16.msra.mxu0 %v4197
    %5581 = vmatprep.subr.bf16.mxu0 0
    %5582 = vmatpush2.bf16.msra.mxu0 %v4212
    %5583 = vmatprep.subr.bf16.mxu0 0
    %5584 = vmatpush2.bf16.msra.mxu0 %v4211
    %5585 = vmatprep.subr.bf16.mxu0 0
    %5586 = vmatpush2.bf16.msra.mxu0 %v4210
    %5587 = vmatprep.subr.bf16.mxu0 0
    %5588 = vmatpush2.bf16.msra.mxu0 %v4209
    %5589 = vmatprep.subr.bf16.mxu0 0
    %5590 = vmatpush2.bf16.msra.mxu0 %v4208
    %5591 = vmatprep.subr.bf16.mxu0 0
    %5592 = vmatpush2.bf16.msra.mxu0 %v4207
    %5593 = vmatprep.subr.bf16.mxu0 0
    %5594 = vmatpush2.bf16.msra.mxu0 %v4206
    %5595 = vmatprep.subr.bf16.mxu0 0
    %5596 = vmatpush2.bf16.msra.mxu0 %v4205
    %5597 = vmatprep.mubr.bf16.mxu0 %v1381
    %5598 = vmatmul.mubr.bf16.gmra.mxu0 %v1379
    %v5599 = vpop.f32.mrf.mxu0
    %v5600 = vadd.f32 %v5560, %v5599
    %v5601 = vpop.f32.mrf.mxu0
    %v5602 = vpop.f32.mrf.mxu0
    %v5603 = vpop.f32.mrf.mxu0
    %5604 = vdwg.mxu0
    %5605 = vmatprep.subr.bf16.mxu0 0
    %5606 = vmatpush1.bf16.msra.mxu0 %v4220
    %5607 = vmatprep.subr.bf16.mxu0 0
    %5608 = vmatpush1.bf16.msra.mxu0 %v4219
    %5609 = vmatprep.subr.bf16.mxu0 0
    %5610 = vmatpush1.bf16.msra.mxu0 %v4218
    %5611 = vmatprep.subr.bf16.mxu0 0
    %5612 = vmatpush1.bf16.msra.mxu0 %v4217
    %5613 = vmatprep.subr.bf16.mxu0 0
    %5614 = vmatpush1.bf16.msra.mxu0 %v4216
    %5615 = vmatprep.subr.bf16.mxu0 0
    %5616 = vmatpush1.bf16.msra.mxu0 %v4215
    %5617 = vmatprep.subr.bf16.mxu0 0
    %5618 = vmatpush1.bf16.msra.mxu0 %v4214
    %5619 = vmatprep.subr.bf16.mxu0 0
    %5620 = vmatpush1.bf16.msra.mxu0 %v4213
    %5621 = vmatprep.subr.bf16.mxu0 0
    %5622 = vmatpush2.bf16.msra.mxu0 %v4228
    %5623 = vmatprep.subr.bf16.mxu0 0
    %5624 = vmatpush2.bf16.msra.mxu0 %v4227
    %5625 = vmatprep.subr.bf16.mxu0 0
    %5626 = vmatpush2.bf16.msra.mxu0 %v4226
    %5627 = vmatprep.subr.bf16.mxu0 0
    %5628 = vmatpush2.bf16.msra.mxu0 %v4225
    %5629 = vmatprep.subr.bf16.mxu0 0
    %5630 = vmatpush2.bf16.msra.mxu0 %v4224
    %5631 = vmatprep.subr.bf16.mxu0 0
    %5632 = vmatpush2.bf16.msra.mxu0 %v4223
    %5633 = vmatprep.subr.bf16.mxu0 0
    %5634 = vmatpush2.bf16.msra.mxu0 %v4222
    %5635 = vmatprep.subr.bf16.mxu0 0
    %5636 = vmatpush2.bf16.msra.mxu0 %v4221
    %5637 = vmatprep.mubr.bf16.mxu0 %v1378
    %5638 = vmatmul.mubr.bf16.gmra.mxu0 %v1364
    %v5639 = vpop.f32.mrf.mxu0
    %v5640 = vadd.f32 %v5600, %v5639
    %v5641 = vpop.f32.mrf.mxu0
    %v5642 = vpop.f32.mrf.mxu0
    %v5643 = vpop.f32.mrf.mxu0
    %5644 = vdwg.mxu0
    %5645 = vmatprep.subr.bf16.mxu0 0
    %5646 = vmatpush1.bf16.msra.mxu0 %v4236
    %5647 = vmatprep.subr.bf16.mxu0 0
    %5648 = vmatpush1.bf16.msra.mxu0 %v4235
    %5649 = vmatprep.subr.bf16.mxu0 0
    %5650 = vmatpush1.bf16.msra.mxu0 %v4234
    %5651 = vmatprep.subr.bf16.mxu0 0
    %5652 = vmatpush1.bf16.msra.mxu0 %v4233
    %5653 = vmatprep.subr.bf16.mxu0 0
    %5654 = vmatpush1.bf16.msra.mxu0 %v4232
    %5655 = vmatprep.subr.bf16.mxu0 0
    %5656 = vmatpush1.bf16.msra.mxu0 %v4231
    %5657 = vmatprep.subr.bf16.mxu0 0
    %5658 = vmatpush1.bf16.msra.mxu0 %v4230
    %5659 = vmatprep.subr.bf16.mxu0 0
    %5660 = vmatpush1.bf16.msra.mxu0 %v4229
    %5661 = vmatprep.subr.bf16.mxu0 0
    %5662 = vmatpush2.bf16.msra.mxu0 %v4244
    %5663 = vmatprep.subr.bf16.mxu0 0
    %5664 = vmatpush2.bf16.msra.mxu0 %v4243
    %5665 = vmatprep.subr.bf16.mxu0 0
    %5666 = vmatpush2.bf16.msra.mxu0 %v4242
    %5667 = vmatprep.subr.bf16.mxu0 0
    %5668 = vmatpush2.bf16.msra.mxu0 %v4241
    %5669 = vmatprep.subr.bf16.mxu0 0
    %5670 = vmatpush2.bf16.msra.mxu0 %v4240
    %5671 = vmatprep.subr.bf16.mxu0 0
    %5672 = vmatpush2.bf16.msra.mxu0 %v4239
    %5673 = vmatprep.subr.bf16.mxu0 0
    %5674 = vmatpush2.bf16.msra.mxu0 %v4238
    %5675 = vmatprep.subr.bf16.mxu0 0
    %5676 = vmatpush2.bf16.msra.mxu0 %v4237
    %5677 = vmatprep.mubr.bf16.mxu0 %v1382
    %5678 = vmatmul.mubr.bf16.gmra.mxu0 %v1380
    %v5679 = vpop.f32.mrf.mxu0
    %v5680 = vadd.f32 %v5640, %v5679
    %v5681 = vpop.f32.mrf.mxu0
    %v5682 = vpop.f32.mrf.mxu0
    %v5683 = vpop.f32.mrf.mxu0
    %5684 = vdwg.mxu0
    %5685 = vmatprep.subr.bf16.mxu0 0
    %5686 = vmatpush1.bf16.msra.mxu0 %v4252
    %5687 = vmatprep.subr.bf16.mxu0 0
    %5688 = vmatpush1.bf16.msra.mxu0 %v4251
    %5689 = vmatprep.subr.bf16.mxu0 0
    %5690 = vmatpush1.bf16.msra.mxu0 %v4250
    %5691 = vmatprep.subr.bf16.mxu0 0
    %5692 = vmatpush1.bf16.msra.mxu0 %v4249
    %5693 = vmatprep.subr.bf16.mxu0 0
    %5694 = vmatpush1.bf16.msra.mxu0 %v4248
    %5695 = vmatprep.subr.bf16.mxu0 0
    %5696 = vmatpush1.bf16.msra.mxu0 %v4247
    %5697 = vmatprep.subr.bf16.mxu0 0
    %5698 = vmatpush1.bf16.msra.mxu0 %v4246
    %5699 = vmatprep.subr.bf16.mxu0 0
    %5700 = vmatpush1.bf16.msra.mxu0 %v4245
    %5701 = vmatprep.subr.bf16.mxu0 0
    %5702 = vmatpush2.bf16.msra.mxu0 %v4260
    %5703 = vmatprep.subr.bf16.mxu0 0
    %5704 = vmatpush2.bf16.msra.mxu0 %v4259
    %5705 = vmatprep.subr.bf16.mxu0 0
    %5706 = vmatpush2.bf16.msra.mxu0 %v4258
    %5707 = vmatprep.subr.bf16.mxu0 0
    %5708 = vmatpush2.bf16.msra.mxu0 %v4257
    %5709 = vmatprep.subr.bf16.mxu0 0
    %5710 = vmatpush2.bf16.msra.mxu0 %v4256
    %5711 = vmatprep.subr.bf16.mxu0 0
    %5712 = vmatpush2.bf16.msra.mxu0 %v4255
    %5713 = vmatprep.subr.bf16.mxu0 0
    %5714 = vmatpush2.bf16.msra.mxu0 %v4254
    %5715 = vmatprep.subr.bf16.mxu0 0
    %5716 = vmatpush2.bf16.msra.mxu0 %v4253
    %5717 = vmatprep.mubr.bf16.mxu0 %v1420
    %5718 = vmatmul.mubr.bf16.gmra.mxu0 %v1406
    %v5719 = vpop.f32.mrf.mxu0
    %v5720 = vadd.f32 %v5680, %v5719
    %v5721 = vpop.f32.mrf.mxu0
    %v5722 = vpop.f32.mrf.mxu0
    %v5723 = vpop.f32.mrf.mxu0
    %5724 = vdwg.mxu0
    %5725 = vmatprep.subr.bf16.mxu0 0
    %5726 = vmatpush1.bf16.msra.mxu0 %v4268
    %5727 = vmatprep.subr.bf16.mxu0 0
    %5728 = vmatpush1.bf16.msra.mxu0 %v4267
    %5729 = vmatprep.subr.bf16.mxu0 0
    %5730 = vmatpush1.bf16.msra.mxu0 %v4266
    %5731 = vmatprep.subr.bf16.mxu0 0
    %5732 = vmatpush1.bf16.msra.mxu0 %v4265
    %5733 = vmatprep.subr.bf16.mxu0 0
    %5734 = vmatpush1.bf16.msra.mxu0 %v4264
    %5735 = vmatprep.subr.bf16.mxu0 0
    %5736 = vmatpush1.bf16.msra.mxu0 %v4263
    %5737 = vmatprep.subr.bf16.mxu0 0
    %5738 = vmatpush1.bf16.msra.mxu0 %v4262
    %5739 = vmatprep.subr.bf16.mxu0 0
    %5740 = vmatpush1.bf16.msra.mxu0 %v4261
    %5741 = vmatprep.subr.bf16.mxu0 0
    %5742 = vmatpush2.bf16.msra.mxu0 %v4276
    %5743 = vmatprep.subr.bf16.mxu0 0
    %5744 = vmatpush2.bf16.msra.mxu0 %v4275
    %5745 = vmatprep.subr.bf16.mxu0 0
    %5746 = vmatpush2.bf16.msra.mxu0 %v4274
    %5747 = vmatprep.subr.bf16.mxu0 0
    %5748 = vmatpush2.bf16.msra.mxu0 %v4273
    %5749 = vmatprep.subr.bf16.mxu0 0
    %5750 = vmatpush2.bf16.msra.mxu0 %v4272
    %5751 = vmatprep.subr.bf16.mxu0 0
    %5752 = vmatpush2.bf16.msra.mxu0 %v4271
    %5753 = vmatprep.subr.bf16.mxu0 0
    %5754 = vmatpush2.bf16.msra.mxu0 %v4270
    %5755 = vmatprep.subr.bf16.mxu0 0
    %5756 = vmatpush2.bf16.msra.mxu0 %v4269
    %5757 = vmatprep.mubr.bf16.mxu0 %v1430
    %5758 = vmatmul.mubr.bf16.gmra.mxu0 %v1428
    %v5759 = vpop.f32.mrf.mxu0
    %v5760 = vadd.f32 %v5720, %v5759
    %v5761 = vpop.f32.mrf.mxu0
    %v5762 = vpop.f32.mrf.mxu0
    %v5763 = vpop.f32.mrf.mxu0
    %5764 = vdwg.mxu0
    %5765 = vmatprep.subr.bf16.mxu0 0
    %5766 = vmatpush1.bf16.msra.mxu0 %v4284
    %5767 = vmatprep.subr.bf16.mxu0 0
    %5768 = vmatpush1.bf16.msra.mxu0 %v4283
    %5769 = vmatprep.subr.bf16.mxu0 0
    %5770 = vmatpush1.bf16.msra.mxu0 %v4282
    %5771 = vmatprep.subr.bf16.mxu0 0
    %5772 = vmatpush1.bf16.msra.mxu0 %v4281
    %5773 = vmatprep.subr.bf16.mxu0 0
    %5774 = vmatpush1.bf16.msra.mxu0 %v4280
    %5775 = vmatprep.subr.bf16.mxu0 0
    %5776 = vmatpush1.bf16.msra.mxu0 %v4279
    %5777 = vmatprep.subr.bf16.mxu0 0
    %5778 = vmatpush1.bf16.msra.mxu0 %v4278
    %5779 = vmatprep.subr.bf16.mxu0 0
    %5780 = vmatpush1.bf16.msra.mxu0 %v4277
    %5781 = vmatprep.subr.bf16.mxu0 0
    %5782 = vmatpush2.bf16.msra.mxu0 %v4292
    %5783 = vmatprep.subr.bf16.mxu0 0
    %5784 = vmatpush2.bf16.msra.mxu0 %v4291
    %5785 = vmatprep.subr.bf16.mxu0 0
    %5786 = vmatpush2.bf16.msra.mxu0 %v4290
    %5787 = vmatprep.subr.bf16.mxu0 0
    %5788 = vmatpush2.bf16.msra.mxu0 %v4289
    %5789 = vmatprep.subr.bf16.mxu0 0
    %5790 = vmatpush2.bf16.msra.mxu0 %v4288
    %5791 = vmatprep.subr.bf16.mxu0 0
    %5792 = vmatpush2.bf16.msra.mxu0 %v4287
    %5793 = vmatprep.subr.bf16.mxu0 0
    %5794 = vmatpush2.bf16.msra.mxu0 %v4286
    %5795 = vmatprep.subr.bf16.mxu0 0
    %5796 = vmatpush2.bf16.msra.mxu0 %v4285
    %5797 = vmatprep.mubr.bf16.mxu0 %v1427
    %5798 = vmatmul.mubr.bf16.gmra.mxu0 %v1413
    %v5799 = vpop.f32.mrf.mxu0
    %v5800 = vadd.f32 %v5760, %v5799
    %v5801 = vpop.f32.mrf.mxu0
    %v5802 = vpop.f32.mrf.mxu0
    %v5803 = vpop.f32.mrf.mxu0
    %5804 = vdwg.mxu0
    %5805 = vmatprep.subr.bf16.mxu0 0
    %5806 = vmatpush1.bf16.msra.mxu0 %v4300
    %5807 = vmatprep.subr.bf16.mxu0 0
    %5808 = vmatpush1.bf16.msra.mxu0 %v4299
    %5809 = vmatprep.subr.bf16.mxu0 0
    %5810 = vmatpush1.bf16.msra.mxu0 %v4298
    %5811 = vmatprep.subr.bf16.mxu0 0
    %5812 = vmatpush1.bf16.msra.mxu0 %v4297
    %5813 = vmatprep.subr.bf16.mxu0 0
    %5814 = vmatpush1.bf16.msra.mxu0 %v4296
    %5815 = vmatprep.subr.bf16.mxu0 0
    %5816 = vmatpush1.bf16.msra.mxu0 %v4295
    %5817 = vmatprep.subr.bf16.mxu0 0
    %5818 = vmatpush1.bf16.msra.mxu0 %v4294
    %5819 = vmatprep.subr.bf16.mxu0 0
    %5820 = vmatpush1.bf16.msra.mxu0 %v4293
    %5821 = vmatprep.subr.bf16.mxu0 0
    %5822 = vmatpush2.bf16.msra.mxu0 %v4308
    %5823 = vmatprep.subr.bf16.mxu0 0
    %5824 = vmatpush2.bf16.msra.mxu0 %v4307
    %5825 = vmatprep.subr.bf16.mxu0 0
    %5826 = vmatpush2.bf16.msra.mxu0 %v4306
    %5827 = vmatprep.subr.bf16.mxu0 0
    %5828 = vmatpush2.bf16.msra.mxu0 %v4305
    %5829 = vmatprep.subr.bf16.mxu0 0
    %5830 = vmatpush2.bf16.msra.mxu0 %v4304
    %5831 = vmatprep.subr.bf16.mxu0 0
    %5832 = vmatpush2.bf16.msra.mxu0 %v4303
    %5833 = vmatprep.subr.bf16.mxu0 0
    %5834 = vmatpush2.bf16.msra.mxu0 %v4302
    %5835 = vmatprep.subr.bf16.mxu0 0
    %5836 = vmatpush2.bf16.msra.mxu0 %v4301
    %5837 = vmatprep.mubr.bf16.mxu0 %v1431
    %5838 = vmatmul.mubr.bf16.gmra.mxu0 %v1429
    %v5839 = vpop.f32.mrf.mxu0
    %v5840 = vadd.f32 %v5800, %v5839
    %v5841 = vpop.f32.mrf.mxu0
    %v5842 = vpop.f32.mrf.mxu0
    %v5843 = vpop.f32.mrf.mxu0
    %5844 = vdwg.mxu0
    %5845 = vmatprep.subr.bf16.mxu0 0
    %5846 = vmatpush1.bf16.msra.mxu0 %v4316
    %5847 = vmatprep.subr.bf16.mxu0 0
    %5848 = vmatpush1.bf16.msra.mxu0 %v4315
    %5849 = vmatprep.subr.bf16.mxu0 0
    %5850 = vmatpush1.bf16.msra.mxu0 %v4314
    %5851 = vmatprep.subr.bf16.mxu0 0
    %5852 = vmatpush1.bf16.msra.mxu0 %v4313
    %5853 = vmatprep.subr.bf16.mxu0 0
    %5854 = vmatpush1.bf16.msra.mxu0 %v4312
    %5855 = vmatprep.subr.bf16.mxu0 0
    %5856 = vmatpush1.bf16.msra.mxu0 %v4311
    %5857 = vmatprep.subr.bf16.mxu0 0
    %5858 = vmatpush1.bf16.msra.mxu0 %v4310
    %5859 = vmatprep.subr.bf16.mxu0 0
    %5860 = vmatpush1.bf16.msra.mxu0 %v4309
    %5861 = vmatprep.subr.bf16.mxu0 0
    %5862 = vmatpush2.bf16.msra.mxu0 %v4324
    %5863 = vmatprep.subr.bf16.mxu0 0
    %5864 = vmatpush2.bf16.msra.mxu0 %v4323
    %5865 = vmatprep.subr.bf16.mxu0 0
    %5866 = vmatpush2.bf16.msra.mxu0 %v4322
    %5867 = vmatprep.subr.bf16.mxu0 0
    %5868 = vmatpush2.bf16.msra.mxu0 %v4321
    %5869 = vmatprep.subr.bf16.mxu0 0
    %5870 = vmatpush2.bf16.msra.mxu0 %v4320
    %5871 = vmatprep.subr.bf16.mxu0 0
    %5872 = vmatpush2.bf16.msra.mxu0 %v4319
    %5873 = vmatprep.subr.bf16.mxu0 0
    %5874 = vmatpush2.bf16.msra.mxu0 %v4318
    %5875 = vmatprep.subr.bf16.mxu0 0
    %5876 = vmatpush2.bf16.msra.mxu0 %v4317
    %5877 = vmatprep.mubr.bf16.mxu0 %v1469
    %5878 = vmatmul.mubr.bf16.gmra.mxu0 %v1455
    %v5879 = vpop.f32.mrf.mxu0
    %v5880 = vadd.f32 %v5840, %v5879
    %v5881 = vpop.f32.mrf.mxu0
    %v5882 = vpop.f32.mrf.mxu0
    %v5883 = vpop.f32.mrf.mxu0
    %5884 = vdwg.mxu0
    %5885 = vmatprep.subr.bf16.mxu0 0
    %5886 = vmatpush1.bf16.msra.mxu0 %v4332
    %5887 = vmatprep.subr.bf16.mxu0 0
    %5888 = vmatpush1.bf16.msra.mxu0 %v4331
    %5889 = vmatprep.subr.bf16.mxu0 0
    %5890 = vmatpush1.bf16.msra.mxu0 %v4330
    %5891 = vmatprep.subr.bf16.mxu0 0
    %5892 = vmatpush1.bf16.msra.mxu0 %v4329
    %5893 = vmatprep.subr.bf16.mxu0 0
    %5894 = vmatpush1.bf16.msra.mxu0 %v4328
    %5895 = vmatprep.subr.bf16.mxu0 0
    %5896 = vmatpush1.bf16.msra.mxu0 %v4327
    %5897 = vmatprep.subr.bf16.mxu0 0
    %5898 = vmatpush1.bf16.msra.mxu0 %v4326
    %5899 = vmatprep.subr.bf16.mxu0 0
    %5900 = vmatpush1.bf16.msra.mxu0 %v4325
    %5901 = vmatprep.subr.bf16.mxu0 0
    %5902 = vmatpush2.bf16.msra.mxu0 %v4340
    %5903 = vmatprep.subr.bf16.mxu0 0
    %5904 = vmatpush2.bf16.msra.mxu0 %v4339
    %5905 = vmatprep.subr.bf16.mxu0 0
    %5906 = vmatpush2.bf16.msra.mxu0 %v4338
    %5907 = vmatprep.subr.bf16.mxu0 0
    %5908 = vmatpush2.bf16.msra.mxu0 %v4337
    %5909 = vmatprep.subr.bf16.mxu0 0
    %5910 = vmatpush2.bf16.msra.mxu0 %v4336
    %5911 = vmatprep.subr.bf16.mxu0 0
    %5912 = vmatpush2.bf16.msra.mxu0 %v4335
    %5913 = vmatprep.subr.bf16.mxu0 0
    %5914 = vmatpush2.bf16.msra.mxu0 %v4334
    %5915 = vmatprep.subr.bf16.mxu0 0
    %5916 = vmatpush2.bf16.msra.mxu0 %v4333
    %5917 = vmatprep.mubr.bf16.mxu0 %v1479
    %5918 = vmatmul.mubr.bf16.gmra.mxu0 %v1477
    %v5919 = vpop.f32.mrf.mxu0
    %v5920 = vadd.f32 %v5880, %v5919
    %v5921 = vpop.f32.mrf.mxu0
    %v5922 = vpop.f32.mrf.mxu0
    %v5923 = vpop.f32.mrf.mxu0
    %5924 = vdwg.mxu0
    %5925 = vmatprep.subr.bf16.mxu0 0
    %5926 = vmatpush1.bf16.msra.mxu0 %v4348
    %5927 = vmatprep.subr.bf16.mxu0 0
    %5928 = vmatpush1.bf16.msra.mxu0 %v4347
    %5929 = vmatprep.subr.bf16.mxu0 0
    %5930 = vmatpush1.bf16.msra.mxu0 %v4346
    %5931 = vmatprep.subr.bf16.mxu0 0
    %5932 = vmatpush1.bf16.msra.mxu0 %v4345
    %5933 = vmatprep.subr.bf16.mxu0 0
    %5934 = vmatpush1.bf16.msra.mxu0 %v4344
    %5935 = vmatprep.subr.bf16.mxu0 0
    %5936 = vmatpush1.bf16.msra.mxu0 %v4343
    %5937 = vmatprep.subr.bf16.mxu0 0
    %5938 = vmatpush1.bf16.msra.mxu0 %v4342
    %5939 = vmatprep.subr.bf16.mxu0 0
    %5940 = vmatpush1.bf16.msra.mxu0 %v4341
    %5941 = vmatprep.subr.bf16.mxu0 0
    %5942 = vmatpush2.bf16.msra.mxu0 %v4356
    %5943 = vmatprep.subr.bf16.mxu0 0
    %5944 = vmatpush2.bf16.msra.mxu0 %v4355
    %5945 = vmatprep.subr.bf16.mxu0 0
    %5946 = vmatpush2.bf16.msra.mxu0 %v4354
    %5947 = vmatprep.subr.bf16.mxu0 0
    %5948 = vmatpush2.bf16.msra.mxu0 %v4353
    %5949 = vmatprep.subr.bf16.mxu0 0
    %5950 = vmatpush2.bf16.msra.mxu0 %v4352
    %5951 = vmatprep.subr.bf16.mxu0 0
    %5952 = vmatpush2.bf16.msra.mxu0 %v4351
    %5953 = vmatprep.subr.bf16.mxu0 0
    %5954 = vmatpush2.bf16.msra.mxu0 %v4350
    %5955 = vmatprep.subr.bf16.mxu0 0
    %5956 = vmatpush2.bf16.msra.mxu0 %v4349
    %5957 = vmatprep.mubr.bf16.mxu0 %v1476
    %5958 = vmatmul.mubr.bf16.gmra.mxu0 %v1462
    %v5959 = vpop.f32.mrf.mxu0
    %v5960 = vadd.f32 %v5920, %v5959
    %v5961 = vpop.f32.mrf.mxu0
    %v5962 = vpop.f32.mrf.mxu0
    %v5963 = vpop.f32.mrf.mxu0
    %5964 = vdwg.mxu0
    %5965 = vmatprep.subr.bf16.mxu0 0
    %5966 = vmatpush1.bf16.msra.mxu0 %v4364
    %5967 = vmatprep.subr.bf16.mxu0 0
    %5968 = vmatpush1.bf16.msra.mxu0 %v4363
    %5969 = vmatprep.subr.bf16.mxu0 0
    %5970 = vmatpush1.bf16.msra.mxu0 %v4362
    %5971 = vmatprep.subr.bf16.mxu0 0
    %5972 = vmatpush1.bf16.msra.mxu0 %v4361
    %5973 = vmatprep.subr.bf16.mxu0 0
    %5974 = vmatpush1.bf16.msra.mxu0 %v4360
    %5975 = vmatprep.subr.bf16.mxu0 0
    %5976 = vmatpush1.bf16.msra.mxu0 %v4359
    %5977 = vmatprep.subr.bf16.mxu0 0
    %5978 = vmatpush1.bf16.msra.mxu0 %v4358
    %5979 = vmatprep.subr.bf16.mxu0 0
    %5980 = vmatpush1.bf16.msra.mxu0 %v4357
    %5981 = vmatprep.subr.bf16.mxu0 0
    %5982 = vmatpush2.bf16.msra.mxu0 %v4372
    %5983 = vmatprep.subr.bf16.mxu0 0
    %5984 = vmatpush2.bf16.msra.mxu0 %v4371
    %5985 = vmatprep.subr.bf16.mxu0 0
    %5986 = vmatpush2.bf16.msra.mxu0 %v4370
    %5987 = vmatprep.subr.bf16.mxu0 0
    %5988 = vmatpush2.bf16.msra.mxu0 %v4369
    %5989 = vmatprep.subr.bf16.mxu0 0
    %5990 = vmatpush2.bf16.msra.mxu0 %v4368
    %5991 = vmatprep.subr.bf16.mxu0 0
    %5992 = vmatpush2.bf16.msra.mxu0 %v4367
    %5993 = vmatprep.subr.bf16.mxu0 0
    %5994 = vmatpush2.bf16.msra.mxu0 %v4366
    %5995 = vmatprep.subr.bf16.mxu0 0
    %5996 = vmatpush2.bf16.msra.mxu0 %v4365
    %5997 = vmatprep.mubr.bf16.mxu0 %v1480
    %5998 = vmatmul.mubr.bf16.gmra.mxu0 %v1478
    %v5999 = vpop.f32.mrf.mxu0
    %v6000 = vadd.f32 %v5960, %v5999
    %v6001 = vpop.f32.mrf.mxu0
    %v6002 = vpop.f32.mrf.mxu0
    %v6003 = vpop.f32.mrf.mxu0
    %6004 = vdwg.mxu0
    %6005 = vmatprep.subr.bf16.mxu0 0
    %6006 = vmatpush1.bf16.msra.mxu0 %v4380
    %6007 = vmatprep.subr.bf16.mxu0 0
    %6008 = vmatpush1.bf16.msra.mxu0 %v4379
    %6009 = vmatprep.subr.bf16.mxu0 0
    %6010 = vmatpush1.bf16.msra.mxu0 %v4378
    %6011 = vmatprep.subr.bf16.mxu0 0
    %6012 = vmatpush1.bf16.msra.mxu0 %v4377
    %6013 = vmatprep.subr.bf16.mxu0 0
    %6014 = vmatpush1.bf16.msra.mxu0 %v4376
    %6015 = vmatprep.subr.bf16.mxu0 0
    %6016 = vmatpush1.bf16.msra.mxu0 %v4375
    %6017 = vmatprep.subr.bf16.mxu0 0
    %6018 = vmatpush1.bf16.msra.mxu0 %v4374
    %6019 = vmatprep.subr.bf16.mxu0 0
    %6020 = vmatpush1.bf16.msra.mxu0 %v4373
    %6021 = vmatprep.subr.bf16.mxu0 0
    %6022 = vmatpush2.bf16.msra.mxu0 %v4388
    %6023 = vmatprep.subr.bf16.mxu0 0
    %6024 = vmatpush2.bf16.msra.mxu0 %v4387
    %6025 = vmatprep.subr.bf16.mxu0 0
    %6026 = vmatpush2.bf16.msra.mxu0 %v4386
    %6027 = vmatprep.subr.bf16.mxu0 0
    %6028 = vmatpush2.bf16.msra.mxu0 %v4385
    %6029 = vmatprep.subr.bf16.mxu0 0
    %6030 = vmatpush2.bf16.msra.mxu0 %v4384
    %6031 = vmatprep.subr.bf16.mxu0 0
    %6032 = vmatpush2.bf16.msra.mxu0 %v4383
    %6033 = vmatprep.subr.bf16.mxu0 0
    %6034 = vmatpush2.bf16.msra.mxu0 %v4382
    %6035 = vmatprep.subr.bf16.mxu0 0
    %6036 = vmatpush2.bf16.msra.mxu0 %v4381
    %6037 = vmatprep.mubr.bf16.mxu0 %v1518
    %6038 = vmatmul.mubr.bf16.gmra.mxu0 %v1504
    %v6039 = vpop.f32.mrf.mxu0
    %v6040 = vadd.f32 %v6000, %v6039
    %v6041 = vpop.f32.mrf.mxu0
    %v6042 = vpop.f32.mrf.mxu0
    %v6043 = vpop.f32.mrf.mxu0
    %6044 = vdwg.mxu0
    %6045 = vmatprep.subr.bf16.mxu0 0
    %6046 = vmatpush1.bf16.msra.mxu0 %v4396
    %6047 = vmatprep.subr.bf16.mxu0 0
    %6048 = vmatpush1.bf16.msra.mxu0 %v4395
    %6049 = vmatprep.subr.bf16.mxu0 0
    %6050 = vmatpush1.bf16.msra.mxu0 %v4394
    %6051 = vmatprep.subr.bf16.mxu0 0
    %6052 = vmatpush1.bf16.msra.mxu0 %v4393
    %6053 = vmatprep.subr.bf16.mxu0 0
    %6054 = vmatpush1.bf16.msra.mxu0 %v4392
    %6055 = vmatprep.subr.bf16.mxu0 0
    %6056 = vmatpush1.bf16.msra.mxu0 %v4391
    %6057 = vmatprep.subr.bf16.mxu0 0
    %6058 = vmatpush1.bf16.msra.mxu0 %v4390
    %6059 = vmatprep.subr.bf16.mxu0 0
    %6060 = vmatpush1.bf16.msra.mxu0 %v4389
    %6061 = vmatprep.subr.bf16.mxu0 0
    %6062 = vmatpush2.bf16.msra.mxu0 %v4404
    %6063 = vmatprep.subr.bf16.mxu0 0
    %6064 = vmatpush2.bf16.msra.mxu0 %v4403
    %6065 = vmatprep.subr.bf16.mxu0 0
    %6066 = vmatpush2.bf16.msra.mxu0 %v4402
    %6067 = vmatprep.subr.bf16.mxu0 0
    %6068 = vmatpush2.bf16.msra.mxu0 %v4401
    %6069 = vmatprep.subr.bf16.mxu0 0
    %6070 = vmatpush2.bf16.msra.mxu0 %v4400
    %6071 = vmatprep.subr.bf16.mxu0 0
    %6072 = vmatpush2.bf16.msra.mxu0 %v4399
    %6073 = vmatprep.subr.bf16.mxu0 0
    %6074 = vmatpush2.bf16.msra.mxu0 %v4398
    %6075 = vmatprep.subr.bf16.mxu0 0
    %6076 = vmatpush2.bf16.msra.mxu0 %v4397
    %6077 = vmatprep.mubr.bf16.mxu0 %v1528
    %6078 = vmatmul.mubr.bf16.gmra.mxu0 %v1526
    %v6079 = vpop.f32.mrf.mxu0
    %v6080 = vadd.f32 %v6040, %v6079
    %v6081 = vpop.f32.mrf.mxu0
    %v6082 = vpop.f32.mrf.mxu0
    %v6083 = vpop.f32.mrf.mxu0
    %6084 = vdwg.mxu0
    %6085 = vmatprep.subr.bf16.mxu0 0
    %6086 = vmatpush1.bf16.msra.mxu0 %v4412
    %6087 = vmatprep.subr.bf16.mxu0 0
    %6088 = vmatpush1.bf16.msra.mxu0 %v4411
    %6089 = vmatprep.subr.bf16.mxu0 0
    %6090 = vmatpush1.bf16.msra.mxu0 %v4410
    %6091 = vmatprep.subr.bf16.mxu0 0
    %6092 = vmatpush1.bf16.msra.mxu0 %v4409
    %6093 = vmatprep.subr.bf16.mxu0 0
    %6094 = vmatpush1.bf16.msra.mxu0 %v4408
    %6095 = vmatprep.subr.bf16.mxu0 0
    %6096 = vmatpush1.bf16.msra.mxu0 %v4407
    %6097 = vmatprep.subr.bf16.mxu0 0
    %6098 = vmatpush1.bf16.msra.mxu0 %v4406
    %6099 = vmatprep.subr.bf16.mxu0 0
    %6100 = vmatpush1.bf16.msra.mxu0 %v4405
    %6101 = vmatprep.subr.bf16.mxu0 0
    %6102 = vmatpush2.bf16.msra.mxu0 %v4420
    %6103 = vmatprep.subr.bf16.mxu0 0
    %6104 = vmatpush2.bf16.msra.mxu0 %v4419
    %6105 = vmatprep.subr.bf16.mxu0 0
    %6106 = vmatpush2.bf16.msra.mxu0 %v4418
    %6107 = vmatprep.subr.bf16.mxu0 0
    %6108 = vmatpush2.bf16.msra.mxu0 %v4417
    %6109 = vmatprep.subr.bf16.mxu0 0
    %6110 = vmatpush2.bf16.msra.mxu0 %v4416
    %6111 = vmatprep.subr.bf16.mxu0 0
    %6112 = vmatpush2.bf16.msra.mxu0 %v4415
    %6113 = vmatprep.subr.bf16.mxu0 0
    %6114 = vmatpush2.bf16.msra.mxu0 %v4414
    %6115 = vmatprep.subr.bf16.mxu0 0
    %6116 = vmatpush2.bf16.msra.mxu0 %v4413
    %6117 = vmatprep.mubr.bf16.mxu0 %v1525
    %6118 = vmatmul.mubr.bf16.gmra.mxu0 %v1511
    %v6119 = vpop.f32.mrf.mxu0
    %v6120 = vadd.f32 %v6080, %v6119
    %v6121 = vpop.f32.mrf.mxu0
    %v6122 = vpop.f32.mrf.mxu0
    %v6123 = vpop.f32.mrf.mxu0
    %6124 = vdwg.mxu0
    %6125 = vmatprep.subr.bf16.mxu0 0
    %6126 = vmatpush1.bf16.msra.mxu0 %v4428
    %6127 = vmatprep.subr.bf16.mxu0 0
    %6128 = vmatpush1.bf16.msra.mxu0 %v4427
    %6129 = vmatprep.subr.bf16.mxu0 0
    %6130 = vmatpush1.bf16.msra.mxu0 %v4426
    %6131 = vmatprep.subr.bf16.mxu0 0
    %6132 = vmatpush1.bf16.msra.mxu0 %v4425
    %6133 = vmatprep.subr.bf16.mxu0 0
    %6134 = vmatpush1.bf16.msra.mxu0 %v4424
    %6135 = vmatprep.subr.bf16.mxu0 0
    %6136 = vmatpush1.bf16.msra.mxu0 %v4423
    %6137 = vmatprep.subr.bf16.mxu0 0
    %6138 = vmatpush1.bf16.msra.mxu0 %v4422
    %6139 = vmatprep.subr.bf16.mxu0 0
    %6140 = vmatpush1.bf16.msra.mxu0 %v4421
    %6141 = vmatprep.subr.bf16.mxu0 0
    %6142 = vmatpush2.bf16.msra.mxu0 %v4436
    %6143 = vmatprep.subr.bf16.mxu0 0
    %6144 = vmatpush2.bf16.msra.mxu0 %v4435
    %6145 = vmatprep.subr.bf16.mxu0 0
    %6146 = vmatpush2.bf16.msra.mxu0 %v4434
    %6147 = vmatprep.subr.bf16.mxu0 0
    %6148 = vmatpush2.bf16.msra.mxu0 %v4433
    %6149 = vmatprep.subr.bf16.mxu0 0
    %6150 = vmatpush2.bf16.msra.mxu0 %v4432
    %6151 = vmatprep.subr.bf16.mxu0 0
    %6152 = vmatpush2.bf16.msra.mxu0 %v4431
    %6153 = vmatprep.subr.bf16.mxu0 0
    %6154 = vmatpush2.bf16.msra.mxu0 %v4430
    %6155 = vmatprep.subr.bf16.mxu0 0
    %6156 = vmatpush2.bf16.msra.mxu0 %v4429
    %6157 = vmatprep.mubr.bf16.mxu0 %v1529
    %6158 = vmatmul.mubr.bf16.gmra.mxu0 %v1527
    %v6159 = vpop.f32.mrf.mxu0
    %v6160 = vadd.f32 %v6120, %v6159
    %v6161 = vpop.f32.mrf.mxu0
    %v6162 = vpop.f32.mrf.mxu0
    %v6163 = vpop.f32.mrf.mxu0
    %6164 = vdwg.mxu0
    %6165 = vmatprep.subr.bf16.mxu0 0
    %6166 = vmatpush1.bf16.msra.mxu0 %v4444
    %6167 = vmatprep.subr.bf16.mxu0 0
    %6168 = vmatpush1.bf16.msra.mxu0 %v4443
    %6169 = vmatprep.subr.bf16.mxu0 0
    %6170 = vmatpush1.bf16.msra.mxu0 %v4442
    %6171 = vmatprep.subr.bf16.mxu0 0
    %6172 = vmatpush1.bf16.msra.mxu0 %v4441
    %6173 = vmatprep.subr.bf16.mxu0 0
    %6174 = vmatpush1.bf16.msra.mxu0 %v4440
    %6175 = vmatprep.subr.bf16.mxu0 0
    %6176 = vmatpush1.bf16.msra.mxu0 %v4439
    %6177 = vmatprep.subr.bf16.mxu0 0
    %6178 = vmatpush1.bf16.msra.mxu0 %v4438
    %6179 = vmatprep.subr.bf16.mxu0 0
    %6180 = vmatpush1.bf16.msra.mxu0 %v4437
    %6181 = vmatprep.subr.bf16.mxu0 0
    %6182 = vmatpush2.bf16.msra.mxu0 %v4452
    %6183 = vmatprep.subr.bf16.mxu0 0
    %6184 = vmatpush2.bf16.msra.mxu0 %v4451
    %6185 = vmatprep.subr.bf16.mxu0 0
    %6186 = vmatpush2.bf16.msra.mxu0 %v4450
    %6187 = vmatprep.subr.bf16.mxu0 0
    %6188 = vmatpush2.bf16.msra.mxu0 %v4449
    %6189 = vmatprep.subr.bf16.mxu0 0
    %6190 = vmatpush2.bf16.msra.mxu0 %v4448
    %6191 = vmatprep.subr.bf16.mxu0 0
    %6192 = vmatpush2.bf16.msra.mxu0 %v4447
    %6193 = vmatprep.subr.bf16.mxu0 0
    %6194 = vmatpush2.bf16.msra.mxu0 %v4446
    %6195 = vmatprep.subr.bf16.mxu0 0
    %6196 = vmatpush2.bf16.msra.mxu0 %v4445
    %6197 = vmatprep.mubr.bf16.mxu0 %v1567
    %6198 = vmatmul.mubr.bf16.gmra.mxu0 %v1553
    %v6199 = vpop.f32.mrf.mxu0
    %v6200 = vadd.f32 %v6160, %v6199
    %v6201 = vpop.f32.mrf.mxu0
    %v6202 = vpop.f32.mrf.mxu0
    %v6203 = vpop.f32.mrf.mxu0
    %6204 = vdwg.mxu0
    %6205 = vmatprep.subr.bf16.mxu0 0
    %6206 = vmatpush1.bf16.msra.mxu0 %v4460
    %6207 = vmatprep.subr.bf16.mxu0 0
    %6208 = vmatpush1.bf16.msra.mxu0 %v4459
    %6209 = vmatprep.subr.bf16.mxu0 0
    %6210 = vmatpush1.bf16.msra.mxu0 %v4458
    %6211 = vmatprep.subr.bf16.mxu0 0
    %6212 = vmatpush1.bf16.msra.mxu0 %v4457
    %6213 = vmatprep.subr.bf16.mxu0 0
    %6214 = vmatpush1.bf16.msra.mxu0 %v4456
    %6215 = vmatprep.subr.bf16.mxu0 0
    %6216 = vmatpush1.bf16.msra.mxu0 %v4455
    %6217 = vmatprep.subr.bf16.mxu0 0
    %6218 = vmatpush1.bf16.msra.mxu0 %v4454
    %6219 = vmatprep.subr.bf16.mxu0 0
    %6220 = vmatpush1.bf16.msra.mxu0 %v4453
    %6221 = vmatprep.subr.bf16.mxu0 0
    %6222 = vmatpush2.bf16.msra.mxu0 %v4468
    %6223 = vmatprep.subr.bf16.mxu0 0
    %6224 = vmatpush2.bf16.msra.mxu0 %v4467
    %6225 = vmatprep.subr.bf16.mxu0 0
    %6226 = vmatpush2.bf16.msra.mxu0 %v4466
    %6227 = vmatprep.subr.bf16.mxu0 0
    %6228 = vmatpush2.bf16.msra.mxu0 %v4465
    %6229 = vmatprep.subr.bf16.mxu0 0
    %6230 = vmatpush2.bf16.msra.mxu0 %v4464
    %6231 = vmatprep.subr.bf16.mxu0 0
    %6232 = vmatpush2.bf16.msra.mxu0 %v4463
    %6233 = vmatprep.subr.bf16.mxu0 0
    %6234 = vmatpush2.bf16.msra.mxu0 %v4462
    %6235 = vmatprep.subr.bf16.mxu0 0
    %6236 = vmatpush2.bf16.msra.mxu0 %v4461
    %6237 = vmatprep.mubr.bf16.mxu0 %v1577
    %6238 = vmatmul.mubr.bf16.gmra.mxu0 %v1575
    %v6239 = vpop.f32.mrf.mxu0
    %v6240 = vadd.f32 %v6200, %v6239
    %v6241 = vpop.f32.mrf.mxu0
    %v6242 = vpop.f32.mrf.mxu0
    %v6243 = vpop.f32.mrf.mxu0
    %6244 = vdwg.mxu0
    %6245 = vmatprep.subr.bf16.mxu0 0
    %6246 = vmatpush1.bf16.msra.mxu0 %v4476
    %6247 = vmatprep.subr.bf16.mxu0 0
    %6248 = vmatpush1.bf16.msra.mxu0 %v4475
    %6249 = vmatprep.subr.bf16.mxu0 0
    %6250 = vmatpush1.bf16.msra.mxu0 %v4474
    %6251 = vmatprep.subr.bf16.mxu0 0
    %6252 = vmatpush1.bf16.msra.mxu0 %v4473
    %6253 = vmatprep.subr.bf16.mxu0 0
    %6254 = vmatpush1.bf16.msra.mxu0 %v4472
    %6255 = vmatprep.subr.bf16.mxu0 0
    %6256 = vmatpush1.bf16.msra.mxu0 %v4471
    %6257 = vmatprep.subr.bf16.mxu0 0
    %6258 = vmatpush1.bf16.msra.mxu0 %v4470
    %6259 = vmatprep.subr.bf16.mxu0 0
    %6260 = vmatpush1.bf16.msra.mxu0 %v4469
    %6261 = vmatprep.subr.bf16.mxu0 0
    %6262 = vmatpush2.bf16.msra.mxu0 %v4484
    %6263 = vmatprep.subr.bf16.mxu0 0
    %6264 = vmatpush2.bf16.msra.mxu0 %v4483
    %6265 = vmatprep.subr.bf16.mxu0 0
    %6266 = vmatpush2.bf16.msra.mxu0 %v4482
    %6267 = vmatprep.subr.bf16.mxu0 0
    %6268 = vmatpush2.bf16.msra.mxu0 %v4481
    %6269 = vmatprep.subr.bf16.mxu0 0
    %6270 = vmatpush2.bf16.msra.mxu0 %v4480
    %6271 = vmatprep.subr.bf16.mxu0 0
    %6272 = vmatpush2.bf16.msra.mxu0 %v4479
    %6273 = vmatprep.subr.bf16.mxu0 0
    %6274 = vmatpush2.bf16.msra.mxu0 %v4478
    %6275 = vmatprep.subr.bf16.mxu0 0
    %6276 = vmatpush2.bf16.msra.mxu0 %v4477
    %6277 = vmatprep.mubr.bf16.mxu0 %v1574
    %6278 = vmatmul.mubr.bf16.gmra.mxu0 %v1560
    %v6279 = vpop.f32.mrf.mxu0
    %v6280 = vadd.f32 %v6240, %v6279
    %v6281 = vpop.f32.mrf.mxu0
    %v6282 = vpop.f32.mrf.mxu0
    %v6283 = vpop.f32.mrf.mxu0
    %6284 = vdwg.mxu0
    %6285 = vmatprep.subr.bf16.mxu0 0
    %6286 = vmatpush1.bf16.msra.mxu0 %v4492
    %6287 = vmatprep.subr.bf16.mxu0 0
    %6288 = vmatpush1.bf16.msra.mxu0 %v4491
    %6289 = vmatprep.subr.bf16.mxu0 0
    %6290 = vmatpush1.bf16.msra.mxu0 %v4490
    %6291 = vmatprep.subr.bf16.mxu0 0
    %6292 = vmatpush1.bf16.msra.mxu0 %v4489
    %6293 = vmatprep.subr.bf16.mxu0 0
    %6294 = vmatpush1.bf16.msra.mxu0 %v4488
    %6295 = vmatprep.subr.bf16.mxu0 0
    %6296 = vmatpush1.bf16.msra.mxu0 %v4487
    %6297 = vmatprep.subr.bf16.mxu0 0
    %6298 = vmatpush1.bf16.msra.mxu0 %v4486
    %6299 = vmatprep.subr.bf16.mxu0 0
    %6300 = vmatpush1.bf16.msra.mxu0 %v4485
    %6301 = vmatprep.subr.bf16.mxu0 0
    %6302 = vmatpush2.bf16.msra.mxu0 %v4500
    %6303 = vmatprep.subr.bf16.mxu0 0
    %6304 = vmatpush2.bf16.msra.mxu0 %v4499
    %6305 = vmatprep.subr.bf16.mxu0 0
    %6306 = vmatpush2.bf16.msra.mxu0 %v4498
    %6307 = vmatprep.subr.bf16.mxu0 0
    %6308 = vmatpush2.bf16.msra.mxu0 %v4497
    %6309 = vmatprep.subr.bf16.mxu0 0
    %6310 = vmatpush2.bf16.msra.mxu0 %v4496
    %6311 = vmatprep.subr.bf16.mxu0 0
    %6312 = vmatpush2.bf16.msra.mxu0 %v4495
    %6313 = vmatprep.subr.bf16.mxu0 0
    %6314 = vmatpush2.bf16.msra.mxu0 %v4494
    %6315 = vmatprep.subr.bf16.mxu0 0
    %6316 = vmatpush2.bf16.msra.mxu0 %v4493
    %6317 = vmatprep.mubr.bf16.mxu0 %v1578
    %6318 = vmatmul.mubr.bf16.gmra.mxu0 %v1576
    %v6319 = vpop.f32.mrf.mxu0
    %v6320 = vadd.f32 %v6280, %v6319
    %v6321 = vpop.f32.mrf.mxu0
    %v6322 = vpop.f32.mrf.mxu0
    %v6323 = vpop.f32.mrf.mxu0
    %6324 = vdwg.mxu0
    %6325 = vmatprep.subr.bf16.mxu0 0
    %6326 = vmatpush1.bf16.msra.mxu0 %v4508
    %6327 = vmatprep.subr.bf16.mxu0 0
    %6328 = vmatpush1.bf16.msra.mxu0 %v4507
    %6329 = vmatprep.subr.bf16.mxu0 0
    %6330 = vmatpush1.bf16.msra.mxu0 %v4506
    %6331 = vmatprep.subr.bf16.mxu0 0
    %6332 = vmatpush1.bf16.msra.mxu0 %v4505
    %6333 = vmatprep.subr.bf16.mxu0 0
    %6334 = vmatpush1.bf16.msra.mxu0 %v4504
    %6335 = vmatprep.subr.bf16.mxu0 0
    %6336 = vmatpush1.bf16.msra.mxu0 %v4503
    %6337 = vmatprep.subr.bf16.mxu0 0
    %6338 = vmatpush1.bf16.msra.mxu0 %v4502
    %6339 = vmatprep.subr.bf16.mxu0 0
    %6340 = vmatpush1.bf16.msra.mxu0 %v4501
    %6341 = vmatprep.subr.bf16.mxu0 0
    %6342 = vmatpush2.bf16.msra.mxu0 %v4516
    %6343 = vmatprep.subr.bf16.mxu0 0
    %6344 = vmatpush2.bf16.msra.mxu0 %v4515
    %6345 = vmatprep.subr.bf16.mxu0 0
    %6346 = vmatpush2.bf16.msra.mxu0 %v4514
    %6347 = vmatprep.subr.bf16.mxu0 0
    %6348 = vmatpush2.bf16.msra.mxu0 %v4513
    %6349 = vmatprep.subr.bf16.mxu0 0
    %6350 = vmatpush2.bf16.msra.mxu0 %v4512
    %6351 = vmatprep.subr.bf16.mxu0 0
    %6352 = vmatpush2.bf16.msra.mxu0 %v4511
    %6353 = vmatprep.subr.bf16.mxu0 0
    %6354 = vmatpush2.bf16.msra.mxu0 %v4510
    %6355 = vmatprep.subr.bf16.mxu0 0
    %6356 = vmatpush2.bf16.msra.mxu0 %v4509
    %6357 = vmatprep.mubr.bf16.mxu0 %v1616
    %6358 = vmatmul.mubr.bf16.gmra.mxu0 %v1602
    %v6359 = vpop.f32.mrf.mxu0
    %v6360 = vadd.f32 %v6320, %v6359
    %v6361 = vpop.f32.mrf.mxu0
    %v6362 = vpop.f32.mrf.mxu0
    %v6363 = vpop.f32.mrf.mxu0
    %6364 = vdwg.mxu0
    %6365 = vmatprep.subr.bf16.mxu0 0
    %6366 = vmatpush1.bf16.msra.mxu0 %v4524
    %6367 = vmatprep.subr.bf16.mxu0 0
    %6368 = vmatpush1.bf16.msra.mxu0 %v4523
    %6369 = vmatprep.subr.bf16.mxu0 0
    %6370 = vmatpush1.bf16.msra.mxu0 %v4522
    %6371 = vmatprep.subr.bf16.mxu0 0
    %6372 = vmatpush1.bf16.msra.mxu0 %v4521
    %6373 = vmatprep.subr.bf16.mxu0 0
    %6374 = vmatpush1.bf16.msra.mxu0 %v4520
    %6375 = vmatprep.subr.bf16.mxu0 0
    %6376 = vmatpush1.bf16.msra.mxu0 %v4519
    %6377 = vmatprep.subr.bf16.mxu0 0
    %6378 = vmatpush1.bf16.msra.mxu0 %v4518
    %6379 = vmatprep.subr.bf16.mxu0 0
    %6380 = vmatpush1.bf16.msra.mxu0 %v4517
    %6381 = vmatprep.subr.bf16.mxu0 0
    %6382 = vmatpush2.bf16.msra.mxu0 %v4532
    %6383 = vmatprep.subr.bf16.mxu0 0
    %6384 = vmatpush2.bf16.msra.mxu0 %v4531
    %6385 = vmatprep.subr.bf16.mxu0 0
    %6386 = vmatpush2.bf16.msra.mxu0 %v4530
    %6387 = vmatprep.subr.bf16.mxu0 0
    %6388 = vmatpush2.bf16.msra.mxu0 %v4529
    %6389 = vmatprep.subr.bf16.mxu0 0
    %6390 = vmatpush2.bf16.msra.mxu0 %v4528
    %6391 = vmatprep.subr.bf16.mxu0 0
    %6392 = vmatpush2.bf16.msra.mxu0 %v4527
    %6393 = vmatprep.subr.bf16.mxu0 0
    %6394 = vmatpush2.bf16.msra.mxu0 %v4526
    %6395 = vmatprep.subr.bf16.mxu0 0
    %6396 = vmatpush2.bf16.msra.mxu0 %v4525
    %6397 = vmatprep.mubr.bf16.mxu0 %v1626
    %6398 = vmatmul.mubr.bf16.gmra.mxu0 %v1624
    %v6399 = vpop.f32.mrf.mxu0
    %v6400 = vadd.f32 %v6360, %v6399
    %v6401 = vpop.f32.mrf.mxu0
    %v6402 = vpop.f32.mrf.mxu0
    %v6403 = vpop.f32.mrf.mxu0
    %6404 = vdwg.mxu0
    %6405 = vmatprep.subr.bf16.mxu0 0
    %6406 = vmatpush1.bf16.msra.mxu0 %v4540
    %6407 = vmatprep.subr.bf16.mxu0 0
    %6408 = vmatpush1.bf16.msra.mxu0 %v4539
    %6409 = vmatprep.subr.bf16.mxu0 0
    %6410 = vmatpush1.bf16.msra.mxu0 %v4538
    %6411 = vmatprep.subr.bf16.mxu0 0
    %6412 = vmatpush1.bf16.msra.mxu0 %v4537
    %6413 = vmatprep.subr.bf16.mxu0 0
    %6414 = vmatpush1.bf16.msra.mxu0 %v4536
    %6415 = vmatprep.subr.bf16.mxu0 0
    %6416 = vmatpush1.bf16.msra.mxu0 %v4535
    %6417 = vmatprep.subr.bf16.mxu0 0
    %6418 = vmatpush1.bf16.msra.mxu0 %v4534
    %6419 = vmatprep.subr.bf16.mxu0 0
    %6420 = vmatpush1.bf16.msra.mxu0 %v4533
    %6421 = vmatprep.subr.bf16.mxu0 0
    %6422 = vmatpush2.bf16.msra.mxu0 %v4548
    %6423 = vmatprep.subr.bf16.mxu0 0
    %6424 = vmatpush2.bf16.msra.mxu0 %v4547
    %6425 = vmatprep.subr.bf16.mxu0 0
    %6426 = vmatpush2.bf16.msra.mxu0 %v4546
    %6427 = vmatprep.subr.bf16.mxu0 0
    %6428 = vmatpush2.bf16.msra.mxu0 %v4545
    %6429 = vmatprep.subr.bf16.mxu0 0
    %6430 = vmatpush2.bf16.msra.mxu0 %v4544
    %6431 = vmatprep.subr.bf16.mxu0 0
    %6432 = vmatpush2.bf16.msra.mxu0 %v4543
    %6433 = vmatprep.subr.bf16.mxu0 0
    %6434 = vmatpush2.bf16.msra.mxu0 %v4542
    %6435 = vmatprep.subr.bf16.mxu0 0
    %6436 = vmatpush2.bf16.msra.mxu0 %v4541
    %6437 = vmatprep.mubr.bf16.mxu0 %v1623
    %6438 = vmatmul.mubr.bf16.gmra.mxu0 %v1609
    %v6439 = vpop.f32.mrf.mxu0
    %v6440 = vadd.f32 %v6400, %v6439
    %v6441 = vpop.f32.mrf.mxu0
    %v6442 = vpop.f32.mrf.mxu0
    %v6443 = vpop.f32.mrf.mxu0
    %6444 = vdwg.mxu0
    %6445 = vmatprep.subr.bf16.mxu0 0
    %6446 = vmatpush1.bf16.msra.mxu0 %v4556
    %6447 = vmatprep.subr.bf16.mxu0 0
    %6448 = vmatpush1.bf16.msra.mxu0 %v4555
    %6449 = vmatprep.subr.bf16.mxu0 0
    %6450 = vmatpush1.bf16.msra.mxu0 %v4554
    %6451 = vmatprep.subr.bf16.mxu0 0
    %6452 = vmatpush1.bf16.msra.mxu0 %v4553
    %6453 = vmatprep.subr.bf16.mxu0 0
    %6454 = vmatpush1.bf16.msra.mxu0 %v4552
    %6455 = vmatprep.subr.bf16.mxu0 0
    %6456 = vmatpush1.bf16.msra.mxu0 %v4551
    %6457 = vmatprep.subr.bf16.mxu0 0
    %6458 = vmatpush1.bf16.msra.mxu0 %v4550
    %6459 = vmatprep.subr.bf16.mxu0 0
    %6460 = vmatpush1.bf16.msra.mxu0 %v4549
    %6461 = vmatprep.subr.bf16.mxu0 0
    %6462 = vmatpush2.bf16.msra.mxu0 %v4564
    %6463 = vmatprep.subr.bf16.mxu0 0
    %6464 = vmatpush2.bf16.msra.mxu0 %v4563
    %6465 = vmatprep.subr.bf16.mxu0 0
    %6466 = vmatpush2.bf16.msra.mxu0 %v4562
    %6467 = vmatprep.subr.bf16.mxu0 0
    %6468 = vmatpush2.bf16.msra.mxu0 %v4561
    %6469 = vmatprep.subr.bf16.mxu0 0
    %6470 = vmatpush2.bf16.msra.mxu0 %v4560
    %6471 = vmatprep.subr.bf16.mxu0 0
    %6472 = vmatpush2.bf16.msra.mxu0 %v4559
    %6473 = vmatprep.subr.bf16.mxu0 0
    %6474 = vmatpush2.bf16.msra.mxu0 %v4558
    %6475 = vmatprep.subr.bf16.mxu0 0
    %6476 = vmatpush2.bf16.msra.mxu0 %v4557
    %6477 = vmatprep.mubr.bf16.mxu0 %v1627
    %6478 = vmatmul.mubr.bf16.gmra.mxu0 %v1625
    %v6479 = vpop.f32.mrf.mxu0
    %v6480 = vadd.f32 %v6440, %v6479
    %v6481 = vpop.f32.mrf.mxu0
    %v6482 = vpop.f32.mrf.mxu0
    %v6483 = vpop.f32.mrf.mxu0
    %6484 = vdwg.mxu0
    %6485 = vmatprep.subr.bf16.mxu0 0
    %6486 = vmatpush1.bf16.msra.mxu0 %v4572
    %6487 = vmatprep.subr.bf16.mxu0 0
    %6488 = vmatpush1.bf16.msra.mxu0 %v4571
    %6489 = vmatprep.subr.bf16.mxu0 0
    %6490 = vmatpush1.bf16.msra.mxu0 %v4570
    %6491 = vmatprep.subr.bf16.mxu0 0
    %6492 = vmatpush1.bf16.msra.mxu0 %v4569
    %6493 = vmatprep.subr.bf16.mxu0 0
    %6494 = vmatpush1.bf16.msra.mxu0 %v4568
    %6495 = vmatprep.subr.bf16.mxu0 0
    %6496 = vmatpush1.bf16.msra.mxu0 %v4567
    %6497 = vmatprep.subr.bf16.mxu0 0
    %6498 = vmatpush1.bf16.msra.mxu0 %v4566
    %6499 = vmatprep.subr.bf16.mxu0 0
    %6500 = vmatpush1.bf16.msra.mxu0 %v4565
    %6501 = vmatprep.subr.bf16.mxu0 0
    %6502 = vmatpush2.bf16.msra.mxu0 %v4580
    %6503 = vmatprep.subr.bf16.mxu0 0
    %6504 = vmatpush2.bf16.msra.mxu0 %v4579
    %6505 = vmatprep.subr.bf16.mxu0 0
    %6506 = vmatpush2.bf16.msra.mxu0 %v4578
    %6507 = vmatprep.subr.bf16.mxu0 0
    %6508 = vmatpush2.bf16.msra.mxu0 %v4577
    %6509 = vmatprep.subr.bf16.mxu0 0
    %6510 = vmatpush2.bf16.msra.mxu0 %v4576
    %6511 = vmatprep.subr.bf16.mxu0 0
    %6512 = vmatpush2.bf16.msra.mxu0 %v4575
    %6513 = vmatprep.subr.bf16.mxu0 0
    %6514 = vmatpush2.bf16.msra.mxu0 %v4574
    %6515 = vmatprep.subr.bf16.mxu0 0
    %6516 = vmatpush2.bf16.msra.mxu0 %v4573
    %6517 = vmatprep.mubr.bf16.mxu0 %v1665
    %6518 = vmatmul.mubr.bf16.gmra.mxu0 %v1651
    %v6519 = vpop.f32.mrf.mxu0
    %v6520 = vadd.f32 %v6480, %v6519
    %v6521 = vpop.f32.mrf.mxu0
    %v6522 = vpop.f32.mrf.mxu0
    %v6523 = vpop.f32.mrf.mxu0
    %6524 = vdwg.mxu0
    %6525 = vmatprep.subr.bf16.mxu0 0
    %6526 = vmatpush1.bf16.msra.mxu0 %v4588
    %6527 = vmatprep.subr.bf16.mxu0 0
    %6528 = vmatpush1.bf16.msra.mxu0 %v4587
    %6529 = vmatprep.subr.bf16.mxu0 0
    %6530 = vmatpush1.bf16.msra.mxu0 %v4586
    %6531 = vmatprep.subr.bf16.mxu0 0
    %6532 = vmatpush1.bf16.msra.mxu0 %v4585
    %6533 = vmatprep.subr.bf16.mxu0 0
    %6534 = vmatpush1.bf16.msra.mxu0 %v4584
    %6535 = vmatprep.subr.bf16.mxu0 0
    %6536 = vmatpush1.bf16.msra.mxu0 %v4583
    %6537 = vmatprep.subr.bf16.mxu0 0
    %6538 = vmatpush1.bf16.msra.mxu0 %v4582
    %6539 = vmatprep.subr.bf16.mxu0 0
    %6540 = vmatpush1.bf16.msra.mxu0 %v4581
    %6541 = vmatprep.subr.bf16.mxu0 0
    %6542 = vmatpush2.bf16.msra.mxu0 %v4596
    %6543 = vmatprep.subr.bf16.mxu0 0
    %6544 = vmatpush2.bf16.msra.mxu0 %v4595
    %6545 = vmatprep.subr.bf16.mxu0 0
    %6546 = vmatpush2.bf16.msra.mxu0 %v4594
    %6547 = vmatprep.subr.bf16.mxu0 0
    %6548 = vmatpush2.bf16.msra.mxu0 %v4593
    %6549 = vmatprep.subr.bf16.mxu0 0
    %6550 = vmatpush2.bf16.msra.mxu0 %v4592
    %6551 = vmatprep.subr.bf16.mxu0 0
    %6552 = vmatpush2.bf16.msra.mxu0 %v4591
    %6553 = vmatprep.subr.bf16.mxu0 0
    %6554 = vmatpush2.bf16.msra.mxu0 %v4590
    %6555 = vmatprep.subr.bf16.mxu0 0
    %6556 = vmatpush2.bf16.msra.mxu0 %v4589
    %6557 = vmatprep.mubr.bf16.mxu0 %v1675
    %6558 = vmatmul.mubr.bf16.gmra.mxu0 %v1673
    %v6559 = vpop.f32.mrf.mxu0
    %v6560 = vadd.f32 %v6520, %v6559
    %v6561 = vpop.f32.mrf.mxu0
    %v6562 = vpop.f32.mrf.mxu0
    %v6563 = vpop.f32.mrf.mxu0
    %6564 = vdwg.mxu0
    %6565 = vmatprep.subr.bf16.mxu0 0
    %6566 = vmatpush1.bf16.msra.mxu0 %v4604
    %6567 = vmatprep.subr.bf16.mxu0 0
    %6568 = vmatpush1.bf16.msra.mxu0 %v4603
    %6569 = vmatprep.subr.bf16.mxu0 0
    %6570 = vmatpush1.bf16.msra.mxu0 %v4602
    %6571 = vmatprep.subr.bf16.mxu0 0
    %6572 = vmatpush1.bf16.msra.mxu0 %v4601
    %6573 = vmatprep.subr.bf16.mxu0 0
    %6574 = vmatpush1.bf16.msra.mxu0 %v4600
    %6575 = vmatprep.subr.bf16.mxu0 0
    %6576 = vmatpush1.bf16.msra.mxu0 %v4599
    %6577 = vmatprep.subr.bf16.mxu0 0
    %6578 = vmatpush1.bf16.msra.mxu0 %v4598
    %6579 = vmatprep.subr.bf16.mxu0 0
    %6580 = vmatpush1.bf16.msra.mxu0 %v4597
    %6581 = vmatprep.subr.bf16.mxu0 0
    %6582 = vmatpush2.bf16.msra.mxu0 %v4612
    %6583 = vmatprep.subr.bf16.mxu0 0
    %6584 = vmatpush2.bf16.msra.mxu0 %v4611
    %6585 = vmatprep.subr.bf16.mxu0 0
    %6586 = vmatpush2.bf16.msra.mxu0 %v4610
    %6587 = vmatprep.subr.bf16.mxu0 0
    %6588 = vmatpush2.bf16.msra.mxu0 %v4609
    %6589 = vmatprep.subr.bf16.mxu0 0
    %6590 = vmatpush2.bf16.msra.mxu0 %v4608
    %6591 = vmatprep.subr.bf16.mxu0 0
    %6592 = vmatpush2.bf16.msra.mxu0 %v4607
    %6593 = vmatprep.subr.bf16.mxu0 0
    %6594 = vmatpush2.bf16.msra.mxu0 %v4606
    %6595 = vmatprep.subr.bf16.mxu0 0
    %6596 = vmatpush2.bf16.msra.mxu0 %v4605
    %6597 = vmatprep.mubr.bf16.mxu0 %v1672
    %6598 = vmatmul.mubr.bf16.gmra.mxu0 %v1658
    %v6599 = vpop.f32.mrf.mxu0
    %v6600 = vadd.f32 %v6560, %v6599
    %v6601 = vpop.f32.mrf.mxu0
    %v6602 = vpop.f32.mrf.mxu0
    %v6603 = vpop.f32.mrf.mxu0
    %6604 = vdwg.mxu0
    %6605 = vmatprep.subr.bf16.mxu0 0
    %6606 = vmatpush1.bf16.msra.mxu0 %v4620
    %6607 = vmatprep.subr.bf16.mxu0 0
    %6608 = vmatpush1.bf16.msra.mxu0 %v4619
    %6609 = vmatprep.subr.bf16.mxu0 0
    %6610 = vmatpush1.bf16.msra.mxu0 %v4618
    %6611 = vmatprep.subr.bf16.mxu0 0
    %6612 = vmatpush1.bf16.msra.mxu0 %v4617
    %6613 = vmatprep.subr.bf16.mxu0 0
    %6614 = vmatpush1.bf16.msra.mxu0 %v4616
    %6615 = vmatprep.subr.bf16.mxu0 0
    %6616 = vmatpush1.bf16.msra.mxu0 %v4615
    %6617 = vmatprep.subr.bf16.mxu0 0
    %6618 = vmatpush1.bf16.msra.mxu0 %v4614
    %6619 = vmatprep.subr.bf16.mxu0 0
    %6620 = vmatpush1.bf16.msra.mxu0 %v4613
    %6621 = vmatprep.subr.bf16.mxu0 0
    %6622 = vmatpush2.bf16.msra.mxu0 %v4628
    %6623 = vmatprep.subr.bf16.mxu0 0
    %6624 = vmatpush2.bf16.msra.mxu0 %v4627
    %6625 = vmatprep.subr.bf16.mxu0 0
    %6626 = vmatpush2.bf16.msra.mxu0 %v4626
    %6627 = vmatprep.subr.bf16.mxu0 0
    %6628 = vmatpush2.bf16.msra.mxu0 %v4625
    %6629 = vmatprep.subr.bf16.mxu0 0
    %6630 = vmatpush2.bf16.msra.mxu0 %v4624
    %6631 = vmatprep.subr.bf16.mxu0 0
    %6632 = vmatpush2.bf16.msra.mxu0 %v4623
    %6633 = vmatprep.subr.bf16.mxu0 0
    %6634 = vmatpush2.bf16.msra.mxu0 %v4622
    %6635 = vmatprep.subr.bf16.mxu0 0
    %6636 = vmatpush2.bf16.msra.mxu0 %v4621
    %6637 = vmatprep.mubr.bf16.mxu0 %v1676
    %6638 = vmatmul.mubr.bf16.gmra.mxu0 %v1674
    %v6639 = vpop.f32.mrf.mxu0
    %v6640 = vadd.f32 %v6600, %v6639
    %v6641 = vpop.f32.mrf.mxu0
    %v6642 = vpop.f32.mrf.mxu0
    %v6643 = vpop.f32.mrf.mxu0
    %6644 = vdwg.mxu0
    %v6645 = vmax.f32 %v6640, 0.0
    %v6646 = vpack.c.bf16 %v6645, %v6645
    %v6647 = vld [vmem:[%s3] sm:$0xf]
    %v6648 = vld [vmem:[%s3 + $0x4] sm:$0xf]
    %v6649 = vld [vmem:[%s3 + $0x8] sm:$0xf]
    %v6650 = vld [vmem:[%s3 + $0xc] sm:$0xf]
    %v6651 = vld [vmem:[%s3 + $0x10] sm:$0xf]
    %v6652 = vld [vmem:[%s3 + $0x14] sm:$0xf]
    %v6653 = vld [vmem:[%s3 + $0x18] sm:$0xf]
    %v6654 = vld [vmem:[%s3 + $0x1c] sm:$0xf]
    %v6655 = vld [vmem:[%s3 + $0x20] sm:$0xf]
    %v6656 = vld [vmem:[%s3 + $0x24] sm:$0xf]
    %v6657 = vld [vmem:[%s3 + $0x28] sm:$0xf]
    %v6658 = vld [vmem:[%s3 + $0x2c] sm:$0xf]
    %v6659 = vld [vmem:[%s3 + $0x30] sm:$0xf]
    %v6660 = vld [vmem:[%s3 + $0x34] sm:$0xf]
    %v6661 = vld [vmem:[%s3 + $0x38] sm:$0xf]
    %v6662 = vld [vmem:[%s3 + $0x3c] sm:$0xf]
    %v6663 = vld [vmem:[#allocation7] sm:$0x1]
    %v6665 = vlaneseq
    %v6666 = vshrl.u32 %v6665, 7
    %v6667 = vsub.s32 0, %v6666
    %v6668 = vrot.slane %v6663, %v6667
    %v6686 = vunpack.c.l.b16 %v6647
    %v6687 = vunpack.c.l.b16 %v6648
    %v6688 = vunpack.c.l.b16 %v6649
    %v6689 = vunpack.c.l.b16 %v6650
    %v6690 = vunpack.c.l.b16 %v6651
    %v6691 = vunpack.c.l.b16 %v6652
    %v6692 = vunpack.c.l.b16 %v6653
    %v6693 = vunpack.c.l.b16 %v6654
    %v6694 = vunpack.c.l.b16 %v6655
    %v6695 = vunpack.c.l.b16 %v6656
    %v6696 = vunpack.c.l.b16 %v6657
    %v6697 = vunpack.c.l.b16 %v6658
    %v6698 = vunpack.c.l.b16 %v6659
    %v6699 = vunpack.c.l.b16 %v6660
    %v6700 = vunpack.c.l.b16 %v6661
    %v6701 = vunpack.c.l.b16 %v6662
    %v6702 = vpack.c.b16 %v6687, %v6686
    %v6703 = vpack.c.b16 %v6689, %v6688
    %v6704 = vpack.c.b16 %v6691, %v6690
    %v6705 = vpack.c.b16 %v6693, %v6692
    %v6706 = vpack.c.b16 %v6695, %v6694
    %v6707 = vpack.c.b16 %v6697, %v6696
    %v6708 = vpack.c.b16 %v6699, %v6698
    %v6709 = vpack.c.b16 %v6701, %v6700
    %6718 = vmatprep.subr.bf16.mxu0 0
    %6719 = vmatpush1.bf16.msra.mxu0 %v6709
    %6720 = vmatprep.subr.bf16.mxu0 0
    %6721 = vmatpush1.bf16.msra.mxu0 %v6708
    %6722 = vmatprep.subr.bf16.mxu0 0
    %6723 = vmatpush1.bf16.msra.mxu0 %v6707
    %6724 = vmatprep.subr.bf16.mxu0 0
    %6725 = vmatpush1.bf16.msra.mxu0 %v6706
    %6726 = vmatprep.subr.bf16.mxu0 0
    %6727 = vmatpush1.bf16.msra.mxu0 %v6705
    %6728 = vmatprep.subr.bf16.mxu0 0
    %6729 = vmatpush1.bf16.msra.mxu0 %v6704
    %6730 = vmatprep.subr.bf16.mxu0 0
    %6731 = vmatpush1.bf16.msra.mxu0 %v6703
    %6732 = vmatprep.subr.bf16.mxu0 0
    %6733 = vmatpush1.bf16.msra.mxu0 %v6702
    %6734 = vmatprep.subr.bf16.mxu0 0
    %6735 = vmatpush2.bf16.msra.mxu0 0
    %6736 = vmatprep.subr.bf16.mxu0 0
    %6737 = vmatpush2.bf16.msra.mxu0 0
    %6738 = vmatprep.subr.bf16.mxu0 0
    %6739 = vmatpush2.bf16.msra.mxu0 0
    %6740 = vmatprep.subr.bf16.mxu0 0
    %6741 = vmatpush2.bf16.msra.mxu0 0
    %6742 = vmatprep.subr.bf16.mxu0 0
    %6743 = vmatpush2.bf16.msra.mxu0 0
    %6744 = vmatprep.subr.bf16.mxu0 0
    %6745 = vmatpush2.bf16.msra.mxu0 0
    %6746 = vmatprep.subr.bf16.mxu0 0
    %6747 = vmatpush2.bf16.msra.mxu0 0
    %6748 = vmatprep.subr.bf16.mxu0 0
    %6749 = vmatpush2.bf16.msra.mxu0 0
    %6750 = vmatprep.mubr.bf16.mxu0 0
    %6751 = vmatmul.mubr.bf16.gmra.mxu0 %v6646
    %v6752 = vpop.f32.mrf.mxu0
    %v6753 = vadd.f32 %v6668, %v6752
    %v6754 = vpop.f32.mrf.mxu0
    %v6755 = vpop.f32.mrf.mxu0
    %v6756 = vpop.f32.mrf.mxu0
    %6757 = vdwg.mxu0
    %vm6758 = vcmask 74752
    %v6759 = vsel %vm6758, %v6753, -inf
    %6760 = vmax.xlane.f32.xlu0 %v6759
    %v6761 = vpop.xlane.xlu0 %6760
    %v6762 = vsub.f32 %v6753, %v6761
    %v6763 = vmul.f32 %v6762, 1.442695
    %v6764 = vpow.pop %v6763
    %v6765 = vsel %vm6758, %v6764, 0.0
    %6766 = vadd.xlane.f32.xlu0 %v6765
    %v6767 = vpop.xlane.xlu0 %6766
    %v6768 = vlog2.pop %v6767
    %v6769 = vmul.f32 %v6768, 0.6931472
    %v6770 = vadd.f32 %v6761, %v6769
    %v6771 = vsub.f32 %v6753, %v6770
    %6772 = vst.msk [vmem:[#allocation8] sm:$0x3] %vm6758, %v6771
    // Predicated region
    $region34: #{simple_cnn_forward.3} parent=1 // pred_check
      _
    $region35: #{simple_cnn_forward.3} parent=1 // pred_check_branch
      %6774 = sbr.rel (0) target = $region37
    $region36: #{simple_cnn_forward.3} parent=1 // pred_region
      %s6776 = ssub.s32 32, 32
      %6777 = vsyncadd [#allocation4], %s6776
      %s6779 = sshll.u32 [#allocation8], 4
      %s6780 = int_to_ptr.vmem [resolvable:$true] %s6779
      %6782 = dma.vmem_to_hbm [thread:$0]  %s6780, 32, %s5, [#allocation4]
    $region37: #{simple_cnn_forward.3} parent=1 // pred_fallthru
      _
    // Predicated region
    $region38: #{simple_cnn_forward.3} parent=1 // pred_check
      _
    $region39: #{simple_cnn_forward.3} parent=1 // pred_check_branch
      %6784 = sbr.rel (0) target = $region41
    $region40: #{simple_cnn_forward.3} parent=1 // pred_region
      %6785 = dma.done [#allocation4], 32
    $region41: #{simple_cnn_forward.3} parent=1 // pred_fallthru
      _
    %6786 = vsyncpa [#allocation3], 1
    %6787 = vsyncpa [#allocation6], 1
    %6788 = vsyncpa [#allocation4], 1

</llo_original>
